<compile_context>
chip_gen: v5e
topology: v5e:2x2
jax: 0.10.0
libtpu: 0.0.40
codegen_flags: <defaults>
</compile_context>

<pallas_src>
import numpy as np
import jax
import jax.numpy as jnp
from jax import lax
from jax.experimental import pallas as pl
from jax.experimental.pallas import tpu as pltpu

# model hyper-parameters (consistent with the module's __init__ defaults)
D_MODEL = 32          # args.ts_d_model
N_HEADS = 4           # args.ts_n_heads
HEAD_DIM = D_MODEL // N_HEADS
D_FF = 64             # args.ts_d_ff
C_OUT = 1             # args.c_out
CRS_D_LAYERS = 1      # args.crs_d_layers
D_LAYERS = 1          # args.d_layers
LN_EPS = 1e-5
SCALE = 1.0 / float(HEAD_DIM) ** 0.5   # FullAttention: 1/sqrt(E)
LANES = 128


# ----------------------------- in-kernel helpers -----------------------------

def _layer_norm(x, gamma, beta):
    mu = jnp.mean(x, axis=-1, keepdims=True)
    var = jnp.mean((x - mu) ** 2, axis=-1, keepdims=True)
    return (x - mu) * lax.rsqrt(var + LN_EPS) * gamma + beta


def _attention(q, kv, wo, bo, B, Lq, Lkv):
    """Multi-head attention on flattened activations.

    q:  [B*Lq, D]      (already projected, bias added)
    kv: [B*Lkv, 2*D]   fused [k | v] (already projected, bias added)
    wo: [D, D] output projection, bo: [1, D]
    Returns [B*Lq, D].

    Per-batch row slices are sublane-aligned (L = 8 rows); the output projection is
    accumulated per head so heads never need to be re-concatenated along lanes.
    """
    wo_h = [wo[h * HEAD_DIM:(h + 1) * HEAD_DIM, :] for h in range(N_HEADS)]
    outs = []
    for b in range(B):
        qb = q[b * Lq:(b + 1) * Lq, :]
        kvb = kv[b * Lkv:(b + 1) * Lkv, :]
        acc = None
        for h in range(N_HEADS):
            lo = h * HEAD_DIM
            qh = qb[:, lo:lo + HEAD_DIM]
            kh = kvb[:, lo:lo + HEAD_DIM]
            vh = kvb[:, D_MODEL + lo:D_MODEL + lo + HEAD_DIM]
            # q @ k^T without an explicit transpose (contract last dims).
            s = lax.dot_general(qh, kh, (((1,), (1,)), ((), ())),
                                preferred_element_type=jnp.float32) * SCALE
            s = s - jnp.max(s, axis=-1, keepdims=True)
            p = jnp.exp(s)
            p = p / jnp.sum(p, axis=-1, keepdims=True)
            oh = jnp.dot(p, vh, preferred_element_type=jnp.float32)
            contrib = jnp.dot(oh, wo_h[h], preferred_element_type=jnp.float32)
            acc = contrib if acc is None else acc + contrib
        outs.append(acc)
    out = outs[0] if B == 1 else jnp.concatenate(outs, axis=0)
    return out + bo


# ------------------------------ fused kernel ----------------------------------

def _make_kernel(n_cross, n_enc, wmap, vmap, B, Lq, Lkv):
    """wmap: name -> (row, nrows, ncols) inside the weight slab [R, 128].
       vmap: name -> (row, width)        inside the vector slab [Rv, 128]."""

    def W(ref, name):
        r, nr, nc = wmap[name]
        return ref[r:r + nr, :nc]          # static sublane slice, lanes start at 0

    def V(ref, name):
        r, nc = vmap[name]
        return ref[r:r + 1, :nc]           # one row per vector, lanes start at 0

    def kernel(x_ref, y_ref, w_ref, v_ref, o_ref):
        x = x_ref[...].astype(jnp.float32)     # [B*Lq, D]
        y = y_ref[...].astype(jnp.float32)     # [B*Lkv, D]

        # ---- Cross_Encoder: irradiance_guided_cross_attn layers -------------
        for i in range(n_cross):
            q = jnp.dot(x, W(w_ref, f"c{i}_wq"),
                        preferred_element_type=jnp.float32) + V(v_ref, f"c{i}_bq")
            kv = jnp.dot(y, W(w_ref, f"c{i}_wkv"),
                         preferred_element_type=jnp.float32) + V(v_ref, f"c{i}_bkv")
            a = _attention(q, kv, W(w_ref, f"c{i}_wo"), V(v_ref, f"c{i}_bo"),
                           B, Lq, Lkv)
            x = _layer_norm(x + a, V(v_ref, f"c{i}_g"), V(v_ref, f"c{i}_b"))

        # Cross_Encoder final LayerNorm
        x = _layer_norm(x, V(v_ref, "cn_g"), V(v_ref, "cn_b"))

        # ---- Encoder: EncoderLayer (self-attn + 1x1-conv FFN) ----------------
        for i in range(n_enc):
            qkv = jnp.dot(x, W(w_ref, f"e{i}_wqkv"),
                          preferred_element_type=jnp.float32) + V(v_ref, f"e{i}_bqkv")
            a = _attention(qkv[:, :D_MODEL], qkv[:, D_MODEL:3 * D_MODEL],
                           W(w_ref, f"e{i}_wo"), V(v_ref, f"e{i}_bo"), B, Lq, Lq)
            x = _layer_norm(x + a, V(v_ref, f"e{i}_g1"), V(v_ref, f"e{i}_b1"))
            ff = jnp.maximum(
                jnp.dot(x, W(w_ref, f"e{i}_w1"),
                        preferred_element_type=jnp.float32) + V(v_ref, f"e{i}_fb1"),
                0.0)
            ff = jnp.dot(ff, W(w_ref, f"e{i}_w2"),
                         preferred_element_type=jnp.float32) + V(v_ref, f"e{i}_fb2")
            x = _layer_norm(x + ff, V(v_ref, f"e{i}_g2"), V(v_ref, f"e{i}_b2"))

        # Encoder final LayerNorm + projection Linear(d_model, c_out)
        x = _layer_norm(x, V(v_ref, "dn_g"), V(v_ref, "dn_b"))
        out = jnp.dot(x, W(w_ref, "p_w"),
                      preferred_element_type=jnp.float32) + V(v_ref, "p_b")
        o_ref[...] = out.astype(o_ref.dtype)

    return kernel


# ------------------------------ param packing ---------------------------------

def pack_params(params):
    """Packs every weight matrix into one sublane-stacked [R, 128] slab (columns start
    at lane 0, rows at multiples of 32/64) and every 1-D parameter into one [Rv, 128]
    slab (one row per vector). Packing is done in numpy on the host."""
    wmap, w_entries, wrow = {}, [], 0
    vmap, v_entries, vrow = {}, [], 0

    def add_w(name, mat):
        nonlocal wrow
        mat = np.asarray(mat, np.float32)
        wmap[name] = (wrow, mat.shape[0], mat.shape[1])
        w_entries.append((wrow, mat))
        wrow += mat.shape[0]

    def add_v(name, *vecs):
        nonlocal vrow
        vec = np.concatenate([np.asarray(v, np.float32).reshape(-1) for v in vecs])
        vmap[name] = (vrow, vec.shape[0])
        v_entries.append((vrow, vec))
        vrow += 1

    for i, lp in enumerate(params["cross_layers"]):
        add_w(f"c{i}_wq", lp["wq"])
        add_w(f"c{i}_wkv", np.concatenate(
            [np.asarray(lp["wk"], np.float32), np.asarray(lp["wv"], np.float32)], axis=1))
        add_w(f"c{i}_wo", lp["wo"])
        add_v(f"c{i}_bq", lp["bq"])
        add_v(f"c{i}_bkv", lp["bk"], lp["bv"])
        add_v(f"c{i}_bo", lp["bo"])
        add_v(f"c{i}_g", lp["ln_g"])
        add_v(f"c{i}_b", lp["ln_b"])
    add_v("cn_g", params["cross_norm"][0])
    add_v("cn_b", params["cross_norm"][1])

    for i, lp in enumerate(params["enc_layers"]):
        add_w(f"e{i}_wqkv", np.concatenate(
            [np.asarray(lp["wq"], np.float32), np.asarray(lp["wk"], np.float32),
             np.asarray(lp["wv"], np.float32)], axis=1))
        add_w(f"e{i}_wo", lp["wo"])
        add_w(f"e{i}_w1", lp["w1"])
        add_w(f"e{i}_w2", lp["w2"])
        add_v(f"e{i}_bqkv", lp["bq"], lp["bk"], lp["bv"])
        add_v(f"e{i}_bo", lp["bo"])
        add_v(f"e{i}_g1", lp["ln1_g"])
        add_v(f"e{i}_b1", lp["ln1_b"])
        add_v(f"e{i}_fb1", lp["b1"])
        add_v(f"e{i}_fb2", lp["b2"])
        add_v(f"e{i}_g2", lp["ln2_g"])
        add_v(f"e{i}_b2", lp["ln2_b"])
    add_v("dn_g", params["dec_norm"][0])
    add_v("dn_b", params["dec_norm"][1])
    add_w("p_w", params["proj"][0])
    add_v("p_b", params["proj"][1])

    wr = ((wrow + 7) // 8) * 8
    w_slab = np.zeros((wr, LANES), np.float32)
    for r0, mat in w_entries:
        w_slab[r0:r0 + mat.shape[0], :mat.shape[1]] = mat

    vr = ((vrow + 7) // 8) * 8
    v_slab = np.zeros((vr, LANES), np.float32)
    for r0, vec in v_entries:
        v_slab[r0, :vec.shape[0]] = vec

    return jnp.asarray(w_slab), wmap, jnp.asarray(v_slab), vmap


# ------------------------------ pallas wrapper ---------------------------------

def _spec2d(shape):
    return pl.BlockSpec(shape, lambda i: (0, 0))


def dec_model_forward(ts_enc_x, img_enc_x, dec_inp, dec_inp_mark, params):
    # dec_inp / dec_inp_mark are accepted but unused, exactly like the PyTorch forward
    # (self.dec_embedding is never invoked; dropout is identity at eval).
    del dec_inp, dec_inp_mark
    B, Lq, D = ts_enc_x.shape
    Lkv = img_enc_x.shape[1]

    w_slab, wmap, v_slab, vmap = pack_params(params)
    x2 = ts_enc_x.reshape(B * Lq, D)
    y2 = img_enc_x.reshape(B * Lkv, D)

    kernel = _make_kernel(len(params["cross_layers"]), len(params["enc_layers"]),
                          wmap, vmap, B, Lq, Lkv)

    out = pl.pallas_call(
        kernel,
        out_shape=jax.ShapeDtypeStruct((B * Lq, C_OUT), ts_enc_x.dtype),
        grid=(1,),
        in_specs=[_spec2d(tuple(x2.shape)), _spec2d(tuple(y2.shape)),
                  _spec2d(tuple(w_slab.shape)), _spec2d(tuple(v_slab.shape))],
        out_specs=_spec2d((B * Lq, C_OUT)),
        compiler_params=pltpu.CompilerParams(dimension_semantics=("arbitrary",)),
    )(x2, y2, w_slab, v_slab)
    return out.reshape(B, Lq, C_OUT)


# ------------------------------ parameter init ---------------------------------

def _linear(key, din, dout, scale=0.05):
    kw, kb = jax.random.split(key)
    w = jax.random.normal(kw, (din, dout), jnp.float32) * scale
    b = jax.random.normal(kb, (1, dout), jnp.float32) * scale
    return w, b


def _ln_params(d):
    return (jnp.ones((1, d), jnp.float32), jnp.zeros((1, d), jnp.float32))


def init_params(key):
    n_keys = CRS_D_LAYERS * 4 + D_LAYERS * 6 + 1
    keys = jax.random.split(key, n_keys)
    ki = iter(range(n_keys))

    cross_layers = []
    for _ in range(CRS_D_LAYERS):
        wq, bq = _linear(keys[next(ki)], D_MODEL, D_MODEL)
        wk, bk = _linear(keys[next(ki)], D_MODEL, D_MODEL)
        wv, bv = _linear(keys[next(ki)], D_MODEL, D_MODEL)
        wo, bo = _linear(keys[next(ki)], D_MODEL, D_MODEL)
        g, b = _ln_params(D_MODEL)
        cross_layers.append(dict(wq=wq, bq=bq, wk=wk, bk=bk, wv=wv, bv=bv,
                                 wo=wo, bo=bo, ln_g=g, ln_b=b))

    enc_layers = []
    for _ in range(D_LAYERS):
        wq, bq = _linear(keys[next(ki)], D_MODEL, D_MODEL)
        wk, bk = _linear(keys[next(ki)], D_MODEL, D_MODEL)
        wv, bv = _linear(keys[next(ki)], D_MODEL, D_MODEL)
        wo, bo = _linear(keys[next(ki)], D_MODEL, D_MODEL)
        w1, b1 = _linear(keys[next(ki)], D_MODEL, D_FF)
        w2, b2 = _linear(keys[next(ki)], D_FF, D_MODEL)
        g1, be1 = _ln_params(D_MODEL)
        g2, be2 = _ln_params(D_MODEL)
        enc_layers.append(dict(wq=wq, bq=bq, wk=wk, bk=bk, wv=wv, bv=bv,
                               wo=wo, bo=bo, ln1_g=g1, ln1_b=be1,
                               w1=w1, b1=b1, w2=w2, b2=b2, ln2_g=g2, ln2_b=be2))

    wp, bp = _linear(keys[n_keys - 1], D_MODEL, C_OUT)
    return {
        "cross_layers": cross_layers,
        "cross_norm": _ln_params(D_MODEL),
        "enc_layers": enc_layers,
        "dec_norm": _ln_params(D_MODEL),
        "proj": (wp, bp),
    }


# --------------------------- pure-JAX reference --------------------------------

def _ref_ln(x, g, b):
    mu = jnp.mean(x, axis=-1, keepdims=True)
    var = jnp.mean((x - mu) ** 2, axis=-1, keepdims=True)
    return (x - mu) / jnp.sqrt(var + LN_EPS) * g + b


def _ref_mha(xq, xkv, p):
    q = xq @ p["wq"] + p["bq"]
    k = xkv @ p["wk"] + p["bk"]
    v = xkv @ p["wv"] + p["bv"]
    B, L, _ = q.shape
    S = k.shape[1]
    qh = q.reshape(B, L, N_HEADS, HEAD_DIM)
    kh = k.reshape(B, S, N_HEADS, HEAD_DIM)
    vh = v.reshape(B, S, N_HEADS, HEAD_DIM)
    s = jnp.einsum("blhe,bshe->bhls", qh, kh) * SCALE
    a = jax.nn.softmax(s, axis=-1)
    o = jnp.einsum("bhls,bshe->blhe", a, vh).reshape(B, L, D_MODEL)
    return o @ p["wo"] + p["bo"]


def ref_forward(ts_enc_x, img_enc_x, params):
    x = ts_enc_x
    for lp in params["cross_layers"]:
        x = _ref_ln(x + _ref_mha(x, img_enc_x, lp), lp["ln_g"], lp["ln_b"])
    x = _ref_ln(x, *params["cross_norm"])
    for lp in params["enc_layers"]:
        x = _ref_ln(x + _ref_mha(x, x, lp), lp["ln1_g"], lp["ln1_b"])
        ff = jnp.maximum(x @ lp["w1"] + lp["b1"], 0.0) @ lp["w2"] + lp["b2"]
        x = _ref_ln(x + ff, lp["ln2_g"], lp["ln2_b"])
    x = _ref_ln(x, *params["dec_norm"])
    wp, bp = params["proj"]
    return x @ wp + bp


# ----------------------------------- main --------------------------------------

if __name__ == "__main__":
    jax.config.update("jax_default_matmul_precision", "highest")

    B = 2
    L_TS = 8       # query sequence length (ts encoder output)
    L_IMG = 8      # key/value sequence length (img encoder output, img_enc_len)
    PRED_LEN = 8

    key = jax.random.PRNGKey(0)
    k1, k2, k3, k4, kp = jax.random.split(key, 5)
    ts_enc_x = jax.random.normal(k1, (B, L_TS, D_MODEL), jnp.float32)
    img_enc_x = jax.random.normal(k2, (B, L_IMG, D_MODEL), jnp.float32)
    dec_inp = jax.random.normal(k3, (B, PRED_LEN, 1), jnp.float32)        # unused by forward
    dec_inp_mark = jax.random.normal(k4, (B, PRED_LEN, 4), jnp.float32)   # unused by forward

    params = init_params(kp)

    out = dec_model_forward(ts_enc_x, img_enc_x, dec_inp, dec_inp_mark, params)
    out = jax.block_until_ready(out)
    assert out.shape == (B, L_TS, C_OUT)

    ref = jax.block_until_ready(ref_forward(ts_enc_x, img_enc_x, params))
    np.testing.assert_allclose(np.asarray(out), np.asarray(ref), rtol=2e-3, atol=2e-3)

    print("KERNEL_OK")
</pallas_src>

<mosaic_0001>
module attributes {stable_mosaic.version = 11 : i64} {
  func.func @kernel(%arg0: i32, %arg1: memref<16x32xf32, #tpu.memory_space<vmem>>, %arg2: memref<16x32xf32, #tpu.memory_space<vmem>>, %arg3: memref<288x128xf32, #tpu.memory_space<vmem>>, %arg4: memref<24x128xf32, #tpu.memory_space<vmem>>, %arg5: memref<16x1xf32, #tpu.memory_space<vmem>>) attributes {dimension_semantics = [#tpu.dimension_semantics<arbitrary>], iteration_bounds = array<i64: 1>, scalar_prefetch = 0 : i64, scratch_operands = 0 : i64, tpu.core_type = #tpu.core_type<tc>, window_params = [{pipeline_mode = #tpu.pipeline_mode<synchronous>, transform_indices = @transform_0, window_bounds = array<i64: 16, 32>}, {pipeline_mode = #tpu.pipeline_mode<synchronous>, transform_indices = @transform_1, window_bounds = array<i64: 16, 32>}, {pipeline_mode = #tpu.pipeline_mode<synchronous>, transform_indices = @transform_2, window_bounds = array<i64: 288, 128>}, {pipeline_mode = #tpu.pipeline_mode<synchronous>, transform_indices = @transform_3, window_bounds = array<i64: 24, 128>}, {pipeline_mode = #tpu.pipeline_mode<synchronous>, transform_indices = @transform_4, window_bounds = array<i64: 16, 1>}]} {
    %c0 = arith.constant 0 : index
    %c0_0 = arith.constant 0 : index
    %0 = vector.load %arg1[%c0, %c0_0] : memref<16x32xf32, #tpu.memory_space<vmem>>, vector<16x32xf32>
    %c0_1 = arith.constant 0 : index
    %c0_2 = arith.constant 0 : index
    %1 = vector.load %arg2[%c0_1, %c0_2] : memref<16x32xf32, #tpu.memory_space<vmem>>, vector<16x32xf32>
    %c0_3 = arith.constant 0 : index
    %c0_4 = arith.constant 0 : index
    %2 = vector.load %arg3[%c0_3, %c0_4] : memref<288x128xf32, #tpu.memory_space<vmem>>, vector<32x32xf32>
    %cst = arith.constant dense<0.000000e+00> : vector<16x32xf32>
    %3 = tpu.matmul %0, %2, %cst {dimension_numbers = #tpu.dot_dimension_numbers<[1], [0], [0], [1], [0, 0, 1, 1], [], []>, precision = #tpu.contract_precision<fp32>} : vector<16x32xf32>, vector<32x32xf32>, vector<16x32xf32> -> vector<16x32xf32>
    %c0_5 = arith.constant 0 : index
    %c0_6 = arith.constant 0 : index
    %4 = vector.load %arg4[%c0_5, %c0_6] : memref<24x128xf32, #tpu.memory_space<vmem>>, vector<1x32xf32>
    %5 = vector.broadcast %4 : vector<1x32xf32> to vector<16x32xf32>
    %6 = arith.addf %3, %5 : vector<16x32xf32>
    %c32 = arith.constant 32 : index
    %c0_7 = arith.constant 0 : index
    %7 = vector.load %arg3[%c32, %c0_7] : memref<288x128xf32, #tpu.memory_space<vmem>>, vector<32x64xf32>
    %cst_8 = arith.constant dense<0.000000e+00> : vector<16x64xf32>
    %8 = tpu.matmul %1, %7, %cst_8 {dimension_numbers = #tpu.dot_dimension_numbers<[1], [0], [0], [1], [0, 0, 1, 1], [], []>, precision = #tpu.contract_precision<fp32>} : vector<16x32xf32>, vector<32x64xf32>, vector<16x64xf32> -> vector<16x64xf32>
    %c1 = arith.constant 1 : index
    %c0_9 = arith.constant 0 : index
    %9 = vector.load %arg4[%c1, %c0_9] : memref<24x128xf32, #tpu.memory_space<vmem>>, vector<1x64xf32>
    %10 = vector.broadcast %9 : vector<1x64xf32> to vector<16x64xf32>
    %11 = arith.addf %8, %10 : vector<16x64xf32>
    %c64 = arith.constant 64 : index
    %c0_10 = arith.constant 0 : index
    %12 = vector.load %arg3[%c64, %c0_10] : memref<288x128xf32, #tpu.memory_space<vmem>>, vector<32x32xf32>
    %c2 = arith.constant 2 : index
    %c0_11 = arith.constant 0 : index
    %13 = vector.load %arg4[%c2, %c0_11] : memref<24x128xf32, #tpu.memory_space<vmem>>, vector<1x32xf32>
    %14 = vector.extract_strided_slice %12 {offsets = [0, 0], sizes = [8, 32], strides = [1, 1]} : vector<32x32xf32> to vector<8x32xf32>
    %15 = vector.extract_strided_slice %12 {offsets = [8, 0], sizes = [8, 32], strides = [1, 1]} : vector<32x32xf32> to vector<8x32xf32>
    %16 = vector.extract_strided_slice %12 {offsets = [16, 0], sizes = [8, 32], strides = [1, 1]} : vector<32x32xf32> to vector<8x32xf32>
    %17 = vector.extract_strided_slice %12 {offsets = [24, 0], sizes = [8, 32], strides = [1, 1]} : vector<32x32xf32> to vector<8x32xf32>
    %18 = vector.extract_strided_slice %6 {offsets = [0, 0], sizes = [8, 32], strides = [1, 1]} : vector<16x32xf32> to vector<8x32xf32>
    %19 = vector.extract_strided_slice %11 {offsets = [0, 0], sizes = [8, 64], strides = [1, 1]} : vector<16x64xf32> to vector<8x64xf32>
    %20 = vector.extract_strided_slice %18 {offsets = [0, 0], sizes = [8, 8], strides = [1, 1]} : vector<8x32xf32> to vector<8x8xf32>
    %21 = vector.extract_strided_slice %19 {offsets = [0, 0], sizes = [8, 8], strides = [1, 1]} : vector<8x64xf32> to vector<8x8xf32>
    %22 = vector.extract_strided_slice %19 {offsets = [0, 32], sizes = [8, 8], strides = [1, 1]} : vector<8x64xf32> to vector<8x8xf32>
    %cst_12 = arith.constant dense<0.000000e+00> : vector<8x8xf32>
    %23 = tpu.matmul %20, %21, %cst_12 {dimension_numbers = #tpu.dot_dimension_numbers<[1], [1], [0], [0], [0, 0, 1, 0], [], []>, precision = #tpu.contract_precision<fp32>} : vector<8x8xf32>, vector<8x8xf32>, vector<8x8xf32> -> vector<8x8xf32>
    %cst_13 = arith.constant 0.353553385 : f32
    %24 = vector.broadcast %cst_13 : f32 to vector<8x8xf32>
    %25 = arith.mulf %23, %24 : vector<8x8xf32>
    %cst_14 = arith.constant dense<0xFF800000> : vector<8xf32>
    %26 = vector.multi_reduction <maximumf>, %25, %cst_14 [1] : vector<8x8xf32> to vector<8xf32>
    %27 = vector.shape_cast %26 : vector<8xf32> to vector<8x1xf32>
    %28 = vector.broadcast %27 : vector<8x1xf32> to vector<8x8xf32>
    %29 = arith.subf %25, %28 : vector<8x8xf32>
    %30 = math.exp %29 : vector<8x8xf32>
    %cst_15 = arith.constant dense<0.000000e+00> : vector<8xf32>
    %31 = vector.multi_reduction <add>, %30, %cst_15 [1] : vector<8x8xf32> to vector<8xf32>
    %32 = vector.shape_cast %31 : vector<8xf32> to vector<8x1xf32>
    %33 = vector.broadcast %32 : vector<8x1xf32> to vector<8x8xf32>
    %34 = arith.divf %30, %33 : vector<8x8xf32>
    %cst_16 = arith.constant dense<0.000000e+00> : vector<8x8xf32>
    %35 = tpu.matmul %34, %22, %cst_16 {dimension_numbers = #tpu.dot_dimension_numbers<[1], [0], [0], [1], [0, 0, 1, 1], [], []>, precision = #tpu.contract_precision<fp32>} : vector<8x8xf32>, vector<8x8xf32>, vector<8x8xf32> -> vector<8x8xf32>
    %cst_17 = arith.constant dense<0.000000e+00> : vector<8x32xf32>
    %36 = tpu.matmul %35, %14, %cst_17 {dimension_numbers = #tpu.dot_dimension_numbers<[1], [0], [0], [1], [0, 0, 1, 1], [], []>, precision = #tpu.contract_precision<fp32>} : vector<8x8xf32>, vector<8x32xf32>, vector<8x32xf32> -> vector<8x32xf32>
    %37 = vector.extract_strided_slice %18 {offsets = [0, 8], sizes = [8, 8], strides = [1, 1]} : vector<8x32xf32> to vector<8x8xf32>
    %38 = vector.extract_strided_slice %19 {offsets = [0, 8], sizes = [8, 8], strides = [1, 1]} : vector<8x64xf32> to vector<8x8xf32>
    %39 = vector.extract_strided_slice %19 {offsets = [0, 40], sizes = [8, 8], strides = [1, 1]} : vector<8x64xf32> to vector<8x8xf32>
    %cst_18 = arith.constant dense<0.000000e+00> : vector<8x8xf32>
    %40 = tpu.matmul %37, %38, %cst_18 {dimension_numbers = #tpu.dot_dimension_numbers<[1], [1], [0], [0], [0, 0, 1, 0], [], []>, precision = #tpu.contract_precision<fp32>} : vector<8x8xf32>, vector<8x8xf32>, vector<8x8xf32> -> vector<8x8xf32>
    %cst_19 = arith.constant 0.353553385 : f32
    %41 = vector.broadcast %cst_19 : f32 to vector<8x8xf32>
    %42 = arith.mulf %40, %41 : vector<8x8xf32>
    %cst_20 = arith.constant dense<0xFF800000> : vector<8xf32>
    %43 = vector.multi_reduction <maximumf>, %42, %cst_20 [1] : vector<8x8xf32> to vector<8xf32>
    %44 = vector.shape_cast %43 : vector<8xf32> to vector<8x1xf32>
    %45 = vector.broadcast %44 : vector<8x1xf32> to vector<8x8xf32>
    %46 = arith.subf %42, %45 : vector<8x8xf32>
    %47 = math.exp %46 : vector<8x8xf32>
    %cst_21 = arith.constant dense<0.000000e+00> : vector<8xf32>
    %48 = vector.multi_reduction <add>, %47, %cst_21 [1] : vector<8x8xf32> to vector<8xf32>
    %49 = vector.shape_cast %48 : vector<8xf32> to vector<8x1xf32>
    %50 = vector.broadcast %49 : vector<8x1xf32> to vector<8x8xf32>
    %51 = arith.divf %47, %50 : vector<8x8xf32>
    %cst_22 = arith.constant dense<0.000000e+00> : vector<8x8xf32>
    %52 = tpu.matmul %51, %39, %cst_22 {dimension_numbers = #tpu.dot_dimension_numbers<[1], [0], [0], [1], [0, 0, 1, 1], [], []>, precision = #tpu.contract_precision<fp32>} : vector<8x8xf32>, vector<8x8xf32>, vector<8x8xf32> -> vector<8x8xf32>
    %cst_23 = arith.constant dense<0.000000e+00> : vector<8x32xf32>
    %53 = tpu.matmul %52, %15, %cst_23 {dimension_numbers = #tpu.dot_dimension_numbers<[1], [0], [0], [1], [0, 0, 1, 1], [], []>, precision = #tpu.contract_precision<fp32>} : vector<8x8xf32>, vector<8x32xf32>, vector<8x32xf32> -> vector<8x32xf32>
    %54 = arith.addf %36, %53 : vector<8x32xf32>
    %55 = vector.extract_strided_slice %18 {offsets = [0, 16], sizes = [8, 8], strides = [1, 1]} : vector<8x32xf32> to vector<8x8xf32>
    %56 = vector.extract_strided_slice %19 {offsets = [0, 16], sizes = [8, 8], strides = [1, 1]} : vector<8x64xf32> to vector<8x8xf32>
    %57 = vector.extract_strided_slice %19 {offsets = [0, 48], sizes = [8, 8], strides = [1, 1]} : vector<8x64xf32> to vector<8x8xf32>
    %cst_24 = arith.constant dense<0.000000e+00> : vector<8x8xf32>
    %58 = tpu.matmul %55, %56, %cst_24 {dimension_numbers = #tpu.dot_dimension_numbers<[1], [1], [0], [0], [0, 0, 1, 0], [], []>, precision = #tpu.contract_precision<fp32>} : vector<8x8xf32>, vector<8x8xf32>, vector<8x8xf32> -> vector<8x8xf32>
    %cst_25 = arith.constant 0.353553385 : f32
    %59 = vector.broadcast %cst_25 : f32 to vector<8x8xf32>
    %60 = arith.mulf %58, %59 : vector<8x8xf32>
    %cst_26 = arith.constant dense<0xFF800000> : vector<8xf32>
    %61 = vector.multi_reduction <maximumf>, %60, %cst_26 [1] : vector<8x8xf32> to vector<8xf32>
    %62 = vector.shape_cast %61 : vector<8xf32> to vector<8x1xf32>
    %63 = vector.broadcast %62 : vector<8x1xf32> to vector<8x8xf32>
    %64 = arith.subf %60, %63 : vector<8x8xf32>
    %65 = math.exp %64 : vector<8x8xf32>
    %cst_27 = arith.constant dense<0.000000e+00> : vector<8xf32>
    %66 = vector.multi_reduction <add>, %65, %cst_27 [1] : vector<8x8xf32> to vector<8xf32>
    %67 = vector.shape_cast %66 : vector<8xf32> to vector<8x1xf32>
    %68 = vector.broadcast %67 : vector<8x1xf32> to vector<8x8xf32>
    %69 = arith.divf %65, %68 : vector<8x8xf32>
    %cst_28 = arith.constant dense<0.000000e+00> : vector<8x8xf32>
    %70 = tpu.matmul %69, %57, %cst_28 {dimension_numbers = #tpu.dot_dimension_numbers<[1], [0], [0], [1], [0, 0, 1, 1], [], []>, precision = #tpu.contract_precision<fp32>} : vector<8x8xf32>, vector<8x8xf32>, vector<8x8xf32> -> vector<8x8xf32>
    %cst_29 = arith.constant dense<0.000000e+00> : vector<8x32xf32>
    %71 = tpu.matmul %70, %16, %cst_29 {dimension_numbers = #tpu.dot_dimension_numbers<[1], [0], [0], [1], [0, 0, 1, 1], [], []>, precision = #tpu.contract_precision<fp32>} : vector<8x8xf32>, vector<8x32xf32>, vector<8x32xf32> -> vector<8x32xf32>
    %72 = arith.addf %54, %71 : vector<8x32xf32>
    %73 = vector.extract_strided_slice %18 {offsets = [0, 24], sizes = [8, 8], strides = [1, 1]} : vector<8x32xf32> to vector<8x8xf32>
    %74 = vector.extract_strided_slice %19 {offsets = [0, 24], sizes = [8, 8], strides = [1, 1]} : vector<8x64xf32> to vector<8x8xf32>
    %75 = vector.extract_strided_slice %19 {offsets = [0, 56], sizes = [8, 8], strides = [1, 1]} : vector<8x64xf32> to vector<8x8xf32>
    %cst_30 = arith.constant dense<0.000000e+00> : vector<8x8xf32>
    %76 = tpu.matmul %73, %74, %cst_30 {dimension_numbers = #tpu.dot_dimension_numbers<[1], [1], [0], [0], [0, 0, 1, 0], [], []>, precision = #tpu.contract_precision<fp32>} : vector<8x8xf32>, vector<8x8xf32>, vector<8x8xf32> -> vector<8x8xf32>
    %cst_31 = arith.constant 0.353553385 : f32
    %77 = vector.broadcast %cst_31 : f32 to vector<8x8xf32>
    %78 = arith.mulf %76, %77 : vector<8x8xf32>
    %cst_32 = arith.constant dense<0xFF800000> : vector<8xf32>
    %79 = vector.multi_reduction <maximumf>, %78, %cst_32 [1] : vector<8x8xf32> to vector<8xf32>
    %80 = vector.shape_cast %79 : vector<8xf32> to vector<8x1xf32>
    %81 = vector.broadcast %80 : vector<8x1xf32> to vector<8x8xf32>
    %82 = arith.subf %78, %81 : vector<8x8xf32>
    %83 = math.exp %82 : vector<8x8xf32>
    %cst_33 = arith.constant dense<0.000000e+00> : vector<8xf32>
    %84 = vector.multi_reduction <add>, %83, %cst_33 [1] : vector<8x8xf32> to vector<8xf32>
    %85 = vector.shape_cast %84 : vector<8xf32> to vector<8x1xf32>
    %86 = vector.broadcast %85 : vector<8x1xf32> to vector<8x8xf32>
    %87 = arith.divf %83, %86 : vector<8x8xf32>
    %cst_34 = arith.constant dense<0.000000e+00> : vector<8x8xf32>
    %88 = tpu.matmul %87, %75, %cst_34 {dimension_numbers = #tpu.dot_dimension_numbers<[1], [0], [0], [1], [0, 0, 1, 1], [], []>, precision = #tpu.contract_precision<fp32>} : vector<8x8xf32>, vector<8x8xf32>, vector<8x8xf32> -> vector<8x8xf32>
    %cst_35 = arith.constant dense<0.000000e+00> : vector<8x32xf32>
    %89 = tpu.matmul %88, %17, %cst_35 {dimension_numbers = #tpu.dot_dimension_numbers<[1], [0], [0], [1], [0, 0, 1, 1], [], []>, precision = #tpu.contract_precision<fp32>} : vector<8x8xf32>, vector<8x32xf32>, vector<8x32xf32> -> vector<8x32xf32>
    %90 = arith.addf %72, %89 : vector<8x32xf32>
    %91 = vector.extract_strided_slice %6 {offsets = [8, 0], sizes = [8, 32], strides = [1, 1]} : vector<16x32xf32> to vector<8x32xf32>
    %92 = vector.extract_strided_slice %11 {offsets = [8, 0], sizes = [8, 64], strides = [1, 1]} : vector<16x64xf32> to vector<8x64xf32>
    %93 = vector.extract_strided_slice %91 {offsets = [0, 0], sizes = [8, 8], strides = [1, 1]} : vector<8x32xf32> to vector<8x8xf32>
    %94 = vector.extract_strided_slice %92 {offsets = [0, 0], sizes = [8, 8], strides = [1, 1]} : vector<8x64xf32> to vector<8x8xf32>
    %95 = vector.extract_strided_slice %92 {offsets = [0, 32], sizes = [8, 8], strides = [1, 1]} : vector<8x64xf32> to vector<8x8xf32>
    %cst_36 = arith.constant dense<0.000000e+00> : vector<8x8xf32>
    %96 = tpu.matmul %93, %94, %cst_36 {dimension_numbers = #tpu.dot_dimension_numbers<[1], [1], [0], [0], [0, 0, 1, 0], [], []>, precision = #tpu.contract_precision<fp32>} : vector<8x8xf32>, vector<8x8xf32>, vector<8x8xf32> -> vector<8x8xf32>
    %cst_37 = arith.constant 0.353553385 : f32
    %97 = vector.broadcast %cst_37 : f32 to vector<8x8xf32>
    %98 = arith.mulf %96, %97 : vector<8x8xf32>
    %cst_38 = arith.constant dense<0xFF800000> : vector<8xf32>
    %99 = vector.multi_reduction <maximumf>, %98, %cst_38 [1] : vector<8x8xf32> to vector<8xf32>
    %100 = vector.shape_cast %99 : vector<8xf32> to vector<8x1xf32>
    %101 = vector.broadcast %100 : vector<8x1xf32> to vector<8x8xf32>
    %102 = arith.subf %98, %101 : vector<8x8xf32>
    %103 = math.exp %102 : vector<8x8xf32>
    %cst_39 = arith.constant dense<0.000000e+00> : vector<8xf32>
    %104 = vector.multi_reduction <add>, %103, %cst_39 [1] : vector<8x8xf32> to vector<8xf32>
    %105 = vector.shape_cast %104 : vector<8xf32> to vector<8x1xf32>
    %106 = vector.broadcast %105 : vector<8x1xf32> to vector<8x8xf32>
    %107 = arith.divf %103, %106 : vector<8x8xf32>
    %cst_40 = arith.constant dense<0.000000e+00> : vector<8x8xf32>
    %108 = tpu.matmul %107, %95, %cst_40 {dimension_numbers = #tpu.dot_dimension_numbers<[1], [0], [0], [1], [0, 0, 1, 1], [], []>, precision = #tpu.contract_precision<fp32>} : vector<8x8xf32>, vector<8x8xf32>, vector<8x8xf32> -> vector<8x8xf32>
    %cst_41 = arith.constant dense<0.000000e+00> : vector<8x32xf32>
    %109 = tpu.matmul %108, %14, %cst_41 {dimension_numbers = #tpu.dot_dimension_numbers<[1], [0], [0], [1], [0, 0, 1, 1], [], []>, precision = #tpu.contract_precision<fp32>} : vector<8x8xf32>, vector<8x32xf32>, vector<8x32xf32> -> vector<8x32xf32>
    %110 = vector.extract_strided_slice %91 {offsets = [0, 8], sizes = [8, 8], strides = [1, 1]} : vector<8x32xf32> to vector<8x8xf32>
    %111 = vector.extract_strided_slice %92 {offsets = [0, 8], sizes = [8, 8], strides = [1, 1]} : vector<8x64xf32> to vector<8x8xf32>
    %112 = vector.extract_strided_slice %92 {offsets = [0, 40], sizes = [8, 8], strides = [1, 1]} : vector<8x64xf32> to vector<8x8xf32>
    %cst_42 = arith.constant dense<0.000000e+00> : vector<8x8xf32>
    %113 = tpu.matmul %110, %111, %cst_42 {dimension_numbers = #tpu.dot_dimension_numbers<[1], [1], [0], [0], [0, 0, 1, 0], [], []>, precision = #tpu.contract_precision<fp32>} : vector<8x8xf32>, vector<8x8xf32>, vector<8x8xf32> -> vector<8x8xf32>
    %cst_43 = arith.constant 0.353553385 : f32
    %114 = vector.broadcast %cst_43 : f32 to vector<8x8xf32>
    %115 = arith.mulf %113, %114 : vector<8x8xf32>
    %cst_44 = arith.constant dense<0xFF800000> : vector<8xf32>
    %116 = vector.multi_reduction <maximumf>, %115, %cst_44 [1] : vector<8x8xf32> to vector<8xf32>
    %117 = vector.shape_cast %116 : vector<8xf32> to vector<8x1xf32>
    %118 = vector.broadcast %117 : vector<8x1xf32> to vector<8x8xf32>
    %119 = arith.subf %115, %118 : vector<8x8xf32>
    %120 = math.exp %119 : vector<8x8xf32>
    %cst_45 = arith.constant dense<0.000000e+00> : vector<8xf32>
    %121 = vector.multi_reduction <add>, %120, %cst_45 [1] : vector<8x8xf32> to vector<8xf32>
    %122 = vector.shape_cast %121 : vector<8xf32> to vector<8x1xf32>
    %123 = vector.broadcast %122 : vector<8x1xf32> to vector<8x8xf32>
    %124 = arith.divf %120, %123 : vector<8x8xf32>
    %cst_46 = arith.constant dense<0.000000e+00> : vector<8x8xf32>
    %125 = tpu.matmul %124, %112, %cst_46 {dimension_numbers = #tpu.dot_dimension_numbers<[1], [0], [0], [1], [0, 0, 1, 1], [], []>, precision = #tpu.contract_precision<fp32>} : vector<8x8xf32>, vector<8x8xf32>, vector<8x8xf32> -> vector<8x8xf32>
    %cst_47 = arith.constant dense<0.000000e+00> : vector<8x32xf32>
    %126 = tpu.matmul %125, %15, %cst_47 {dimension_numbers = #tpu.dot_dimension_numbers<[1], [0], [0], [1], [0, 0, 1, 1], [], []>, precision = #tpu.contract_precision<fp32>} : vector<8x8xf32>, vector<8x32xf32>, vector<8x32xf32> -> vector<8x32xf32>
    %127 = arith.addf %109, %126 : vector<8x32xf32>
    %128 = vector.extract_strided_slice %91 {offsets = [0, 16], sizes = [8, 8], strides = [1, 1]} : vector<8x32xf32> to vector<8x8xf32>
    %129 = vector.extract_strided_slice %92 {offsets = [0, 16], sizes = [8, 8], strides = [1, 1]} : vector<8x64xf32> to vector<8x8xf32>
    %130 = vector.extract_strided_slice %92 {offsets = [0, 48], sizes = [8, 8], strides = [1, 1]} : vector<8x64xf32> to vector<8x8xf32>
    %cst_48 = arith.constant dense<0.000000e+00> : vector<8x8xf32>
    %131 = tpu.matmul %128, %129, %cst_48 {dimension_numbers = #tpu.dot_dimension_numbers<[1], [1], [0], [0], [0, 0, 1, 0], [], []>, precision = #tpu.contract_precision<fp32>} : vector<8x8xf32>, vector<8x8xf32>, vector<8x8xf32> -> vector<8x8xf32>
    %cst_49 = arith.constant 0.353553385 : f32
    %132 = vector.broadcast %cst_49 : f32 to vector<8x8xf32>
    %133 = arith.mulf %131, %132 : vector<8x8xf32>
    %cst_50 = arith.constant dense<0xFF800000> : vector<8xf32>
    %134 = vector.multi_reduction <maximumf>, %133, %cst_50 [1] : vector<8x8xf32> to vector<8xf32>
    %135 = vector.shape_cast %134 : vector<8xf32> to vector<8x1xf32>
    %136 = vector.broadcast %135 : vector<8x1xf32> to vector<8x8xf32>
    %137 = arith.subf %133, %136 : vector<8x8xf32>
    %138 = math.exp %137 : vector<8x8xf32>
    %cst_51 = arith.constant dense<0.000000e+00> : vector<8xf32>
    %139 = vector.multi_reduction <add>, %138, %cst_51 [1] : vector<8x8xf32> to vector<8xf32>
    %140 = vector.shape_cast %139 : vector<8xf32> to vector<8x1xf32>
    %141 = vector.broadcast %140 : vector<8x1xf32> to vector<8x8xf32>
    %142 = arith.divf %138, %141 : vector<8x8xf32>
    %cst_52 = arith.constant dense<0.000000e+00> : vector<8x8xf32>
    %143 = tpu.matmul %142, %130, %cst_52 {dimension_numbers = #tpu.dot_dimension_numbers<[1], [0], [0], [1], [0, 0, 1, 1], [], []>, precision = #tpu.contract_precision<fp32>} : vector<8x8xf32>, vector<8x8xf32>, vector<8x8xf32> -> vector<8x8xf32>
    %cst_53 = arith.constant dense<0.000000e+00> : vector<8x32xf32>
    %144 = tpu.matmul %143, %16, %cst_53 {dimension_numbers = #tpu.dot_dimension_numbers<[1], [0], [0], [1], [0, 0, 1, 1], [], []>, precision = #tpu.contract_precision<fp32>} : vector<8x8xf32>, vector<8x32xf32>, vector<8x32xf32> -> vector<8x32xf32>
    %145 = arith.addf %127, %144 : vector<8x32xf32>
    %146 = vector.extract_strided_slice %91 {offsets = [0, 24], sizes = [8, 8], strides = [1, 1]} : vector<8x32xf32> to vector<8x8xf32>
    %147 = vector.extract_strided_slice %92 {offsets = [0, 24], sizes = [8, 8], strides = [1, 1]} : vector<8x64xf32> to vector<8x8xf32>
    %148 = vector.extract_strided_slice %92 {offsets = [0, 56], sizes = [8, 8], strides = [1, 1]} : vector<8x64xf32> to vector<8x8xf32>
    %cst_54 = arith.constant dense<0.000000e+00> : vector<8x8xf32>
    %149 = tpu.matmul %146, %147, %cst_54 {dimension_numbers = #tpu.dot_dimension_numbers<[1], [1], [0], [0], [0, 0, 1, 0], [], []>, precision = #tpu.contract_precision<fp32>} : vector<8x8xf32>, vector<8x8xf32>, vector<8x8xf32> -> vector<8x8xf32>
    %cst_55 = arith.constant 0.353553385 : f32
    %150 = vector.broadcast %cst_55 : f32 to vector<8x8xf32>
    %151 = arith.mulf %149, %150 : vector<8x8xf32>
    %cst_56 = arith.constant dense<0xFF800000> : vector<8xf32>
    %152 = vector.multi_reduction <maximumf>, %151, %cst_56 [1] : vector<8x8xf32> to vector<8xf32>
    %153 = vector.shape_cast %152 : vector<8xf32> to vector<8x1xf32>
    %154 = vector.broadcast %153 : vector<8x1xf32> to vector<8x8xf32>
    %155 = arith.subf %151, %154 : vector<8x8xf32>
    %156 = math.exp %155 : vector<8x8xf32>
    %cst_57 = arith.constant dense<0.000000e+00> : vector<8xf32>
    %157 = vector.multi_reduction <add>, %156, %cst_57 [1] : vector<8x8xf32> to vector<8xf32>
    %158 = vector.shape_cast %157 : vector<8xf32> to vector<8x1xf32>
    %159 = vector.broadcast %158 : vector<8x1xf32> to vector<8x8xf32>
    %160 = arith.divf %156, %159 : vector<8x8xf32>
    %cst_58 = arith.constant dense<0.000000e+00> : vector<8x8xf32>
    %161 = tpu.matmul %160, %148, %cst_58 {dimension_numbers = #tpu.dot_dimension_numbers<[1], [0], [0], [1], [0, 0, 1, 1], [], []>, precision = #tpu.contract_precision<fp32>} : vector<8x8xf32>, vector<8x8xf32>, vector<8x8xf32> -> vector<8x8xf32>
    %cst_59 = arith.constant dense<0.000000e+00> : vector<8x32xf32>
    %162 = tpu.matmul %161, %17, %cst_59 {dimension_numbers = #tpu.dot_dimension_numbers<[1], [0], [0], [1], [0, 0, 1, 1], [], []>, precision = #tpu.contract_precision<fp32>} : vector<8x8xf32>, vector<8x32xf32>, vector<8x32xf32> -> vector<8x32xf32>
    %163 = arith.addf %145, %162 : vector<8x32xf32>
    %164 = tpu.concatenate %90, %163 in 0 : vector<8x32xf32>, vector<8x32xf32> -> vector<16x32xf32>
    %165 = vector.broadcast %13 : vector<1x32xf32> to vector<16x32xf32>
    %166 = arith.addf %164, %165 : vector<16x32xf32>
    %167 = arith.addf %0, %166 : vector<16x32xf32>
    %c3 = arith.constant 3 : index
    %c0_60 = arith.constant 0 : index
    %168 = vector.load %arg4[%c3, %c0_60] : memref<24x128xf32, #tpu.memory_space<vmem>>, vector<1x32xf32>
    %c4 = arith.constant 4 : index
    %c0_61 = arith.constant 0 : index
    %169 = vector.load %arg4[%c4, %c0_61] : memref<24x128xf32, #tpu.memory_space<vmem>>, vector<1x32xf32>
    %cst_62 = arith.constant dense<0.000000e+00> : vector<16xf32>
    %170 = vector.multi_reduction <add>, %167, %cst_62 [1] : vector<16x32xf32> to vector<16xf32>
    %171 = vector.shape_cast %170 : vector<16xf32> to vector<16x1xf32>
    %cst_63 = arith.constant 3.200000e+01 : f32
    %172 = vector.broadcast %cst_63 : f32 to vector<16x1xf32>
    %173 = arith.divf %171, %172 : vector<16x1xf32>
    %174 = vector.broadcast %173 : vector<16x1xf32> to vector<16x32xf32>
    %175 = arith.subf %167, %174 : vector<16x32xf32>
    %176 = arith.mulf %175, %175 : vector<16x32xf32>
    %cst_64 = arith.constant dense<0.000000e+00> : vector<16xf32>
    %177 = vector.multi_reduction <add>, %176, %cst_64 [1] : vector<16x32xf32> to vector<16xf32>
    %178 = vector.shape_cast %177 : vector<16xf32> to vector<16x1xf32>
    %cst_65 = arith.constant 3.200000e+01 : f32
    %179 = vector.broadcast %cst_65 : f32 to vector<16x1xf32>
    %180 = arith.divf %178, %179 : vector<16x1xf32>
    %181 = vector.broadcast %173 : vector<16x1xf32> to vector<16x32xf32>
    %182 = arith.subf %167, %181 : vector<16x32xf32>
    %cst_66 = arith.constant 9.99999974E-6 : f32
    %183 = vector.broadcast %cst_66 : f32 to vector<16x1xf32>
    %184 = arith.addf %180, %183 : vector<16x1xf32>
    %185 = math.rsqrt %184 : vector<16x1xf32>
    %186 = vector.broadcast %185 : vector<16x1xf32> to vector<16x32xf32>
    %187 = arith.mulf %182, %186 : vector<16x32xf32>
    %188 = vector.broadcast %168 : vector<1x32xf32> to vector<16x32xf32>
    %189 = arith.mulf %187, %188 : vector<16x32xf32>
    %190 = vector.broadcast %169 : vector<1x32xf32> to vector<16x32xf32>
    %191 = arith.addf %189, %190 : vector<16x32xf32>
    %c5 = arith.constant 5 : index
    %c0_67 = arith.constant 0 : index
    %192 = vector.load %arg4[%c5, %c0_67] : memref<24x128xf32, #tpu.memory_space<vmem>>, vector<1x32xf32>
    %c6 = arith.constant 6 : index
    %c0_68 = arith.constant 0 : index
    %193 = vector.load %arg4[%c6, %c0_68] : memref<24x128xf32, #tpu.memory_space<vmem>>, vector<1x32xf32>
    %cst_69 = arith.constant dense<0.000000e+00> : vector<16xf32>
    %194 = vector.multi_reduction <add>, %191, %cst_69 [1] : vector<16x32xf32> to vector<16xf32>
    %195 = vector.shape_cast %194 : vector<16xf32> to vector<16x1xf32>
    %cst_70 = arith.constant 3.200000e+01 : f32
    %196 = vector.broadcast %cst_70 : f32 to vector<16x1xf32>
    %197 = arith.divf %195, %196 : vector<16x1xf32>
    %198 = vector.broadcast %197 : vector<16x1xf32> to vector<16x32xf32>
    %199 = arith.subf %191, %198 : vector<16x32xf32>
    %200 = arith.mulf %199, %199 : vector<16x32xf32>
    %cst_71 = arith.constant dense<0.000000e+00> : vector<16xf32>
    %201 = vector.multi_reduction <add>, %200, %cst_71 [1] : vector<16x32xf32> to vector<16xf32>
    %202 = vector.shape_cast %201 : vector<16xf32> to vector<16x1xf32>
    %cst_72 = arith.constant 3.200000e+01 : f32
    %203 = vector.broadcast %cst_72 : f32 to vector<16x1xf32>
    %204 = arith.divf %202, %203 : vector<16x1xf32>
    %205 = vector.broadcast %197 : vector<16x1xf32> to vector<16x32xf32>
    %206 = arith.subf %191, %205 : vector<16x32xf32>
    %cst_73 = arith.constant 9.99999974E-6 : f32
    %207 = vector.broadcast %cst_73 : f32 to vector<16x1xf32>
    %208 = arith.addf %204, %207 : vector<16x1xf32>
    %209 = math.rsqrt %208 : vector<16x1xf32>
    %210 = vector.broadcast %209 : vector<16x1xf32> to vector<16x32xf32>
    %211 = arith.mulf %206, %210 : vector<16x32xf32>
    %212 = vector.broadcast %192 : vector<1x32xf32> to vector<16x32xf32>
    %213 = arith.mulf %211, %212 : vector<16x32xf32>
    %214 = vector.broadcast %193 : vector<1x32xf32> to vector<16x32xf32>
    %215 = arith.addf %213, %214 : vector<16x32xf32>
    %c96 = arith.constant 96 : index
    %c0_74 = arith.constant 0 : index
    %216 = vector.load %arg3[%c96, %c0_74] : memref<288x128xf32, #tpu.memory_space<vmem>>, vector<32x96xf32>
    %cst_75 = arith.constant dense<0.000000e+00> : vector<16x96xf32>
    %217 = tpu.matmul %215, %216, %cst_75 {dimension_numbers = #tpu.dot_dimension_numbers<[1], [0], [0], [1], [0, 0, 1, 1], [], []>, precision = #tpu.contract_precision<fp32>} : vector<16x32xf32>, vector<32x96xf32>, vector<16x96xf32> -> vector<16x96xf32>
    %c7 = arith.constant 7 : index
    %c0_76 = arith.constant 0 : index
    %218 = vector.load %arg4[%c7, %c0_76] : memref<24x128xf32, #tpu.memory_space<vmem>>, vector<1x96xf32>
    %219 = vector.broadcast %218 : vector<1x96xf32> to vector<16x96xf32>
    %220 = arith.addf %217, %219 : vector<16x96xf32>
    %221 = vector.extract_strided_slice %220 {offsets = [0, 0], sizes = [16, 32], strides = [1, 1]} : vector<16x96xf32> to vector<16x32xf32>
    %222 = vector.extract_strided_slice %220 {offsets = [0, 32], sizes = [16, 64], strides = [1, 1]} : vector<16x96xf32> to vector<16x64xf32>
    %c128 = arith.constant 128 : index
    %c0_77 = arith.constant 0 : index
    %223 = vector.load %arg3[%c128, %c0_77] : memref<288x128xf32, #tpu.memory_space<vmem>>, vector<32x32xf32>
    %c8 = arith.constant 8 : index
    %c0_78 = arith.constant 0 : index
    %224 = vector.load %arg4[%c8, %c0_78] : memref<24x128xf32, #tpu.memory_space<vmem>>, vector<1x32xf32>
    %225 = vector.extract_strided_slice %223 {offsets = [0, 0], sizes = [8, 32], strides = [1, 1]} : vector<32x32xf32> to vector<8x32xf32>
    %226 = vector.extract_strided_slice %223 {offsets = [8, 0], sizes = [8, 32], strides = [1, 1]} : vector<32x32xf32> to vector<8x32xf32>
    %227 = vector.extract_strided_slice %223 {offsets = [16, 0], sizes = [8, 32], strides = [1, 1]} : vector<32x32xf32> to vector<8x32xf32>
    %228 = vector.extract_strided_slice %223 {offsets = [24, 0], sizes = [8, 32], strides = [1, 1]} : vector<32x32xf32> to vector<8x32xf32>
    %229 = vector.extract_strided_slice %221 {offsets = [0, 0], sizes = [8, 32], strides = [1, 1]} : vector<16x32xf32> to vector<8x32xf32>
    %230 = vector.extract_strided_slice %222 {offsets = [0, 0], sizes = [8, 64], strides = [1, 1]} : vector<16x64xf32> to vector<8x64xf32>
    %231 = vector.extract_strided_slice %229 {offsets = [0, 0], sizes = [8, 8], strides = [1, 1]} : vector<8x32xf32> to vector<8x8xf32>
    %232 = vector.extract_strided_slice %230 {offsets = [0, 0], sizes = [8, 8], strides = [1, 1]} : vector<8x64xf32> to vector<8x8xf32>
    %233 = vector.extract_strided_slice %230 {offsets = [0, 32], sizes = [8, 8], strides = [1, 1]} : vector<8x64xf32> to vector<8x8xf32>
    %cst_79 = arith.constant dense<0.000000e+00> : vector<8x8xf32>
    %234 = tpu.matmul %231, %232, %cst_79 {dimension_numbers = #tpu.dot_dimension_numbers<[1], [1], [0], [0], [0, 0, 1, 0], [], []>, precision = #tpu.contract_precision<fp32>} : vector<8x8xf32>, vector<8x8xf32>, vector<8x8xf32> -> vector<8x8xf32>
    %cst_80 = arith.constant 0.353553385 : f32
    %235 = vector.broadcast %cst_80 : f32 to vector<8x8xf32>
    %236 = arith.mulf %234, %235 : vector<8x8xf32>
    %cst_81 = arith.constant dense<0xFF800000> : vector<8xf32>
    %237 = vector.multi_reduction <maximumf>, %236, %cst_81 [1] : vector<8x8xf32> to vector<8xf32>
    %238 = vector.shape_cast %237 : vector<8xf32> to vector<8x1xf32>
    %239 = vector.broadcast %238 : vector<8x1xf32> to vector<8x8xf32>
    %240 = arith.subf %236, %239 : vector<8x8xf32>
    %241 = math.exp %240 : vector<8x8xf32>
    %cst_82 = arith.constant dense<0.000000e+00> : vector<8xf32>
    %242 = vector.multi_reduction <add>, %241, %cst_82 [1] : vector<8x8xf32> to vector<8xf32>
    %243 = vector.shape_cast %242 : vector<8xf32> to vector<8x1xf32>
    %244 = vector.broadcast %243 : vector<8x1xf32> to vector<8x8xf32>
    %245 = arith.divf %241, %244 : vector<8x8xf32>
    %cst_83 = arith.constant dense<0.000000e+00> : vector<8x8xf32>
    %246 = tpu.matmul %245, %233, %cst_83 {dimension_numbers = #tpu.dot_dimension_numbers<[1], [0], [0], [1], [0, 0, 1, 1], [], []>, precision = #tpu.contract_precision<fp32>} : vector<8x8xf32>, vector<8x8xf32>, vector<8x8xf32> -> vector<8x8xf32>
    %cst_84 = arith.constant dense<0.000000e+00> : vector<8x32xf32>
    %247 = tpu.matmul %246, %225, %cst_84 {dimension_numbers = #tpu.dot_dimension_numbers<[1], [0], [0], [1], [0, 0, 1, 1], [], []>, precision = #tpu.contract_precision<fp32>} : vector<8x8xf32>, vector<8x32xf32>, vector<8x32xf32> -> vector<8x32xf32>
    %248 = vector.extract_strided_slice %229 {offsets = [0, 8], sizes = [8, 8], strides = [1, 1]} : vector<8x32xf32> to vector<8x8xf32>
    %249 = vector.extract_strided_slice %230 {offsets = [0, 8], sizes = [8, 8], strides = [1, 1]} : vector<8x64xf32> to vector<8x8xf32>
    %250 = vector.extract_strided_slice %230 {offsets = [0, 40], sizes = [8, 8], strides = [1, 1]} : vector<8x64xf32> to vector<8x8xf32>
    %cst_85 = arith.constant dense<0.000000e+00> : vector<8x8xf32>
    %251 = tpu.matmul %248, %249, %cst_85 {dimension_numbers = #tpu.dot_dimension_numbers<[1], [1], [0], [0], [0, 0, 1, 0], [], []>, precision = #tpu.contract_precision<fp32>} : vector<8x8xf32>, vector<8x8xf32>, vector<8x8xf32> -> vector<8x8xf32>
    %cst_86 = arith.constant 0.353553385 : f32
    %252 = vector.broadcast %cst_86 : f32 to vector<8x8xf32>
    %253 = arith.mulf %251, %252 : vector<8x8xf32>
    %cst_87 = arith.constant dense<0xFF800000> : vector<8xf32>
    %254 = vector.multi_reduction <maximumf>, %253, %cst_87 [1] : vector<8x8xf32> to vector<8xf32>
    %255 = vector.shape_cast %254 : vector<8xf32> to vector<8x1xf32>
    %256 = vector.broadcast %255 : vector<8x1xf32> to vector<8x8xf32>
    %257 = arith.subf %253, %256 : vector<8x8xf32>
    %258 = math.exp %257 : vector<8x8xf32>
    %cst_88 = arith.constant dense<0.000000e+00> : vector<8xf32>
    %259 = vector.multi_reduction <add>, %258, %cst_88 [1] : vector<8x8xf32> to vector<8xf32>
    %260 = vector.shape_cast %259 : vector<8xf32> to vector<8x1xf32>
    %261 = vector.broadcast %260 : vector<8x1xf32> to vector<8x8xf32>
    %262 = arith.divf %258, %261 : vector<8x8xf32>
    %cst_89 = arith.constant dense<0.000000e+00> : vector<8x8xf32>
    %263 = tpu.matmul %262, %250, %cst_89 {dimension_numbers = #tpu.dot_dimension_numbers<[1], [0], [0], [1], [0, 0, 1, 1], [], []>, precision = #tpu.contract_precision<fp32>} : vector<8x8xf32>, vector<8x8xf32>, vector<8x8xf32> -> vector<8x8xf32>
    %cst_90 = arith.constant dense<0.000000e+00> : vector<8x32xf32>
    %264 = tpu.matmul %263, %226, %cst_90 {dimension_numbers = #tpu.dot_dimension_numbers<[1], [0], [0], [1], [0, 0, 1, 1], [], []>, precision = #tpu.contract_precision<fp32>} : vector<8x8xf32>, vector<8x32xf32>, vector<8x32xf32> -> vector<8x32xf32>
    %265 = arith.addf %247, %264 : vector<8x32xf32>
    %266 = vector.extract_strided_slice %229 {offsets = [0, 16], sizes = [8, 8], strides = [1, 1]} : vector<8x32xf32> to vector<8x8xf32>
    %267 = vector.extract_strided_slice %230 {offsets = [0, 16], sizes = [8, 8], strides = [1, 1]} : vector<8x64xf32> to vector<8x8xf32>
    %268 = vector.extract_strided_slice %230 {offsets = [0, 48], sizes = [8, 8], strides = [1, 1]} : vector<8x64xf32> to vector<8x8xf32>
    %cst_91 = arith.constant dense<0.000000e+00> : vector<8x8xf32>
    %269 = tpu.matmul %266, %267, %cst_91 {dimension_numbers = #tpu.dot_dimension_numbers<[1], [1], [0], [0], [0, 0, 1, 0], [], []>, precision = #tpu.contract_precision<fp32>} : vector<8x8xf32>, vector<8x8xf32>, vector<8x8xf32> -> vector<8x8xf32>
    %cst_92 = arith.constant 0.353553385 : f32
    %270 = vector.broadcast %cst_92 : f32 to vector<8x8xf32>
    %271 = arith.mulf %269, %270 : vector<8x8xf32>
    %cst_93 = arith.constant dense<0xFF800000> : vector<8xf32>
    %272 = vector.multi_reduction <maximumf>, %271, %cst_93 [1] : vector<8x8xf32> to vector<8xf32>
    %273 = vector.shape_cast %272 : vector<8xf32> to vector<8x1xf32>
    %274 = vector.broadcast %273 : vector<8x1xf32> to vector<8x8xf32>
    %275 = arith.subf %271, %274 : vector<8x8xf32>
    %276 = math.exp %275 : vector<8x8xf32>
    %cst_94 = arith.constant dense<0.000000e+00> : vector<8xf32>
    %277 = vector.multi_reduction <add>, %276, %cst_94 [1] : vector<8x8xf32> to vector<8xf32>
    %278 = vector.shape_cast %277 : vector<8xf32> to vector<8x1xf32>
    %279 = vector.broadcast %278 : vector<8x1xf32> to vector<8x8xf32>
    %280 = arith.divf %276, %279 : vector<8x8xf32>
    %cst_95 = arith.constant dense<0.000000e+00> : vector<8x8xf32>
    %281 = tpu.matmul %280, %268, %cst_95 {dimension_numbers = #tpu.dot_dimension_numbers<[1], [0], [0], [1], [0, 0, 1, 1], [], []>, precision = #tpu.contract_precision<fp32>} : vector<8x8xf32>, vector<8x8xf32>, vector<8x8xf32> -> vector<8x8xf32>
    %cst_96 = arith.constant dense<0.000000e+00> : vector<8x32xf32>
    %282 = tpu.matmul %281, %227, %cst_96 {dimension_numbers = #tpu.dot_dimension_numbers<[1], [0], [0], [1], [0, 0, 1, 1], [], []>, precision = #tpu.contract_precision<fp32>} : vector<8x8xf32>, vector<8x32xf32>, vector<8x32xf32> -> vector<8x32xf32>
    %283 = arith.addf %265, %282 : vector<8x32xf32>
    %284 = vector.extract_strided_slice %229 {offsets = [0, 24], sizes = [8, 8], strides = [1, 1]} : vector<8x32xf32> to vector<8x8xf32>
    %285 = vector.extract_strided_slice %230 {offsets = [0, 24], sizes = [8, 8], strides = [1, 1]} : vector<8x64xf32> to vector<8x8xf32>
    %286 = vector.extract_strided_slice %230 {offsets = [0, 56], sizes = [8, 8], strides = [1, 1]} : vector<8x64xf32> to vector<8x8xf32>
    %cst_97 = arith.constant dense<0.000000e+00> : vector<8x8xf32>
    %287 = tpu.matmul %284, %285, %cst_97 {dimension_numbers = #tpu.dot_dimension_numbers<[1], [1], [0], [0], [0, 0, 1, 0], [], []>, precision = #tpu.contract_precision<fp32>} : vector<8x8xf32>, vector<8x8xf32>, vector<8x8xf32> -> vector<8x8xf32>
    %cst_98 = arith.constant 0.353553385 : f32
    %288 = vector.broadcast %cst_98 : f32 to vector<8x8xf32>
    %289 = arith.mulf %287, %288 : vector<8x8xf32>
    %cst_99 = arith.constant dense<0xFF800000> : vector<8xf32>
    %290 = vector.multi_reduction <maximumf>, %289, %cst_99 [1] : vector<8x8xf32> to vector<8xf32>
    %291 = vector.shape_cast %290 : vector<8xf32> to vector<8x1xf32>
    %292 = vector.broadcast %291 : vector<8x1xf32> to vector<8x8xf32>
    %293 = arith.subf %289, %292 : vector<8x8xf32>
    %294 = math.exp %293 : vector<8x8xf32>
    %cst_100 = arith.constant dense<0.000000e+00> : vector<8xf32>
    %295 = vector.multi_reduction <add>, %294, %cst_100 [1] : vector<8x8xf32> to vector<8xf32>
    %296 = vector.shape_cast %295 : vector<8xf32> to vector<8x1xf32>
    %297 = vector.broadcast %296 : vector<8x1xf32> to vector<8x8xf32>
    %298 = arith.divf %294, %297 : vector<8x8xf32>
    %cst_101 = arith.constant dense<0.000000e+00> : vector<8x8xf32>
    %299 = tpu.matmul %298, %286, %cst_101 {dimension_numbers = #tpu.dot_dimension_numbers<[1], [0], [0], [1], [0, 0, 1, 1], [], []>, precision = #tpu.contract_precision<fp32>} : vector<8x8xf32>, vector<8x8xf32>, vector<8x8xf32> -> vector<8x8xf32>
    %cst_102 = arith.constant dense<0.000000e+00> : vector<8x32xf32>
    %300 = tpu.matmul %299, %228, %cst_102 {dimension_numbers = #tpu.dot_dimension_numbers<[1], [0], [0], [1], [0, 0, 1, 1], [], []>, precision = #tpu.contract_precision<fp32>} : vector<8x8xf32>, vector<8x32xf32>, vector<8x32xf32> -> vector<8x32xf32>
    %301 = arith.addf %283, %300 : vector<8x32xf32>
    %302 = vector.extract_strided_slice %221 {offsets = [8, 0], sizes = [8, 32], strides = [1, 1]} : vector<16x32xf32> to vector<8x32xf32>
    %303 = vector.extract_strided_slice %222 {offsets = [8, 0], sizes = [8, 64], strides = [1, 1]} : vector<16x64xf32> to vector<8x64xf32>
    %304 = vector.extract_strided_slice %302 {offsets = [0, 0], sizes = [8, 8], strides = [1, 1]} : vector<8x32xf32> to vector<8x8xf32>
    %305 = vector.extract_strided_slice %303 {offsets = [0, 0], sizes = [8, 8], strides = [1, 1]} : vector<8x64xf32> to vector<8x8xf32>
    %306 = vector.extract_strided_slice %303 {offsets = [0, 32], sizes = [8, 8], strides = [1, 1]} : vector<8x64xf32> to vector<8x8xf32>
    %cst_103 = arith.constant dense<0.000000e+00> : vector<8x8xf32>
    %307 = tpu.matmul %304, %305, %cst_103 {dimension_numbers = #tpu.dot_dimension_numbers<[1], [1], [0], [0], [0, 0, 1, 0], [], []>, precision = #tpu.contract_precision<fp32>} : vector<8x8xf32>, vector<8x8xf32>, vector<8x8xf32> -> vector<8x8xf32>
    %cst_104 = arith.constant 0.353553385 : f32
    %308 = vector.broadcast %cst_104 : f32 to vector<8x8xf32>
    %309 = arith.mulf %307, %308 : vector<8x8xf32>
    %cst_105 = arith.constant dense<0xFF800000> : vector<8xf32>
    %310 = vector.multi_reduction <maximumf>, %309, %cst_105 [1] : vector<8x8xf32> to vector<8xf32>
    %311 = vector.shape_cast %310 : vector<8xf32> to vector<8x1xf32>
    %312 = vector.broadcast %311 : vector<8x1xf32> to vector<8x8xf32>
    %313 = arith.subf %309, %312 : vector<8x8xf32>
    %314 = math.exp %313 : vector<8x8xf32>
    %cst_106 = arith.constant dense<0.000000e+00> : vector<8xf32>
    %315 = vector.multi_reduction <add>, %314, %cst_106 [1] : vector<8x8xf32> to vector<8xf32>
    %316 = vector.shape_cast %315 : vector<8xf32> to vector<8x1xf32>
    %317 = vector.broadcast %316 : vector<8x1xf32> to vector<8x8xf32>
    %318 = arith.divf %314, %317 : vector<8x8xf32>
    %cst_107 = arith.constant dense<0.000000e+00> : vector<8x8xf32>
    %319 = tpu.matmul %318, %306, %cst_107 {dimension_numbers = #tpu.dot_dimension_numbers<[1], [0], [0], [1], [0, 0, 1, 1], [], []>, precision = #tpu.contract_precision<fp32>} : vector<8x8xf32>, vector<8x8xf32>, vector<8x8xf32> -> vector<8x8xf32>
    %cst_108 = arith.constant dense<0.000000e+00> : vector<8x32xf32>
    %320 = tpu.matmul %319, %225, %cst_108 {dimension_numbers = #tpu.dot_dimension_numbers<[1], [0], [0], [1], [0, 0, 1, 1], [], []>, precision = #tpu.contract_precision<fp32>} : vector<8x8xf32>, vector<8x32xf32>, vector<8x32xf32> -> vector<8x32xf32>
    %321 = vector.extract_strided_slice %302 {offsets = [0, 8], sizes = [8, 8], strides = [1, 1]} : vector<8x32xf32> to vector<8x8xf32>
    %322 = vector.extract_strided_slice %303 {offsets = [0, 8], sizes = [8, 8], strides = [1, 1]} : vector<8x64xf32> to vector<8x8xf32>
    %323 = vector.extract_strided_slice %303 {offsets = [0, 40], sizes = [8, 8], strides = [1, 1]} : vector<8x64xf32> to vector<8x8xf32>
    %cst_109 = arith.constant dense<0.000000e+00> : vector<8x8xf32>
    %324 = tpu.matmul %321, %322, %cst_109 {dimension_numbers = #tpu.dot_dimension_numbers<[1], [1], [0], [0], [0, 0, 1, 0], [], []>, precision = #tpu.contract_precision<fp32>} : vector<8x8xf32>, vector<8x8xf32>, vector<8x8xf32> -> vector<8x8xf32>
    %cst_110 = arith.constant 0.353553385 : f32
    %325 = vector.broadcast %cst_110 : f32 to vector<8x8xf32>
    %326 = arith.mulf %324, %325 : vector<8x8xf32>
    %cst_111 = arith.constant dense<0xFF800000> : vector<8xf32>
    %327 = vector.multi_reduction <maximumf>, %326, %cst_111 [1] : vector<8x8xf32> to vector<8xf32>
    %328 = vector.shape_cast %327 : vector<8xf32> to vector<8x1xf32>
    %329 = vector.broadcast %328 : vector<8x1xf32> to vector<8x8xf32>
    %330 = arith.subf %326, %329 : vector<8x8xf32>
    %331 = math.exp %330 : vector<8x8xf32>
    %cst_112 = arith.constant dense<0.000000e+00> : vector<8xf32>
    %332 = vector.multi_reduction <add>, %331, %cst_112 [1] : vector<8x8xf32> to vector<8xf32>
    %333 = vector.shape_cast %332 : vector<8xf32> to vector<8x1xf32>
    %334 = vector.broadcast %333 : vector<8x1xf32> to vector<8x8xf32>
    %335 = arith.divf %331, %334 : vector<8x8xf32>
    %cst_113 = arith.constant dense<0.000000e+00> : vector<8x8xf32>
    %336 = tpu.matmul %335, %323, %cst_113 {dimension_numbers = #tpu.dot_dimension_numbers<[1], [0], [0], [1], [0, 0, 1, 1], [], []>, precision = #tpu.contract_precision<fp32>} : vector<8x8xf32>, vector<8x8xf32>, vector<8x8xf32> -> vector<8x8xf32>
    %cst_114 = arith.constant dense<0.000000e+00> : vector<8x32xf32>
    %337 = tpu.matmul %336, %226, %cst_114 {dimension_numbers = #tpu.dot_dimension_numbers<[1], [0], [0], [1], [0, 0, 1, 1], [], []>, precision = #tpu.contract_precision<fp32>} : vector<8x8xf32>, vector<8x32xf32>, vector<8x32xf32> -> vector<8x32xf32>
    %338 = arith.addf %320, %337 : vector<8x32xf32>
    %339 = vector.extract_strided_slice %302 {offsets = [0, 16], sizes = [8, 8], strides = [1, 1]} : vector<8x32xf32> to vector<8x8xf32>
    %340 = vector.extract_strided_slice %303 {offsets = [0, 16], sizes = [8, 8], strides = [1, 1]} : vector<8x64xf32> to vector<8x8xf32>
    %341 = vector.extract_strided_slice %303 {offsets = [0, 48], sizes = [8, 8], strides = [1, 1]} : vector<8x64xf32> to vector<8x8xf32>
    %cst_115 = arith.constant dense<0.000000e+00> : vector<8x8xf32>
    %342 = tpu.matmul %339, %340, %cst_115 {dimension_numbers = #tpu.dot_dimension_numbers<[1], [1], [0], [0], [0, 0, 1, 0], [], []>, precision = #tpu.contract_precision<fp32>} : vector<8x8xf32>, vector<8x8xf32>, vector<8x8xf32> -> vector<8x8xf32>
    %cst_116 = arith.constant 0.353553385 : f32
    %343 = vector.broadcast %cst_116 : f32 to vector<8x8xf32>
    %344 = arith.mulf %342, %343 : vector<8x8xf32>
    %cst_117 = arith.constant dense<0xFF800000> : vector<8xf32>
    %345 = vector.multi_reduction <maximumf>, %344, %cst_117 [1] : vector<8x8xf32> to vector<8xf32>
    %346 = vector.shape_cast %345 : vector<8xf32> to vector<8x1xf32>
    %347 = vector.broadcast %346 : vector<8x1xf32> to vector<8x8xf32>
    %348 = arith.subf %344, %347 : vector<8x8xf32>
    %349 = math.exp %348 : vector<8x8xf32>
    %cst_118 = arith.constant dense<0.000000e+00> : vector<8xf32>
    %350 = vector.multi_reduction <add>, %349, %cst_118 [1] : vector<8x8xf32> to vector<8xf32>
    %351 = vector.shape_cast %350 : vector<8xf32> to vector<8x1xf32>
    %352 = vector.broadcast %351 : vector<8x1xf32> to vector<8x8xf32>
    %353 = arith.divf %349, %352 : vector<8x8xf32>
    %cst_119 = arith.constant dense<0.000000e+00> : vector<8x8xf32>
    %354 = tpu.matmul %353, %341, %cst_119 {dimension_numbers = #tpu.dot_dimension_numbers<[1], [0], [0], [1], [0, 0, 1, 1], [], []>, precision = #tpu.contract_precision<fp32>} : vector<8x8xf32>, vector<8x8xf32>, vector<8x8xf32> -> vector<8x8xf32>
    %cst_120 = arith.constant dense<0.000000e+00> : vector<8x32xf32>
    %355 = tpu.matmul %354, %227, %cst_120 {dimension_numbers = #tpu.dot_dimension_numbers<[1], [0], [0], [1], [0, 0, 1, 1], [], []>, precision = #tpu.contract_precision<fp32>} : vector<8x8xf32>, vector<8x32xf32>, vector<8x32xf32> -> vector<8x32xf32>
    %356 = arith.addf %338, %355 : vector<8x32xf32>
    %357 = vector.extract_strided_slice %302 {offsets = [0, 24], sizes = [8, 8], strides = [1, 1]} : vector<8x32xf32> to vector<8x8xf32>
    %358 = vector.extract_strided_slice %303 {offsets = [0, 24], sizes = [8, 8], strides = [1, 1]} : vector<8x64xf32> to vector<8x8xf32>
    %359 = vector.extract_strided_slice %303 {offsets = [0, 56], sizes = [8, 8], strides = [1, 1]} : vector<8x64xf32> to vector<8x8xf32>
    %cst_121 = arith.constant dense<0.000000e+00> : vector<8x8xf32>
    %360 = tpu.matmul %357, %358, %cst_121 {dimension_numbers = #tpu.dot_dimension_numbers<[1], [1], [0], [0], [0, 0, 1, 0], [], []>, precision = #tpu.contract_precision<fp32>} : vector<8x8xf32>, vector<8x8xf32>, vector<8x8xf32> -> vector<8x8xf32>
    %cst_122 = arith.constant 0.353553385 : f32
    %361 = vector.broadcast %cst_122 : f32 to vector<8x8xf32>
    %362 = arith.mulf %360, %361 : vector<8x8xf32>
    %cst_123 = arith.constant dense<0xFF800000> : vector<8xf32>
    %363 = vector.multi_reduction <maximumf>, %362, %cst_123 [1] : vector<8x8xf32> to vector<8xf32>
    %364 = vector.shape_cast %363 : vector<8xf32> to vector<8x1xf32>
    %365 = vector.broadcast %364 : vector<8x1xf32> to vector<8x8xf32>
    %366 = arith.subf %362, %365 : vector<8x8xf32>
    %367 = math.exp %366 : vector<8x8xf32>
    %cst_124 = arith.constant dense<0.000000e+00> : vector<8xf32>
    %368 = vector.multi_reduction <add>, %367, %cst_124 [1] : vector<8x8xf32> to vector<8xf32>
    %369 = vector.shape_cast %368 : vector<8xf32> to vector<8x1xf32>
    %370 = vector.broadcast %369 : vector<8x1xf32> to vector<8x8xf32>
    %371 = arith.divf %367, %370 : vector<8x8xf32>
    %cst_125 = arith.constant dense<0.000000e+00> : vector<8x8xf32>
    %372 = tpu.matmul %371, %359, %cst_125 {dimension_numbers = #tpu.dot_dimension_numbers<[1], [0], [0], [1], [0, 0, 1, 1], [], []>, precision = #tpu.contract_precision<fp32>} : vector<8x8xf32>, vector<8x8xf32>, vector<8x8xf32> -> vector<8x8xf32>
    %cst_126 = arith.constant dense<0.000000e+00> : vector<8x32xf32>
    %373 = tpu.matmul %372, %228, %cst_126 {dimension_numbers = #tpu.dot_dimension_numbers<[1], [0], [0], [1], [0, 0, 1, 1], [], []>, precision = #tpu.contract_precision<fp32>} : vector<8x8xf32>, vector<8x32xf32>, vector<8x32xf32> -> vector<8x32xf32>
    %374 = arith.addf %356, %373 : vector<8x32xf32>
    %375 = tpu.concatenate %301, %374 in 0 : vector<8x32xf32>, vector<8x32xf32> -> vector<16x32xf32>
    %376 = vector.broadcast %224 : vector<1x32xf32> to vector<16x32xf32>
    %377 = arith.addf %375, %376 : vector<16x32xf32>
    %378 = arith.addf %215, %377 : vector<16x32xf32>
    %c9 = arith.constant 9 : index
    %c0_127 = arith.constant 0 : index
    %379 = vector.load %arg4[%c9, %c0_127] : memref<24x128xf32, #tpu.memory_space<vmem>>, vector<1x32xf32>
    %c10 = arith.constant 10 : index
    %c0_128 = arith.constant 0 : index
    %380 = vector.load %arg4[%c10, %c0_128] : memref<24x128xf32, #tpu.memory_space<vmem>>, vector<1x32xf32>
    %cst_129 = arith.constant dense<0.000000e+00> : vector<16xf32>
    %381 = vector.multi_reduction <add>, %378, %cst_129 [1] : vector<16x32xf32> to vector<16xf32>
    %382 = vector.shape_cast %381 : vector<16xf32> to vector<16x1xf32>
    %cst_130 = arith.constant 3.200000e+01 : f32
    %383 = vector.broadcast %cst_130 : f32 to vector<16x1xf32>
    %384 = arith.divf %382, %383 : vector<16x1xf32>
    %385 = vector.broadcast %384 : vector<16x1xf32> to vector<16x32xf32>
    %386 = arith.subf %378, %385 : vector<16x32xf32>
    %387 = arith.mulf %386, %386 : vector<16x32xf32>
    %cst_131 = arith.constant dense<0.000000e+00> : vector<16xf32>
    %388 = vector.multi_reduction <add>, %387, %cst_131 [1] : vector<16x32xf32> to vector<16xf32>
    %389 = vector.shape_cast %388 : vector<16xf32> to vector<16x1xf32>
    %cst_132 = arith.constant 3.200000e+01 : f32
    %390 = vector.broadcast %cst_132 : f32 to vector<16x1xf32>
    %391 = arith.divf %389, %390 : vector<16x1xf32>
    %392 = vector.broadcast %384 : vector<16x1xf32> to vector<16x32xf32>
    %393 = arith.subf %378, %392 : vector<16x32xf32>
    %cst_133 = arith.constant 9.99999974E-6 : f32
    %394 = vector.broadcast %cst_133 : f32 to vector<16x1xf32>
    %395 = arith.addf %391, %394 : vector<16x1xf32>
    %396 = math.rsqrt %395 : vector<16x1xf32>
    %397 = vector.broadcast %396 : vector<16x1xf32> to vector<16x32xf32>
    %398 = arith.mulf %393, %397 : vector<16x32xf32>
    %399 = vector.broadcast %379 : vector<1x32xf32> to vector<16x32xf32>
    %400 = arith.mulf %398, %399 : vector<16x32xf32>
    %401 = vector.broadcast %380 : vector<1x32xf32> to vector<16x32xf32>
    %402 = arith.addf %400, %401 : vector<16x32xf32>
    %c160 = arith.constant 160 : index
    %c0_134 = arith.constant 0 : index
    %403 = vector.load %arg3[%c160, %c0_134] : memref<288x128xf32, #tpu.memory_space<vmem>>, vector<32x64xf32>
    %cst_135 = arith.constant dense<0.000000e+00> : vector<16x64xf32>
    %404 = tpu.matmul %402, %403, %cst_135 {dimension_numbers = #tpu.dot_dimension_numbers<[1], [0], [0], [1], [0, 0, 1, 1], [], []>, precision = #tpu.contract_precision<fp32>} : vector<16x32xf32>, vector<32x64xf32>, vector<16x64xf32> -> vector<16x64xf32>
    %c11 = arith.constant 11 : index
    %c0_136 = arith.constant 0 : index
    %405 = vector.load %arg4[%c11, %c0_136] : memref<24x128xf32, #tpu.memory_space<vmem>>, vector<1x64xf32>
    %406 = vector.broadcast %405 : vector<1x64xf32> to vector<16x64xf32>
    %407 = arith.addf %404, %406 : vector<16x64xf32>
    %cst_137 = arith.constant 0.000000e+00 : f32
    %408 = vector.broadcast %cst_137 : f32 to vector<16x64xf32>
    %409 = arith.maximumf %407, %408 : vector<16x64xf32>
    %c192 = arith.constant 192 : index
    %c0_138 = arith.constant 0 : index
    %410 = vector.load %arg3[%c192, %c0_138] : memref<288x128xf32, #tpu.memory_space<vmem>>, vector<64x32xf32>
    %cst_139 = arith.constant dense<0.000000e+00> : vector<16x32xf32>
    %411 = tpu.matmul %409, %410, %cst_139 {dimension_numbers = #tpu.dot_dimension_numbers<[1], [0], [0], [1], [0, 0, 1, 1], [], []>, precision = #tpu.contract_precision<fp32>} : vector<16x64xf32>, vector<64x32xf32>, vector<16x32xf32> -> vector<16x32xf32>
    %c12 = arith.constant 12 : index
    %c0_140 = arith.constant 0 : index
    %412 = vector.load %arg4[%c12, %c0_140] : memref<24x128xf32, #tpu.memory_space<vmem>>, vector<1x32xf32>
    %413 = vector.broadcast %412 : vector<1x32xf32> to vector<16x32xf32>
    %414 = arith.addf %411, %413 : vector<16x32xf32>
    %415 = arith.addf %402, %414 : vector<16x32xf32>
    %c13 = arith.constant 13 : index
    %c0_141 = arith.constant 0 : index
    %416 = vector.load %arg4[%c13, %c0_141] : memref<24x128xf32, #tpu.memory_space<vmem>>, vector<1x32xf32>
    %c14 = arith.constant 14 : index
    %c0_142 = arith.constant 0 : index
    %417 = vector.load %arg4[%c14, %c0_142] : memref<24x128xf32, #tpu.memory_space<vmem>>, vector<1x32xf32>
    %cst_143 = arith.constant dense<0.000000e+00> : vector<16xf32>
    %418 = vector.multi_reduction <add>, %415, %cst_143 [1] : vector<16x32xf32> to vector<16xf32>
    %419 = vector.shape_cast %418 : vector<16xf32> to vector<16x1xf32>
    %cst_144 = arith.constant 3.200000e+01 : f32
    %420 = vector.broadcast %cst_144 : f32 to vector<16x1xf32>
    %421 = arith.divf %419, %420 : vector<16x1xf32>
    %422 = vector.broadcast %421 : vector<16x1xf32> to vector<16x32xf32>
    %423 = arith.subf %415, %422 : vector<16x32xf32>
    %424 = arith.mulf %423, %423 : vector<16x32xf32>
    %cst_145 = arith.constant dense<0.000000e+00> : vector<16xf32>
    %425 = vector.multi_reduction <add>, %424, %cst_145 [1] : vector<16x32xf32> to vector<16xf32>
    %426 = vector.shape_cast %425 : vector<16xf32> to vector<16x1xf32>
    %cst_146 = arith.constant 3.200000e+01 : f32
    %427 = vector.broadcast %cst_146 : f32 to vector<16x1xf32>
    %428 = arith.divf %426, %427 : vector<16x1xf32>
    %429 = vector.broadcast %421 : vector<16x1xf32> to vector<16x32xf32>
    %430 = arith.subf %415, %429 : vector<16x32xf32>
    %cst_147 = arith.constant 9.99999974E-6 : f32
    %431 = vector.broadcast %cst_147 : f32 to vector<16x1xf32>
    %432 = arith.addf %428, %431 : vector<16x1xf32>
    %433 = math.rsqrt %432 : vector<16x1xf32>
    %434 = vector.broadcast %433 : vector<16x1xf32> to vector<16x32xf32>
    %435 = arith.mulf %430, %434 : vector<16x32xf32>
    %436 = vector.broadcast %416 : vector<1x32xf32> to vector<16x32xf32>
    %437 = arith.mulf %435, %436 : vector<16x32xf32>
    %438 = vector.broadcast %417 : vector<1x32xf32> to vector<16x32xf32>
    %439 = arith.addf %437, %438 : vector<16x32xf32>
    %c15 = arith.constant 15 : index
    %c0_148 = arith.constant 0 : index
    %440 = vector.load %arg4[%c15, %c0_148] : memref<24x128xf32, #tpu.memory_space<vmem>>, vector<1x32xf32>
    %c16 = arith.constant 16 : index
    %c0_149 = arith.constant 0 : index
    %441 = vector.load %arg4[%c16, %c0_149] : memref<24x128xf32, #tpu.memory_space<vmem>>, vector<1x32xf32>
    %cst_150 = arith.constant dense<0.000000e+00> : vector<16xf32>
    %442 = vector.multi_reduction <add>, %439, %cst_150 [1] : vector<16x32xf32> to vector<16xf32>
    %443 = vector.shape_cast %442 : vector<16xf32> to vector<16x1xf32>
    %cst_151 = arith.constant 3.200000e+01 : f32
    %444 = vector.broadcast %cst_151 : f32 to vector<16x1xf32>
    %445 = arith.divf %443, %444 : vector<16x1xf32>
    %446 = vector.broadcast %445 : vector<16x1xf32> to vector<16x32xf32>
    %447 = arith.subf %439, %446 : vector<16x32xf32>
    %448 = arith.mulf %447, %447 : vector<16x32xf32>
    %cst_152 = arith.constant dense<0.000000e+00> : vector<16xf32>
    %449 = vector.multi_reduction <add>, %448, %cst_152 [1] : vector<16x32xf32> to vector<16xf32>
    %450 = vector.shape_cast %449 : vector<16xf32> to vector<16x1xf32>
    %cst_153 = arith.constant 3.200000e+01 : f32
    %451 = vector.broadcast %cst_153 : f32 to vector<16x1xf32>
    %452 = arith.divf %450, %451 : vector<16x1xf32>
    %453 = vector.broadcast %445 : vector<16x1xf32> to vector<16x32xf32>
    %454 = arith.subf %439, %453 : vector<16x32xf32>
    %cst_154 = arith.constant 9.99999974E-6 : f32
    %455 = vector.broadcast %cst_154 : f32 to vector<16x1xf32>
    %456 = arith.addf %452, %455 : vector<16x1xf32>
    %457 = math.rsqrt %456 : vector<16x1xf32>
    %458 = vector.broadcast %457 : vector<16x1xf32> to vector<16x32xf32>
    %459 = arith.mulf %454, %458 : vector<16x32xf32>
    %460 = vector.broadcast %440 : vector<1x32xf32> to vector<16x32xf32>
    %461 = arith.mulf %459, %460 : vector<16x32xf32>
    %462 = vector.broadcast %441 : vector<1x32xf32> to vector<16x32xf32>
    %463 = arith.addf %461, %462 : vector<16x32xf32>
    %c256 = arith.constant 256 : index
    %c0_155 = arith.constant 0 : index
    %464 = vector.load %arg3[%c256, %c0_155] : memref<288x128xf32, #tpu.memory_space<vmem>>, vector<32x1xf32>
    %cst_156 = arith.constant dense<0.000000e+00> : vector<16x1xf32>
    %465 = tpu.matmul %463, %464, %cst_156 {dimension_numbers = #tpu.dot_dimension_numbers<[1], [0], [0], [1], [0, 0, 1, 1], [], []>, precision = #tpu.contract_precision<fp32>} : vector<16x32xf32>, vector<32x1xf32>, vector<16x1xf32> -> vector<16x1xf32>
    %c17 = arith.constant 17 : index
    %c0_157 = arith.constant 0 : index
    %466 = vector.load %arg4[%c17, %c0_157] : memref<24x128xf32, #tpu.memory_space<vmem>>, vector<1x1xf32>
    %467 = vector.broadcast %466 : vector<1x1xf32> to vector<16x1xf32>
    %468 = arith.addf %465, %467 : vector<16x1xf32>
    %c0_158 = arith.constant 0 : index
    %c0_159 = arith.constant 0 : index
    %469 = vector.load %arg5[%c0_158, %c0_159] : memref<16x1xf32, #tpu.memory_space<vmem>>, vector<16x1xf32>
    tpu.vector_store %arg5[%c0_158, %c0_159], %468 {strides = array<i32>} : memref<16x1xf32, #tpu.memory_space<vmem>>, vector<16x1xf32>,
    return
  }
  func.func @transform_0(%arg0: i32) -> (i32, i32) {
    %c0_i32 = arith.constant 0 : i32
    %c0_i32_0 = arith.constant 0 : i32
    %c0_i32_1 = arith.constant 0 : i32
    return %c0_i32, %c0_i32_0 : i32, i32
  }
  func.func @transform_1(%arg0: i32) -> (i32, i32) {
    %c0_i32 = arith.constant 0 : i32
    %c0_i32_0 = arith.constant 0 : i32
    %c0_i32_1 = arith.constant 0 : i32
    return %c0_i32, %c0_i32_0 : i32, i32
  }
  func.func @transform_2(%arg0: i32) -> (i32, i32) {
    %c0_i32 = arith.constant 0 : i32
    %c0_i32_0 = arith.constant 0 : i32
    %c0_i32_1 = arith.constant 0 : i32
    return %c0_i32, %c0_i32_0 : i32, i32
  }
  func.func @transform_3(%arg0: i32) -> (i32, i32) {
    %c0_i32 = arith.constant 0 : i32
    %c0_i32_0 = arith.constant 0 : i32
    %c0_i32_1 = arith.constant 0 : i32
    return %c0_i32, %c0_i32_0 : i32, i32
  }
  func.func @transform_4(%arg0: i32) -> (i32, i32) {
    %c0_i32 = arith.constant 0 : i32
    %c0_i32_0 = arith.constant 0 : i32
    %c0_i32_1 = arith.constant 0 : i32
    return %c0_i32, %c0_i32_0 : i32, i32
  }
}

</mosaic_0001>

<llo_original>
// kernel: tpu_custom_call.1
$region0: #{tpu_custom_call.1}
  #allocation0 [shape = 'u32[]', space=smem, size = 0x4, offset = 0x4, fixed_abs, tag = 'smem constant byte address 0x4 - core index']
  #allocation1 [shape = 'u32[72,128]{1,0:T(1,128)}', space=vmem, size = 0x9000, scoped, tag = 'internal scratch']
  %s0 = inlined_call_operand.hbm [shape: f32[16,32], index: 0, kind: input, shape index: {}]
  %s1 = inlined_call_operand.hbm [shape: f32[16,32], index: 1, kind: input, shape index: {}]
  %s2 = inlined_call_operand.hbm [shape: f32[288,128], index: 2, kind: input, shape index: {}]
  %s3 = inlined_call_operand.hbm [shape: f32[24,128], index: 3, kind: input, shape index: {}]
  %s4 = inlined_call_operand.vmem [shape: f32[16,1], index: 4, kind: output, shape index: {}]
  %s5 = sld [smem:[#allocation0]]
  $region42: #{tpu_custom_call.1} parent=0
    _
  %s7 = ssub.s32 1, %s5
  %s8 = scalar_select 0, %s7, %s5
  $region1: #{tpu_custom_call.1} parent=0
    #allocation2 [shape = 'u8[8192]{0}', space=vmem, size = 0x2000, scoped, tag = 'input window, operand 0, single buffered']
    #allocation3 [shape = 's32[1]{0}', space=sflag, size = 0x4, scoped, tag = 'scoped memory for tpu_custom_call.1']
    #allocation4 [shape = 'u8[8192]{0}', space=vmem, size = 0x2000, scoped, tag = 'input window, operand 1, single buffered']
    #allocation5 [shape = 's32[1]{0}', space=sflag, size = 0x4, scoped, tag = 'scoped memory for tpu_custom_call.1']
    #allocation6 [shape = 'u8[147456]{0}', space=vmem, size = 0x24000, scoped, tag = 'input window, operand 2, single buffered']
    #allocation7 [shape = 'u8[12288]{0}', space=vmem, size = 0x3000, scoped, tag = 'input window, operand 3, single buffered']
    #allocation8 [shape = 's32[1]{0}', space=sflag, size = 0x4, scoped, tag = 'scoped memory for tpu_custom_call.1']
    %9 = vsyncpa [#allocation3], 0
    %10 = vsyncpa [#allocation5], 0
    %11 = vsyncpa [#allocation8], 0
    // Predicated region
    $region2: #{tpu_custom_call.1} parent=1 // pred_check
      _
    $region3: #{tpu_custom_call.1} parent=1 // pred_check_branch
      %13 = sbr.rel (0) target = $region5
    $region4: #{tpu_custom_call.1} parent=1 // pred_region
      %15 = vsyncadd [#allocation3], 0
      %s16 = sshll.u32 %s0, 4
      %s17 = int_to_ptr.hbm [resolvable:$true] %s16
      %s18 = sshll.u32 [#allocation2], 4
      %s19 = int_to_ptr.vmem [resolvable:$true] %s18
      %24 = dma.hbm_to_vmem [thread:$0]  %s17, 256, %s19, [#allocation3], 128, 128, 8
    $region5: #{tpu_custom_call.1} parent=1 // pred_fallthru
      _
    // Predicated region
    $region6: #{tpu_custom_call.1} parent=1 // pred_check
      _
    $region7: #{tpu_custom_call.1} parent=1 // pred_check_branch
      %26 = sbr.rel (0) target = $region9
    $region8: #{tpu_custom_call.1} parent=1 // pred_region
      %28 = vsyncadd [#allocation5], 0
      %s29 = sshll.u32 %s1, 4
      %s30 = int_to_ptr.hbm [resolvable:$true] %s29
      %s31 = sshll.u32 [#allocation4], 4
      %s32 = int_to_ptr.vmem [resolvable:$true] %s31
      %37 = dma.hbm_to_vmem [thread:$0]  %s30, 256, %s32, [#allocation5], 128, 128, 8
    $region9: #{tpu_custom_call.1} parent=1 // pred_fallthru
      _
    // Predicated region
    $region10: #{tpu_custom_call.1} parent=1 // pred_check
      _
    $region11: #{tpu_custom_call.1} parent=1 // pred_check_branch
      %39 = sbr.rel (0) target = $region13
    $region12: #{tpu_custom_call.1} parent=1 // pred_region
      %41 = vsyncadd [#allocation5], 0
      %s42 = sshll.u32 %s2, 4
      %s43 = int_to_ptr.hbm [resolvable:$true] %s42
      %s44 = sshll.u32 [#allocation6], 4
      %s45 = int_to_ptr.vmem [resolvable:$true] %s44
      %50 = dma.hbm_to_vmem [thread:$0]  %s43, 4608, %s45, [#allocation5], 128, 128, 8
    $region13: #{tpu_custom_call.1} parent=1 // pred_fallthru
      _
    // Predicated region
    $region14: #{tpu_custom_call.1} parent=1 // pred_check
      _
    $region15: #{tpu_custom_call.1} parent=1 // pred_check_branch
      %52 = sbr.rel (0) target = $region17
    $region16: #{tpu_custom_call.1} parent=1 // pred_region
      %54 = vsyncadd [#allocation8], 0
      %s55 = sshll.u32 %s3, 4
      %s56 = int_to_ptr.hbm [resolvable:$true] %s55
      %s57 = sshll.u32 [#allocation7], 4
      %s58 = int_to_ptr.vmem [resolvable:$true] %s57
      %63 = dma.hbm_to_vmem [thread:$0]  %s56, 384, %s58, [#allocation8], 128, 128, 8
    $region17: #{tpu_custom_call.1} parent=1 // pred_fallthru
      _
    // Predicated region
    $region18: #{tpu_custom_call.1} parent=1 // pred_check
      _
    $region19: #{tpu_custom_call.1} parent=1 // pred_check_branch
      %65 = sbr.rel (0) target = $region21
    $region20: #{tpu_custom_call.1} parent=1 // pred_region
      %67 = dma.done [#allocation3], 256
    $region21: #{tpu_custom_call.1} parent=1 // pred_fallthru
      _
    // Predicated region
    $region22: #{tpu_custom_call.1} parent=1 // pred_check
      _
    $region23: #{tpu_custom_call.1} parent=1 // pred_check_branch
      %69 = sbr.rel (0) target = $region25
    $region24: #{tpu_custom_call.1} parent=1 // pred_region
      %71 = dma.done [#allocation5], 256
    $region25: #{tpu_custom_call.1} parent=1 // pred_fallthru
      _
    // Predicated region
    $region26: #{tpu_custom_call.1} parent=1 // pred_check
      _
    $region27: #{tpu_custom_call.1} parent=1 // pred_check_branch
      %73 = sbr.rel (0) target = $region29
    $region28: #{tpu_custom_call.1} parent=1 // pred_region
      %75 = dma.done [#allocation5], 4608
    $region29: #{tpu_custom_call.1} parent=1 // pred_fallthru
      _
    // Predicated region
    $region30: #{tpu_custom_call.1} parent=1 // pred_check
      _
    $region31: #{tpu_custom_call.1} parent=1 // pred_check_branch
      %77 = sbr.rel (0) target = $region33
    $region32: #{tpu_custom_call.1} parent=1 // pred_region
      %79 = dma.done [#allocation8], 384
    $region33: #{tpu_custom_call.1} parent=1 // pred_fallthru
      _
    %v80 = vld [vmem:[#allocation2] sm:$0xff]
    %v81 = vld [vmem:[#allocation2 + $0x8] sm:$0xff]
    %v82 = vld [vmem:[#allocation4] sm:$0xff]
    %v83 = vld [vmem:[#allocation4 + $0x8] sm:$0xff]
    %v84 = vld [vmem:[#allocation6] sm:$0xff]
    %v85 = vld [vmem:[#allocation6 + $0x8] sm:$0xff]
    %v86 = vld [vmem:[#allocation6 + $0x10] sm:$0xff]
    %v87 = vld [vmem:[#allocation6 + $0x18] sm:$0xff]
    %v88 = vld [vmem:[#allocation7] sm:$0x1]
    %v89 = vperm.slane %v88, 0
    %vm90 = vcmask 261120
    %v92 = vsel %vm90, %v80, 0
    %v95 = vsel %vm90, %v81, 0
    %97 = vmatpush.msra.mxu0 0.0
    %98 = vmatpush.msra.mxu0 0.0
    %99 = vmatpush.msra.mxu0 0.0
    %100 = vmatpush.msra.mxu0 0.0
    %101 = vmatpush.msra.mxu0 0.0
    %102 = vmatpush.msra.mxu0 0.0
    %103 = vmatpush.msra.mxu0 0.0
    %104 = vmatpush.msra.mxu0 0.0
    %105 = vmatpush.msra.mxu0 0.0
    %106 = vmatpush.msra.mxu0 0.0
    %107 = vmatpush.msra.mxu0 0.0
    %108 = vmatpush.msra.mxu0 0.0
    %v109 = vand.u32 %v87, 4294901760
    %110 = vmatpush.msra.mxu0 %v109
    %v111 = vand.u32 %v86, 4294901760
    %112 = vmatpush.msra.mxu0 %v111
    %v113 = vand.u32 %v85, 4294901760
    %114 = vmatpush.msra.mxu0 %v113
    %v115 = vand.u32 %v84, 4294901760
    %116 = vmatpush.msra.mxu0 %v115
    %v117 = vand.u32 %v92, 4294901760
    %v118 = vsub.f32 %v92, %v117
    %v119 = vand.u32 %v118, 4294901760
    %v120 = vsub.f32 %v118, %v119
    %v121 = vand.u32 %v120, 4294901760
    %122 = vmatmul.f32.gmra.mxu0 %v121
    %v123 = vpop.f32.mrf.mxu0
    %v124 = vadd.f32 %v89, %v123
    %v125 = vand.u32 %v95, 4294901760
    %v126 = vsub.f32 %v95, %v125
    %v127 = vand.u32 %v126, 4294901760
    %v128 = vsub.f32 %v126, %v127
    %v129 = vand.u32 %v128, 4294901760
    %130 = vmatmul.f32.gmra.mxu0 %v129
    %v131 = vpop.f32.mrf.mxu0
    %v132 = vadd.f32 %v89, %v131
    %133 = vdwg.mxu0
    %134 = vmatpush.msra.mxu0 0.0
    %135 = vmatpush.msra.mxu0 0.0
    %136 = vmatpush.msra.mxu0 0.0
    %137 = vmatpush.msra.mxu0 0.0
    %138 = vmatpush.msra.mxu0 0.0
    %139 = vmatpush.msra.mxu0 0.0
    %140 = vmatpush.msra.mxu0 0.0
    %141 = vmatpush.msra.mxu0 0.0
    %142 = vmatpush.msra.mxu0 0.0
    %143 = vmatpush.msra.mxu0 0.0
    %144 = vmatpush.msra.mxu0 0.0
    %145 = vmatpush.msra.mxu0 0.0
    %v146 = vand.u32 %v87, 4294901760
    %v147 = vsub.f32 %v87, %v146
    %v148 = vand.u32 %v147, 4294901760
    %v149 = vsub.f32 %v147, %v148
    %v150 = vand.u32 %v149, 4294901760
    %151 = vmatpush.msra.mxu0 %v150
    %v152 = vand.u32 %v86, 4294901760
    %v153 = vsub.f32 %v86, %v152
    %v154 = vand.u32 %v153, 4294901760
    %v155 = vsub.f32 %v153, %v154
    %v156 = vand.u32 %v155, 4294901760
    %157 = vmatpush.msra.mxu0 %v156
    %v158 = vand.u32 %v85, 4294901760
    %v159 = vsub.f32 %v85, %v158
    %v160 = vand.u32 %v159, 4294901760
    %v161 = vsub.f32 %v159, %v160
    %v162 = vand.u32 %v161, 4294901760
    %163 = vmatpush.msra.mxu0 %v162
    %v164 = vand.u32 %v84, 4294901760
    %v165 = vsub.f32 %v84, %v164
    %v166 = vand.u32 %v165, 4294901760
    %v167 = vsub.f32 %v165, %v166
    %v168 = vand.u32 %v167, 4294901760
    %169 = vmatpush.msra.mxu0 %v168
    %v170 = vand.u32 %v92, 4294901760
    %171 = vmatmul.f32.gmra.mxu0 %v170
    %v172 = vpop.f32.mrf.mxu0
    %v173 = vadd.f32 %v124, %v172
    %v174 = vand.u32 %v95, 4294901760
    %175 = vmatmul.f32.gmra.mxu0 %v174
    %v176 = vpop.f32.mrf.mxu0
    %v177 = vadd.f32 %v132, %v176
    %178 = vdwg.mxu0
    %179 = vmatpush.msra.mxu0 0.0
    %180 = vmatpush.msra.mxu0 0.0
    %181 = vmatpush.msra.mxu0 0.0
    %182 = vmatpush.msra.mxu0 0.0
    %183 = vmatpush.msra.mxu0 0.0
    %184 = vmatpush.msra.mxu0 0.0
    %185 = vmatpush.msra.mxu0 0.0
    %186 = vmatpush.msra.mxu0 0.0
    %187 = vmatpush.msra.mxu0 0.0
    %188 = vmatpush.msra.mxu0 0.0
    %189 = vmatpush.msra.mxu0 0.0
    %190 = vmatpush.msra.mxu0 0.0
    %v191 = vand.u32 %v87, 4294901760
    %v192 = vsub.f32 %v87, %v191
    %193 = vmatpush.msra.mxu0 %v192
    %v194 = vand.u32 %v86, 4294901760
    %v195 = vsub.f32 %v86, %v194
    %196 = vmatpush.msra.mxu0 %v195
    %v197 = vand.u32 %v85, 4294901760
    %v198 = vsub.f32 %v85, %v197
    %199 = vmatpush.msra.mxu0 %v198
    %v200 = vand.u32 %v84, 4294901760
    %v201 = vsub.f32 %v84, %v200
    %202 = vmatpush.msra.mxu0 %v201
    %v203 = vand.u32 %v92, 4294901760
    %v204 = vsub.f32 %v92, %v203
    %205 = vmatmul.f32.gmra.mxu0 %v204
    %v206 = vpop.f32.mrf.mxu0
    %v207 = vadd.f32 %v173, %v206
    %v208 = vand.u32 %v95, 4294901760
    %v209 = vsub.f32 %v95, %v208
    %210 = vmatmul.f32.gmra.mxu0 %v209
    %v211 = vpop.f32.mrf.mxu0
    %v212 = vadd.f32 %v177, %v211
    %213 = vdwg.mxu0
    %214 = vmatpush.msra.mxu0 0.0
    %215 = vmatpush.msra.mxu0 0.0
    %216 = vmatpush.msra.mxu0 0.0
    %217 = vmatpush.msra.mxu0 0.0
    %218 = vmatpush.msra.mxu0 0.0
    %219 = vmatpush.msra.mxu0 0.0
    %220 = vmatpush.msra.mxu0 0.0
    %221 = vmatpush.msra.mxu0 0.0
    %222 = vmatpush.msra.mxu0 0.0
    %223 = vmatpush.msra.mxu0 0.0
    %224 = vmatpush.msra.mxu0 0.0
    %225 = vmatpush.msra.mxu0 0.0
    %v226 = vand.u32 %v87, 4294901760
    %227 = vmatpush.msra.mxu0 %v226
    %v228 = vand.u32 %v86, 4294901760
    %229 = vmatpush.msra.mxu0 %v228
    %v230 = vand.u32 %v85, 4294901760
    %231 = vmatpush.msra.mxu0 %v230
    %v232 = vand.u32 %v84, 4294901760
    %233 = vmatpush.msra.mxu0 %v232
    %v234 = vand.u32 %v92, 4294901760
    %v235 = vsub.f32 %v92, %v234
    %v236 = vand.u32 %v235, 4294901760
    %237 = vmatmul.f32.gmra.mxu0 %v236
    %v238 = vpop.f32.mrf.mxu0
    %v239 = vadd.f32 %v207, %v238
    %v240 = vand.u32 %v95, 4294901760
    %v241 = vsub.f32 %v95, %v240
    %v242 = vand.u32 %v241, 4294901760
    %243 = vmatmul.f32.gmra.mxu0 %v242
    %v244 = vpop.f32.mrf.mxu0
    %v245 = vadd.f32 %v212, %v244
    %246 = vdwg.mxu0
    %247 = vmatpush.msra.mxu0 0.0
    %248 = vmatpush.msra.mxu0 0.0
    %249 = vmatpush.msra.mxu0 0.0
    %250 = vmatpush.msra.mxu0 0.0
    %251 = vmatpush.msra.mxu0 0.0
    %252 = vmatpush.msra.mxu0 0.0
    %253 = vmatpush.msra.mxu0 0.0
    %254 = vmatpush.msra.mxu0 0.0
    %255 = vmatpush.msra.mxu0 0.0
    %256 = vmatpush.msra.mxu0 0.0
    %257 = vmatpush.msra.mxu0 0.0
    %258 = vmatpush.msra.mxu0 0.0
    %v259 = vand.u32 %v87, 4294901760
    %v260 = vsub.f32 %v87, %v259
    %v261 = vand.u32 %v260, 4294901760
    %262 = vmatpush.msra.mxu0 %v261
    %v263 = vand.u32 %v86, 4294901760
    %v264 = vsub.f32 %v86, %v263
    %v265 = vand.u32 %v264, 4294901760
    %266 = vmatpush.msra.mxu0 %v265
    %v267 = vand.u32 %v85, 4294901760
    %v268 = vsub.f32 %v85, %v267
    %v269 = vand.u32 %v268, 4294901760
    %270 = vmatpush.msra.mxu0 %v269
    %v271 = vand.u32 %v84, 4294901760
    %v272 = vsub.f32 %v84, %v271
    %v273 = vand.u32 %v272, 4294901760
    %274 = vmatpush.msra.mxu0 %v273
    %v275 = vand.u32 %v92, 4294901760
    %276 = vmatmul.f32.gmra.mxu0 %v275
    %v277 = vpop.f32.mrf.mxu0
    %v278 = vadd.f32 %v239, %v277
    %v279 = vand.u32 %v95, 4294901760
    %280 = vmatmul.f32.gmra.mxu0 %v279
    %v281 = vpop.f32.mrf.mxu0
    %v282 = vadd.f32 %v245, %v281
    %283 = vdwg.mxu0
    %284 = vmatpush.msra.mxu0 0.0
    %285 = vmatpush.msra.mxu0 0.0
    %286 = vmatpush.msra.mxu0 0.0
    %287 = vmatpush.msra.mxu0 0.0
    %288 = vmatpush.msra.mxu0 0.0
    %289 = vmatpush.msra.mxu0 0.0
    %290 = vmatpush.msra.mxu0 0.0
    %291 = vmatpush.msra.mxu0 0.0
    %292 = vmatpush.msra.mxu0 0.0
    %293 = vmatpush.msra.mxu0 0.0
    %294 = vmatpush.msra.mxu0 0.0
    %295 = vmatpush.msra.mxu0 0.0
    %v296 = vand.u32 %v87, 4294901760
    %297 = vmatpush.msra.mxu0 %v296
    %v298 = vand.u32 %v86, 4294901760
    %299 = vmatpush.msra.mxu0 %v298
    %v300 = vand.u32 %v85, 4294901760
    %301 = vmatpush.msra.mxu0 %v300
    %v302 = vand.u32 %v84, 4294901760
    %303 = vmatpush.msra.mxu0 %v302
    %v304 = vand.u32 %v92, 4294901760
    %305 = vmatmul.f32.gmra.mxu0 %v304
    %v306 = vpop.f32.mrf.mxu0
    %v307 = vadd.f32 %v278, %v306
    %v308 = vand.u32 %v95, 4294901760
    %309 = vmatmul.f32.gmra.mxu0 %v308
    %v310 = vpop.f32.mrf.mxu0
    %v311 = vadd.f32 %v282, %v310
    %312 = vdwg.mxu0
    %v313 = vld [vmem:[#allocation6 + $0x20] sm:$0xff]
    %v314 = vld [vmem:[#allocation6 + $0x28] sm:$0xff]
    %v315 = vld [vmem:[#allocation6 + $0x30] sm:$0xff]
    %v316 = vld [vmem:[#allocation6 + $0x38] sm:$0xff]
    %v317 = vld [vmem:[#allocation7 + $0x1] sm:$0x1]
    %v318 = vperm.slane %v317, 0
    %v320 = vsel %vm90, %v82, 0
    %v323 = vsel %vm90, %v83, 0
    %325 = vmatpush.msra.mxu0 0.0
    %326 = vmatpush.msra.mxu0 0.0
    %327 = vmatpush.msra.mxu0 0.0
    %328 = vmatpush.msra.mxu0 0.0
    %329 = vmatpush.msra.mxu0 0.0
    %330 = vmatpush.msra.mxu0 0.0
    %331 = vmatpush.msra.mxu0 0.0
    %332 = vmatpush.msra.mxu0 0.0
    %333 = vmatpush.msra.mxu0 0.0
    %334 = vmatpush.msra.mxu0 0.0
    %335 = vmatpush.msra.mxu0 0.0
    %336 = vmatpush.msra.mxu0 0.0
    %v337 = vand.u32 %v316, 4294901760
    %338 = vmatpush.msra.mxu0 %v337
    %v339 = vand.u32 %v315, 4294901760
    %340 = vmatpush.msra.mxu0 %v339
    %v341 = vand.u32 %v314, 4294901760
    %342 = vmatpush.msra.mxu0 %v341
    %v343 = vand.u32 %v313, 4294901760
    %344 = vmatpush.msra.mxu0 %v343
    %v345 = vand.u32 %v320, 4294901760
    %v346 = vsub.f32 %v320, %v345
    %v347 = vand.u32 %v346, 4294901760
    %v348 = vsub.f32 %v346, %v347
    %v349 = vand.u32 %v348, 4294901760
    %350 = vmatmul.f32.gmra.mxu0 %v349
    %v351 = vpop.f32.mrf.mxu0
    %v352 = vadd.f32 %v318, %v351
    %v353 = vand.u32 %v323, 4294901760
    %v354 = vsub.f32 %v323, %v353
    %v355 = vand.u32 %v354, 4294901760
    %v356 = vsub.f32 %v354, %v355
    %v357 = vand.u32 %v356, 4294901760
    %358 = vmatmul.f32.gmra.mxu0 %v357
    %v359 = vpop.f32.mrf.mxu0
    %v360 = vadd.f32 %v318, %v359
    %361 = vdwg.mxu0
    %362 = vmatpush.msra.mxu0 0.0
    %363 = vmatpush.msra.mxu0 0.0
    %364 = vmatpush.msra.mxu0 0.0
    %365 = vmatpush.msra.mxu0 0.0
    %366 = vmatpush.msra.mxu0 0.0
    %367 = vmatpush.msra.mxu0 0.0
    %368 = vmatpush.msra.mxu0 0.0
    %369 = vmatpush.msra.mxu0 0.0
    %370 = vmatpush.msra.mxu0 0.0
    %371 = vmatpush.msra.mxu0 0.0
    %372 = vmatpush.msra.mxu0 0.0
    %373 = vmatpush.msra.mxu0 0.0
    %v374 = vand.u32 %v316, 4294901760
    %v375 = vsub.f32 %v316, %v374
    %v376 = vand.u32 %v375, 4294901760
    %v377 = vsub.f32 %v375, %v376
    %v378 = vand.u32 %v377, 4294901760
    %379 = vmatpush.msra.mxu0 %v378
    %v380 = vand.u32 %v315, 4294901760
    %v381 = vsub.f32 %v315, %v380
    %v382 = vand.u32 %v381, 4294901760
    %v383 = vsub.f32 %v381, %v382
    %v384 = vand.u32 %v383, 4294901760
    %385 = vmatpush.msra.mxu0 %v384
    %v386 = vand.u32 %v314, 4294901760
    %v387 = vsub.f32 %v314, %v386
    %v388 = vand.u32 %v387, 4294901760
    %v389 = vsub.f32 %v387, %v388
    %v390 = vand.u32 %v389, 4294901760
    %391 = vmatpush.msra.mxu0 %v390
    %v392 = vand.u32 %v313, 4294901760
    %v393 = vsub.f32 %v313, %v392
    %v394 = vand.u32 %v393, 4294901760
    %v395 = vsub.f32 %v393, %v394
    %v396 = vand.u32 %v395, 4294901760
    %397 = vmatpush.msra.mxu0 %v396
    %v398 = vand.u32 %v320, 4294901760
    %399 = vmatmul.f32.gmra.mxu0 %v398
    %v400 = vpop.f32.mrf.mxu0
    %v401 = vadd.f32 %v352, %v400
    %v402 = vand.u32 %v323, 4294901760
    %403 = vmatmul.f32.gmra.mxu0 %v402
    %v404 = vpop.f32.mrf.mxu0
    %v405 = vadd.f32 %v360, %v404
    %406 = vdwg.mxu0
    %407 = vmatpush.msra.mxu0 0.0
    %408 = vmatpush.msra.mxu0 0.0
    %409 = vmatpush.msra.mxu0 0.0
    %410 = vmatpush.msra.mxu0 0.0
    %411 = vmatpush.msra.mxu0 0.0
    %412 = vmatpush.msra.mxu0 0.0
    %413 = vmatpush.msra.mxu0 0.0
    %414 = vmatpush.msra.mxu0 0.0
    %415 = vmatpush.msra.mxu0 0.0
    %416 = vmatpush.msra.mxu0 0.0
    %417 = vmatpush.msra.mxu0 0.0
    %418 = vmatpush.msra.mxu0 0.0
    %v419 = vand.u32 %v316, 4294901760
    %v420 = vsub.f32 %v316, %v419
    %421 = vmatpush.msra.mxu0 %v420
    %v422 = vand.u32 %v315, 4294901760
    %v423 = vsub.f32 %v315, %v422
    %424 = vmatpush.msra.mxu0 %v423
    %v425 = vand.u32 %v314, 4294901760
    %v426 = vsub.f32 %v314, %v425
    %427 = vmatpush.msra.mxu0 %v426
    %v428 = vand.u32 %v313, 4294901760
    %v429 = vsub.f32 %v313, %v428
    %430 = vmatpush.msra.mxu0 %v429
    %v431 = vand.u32 %v320, 4294901760
    %v432 = vsub.f32 %v320, %v431
    %433 = vmatmul.f32.gmra.mxu0 %v432
    %v434 = vpop.f32.mrf.mxu0
    %v435 = vadd.f32 %v401, %v434
    %v436 = vand.u32 %v323, 4294901760
    %v437 = vsub.f32 %v323, %v436
    %438 = vmatmul.f32.gmra.mxu0 %v437
    %v439 = vpop.f32.mrf.mxu0
    %v440 = vadd.f32 %v405, %v439
    %441 = vdwg.mxu0
    %442 = vmatpush.msra.mxu0 0.0
    %443 = vmatpush.msra.mxu0 0.0
    %444 = vmatpush.msra.mxu0 0.0
    %445 = vmatpush.msra.mxu0 0.0
    %446 = vmatpush.msra.mxu0 0.0
    %447 = vmatpush.msra.mxu0 0.0
    %448 = vmatpush.msra.mxu0 0.0
    %449 = vmatpush.msra.mxu0 0.0
    %450 = vmatpush.msra.mxu0 0.0
    %451 = vmatpush.msra.mxu0 0.0
    %452 = vmatpush.msra.mxu0 0.0
    %453 = vmatpush.msra.mxu0 0.0
    %v454 = vand.u32 %v316, 4294901760
    %455 = vmatpush.msra.mxu0 %v454
    %v456 = vand.u32 %v315, 4294901760
    %457 = vmatpush.msra.mxu0 %v456
    %v458 = vand.u32 %v314, 4294901760
    %459 = vmatpush.msra.mxu0 %v458
    %v460 = vand.u32 %v313, 4294901760
    %461 = vmatpush.msra.mxu0 %v460
    %v462 = vand.u32 %v320, 4294901760
    %v463 = vsub.f32 %v320, %v462
    %v464 = vand.u32 %v463, 4294901760
    %465 = vmatmul.f32.gmra.mxu0 %v464
    %v466 = vpop.f32.mrf.mxu0
    %v467 = vadd.f32 %v435, %v466
    %v468 = vand.u32 %v323, 4294901760
    %v469 = vsub.f32 %v323, %v468
    %v470 = vand.u32 %v469, 4294901760
    %471 = vmatmul.f32.gmra.mxu0 %v470
    %v472 = vpop.f32.mrf.mxu0
    %v473 = vadd.f32 %v440, %v472
    %474 = vdwg.mxu0
    %475 = vmatpush.msra.mxu0 0.0
    %476 = vmatpush.msra.mxu0 0.0
    %477 = vmatpush.msra.mxu0 0.0
    %478 = vmatpush.msra.mxu0 0.0
    %479 = vmatpush.msra.mxu0 0.0
    %480 = vmatpush.msra.mxu0 0.0
    %481 = vmatpush.msra.mxu0 0.0
    %482 = vmatpush.msra.mxu0 0.0
    %483 = vmatpush.msra.mxu0 0.0
    %484 = vmatpush.msra.mxu0 0.0
    %485 = vmatpush.msra.mxu0 0.0
    %486 = vmatpush.msra.mxu0 0.0
    %v487 = vand.u32 %v316, 4294901760
    %v488 = vsub.f32 %v316, %v487
    %v489 = vand.u32 %v488, 4294901760
    %490 = vmatpush.msra.mxu0 %v489
    %v491 = vand.u32 %v315, 4294901760
    %v492 = vsub.f32 %v315, %v491
    %v493 = vand.u32 %v492, 4294901760
    %494 = vmatpush.msra.mxu0 %v493
    %v495 = vand.u32 %v314, 4294901760
    %v496 = vsub.f32 %v314, %v495
    %v497 = vand.u32 %v496, 4294901760
    %498 = vmatpush.msra.mxu0 %v497
    %v499 = vand.u32 %v313, 4294901760
    %v500 = vsub.f32 %v313, %v499
    %v501 = vand.u32 %v500, 4294901760
    %502 = vmatpush.msra.mxu0 %v501
    %v503 = vand.u32 %v320, 4294901760
    %504 = vmatmul.f32.gmra.mxu0 %v503
    %v505 = vpop.f32.mrf.mxu0
    %v506 = vadd.f32 %v467, %v505
    %v507 = vand.u32 %v323, 4294901760
    %508 = vmatmul.f32.gmra.mxu0 %v507
    %v509 = vpop.f32.mrf.mxu0
    %v510 = vadd.f32 %v473, %v509
    %511 = vdwg.mxu0
    %512 = vmatpush.msra.mxu0 0.0
    %513 = vmatpush.msra.mxu0 0.0
    %514 = vmatpush.msra.mxu0 0.0
    %515 = vmatpush.msra.mxu0 0.0
    %516 = vmatpush.msra.mxu0 0.0
    %517 = vmatpush.msra.mxu0 0.0
    %518 = vmatpush.msra.mxu0 0.0
    %519 = vmatpush.msra.mxu0 0.0
    %520 = vmatpush.msra.mxu0 0.0
    %521 = vmatpush.msra.mxu0 0.0
    %522 = vmatpush.msra.mxu0 0.0
    %523 = vmatpush.msra.mxu0 0.0
    %v524 = vand.u32 %v316, 4294901760
    %525 = vmatpush.msra.mxu0 %v524
    %v526 = vand.u32 %v315, 4294901760
    %527 = vmatpush.msra.mxu0 %v526
    %v528 = vand.u32 %v314, 4294901760
    %529 = vmatpush.msra.mxu0 %v528
    %v530 = vand.u32 %v313, 4294901760
    %531 = vmatpush.msra.mxu0 %v530
    %v532 = vand.u32 %v320, 4294901760
    %533 = vmatmul.f32.gmra.mxu0 %v532
    %v534 = vpop.f32.mrf.mxu0
    %v535 = vadd.f32 %v506, %v534
    %v536 = vand.u32 %v323, 4294901760
    %537 = vmatmul.f32.gmra.mxu0 %v536
    %v538 = vpop.f32.mrf.mxu0
    %v539 = vadd.f32 %v510, %v538
    %540 = vdwg.mxu0
    %v541 = vld [vmem:[#allocation6 + $0x40] sm:$0xff]
    %v542 = vld [vmem:[#allocation6 + $0x48] sm:$0xff]
    %v543 = vld [vmem:[#allocation6 + $0x50] sm:$0xff]
    %v544 = vld [vmem:[#allocation6 + $0x58] sm:$0xff]
    %v545 = vld [vmem:[#allocation7 + $0x2] sm:$0x1]
    %vm546 = vcmask 64512
    %v548 = vsel %vm546, %v307, 0
    %v551 = vsel %vm546, %v535, 0
    %553 = vmatpush.xpose.msra.mxu0 0.0
    %554 = vmatpush.xpose.msra.mxu0 0.0
    %555 = vmatpush.xpose.msra.mxu0 0.0
    %556 = vmatpush.xpose.msra.mxu0 0.0
    %557 = vmatpush.xpose.msra.mxu0 0.0
    %558 = vmatpush.xpose.msra.mxu0 0.0
    %559 = vmatpush.xpose.msra.mxu0 0.0
    %560 = vmatpush.xpose.msra.mxu0 0.0
    %561 = vmatpush.xpose.msra.mxu0 0.0
    %562 = vmatpush.xpose.msra.mxu0 0.0
    %563 = vmatpush.xpose.msra.mxu0 0.0
    %564 = vmatpush.xpose.msra.mxu0 0.0
    %565 = vmatpush.xpose.msra.mxu0 0.0
    %566 = vmatpush.xpose.msra.mxu0 0.0
    %567 = vmatpush.xpose.msra.mxu0 0.0
    %v568 = vand.u32 %v551, 4294901760
    %569 = vmatpush.xpose.msra.mxu0 %v568
    %v570 = vand.u32 %v548, 4294901760
    %v571 = vsub.f32 %v548, %v570
    %v572 = vand.u32 %v571, 4294901760
    %v573 = vsub.f32 %v571, %v572
    %v574 = vand.u32 %v573, 4294901760
    %575 = vmatmul.f32.gmra.mxu0 %v574
    %v576 = vpop.f32.mrf.mxu0
    %v577 = vadd.f32 0.0, %v576
    %578 = vdwg.mxu0
    %579 = vmatpush.xpose.msra.mxu0 0.0
    %580 = vmatpush.xpose.msra.mxu0 0.0
    %581 = vmatpush.xpose.msra.mxu0 0.0
    %582 = vmatpush.xpose.msra.mxu0 0.0
    %583 = vmatpush.xpose.msra.mxu0 0.0
    %584 = vmatpush.xpose.msra.mxu0 0.0
    %585 = vmatpush.xpose.msra.mxu0 0.0
    %586 = vmatpush.xpose.msra.mxu0 0.0
    %587 = vmatpush.xpose.msra.mxu0 0.0
    %588 = vmatpush.xpose.msra.mxu0 0.0
    %589 = vmatpush.xpose.msra.mxu0 0.0
    %590 = vmatpush.xpose.msra.mxu0 0.0
    %591 = vmatpush.xpose.msra.mxu0 0.0
    %592 = vmatpush.xpose.msra.mxu0 0.0
    %593 = vmatpush.xpose.msra.mxu0 0.0
    %v594 = vand.u32 %v551, 4294901760
    %v595 = vsub.f32 %v551, %v594
    %v596 = vand.u32 %v595, 4294901760
    %v597 = vsub.f32 %v595, %v596
    %v598 = vand.u32 %v597, 4294901760
    %599 = vmatpush.xpose.msra.mxu0 %v598
    %v600 = vand.u32 %v548, 4294901760
    %601 = vmatmul.f32.gmra.mxu0 %v600
    %v602 = vpop.f32.mrf.mxu0
    %v603 = vadd.f32 %v577, %v602
    %604 = vdwg.mxu0
    %605 = vmatpush.xpose.msra.mxu0 0.0
    %606 = vmatpush.xpose.msra.mxu0 0.0
    %607 = vmatpush.xpose.msra.mxu0 0.0
    %608 = vmatpush.xpose.msra.mxu0 0.0
    %609 = vmatpush.xpose.msra.mxu0 0.0
    %610 = vmatpush.xpose.msra.mxu0 0.0
    %611 = vmatpush.xpose.msra.mxu0 0.0
    %612 = vmatpush.xpose.msra.mxu0 0.0
    %613 = vmatpush.xpose.msra.mxu0 0.0
    %614 = vmatpush.xpose.msra.mxu0 0.0
    %615 = vmatpush.xpose.msra.mxu0 0.0
    %616 = vmatpush.xpose.msra.mxu0 0.0
    %617 = vmatpush.xpose.msra.mxu0 0.0
    %618 = vmatpush.xpose.msra.mxu0 0.0
    %619 = vmatpush.xpose.msra.mxu0 0.0
    %v620 = vand.u32 %v551, 4294901760
    %v621 = vsub.f32 %v551, %v620
    %622 = vmatpush.xpose.msra.mxu0 %v621
    %v623 = vand.u32 %v548, 4294901760
    %v624 = vsub.f32 %v548, %v623
    %625 = vmatmul.f32.gmra.mxu0 %v624
    %v626 = vpop.f32.mrf.mxu0
    %v627 = vadd.f32 %v603, %v626
    %628 = vdwg.mxu0
    %629 = vmatpush.xpose.msra.mxu0 0.0
    %630 = vmatpush.xpose.msra.mxu0 0.0
    %631 = vmatpush.xpose.msra.mxu0 0.0
    %632 = vmatpush.xpose.msra.mxu0 0.0
    %633 = vmatpush.xpose.msra.mxu0 0.0
    %634 = vmatpush.xpose.msra.mxu0 0.0
    %635 = vmatpush.xpose.msra.mxu0 0.0
    %636 = vmatpush.xpose.msra.mxu0 0.0
    %637 = vmatpush.xpose.msra.mxu0 0.0
    %638 = vmatpush.xpose.msra.mxu0 0.0
    %639 = vmatpush.xpose.msra.mxu0 0.0
    %640 = vmatpush.xpose.msra.mxu0 0.0
    %641 = vmatpush.xpose.msra.mxu0 0.0
    %642 = vmatpush.xpose.msra.mxu0 0.0
    %643 = vmatpush.xpose.msra.mxu0 0.0
    %v644 = vand.u32 %v551, 4294901760
    %645 = vmatpush.xpose.msra.mxu0 %v644
    %v646 = vand.u32 %v548, 4294901760
    %v647 = vsub.f32 %v548, %v646
    %v648 = vand.u32 %v647, 4294901760
    %649 = vmatmul.f32.gmra.mxu0 %v648
    %v650 = vpop.f32.mrf.mxu0
    %v651 = vadd.f32 %v627, %v650
    %652 = vdwg.mxu0
    %653 = vmatpush.xpose.msra.mxu0 0.0
    %654 = vmatpush.xpose.msra.mxu0 0.0
    %655 = vmatpush.xpose.msra.mxu0 0.0
    %656 = vmatpush.xpose.msra.mxu0 0.0
    %657 = vmatpush.xpose.msra.mxu0 0.0
    %658 = vmatpush.xpose.msra.mxu0 0.0
    %659 = vmatpush.xpose.msra.mxu0 0.0
    %660 = vmatpush.xpose.msra.mxu0 0.0
    %661 = vmatpush.xpose.msra.mxu0 0.0
    %662 = vmatpush.xpose.msra.mxu0 0.0
    %663 = vmatpush.xpose.msra.mxu0 0.0
    %664 = vmatpush.xpose.msra.mxu0 0.0
    %665 = vmatpush.xpose.msra.mxu0 0.0
    %666 = vmatpush.xpose.msra.mxu0 0.0
    %667 = vmatpush.xpose.msra.mxu0 0.0
    %v668 = vand.u32 %v551, 4294901760
    %v669 = vsub.f32 %v551, %v668
    %v670 = vand.u32 %v669, 4294901760
    %671 = vmatpush.xpose.msra.mxu0 %v670
    %v672 = vand.u32 %v548, 4294901760
    %673 = vmatmul.f32.gmra.mxu0 %v672
    %v674 = vpop.f32.mrf.mxu0
    %v675 = vadd.f32 %v651, %v674
    %676 = vdwg.mxu0
    %677 = vmatpush.xpose.msra.mxu0 0.0
    %678 = vmatpush.xpose.msra.mxu0 0.0
    %679 = vmatpush.xpose.msra.mxu0 0.0
    %680 = vmatpush.xpose.msra.mxu0 0.0
    %681 = vmatpush.xpose.msra.mxu0 0.0
    %682 = vmatpush.xpose.msra.mxu0 0.0
    %683 = vmatpush.xpose.msra.mxu0 0.0
    %684 = vmatpush.xpose.msra.mxu0 0.0
    %685 = vmatpush.xpose.msra.mxu0 0.0
    %686 = vmatpush.xpose.msra.mxu0 0.0
    %687 = vmatpush.xpose.msra.mxu0 0.0
    %688 = vmatpush.xpose.msra.mxu0 0.0
    %689 = vmatpush.xpose.msra.mxu0 0.0
    %690 = vmatpush.xpose.msra.mxu0 0.0
    %691 = vmatpush.xpose.msra.mxu0 0.0
    %v692 = vand.u32 %v551, 4294901760
    %693 = vmatpush.xpose.msra.mxu0 %v692
    %v694 = vand.u32 %v548, 4294901760
    %695 = vmatmul.f32.gmra.mxu0 %v694
    %v696 = vpop.f32.mrf.mxu0
    %v697 = vadd.f32 %v675, %v696
    %698 = vdwg.mxu0
    %v699 = vmul.f32 %v697, 0.35355338
    %v700 = vsel %vm546, %v699, -inf
    %701 = vmax.xlane.f32.xlu0 %v700
    %v702 = vpop.xlane.xlu0 %701
    %v703 = vsub.f32 %v699, %v702
    %v704 = vmul.f32 %v703, 1.442695
    %v705 = vpow.pop %v704
    %v706 = vsel %vm546, %v705, 0.0
    %707 = vadd.xlane.f32.xlu0 %v706
    %v708 = vpop.xlane.xlu0 %707
    %v709 = vrcp.pop %v708
    %v710 = vmul.f32 %v708, %v709
    %v711 = vsub.f32 1.0, %v710
    %v712 = vmul.f32 %v709, %v711
    %v713 = vadd.f32 %v709, %v712
    %vm714 = vweird.f32 %v708
    %vm715 = vweird.f32 %v709
    %vm716 = vmor %vm714, %vm715
    %v717 = vsel %vm716, %v709, %v713
    %v718 = vand.u32 2147483647, %v708
    %vm719 = vcmp.eq.f32.partialorder %v718, 8.507059e+37
    %v720 = vand.u32 %v708, 2147483648
    %v721 = vor.u32 1.1754944e-38, %v720
    %v722 = vsel %vm719, %v721, %v717
    %v723 = vmul.f32 %v705, %v722
    %724 = vrot.lane.b32.xlu0 %v535, 96
    %v725 = vpop.permute.xlu0 %724
    %v728 = vsel %vm546, %v723, 0
    %730 = vmatpush.msra.mxu0 0.0
    %731 = vmatpush.msra.mxu0 0.0
    %732 = vmatpush.msra.mxu0 0.0
    %733 = vmatpush.msra.mxu0 0.0
    %734 = vmatpush.msra.mxu0 0.0
    %735 = vmatpush.msra.mxu0 0.0
    %736 = vmatpush.msra.mxu0 0.0
    %737 = vmatpush.msra.mxu0 0.0
    %738 = vmatpush.msra.mxu0 0.0
    %739 = vmatpush.msra.mxu0 0.0
    %740 = vmatpush.msra.mxu0 0.0
    %741 = vmatpush.msra.mxu0 0.0
    %742 = vmatpush.msra.mxu0 0.0
    %743 = vmatpush.msra.mxu0 0.0
    %744 = vmatpush.msra.mxu0 0.0
    %v745 = vand.u32 %v725, 4294901760
    %746 = vmatpush.msra.mxu0 %v745
    %v747 = vand.u32 %v728, 4294901760
    %v748 = vsub.f32 %v728, %v747
    %v749 = vand.u32 %v748, 4294901760
    %v750 = vsub.f32 %v748, %v749
    %v751 = vand.u32 %v750, 4294901760
    %752 = vmatmul.f32.gmra.mxu0 %v751
    %v753 = vpop.f32.mrf.mxu0
    %v754 = vadd.f32 0.0, %v753
    %755 = vdwg.mxu0
    %756 = vmatpush.msra.mxu0 0.0
    %757 = vmatpush.msra.mxu0 0.0
    %758 = vmatpush.msra.mxu0 0.0
    %759 = vmatpush.msra.mxu0 0.0
    %760 = vmatpush.msra.mxu0 0.0
    %761 = vmatpush.msra.mxu0 0.0
    %762 = vmatpush.msra.mxu0 0.0
    %763 = vmatpush.msra.mxu0 0.0
    %764 = vmatpush.msra.mxu0 0.0
    %765 = vmatpush.msra.mxu0 0.0
    %766 = vmatpush.msra.mxu0 0.0
    %767 = vmatpush.msra.mxu0 0.0
    %768 = vmatpush.msra.mxu0 0.0
    %769 = vmatpush.msra.mxu0 0.0
    %770 = vmatpush.msra.mxu0 0.0
    %v771 = vand.u32 %v725, 4294901760
    %v772 = vsub.f32 %v725, %v771
    %v773 = vand.u32 %v772, 4294901760
    %v774 = vsub.f32 %v772, %v773
    %v775 = vand.u32 %v774, 4294901760
    %776 = vmatpush.msra.mxu0 %v775
    %v777 = vand.u32 %v728, 4294901760
    %778 = vmatmul.f32.gmra.mxu0 %v777
    %v779 = vpop.f32.mrf.mxu0
    %v780 = vadd.f32 %v754, %v779
    %781 = vdwg.mxu0
    %782 = vmatpush.msra.mxu0 0.0
    %783 = vmatpush.msra.mxu0 0.0
    %784 = vmatpush.msra.mxu0 0.0
    %785 = vmatpush.msra.mxu0 0.0
    %786 = vmatpush.msra.mxu0 0.0
    %787 = vmatpush.msra.mxu0 0.0
    %788 = vmatpush.msra.mxu0 0.0
    %789 = vmatpush.msra.mxu0 0.0
    %790 = vmatpush.msra.mxu0 0.0
    %791 = vmatpush.msra.mxu0 0.0
    %792 = vmatpush.msra.mxu0 0.0
    %793 = vmatpush.msra.mxu0 0.0
    %794 = vmatpush.msra.mxu0 0.0
    %795 = vmatpush.msra.mxu0 0.0
    %796 = vmatpush.msra.mxu0 0.0
    %v797 = vand.u32 %v725, 4294901760
    %v798 = vsub.f32 %v725, %v797
    %799 = vmatpush.msra.mxu0 %v798
    %v800 = vand.u32 %v728, 4294901760
    %v801 = vsub.f32 %v728, %v800
    %802 = vmatmul.f32.gmra.mxu0 %v801
    %v803 = vpop.f32.mrf.mxu0
    %v804 = vadd.f32 %v780, %v803
    %805 = vdwg.mxu0
    %806 = vmatpush.msra.mxu0 0.0
    %807 = vmatpush.msra.mxu0 0.0
    %808 = vmatpush.msra.mxu0 0.0
    %809 = vmatpush.msra.mxu0 0.0
    %810 = vmatpush.msra.mxu0 0.0
    %811 = vmatpush.msra.mxu0 0.0
    %812 = vmatpush.msra.mxu0 0.0
    %813 = vmatpush.msra.mxu0 0.0
    %814 = vmatpush.msra.mxu0 0.0
    %815 = vmatpush.msra.mxu0 0.0
    %816 = vmatpush.msra.mxu0 0.0
    %817 = vmatpush.msra.mxu0 0.0
    %818 = vmatpush.msra.mxu0 0.0
    %819 = vmatpush.msra.mxu0 0.0
    %820 = vmatpush.msra.mxu0 0.0
    %v821 = vand.u32 %v725, 4294901760
    %822 = vmatpush.msra.mxu0 %v821
    %v823 = vand.u32 %v728, 4294901760
    %v824 = vsub.f32 %v728, %v823
    %v825 = vand.u32 %v824, 4294901760
    %826 = vmatmul.f32.gmra.mxu0 %v825
    %v827 = vpop.f32.mrf.mxu0
    %v828 = vadd.f32 %v804, %v827
    %829 = vdwg.mxu0
    %830 = vmatpush.msra.mxu0 0.0
    %831 = vmatpush.msra.mxu0 0.0
    %832 = vmatpush.msra.mxu0 0.0
    %833 = vmatpush.msra.mxu0 0.0
    %834 = vmatpush.msra.mxu0 0.0
    %835 = vmatpush.msra.mxu0 0.0
    %836 = vmatpush.msra.mxu0 0.0
    %837 = vmatpush.msra.mxu0 0.0
    %838 = vmatpush.msra.mxu0 0.0
    %839 = vmatpush.msra.mxu0 0.0
    %840 = vmatpush.msra.mxu0 0.0
    %841 = vmatpush.msra.mxu0 0.0
    %842 = vmatpush.msra.mxu0 0.0
    %843 = vmatpush.msra.mxu0 0.0
    %844 = vmatpush.msra.mxu0 0.0
    %v845 = vand.u32 %v725, 4294901760
    %v846 = vsub.f32 %v725, %v845
    %v847 = vand.u32 %v846, 4294901760
    %848 = vmatpush.msra.mxu0 %v847
    %v849 = vand.u32 %v728, 4294901760
    %850 = vmatmul.f32.gmra.mxu0 %v849
    %v851 = vpop.f32.mrf.mxu0
    %v852 = vadd.f32 %v828, %v851
    %853 = vdwg.mxu0
    %854 = vmatpush.msra.mxu0 0.0
    %855 = vmatpush.msra.mxu0 0.0
    %856 = vmatpush.msra.mxu0 0.0
    %857 = vmatpush.msra.mxu0 0.0
    %858 = vmatpush.msra.mxu0 0.0
    %859 = vmatpush.msra.mxu0 0.0
    %860 = vmatpush.msra.mxu0 0.0
    %861 = vmatpush.msra.mxu0 0.0
    %862 = vmatpush.msra.mxu0 0.0
    %863 = vmatpush.msra.mxu0 0.0
    %864 = vmatpush.msra.mxu0 0.0
    %865 = vmatpush.msra.mxu0 0.0
    %866 = vmatpush.msra.mxu0 0.0
    %867 = vmatpush.msra.mxu0 0.0
    %868 = vmatpush.msra.mxu0 0.0
    %v869 = vand.u32 %v725, 4294901760
    %870 = vmatpush.msra.mxu0 %v869
    %v871 = vand.u32 %v728, 4294901760
    %872 = vmatmul.f32.gmra.mxu0 %v871
    %v873 = vpop.f32.mrf.mxu0
    %v874 = vadd.f32 %v852, %v873
    %875 = vdwg.mxu0
    %876 = vrot.lane.b32.xlu0 %v307, 120
    %v877 = vpop.permute.xlu0 %876
    %878 = vrot.lane.b32.xlu0 %v535, 120
    %v879 = vpop.permute.xlu0 %878
    %v880 = vsel %vm546, %v877, 0
    %v882 = vsel %vm546, %v879, 0
    %884 = vmatpush.xpose.msra.mxu0 0.0
    %885 = vmatpush.xpose.msra.mxu0 0.0
    %886 = vmatpush.xpose.msra.mxu0 0.0
    %887 = vmatpush.xpose.msra.mxu0 0.0
    %888 = vmatpush.xpose.msra.mxu0 0.0
    %889 = vmatpush.xpose.msra.mxu0 0.0
    %890 = vmatpush.xpose.msra.mxu0 0.0
    %891 = vmatpush.xpose.msra.mxu0 0.0
    %892 = vmatpush.xpose.msra.mxu0 0.0
    %893 = vmatpush.xpose.msra.mxu0 0.0
    %894 = vmatpush.xpose.msra.mxu0 0.0
    %895 = vmatpush.xpose.msra.mxu0 0.0
    %896 = vmatpush.xpose.msra.mxu0 0.0
    %897 = vmatpush.xpose.msra.mxu0 0.0
    %898 = vmatpush.xpose.msra.mxu0 0.0
    %v899 = vand.u32 %v882, 4294901760
    %900 = vmatpush.xpose.msra.mxu0 %v899
    %v901 = vand.u32 %v880, 4294901760
    %v902 = vsub.f32 %v880, %v901
    %v903 = vand.u32 %v902, 4294901760
    %v904 = vsub.f32 %v902, %v903
    %v905 = vand.u32 %v904, 4294901760
    %906 = vmatmul.f32.gmra.mxu0 %v905
    %v907 = vpop.f32.mrf.mxu0
    %v908 = vadd.f32 0.0, %v907
    %909 = vdwg.mxu0
    %910 = vmatpush.xpose.msra.mxu0 0.0
    %911 = vmatpush.xpose.msra.mxu0 0.0
    %912 = vmatpush.xpose.msra.mxu0 0.0
    %913 = vmatpush.xpose.msra.mxu0 0.0
    %914 = vmatpush.xpose.msra.mxu0 0.0
    %915 = vmatpush.xpose.msra.mxu0 0.0
    %916 = vmatpush.xpose.msra.mxu0 0.0
    %917 = vmatpush.xpose.msra.mxu0 0.0
    %918 = vmatpush.xpose.msra.mxu0 0.0
    %919 = vmatpush.xpose.msra.mxu0 0.0
    %920 = vmatpush.xpose.msra.mxu0 0.0
    %921 = vmatpush.xpose.msra.mxu0 0.0
    %922 = vmatpush.xpose.msra.mxu0 0.0
    %923 = vmatpush.xpose.msra.mxu0 0.0
    %924 = vmatpush.xpose.msra.mxu0 0.0
    %v925 = vand.u32 %v882, 4294901760
    %v926 = vsub.f32 %v882, %v925
    %v927 = vand.u32 %v926, 4294901760
    %v928 = vsub.f32 %v926, %v927
    %v929 = vand.u32 %v928, 4294901760
    %930 = vmatpush.xpose.msra.mxu0 %v929
    %v931 = vand.u32 %v880, 4294901760
    %932 = vmatmul.f32.gmra.mxu0 %v931
    %v933 = vpop.f32.mrf.mxu0
    %v934 = vadd.f32 %v908, %v933
    %935 = vdwg.mxu0
    %936 = vmatpush.xpose.msra.mxu0 0.0
    %937 = vmatpush.xpose.msra.mxu0 0.0
    %938 = vmatpush.xpose.msra.mxu0 0.0
    %939 = vmatpush.xpose.msra.mxu0 0.0
    %940 = vmatpush.xpose.msra.mxu0 0.0
    %941 = vmatpush.xpose.msra.mxu0 0.0
    %942 = vmatpush.xpose.msra.mxu0 0.0
    %943 = vmatpush.xpose.msra.mxu0 0.0
    %944 = vmatpush.xpose.msra.mxu0 0.0
    %945 = vmatpush.xpose.msra.mxu0 0.0
    %946 = vmatpush.xpose.msra.mxu0 0.0
    %947 = vmatpush.xpose.msra.mxu0 0.0
    %948 = vmatpush.xpose.msra.mxu0 0.0
    %949 = vmatpush.xpose.msra.mxu0 0.0
    %950 = vmatpush.xpose.msra.mxu0 0.0
    %v951 = vand.u32 %v882, 4294901760
    %v952 = vsub.f32 %v882, %v951
    %953 = vmatpush.xpose.msra.mxu0 %v952
    %v954 = vand.u32 %v880, 4294901760
    %v955 = vsub.f32 %v880, %v954
    %956 = vmatmul.f32.gmra.mxu0 %v955
    %v957 = vpop.f32.mrf.mxu0
    %v958 = vadd.f32 %v934, %v957
    %959 = vdwg.mxu0
    %960 = vmatpush.xpose.msra.mxu0 0.0
    %961 = vmatpush.xpose.msra.mxu0 0.0
    %962 = vmatpush.xpose.msra.mxu0 0.0
    %963 = vmatpush.xpose.msra.mxu0 0.0
    %964 = vmatpush.xpose.msra.mxu0 0.0
    %965 = vmatpush.xpose.msra.mxu0 0.0
    %966 = vmatpush.xpose.msra.mxu0 0.0
    %967 = vmatpush.xpose.msra.mxu0 0.0
    %968 = vmatpush.xpose.msra.mxu0 0.0
    %969 = vmatpush.xpose.msra.mxu0 0.0
    %970 = vmatpush.xpose.msra.mxu0 0.0
    %971 = vmatpush.xpose.msra.mxu0 0.0
    %972 = vmatpush.xpose.msra.mxu0 0.0
    %973 = vmatpush.xpose.msra.mxu0 0.0
    %974 = vmatpush.xpose.msra.mxu0 0.0
    %v975 = vand.u32 %v882, 4294901760
    %976 = vmatpush.xpose.msra.mxu0 %v975
    %v977 = vand.u32 %v880, 4294901760
    %v978 = vsub.f32 %v880, %v977
    %v979 = vand.u32 %v978, 4294901760
    %980 = vmatmul.f32.gmra.mxu0 %v979
    %v981 = vpop.f32.mrf.mxu0
    %v982 = vadd.f32 %v958, %v981
    %983 = vdwg.mxu0
    %984 = vmatpush.xpose.msra.mxu0 0.0
    %985 = vmatpush.xpose.msra.mxu0 0.0
    %986 = vmatpush.xpose.msra.mxu0 0.0
    %987 = vmatpush.xpose.msra.mxu0 0.0
    %988 = vmatpush.xpose.msra.mxu0 0.0
    %989 = vmatpush.xpose.msra.mxu0 0.0
    %990 = vmatpush.xpose.msra.mxu0 0.0
    %991 = vmatpush.xpose.msra.mxu0 0.0
    %992 = vmatpush.xpose.msra.mxu0 0.0
    %993 = vmatpush.xpose.msra.mxu0 0.0
    %994 = vmatpush.xpose.msra.mxu0 0.0
    %995 = vmatpush.xpose.msra.mxu0 0.0
    %996 = vmatpush.xpose.msra.mxu0 0.0
    %997 = vmatpush.xpose.msra.mxu0 0.0
    %998 = vmatpush.xpose.msra.mxu0 0.0
    %v999 = vand.u32 %v882, 4294901760
    %v1000 = vsub.f32 %v882, %v999
    %v1001 = vand.u32 %v1000, 4294901760
    %1002 = vmatpush.xpose.msra.mxu0 %v1001
    %v1003 = vand.u32 %v880, 4294901760
    %1004 = vmatmul.f32.gmra.mxu0 %v1003
    %v1005 = vpop.f32.mrf.mxu0
    %v1006 = vadd.f32 %v982, %v1005
    %1007 = vdwg.mxu0
    %1008 = vmatpush.xpose.msra.mxu0 0.0
    %1009 = vmatpush.xpose.msra.mxu0 0.0
    %1010 = vmatpush.xpose.msra.mxu0 0.0
    %1011 = vmatpush.xpose.msra.mxu0 0.0
    %1012 = vmatpush.xpose.msra.mxu0 0.0
    %1013 = vmatpush.xpose.msra.mxu0 0.0
    %1014 = vmatpush.xpose.msra.mxu0 0.0
    %1015 = vmatpush.xpose.msra.mxu0 0.0
    %1016 = vmatpush.xpose.msra.mxu0 0.0
    %1017 = vmatpush.xpose.msra.mxu0 0.0
    %1018 = vmatpush.xpose.msra.mxu0 0.0
    %1019 = vmatpush.xpose.msra.mxu0 0.0
    %1020 = vmatpush.xpose.msra.mxu0 0.0
    %1021 = vmatpush.xpose.msra.mxu0 0.0
    %1022 = vmatpush.xpose.msra.mxu0 0.0
    %v1023 = vand.u32 %v882, 4294901760
    %1024 = vmatpush.xpose.msra.mxu0 %v1023
    %v1025 = vand.u32 %v880, 4294901760
    %1026 = vmatmul.f32.gmra.mxu0 %v1025
    %v1027 = vpop.f32.mrf.mxu0
    %v1028 = vadd.f32 %v1006, %v1027
    %1029 = vdwg.mxu0
    %v1030 = vmul.f32 %v1028, 0.35355338
    %v1031 = vsel %vm546, %v1030, -inf
    %1032 = vmax.xlane.f32.xlu0 %v1031
    %v1033 = vpop.xlane.xlu0 %1032
    %v1034 = vsub.f32 %v1030, %v1033
    %v1035 = vmul.f32 %v1034, 1.442695
    %v1036 = vpow.pop %v1035
    %v1037 = vsel %vm546, %v1036, 0.0
    %1038 = vadd.xlane.f32.xlu0 %v1037
    %v1039 = vpop.xlane.xlu0 %1038
    %v1040 = vrcp.pop %v1039
    %v1041 = vmul.f32 %v1039, %v1040
    %v1042 = vsub.f32 1.0, %v1041
    %v1043 = vmul.f32 %v1040, %v1042
    %v1044 = vadd.f32 %v1040, %v1043
    %vm1045 = vweird.f32 %v1039
    %vm1046 = vweird.f32 %v1040
    %vm1047 = vmor %vm1045, %vm1046
    %v1048 = vsel %vm1047, %v1040, %v1044
    %v1049 = vand.u32 2147483647, %v1039
    %vm1050 = vcmp.eq.f32.partialorder %v1049, 8.507059e+37
    %v1051 = vand.u32 %v1039, 2147483648
    %v1052 = vor.u32 1.1754944e-38, %v1051
    %v1053 = vsel %vm1050, %v1052, %v1048
    %v1054 = vmul.f32 %v1036, %v1053
    %1055 = vrot.lane.b32.xlu0 %v535, 88
    %v1056 = vpop.permute.xlu0 %1055
    %v1059 = vsel %vm546, %v1054, 0
    %1061 = vmatpush.msra.mxu0 0.0
    %1062 = vmatpush.msra.mxu0 0.0
    %1063 = vmatpush.msra.mxu0 0.0
    %1064 = vmatpush.msra.mxu0 0.0
    %1065 = vmatpush.msra.mxu0 0.0
    %1066 = vmatpush.msra.mxu0 0.0
    %1067 = vmatpush.msra.mxu0 0.0
    %1068 = vmatpush.msra.mxu0 0.0
    %1069 = vmatpush.msra.mxu0 0.0
    %1070 = vmatpush.msra.mxu0 0.0
    %1071 = vmatpush.msra.mxu0 0.0
    %1072 = vmatpush.msra.mxu0 0.0
    %1073 = vmatpush.msra.mxu0 0.0
    %1074 = vmatpush.msra.mxu0 0.0
    %1075 = vmatpush.msra.mxu0 0.0
    %v1076 = vand.u32 %v1056, 4294901760
    %1077 = vmatpush.msra.mxu0 %v1076
    %v1078 = vand.u32 %v1059, 4294901760
    %v1079 = vsub.f32 %v1059, %v1078
    %v1080 = vand.u32 %v1079, 4294901760
    %v1081 = vsub.f32 %v1079, %v1080
    %v1082 = vand.u32 %v1081, 4294901760
    %1083 = vmatmul.f32.gmra.mxu0 %v1082
    %v1084 = vpop.f32.mrf.mxu0
    %v1085 = vadd.f32 0.0, %v1084
    %1086 = vdwg.mxu0
    %1087 = vmatpush.msra.mxu0 0.0
    %1088 = vmatpush.msra.mxu0 0.0
    %1089 = vmatpush.msra.mxu0 0.0
    %1090 = vmatpush.msra.mxu0 0.0
    %1091 = vmatpush.msra.mxu0 0.0
    %1092 = vmatpush.msra.mxu0 0.0
    %1093 = vmatpush.msra.mxu0 0.0
    %1094 = vmatpush.msra.mxu0 0.0
    %1095 = vmatpush.msra.mxu0 0.0
    %1096 = vmatpush.msra.mxu0 0.0
    %1097 = vmatpush.msra.mxu0 0.0
    %1098 = vmatpush.msra.mxu0 0.0
    %1099 = vmatpush.msra.mxu0 0.0
    %1100 = vmatpush.msra.mxu0 0.0
    %1101 = vmatpush.msra.mxu0 0.0
    %v1102 = vand.u32 %v1056, 4294901760
    %v1103 = vsub.f32 %v1056, %v1102
    %v1104 = vand.u32 %v1103, 4294901760
    %v1105 = vsub.f32 %v1103, %v1104
    %v1106 = vand.u32 %v1105, 4294901760
    %1107 = vmatpush.msra.mxu0 %v1106
    %v1108 = vand.u32 %v1059, 4294901760
    %1109 = vmatmul.f32.gmra.mxu0 %v1108
    %v1110 = vpop.f32.mrf.mxu0
    %v1111 = vadd.f32 %v1085, %v1110
    %1112 = vdwg.mxu0
    %1113 = vmatpush.msra.mxu0 0.0
    %1114 = vmatpush.msra.mxu0 0.0
    %1115 = vmatpush.msra.mxu0 0.0
    %1116 = vmatpush.msra.mxu0 0.0
    %1117 = vmatpush.msra.mxu0 0.0
    %1118 = vmatpush.msra.mxu0 0.0
    %1119 = vmatpush.msra.mxu0 0.0
    %1120 = vmatpush.msra.mxu0 0.0
    %1121 = vmatpush.msra.mxu0 0.0
    %1122 = vmatpush.msra.mxu0 0.0
    %1123 = vmatpush.msra.mxu0 0.0
    %1124 = vmatpush.msra.mxu0 0.0
    %1125 = vmatpush.msra.mxu0 0.0
    %1126 = vmatpush.msra.mxu0 0.0
    %1127 = vmatpush.msra.mxu0 0.0
    %v1128 = vand.u32 %v1056, 4294901760
    %v1129 = vsub.f32 %v1056, %v1128
    %1130 = vmatpush.msra.mxu0 %v1129
    %v1131 = vand.u32 %v1059, 4294901760
    %v1132 = vsub.f32 %v1059, %v1131
    %1133 = vmatmul.f32.gmra.mxu0 %v1132
    %v1134 = vpop.f32.mrf.mxu0
    %v1135 = vadd.f32 %v1111, %v1134
    %1136 = vdwg.mxu0
    %1137 = vmatpush.msra.mxu0 0.0
    %1138 = vmatpush.msra.mxu0 0.0
    %1139 = vmatpush.msra.mxu0 0.0
    %1140 = vmatpush.msra.mxu0 0.0
    %1141 = vmatpush.msra.mxu0 0.0
    %1142 = vmatpush.msra.mxu0 0.0
    %1143 = vmatpush.msra.mxu0 0.0
    %1144 = vmatpush.msra.mxu0 0.0
    %1145 = vmatpush.msra.mxu0 0.0
    %1146 = vmatpush.msra.mxu0 0.0
    %1147 = vmatpush.msra.mxu0 0.0
    %1148 = vmatpush.msra.mxu0 0.0
    %1149 = vmatpush.msra.mxu0 0.0
    %1150 = vmatpush.msra.mxu0 0.0
    %1151 = vmatpush.msra.mxu0 0.0
    %v1152 = vand.u32 %v1056, 4294901760
    %1153 = vmatpush.msra.mxu0 %v1152
    %v1154 = vand.u32 %v1059, 4294901760
    %v1155 = vsub.f32 %v1059, %v1154
    %v1156 = vand.u32 %v1155, 4294901760
    %1157 = vmatmul.f32.gmra.mxu0 %v1156
    %v1158 = vpop.f32.mrf.mxu0
    %v1159 = vadd.f32 %v1135, %v1158
    %1160 = vdwg.mxu0
    %1161 = vmatpush.msra.mxu0 0.0
    %1162 = vmatpush.msra.mxu0 0.0
    %1163 = vmatpush.msra.mxu0 0.0
    %1164 = vmatpush.msra.mxu0 0.0
    %1165 = vmatpush.msra.mxu0 0.0
    %1166 = vmatpush.msra.mxu0 0.0
    %1167 = vmatpush.msra.mxu0 0.0
    %1168 = vmatpush.msra.mxu0 0.0
    %1169 = vmatpush.msra.mxu0 0.0
    %1170 = vmatpush.msra.mxu0 0.0
    %1171 = vmatpush.msra.mxu0 0.0
    %1172 = vmatpush.msra.mxu0 0.0
    %1173 = vmatpush.msra.mxu0 0.0
    %1174 = vmatpush.msra.mxu0 0.0
    %1175 = vmatpush.msra.mxu0 0.0
    %v1176 = vand.u32 %v1056, 4294901760
    %v1177 = vsub.f32 %v1056, %v1176
    %v1178 = vand.u32 %v1177, 4294901760
    %1179 = vmatpush.msra.mxu0 %v1178
    %v1180 = vand.u32 %v1059, 4294901760
    %1181 = vmatmul.f32.gmra.mxu0 %v1180
    %v1182 = vpop.f32.mrf.mxu0
    %v1183 = vadd.f32 %v1159, %v1182
    %1184 = vdwg.mxu0
    %1185 = vmatpush.msra.mxu0 0.0
    %1186 = vmatpush.msra.mxu0 0.0
    %1187 = vmatpush.msra.mxu0 0.0
    %1188 = vmatpush.msra.mxu0 0.0
    %1189 = vmatpush.msra.mxu0 0.0
    %1190 = vmatpush.msra.mxu0 0.0
    %1191 = vmatpush.msra.mxu0 0.0
    %1192 = vmatpush.msra.mxu0 0.0
    %1193 = vmatpush.msra.mxu0 0.0
    %1194 = vmatpush.msra.mxu0 0.0
    %1195 = vmatpush.msra.mxu0 0.0
    %1196 = vmatpush.msra.mxu0 0.0
    %1197 = vmatpush.msra.mxu0 0.0
    %1198 = vmatpush.msra.mxu0 0.0
    %1199 = vmatpush.msra.mxu0 0.0
    %v1200 = vand.u32 %v1056, 4294901760
    %1201 = vmatpush.msra.mxu0 %v1200
    %v1202 = vand.u32 %v1059, 4294901760
    %1203 = vmatmul.f32.gmra.mxu0 %v1202
    %v1204 = vpop.f32.mrf.mxu0
    %v1205 = vadd.f32 %v1183, %v1204
    %1206 = vdwg.mxu0
    %v1208 = vsel %vm546, %v1205, 0
    %1210 = vmatpush.msra.mxu0 0.0
    %1211 = vmatpush.msra.mxu0 0.0
    %1212 = vmatpush.msra.mxu0 0.0
    %1213 = vmatpush.msra.mxu0 0.0
    %1214 = vmatpush.msra.mxu0 0.0
    %1215 = vmatpush.msra.mxu0 0.0
    %1216 = vmatpush.msra.mxu0 0.0
    %1217 = vmatpush.msra.mxu0 0.0
    %1218 = vmatpush.msra.mxu0 0.0
    %1219 = vmatpush.msra.mxu0 0.0
    %1220 = vmatpush.msra.mxu0 0.0
    %1221 = vmatpush.msra.mxu0 0.0
    %1222 = vmatpush.msra.mxu0 0.0
    %1223 = vmatpush.msra.mxu0 0.0
    %1224 = vmatpush.msra.mxu0 0.0
    %v1225 = vand.u32 %v542, 4294901760
    %1226 = vmatpush.msra.mxu0 %v1225
    %v1227 = vand.u32 %v1208, 4294901760
    %v1228 = vsub.f32 %v1208, %v1227
    %v1229 = vand.u32 %v1228, 4294901760
    %v1230 = vsub.f32 %v1228, %v1229
    %v1231 = vand.u32 %v1230, 4294901760
    %1232 = vmatmul.f32.gmra.mxu0 %v1231
    %v1233 = vpop.f32.mrf.mxu0
    %v1234 = vadd.f32 0.0, %v1233
    %1235 = vdwg.mxu0
    %1236 = vmatpush.msra.mxu0 0.0
    %1237 = vmatpush.msra.mxu0 0.0
    %1238 = vmatpush.msra.mxu0 0.0
    %1239 = vmatpush.msra.mxu0 0.0
    %1240 = vmatpush.msra.mxu0 0.0
    %1241 = vmatpush.msra.mxu0 0.0
    %1242 = vmatpush.msra.mxu0 0.0
    %1243 = vmatpush.msra.mxu0 0.0
    %1244 = vmatpush.msra.mxu0 0.0
    %1245 = vmatpush.msra.mxu0 0.0
    %1246 = vmatpush.msra.mxu0 0.0
    %1247 = vmatpush.msra.mxu0 0.0
    %1248 = vmatpush.msra.mxu0 0.0
    %1249 = vmatpush.msra.mxu0 0.0
    %1250 = vmatpush.msra.mxu0 0.0
    %v1251 = vand.u32 %v542, 4294901760
    %v1252 = vsub.f32 %v542, %v1251
    %v1253 = vand.u32 %v1252, 4294901760
    %v1254 = vsub.f32 %v1252, %v1253
    %v1255 = vand.u32 %v1254, 4294901760
    %1256 = vmatpush.msra.mxu0 %v1255
    %v1257 = vand.u32 %v1208, 4294901760
    %1258 = vmatmul.f32.gmra.mxu0 %v1257
    %v1259 = vpop.f32.mrf.mxu0
    %v1260 = vadd.f32 %v1234, %v1259
    %1261 = vdwg.mxu0
    %1262 = vmatpush.msra.mxu0 0.0
    %1263 = vmatpush.msra.mxu0 0.0
    %1264 = vmatpush.msra.mxu0 0.0
    %1265 = vmatpush.msra.mxu0 0.0
    %1266 = vmatpush.msra.mxu0 0.0
    %1267 = vmatpush.msra.mxu0 0.0
    %1268 = vmatpush.msra.mxu0 0.0
    %1269 = vmatpush.msra.mxu0 0.0
    %1270 = vmatpush.msra.mxu0 0.0
    %1271 = vmatpush.msra.mxu0 0.0
    %1272 = vmatpush.msra.mxu0 0.0
    %1273 = vmatpush.msra.mxu0 0.0
    %1274 = vmatpush.msra.mxu0 0.0
    %1275 = vmatpush.msra.mxu0 0.0
    %1276 = vmatpush.msra.mxu0 0.0
    %v1277 = vand.u32 %v542, 4294901760
    %v1278 = vsub.f32 %v542, %v1277
    %1279 = vmatpush.msra.mxu0 %v1278
    %v1280 = vand.u32 %v1208, 4294901760
    %v1281 = vsub.f32 %v1208, %v1280
    %1282 = vmatmul.f32.gmra.mxu0 %v1281
    %v1283 = vpop.f32.mrf.mxu0
    %v1284 = vadd.f32 %v1260, %v1283
    %1285 = vdwg.mxu0
    %1286 = vmatpush.msra.mxu0 0.0
    %1287 = vmatpush.msra.mxu0 0.0
    %1288 = vmatpush.msra.mxu0 0.0
    %1289 = vmatpush.msra.mxu0 0.0
    %1290 = vmatpush.msra.mxu0 0.0
    %1291 = vmatpush.msra.mxu0 0.0
    %1292 = vmatpush.msra.mxu0 0.0
    %1293 = vmatpush.msra.mxu0 0.0
    %1294 = vmatpush.msra.mxu0 0.0
    %1295 = vmatpush.msra.mxu0 0.0
    %1296 = vmatpush.msra.mxu0 0.0
    %1297 = vmatpush.msra.mxu0 0.0
    %1298 = vmatpush.msra.mxu0 0.0
    %1299 = vmatpush.msra.mxu0 0.0
    %1300 = vmatpush.msra.mxu0 0.0
    %v1301 = vand.u32 %v542, 4294901760
    %1302 = vmatpush.msra.mxu0 %v1301
    %v1303 = vand.u32 %v1208, 4294901760
    %v1304 = vsub.f32 %v1208, %v1303
    %v1305 = vand.u32 %v1304, 4294901760
    %1306 = vmatmul.f32.gmra.mxu0 %v1305
    %v1307 = vpop.f32.mrf.mxu0
    %v1308 = vadd.f32 %v1284, %v1307
    %1309 = vdwg.mxu0
    %1310 = vmatpush.msra.mxu0 0.0
    %1311 = vmatpush.msra.mxu0 0.0
    %1312 = vmatpush.msra.mxu0 0.0
    %1313 = vmatpush.msra.mxu0 0.0
    %1314 = vmatpush.msra.mxu0 0.0
    %1315 = vmatpush.msra.mxu0 0.0
    %1316 = vmatpush.msra.mxu0 0.0
    %1317 = vmatpush.msra.mxu0 0.0
    %1318 = vmatpush.msra.mxu0 0.0
    %1319 = vmatpush.msra.mxu0 0.0
    %1320 = vmatpush.msra.mxu0 0.0
    %1321 = vmatpush.msra.mxu0 0.0
    %1322 = vmatpush.msra.mxu0 0.0
    %1323 = vmatpush.msra.mxu0 0.0
    %1324 = vmatpush.msra.mxu0 0.0
    %v1325 = vand.u32 %v542, 4294901760
    %v1326 = vsub.f32 %v542, %v1325
    %v1327 = vand.u32 %v1326, 4294901760
    %1328 = vmatpush.msra.mxu0 %v1327
    %v1329 = vand.u32 %v1208, 4294901760
    %1330 = vmatmul.f32.gmra.mxu0 %v1329
    %v1331 = vpop.f32.mrf.mxu0
    %v1332 = vadd.f32 %v1308, %v1331
    %1333 = vdwg.mxu0
    %1334 = vmatpush.msra.mxu0 0.0
    %1335 = vmatpush.msra.mxu0 0.0
    %1336 = vmatpush.msra.mxu0 0.0
    %1337 = vmatpush.msra.mxu0 0.0
    %1338 = vmatpush.msra.mxu0 0.0
    %1339 = vmatpush.msra.mxu0 0.0
    %1340 = vmatpush.msra.mxu0 0.0
    %1341 = vmatpush.msra.mxu0 0.0
    %1342 = vmatpush.msra.mxu0 0.0
    %1343 = vmatpush.msra.mxu0 0.0
    %1344 = vmatpush.msra.mxu0 0.0
    %1345 = vmatpush.msra.mxu0 0.0
    %1346 = vmatpush.msra.mxu0 0.0
    %1347 = vmatpush.msra.mxu0 0.0
    %1348 = vmatpush.msra.mxu0 0.0
    %v1349 = vand.u32 %v542, 4294901760
    %1350 = vmatpush.msra.mxu0 %v1349
    %v1351 = vand.u32 %v1208, 4294901760
    %1352 = vmatmul.f32.gmra.mxu0 %v1351
    %v1353 = vpop.f32.mrf.mxu0
    %v1354 = vadd.f32 %v1332, %v1353
    %1355 = vdwg.mxu0
    %v1357 = vsel %vm546, %v874, 0
    %1359 = vmatpush.msra.mxu0 0.0
    %1360 = vmatpush.msra.mxu0 0.0
    %1361 = vmatpush.msra.mxu0 0.0
    %1362 = vmatpush.msra.mxu0 0.0
    %1363 = vmatpush.msra.mxu0 0.0
    %1364 = vmatpush.msra.mxu0 0.0
    %1365 = vmatpush.msra.mxu0 0.0
    %1366 = vmatpush.msra.mxu0 0.0
    %1367 = vmatpush.msra.mxu0 0.0
    %1368 = vmatpush.msra.mxu0 0.0
    %1369 = vmatpush.msra.mxu0 0.0
    %1370 = vmatpush.msra.mxu0 0.0
    %1371 = vmatpush.msra.mxu0 0.0
    %1372 = vmatpush.msra.mxu0 0.0
    %1373 = vmatpush.msra.mxu0 0.0
    %v1374 = vand.u32 %v541, 4294901760
    %1375 = vmatpush.msra.mxu0 %v1374
    %v1376 = vand.u32 %v1357, 4294901760
    %v1377 = vsub.f32 %v1357, %v1376
    %v1378 = vand.u32 %v1377, 4294901760
    %v1379 = vsub.f32 %v1377, %v1378
    %v1380 = vand.u32 %v1379, 4294901760
    %1381 = vmatmul.f32.gmra.mxu0 %v1380
    %v1382 = vpop.f32.mrf.mxu0
    %v1383 = vadd.f32 %v1354, %v1382
    %1384 = vdwg.mxu0
    %1385 = vmatpush.msra.mxu0 0.0
    %1386 = vmatpush.msra.mxu0 0.0
    %1387 = vmatpush.msra.mxu0 0.0
    %1388 = vmatpush.msra.mxu0 0.0
    %1389 = vmatpush.msra.mxu0 0.0
    %1390 = vmatpush.msra.mxu0 0.0
    %1391 = vmatpush.msra.mxu0 0.0
    %1392 = vmatpush.msra.mxu0 0.0
    %1393 = vmatpush.msra.mxu0 0.0
    %1394 = vmatpush.msra.mxu0 0.0
    %1395 = vmatpush.msra.mxu0 0.0
    %1396 = vmatpush.msra.mxu0 0.0
    %1397 = vmatpush.msra.mxu0 0.0
    %1398 = vmatpush.msra.mxu0 0.0
    %1399 = vmatpush.msra.mxu0 0.0
    %v1400 = vand.u32 %v541, 4294901760
    %v1401 = vsub.f32 %v541, %v1400
    %v1402 = vand.u32 %v1401, 4294901760
    %v1403 = vsub.f32 %v1401, %v1402
    %v1404 = vand.u32 %v1403, 4294901760
    %1405 = vmatpush.msra.mxu0 %v1404
    %v1406 = vand.u32 %v1357, 4294901760
    %1407 = vmatmul.f32.gmra.mxu0 %v1406
    %v1408 = vpop.f32.mrf.mxu0
    %v1409 = vadd.f32 %v1383, %v1408
    %1410 = vdwg.mxu0
    %1411 = vmatpush.msra.mxu0 0.0
    %1412 = vmatpush.msra.mxu0 0.0
    %1413 = vmatpush.msra.mxu0 0.0
    %1414 = vmatpush.msra.mxu0 0.0
    %1415 = vmatpush.msra.mxu0 0.0
    %1416 = vmatpush.msra.mxu0 0.0
    %1417 = vmatpush.msra.mxu0 0.0
    %1418 = vmatpush.msra.mxu0 0.0
    %1419 = vmatpush.msra.mxu0 0.0
    %1420 = vmatpush.msra.mxu0 0.0
    %1421 = vmatpush.msra.mxu0 0.0
    %1422 = vmatpush.msra.mxu0 0.0
    %1423 = vmatpush.msra.mxu0 0.0
    %1424 = vmatpush.msra.mxu0 0.0
    %1425 = vmatpush.msra.mxu0 0.0
    %v1426 = vand.u32 %v541, 4294901760
    %v1427 = vsub.f32 %v541, %v1426
    %1428 = vmatpush.msra.mxu0 %v1427
    %v1429 = vand.u32 %v1357, 4294901760
    %v1430 = vsub.f32 %v1357, %v1429
    %1431 = vmatmul.f32.gmra.mxu0 %v1430
    %v1432 = vpop.f32.mrf.mxu0
    %v1433 = vadd.f32 %v1409, %v1432
    %1434 = vdwg.mxu0
    %1435 = vmatpush.msra.mxu0 0.0
    %1436 = vmatpush.msra.mxu0 0.0
    %1437 = vmatpush.msra.mxu0 0.0
    %1438 = vmatpush.msra.mxu0 0.0
    %1439 = vmatpush.msra.mxu0 0.0
    %1440 = vmatpush.msra.mxu0 0.0
    %1441 = vmatpush.msra.mxu0 0.0
    %1442 = vmatpush.msra.mxu0 0.0
    %1443 = vmatpush.msra.mxu0 0.0
    %1444 = vmatpush.msra.mxu0 0.0
    %1445 = vmatpush.msra.mxu0 0.0
    %1446 = vmatpush.msra.mxu0 0.0
    %1447 = vmatpush.msra.mxu0 0.0
    %1448 = vmatpush.msra.mxu0 0.0
    %1449 = vmatpush.msra.mxu0 0.0
    %v1450 = vand.u32 %v541, 4294901760
    %1451 = vmatpush.msra.mxu0 %v1450
    %v1452 = vand.u32 %v1357, 4294901760
    %v1453 = vsub.f32 %v1357, %v1452
    %v1454 = vand.u32 %v1453, 4294901760
    %1455 = vmatmul.f32.gmra.mxu0 %v1454
    %v1456 = vpop.f32.mrf.mxu0
    %v1457 = vadd.f32 %v1433, %v1456
    %1458 = vdwg.mxu0
    %1459 = vmatpush.msra.mxu0 0.0
    %1460 = vmatpush.msra.mxu0 0.0
    %1461 = vmatpush.msra.mxu0 0.0
    %1462 = vmatpush.msra.mxu0 0.0
    %1463 = vmatpush.msra.mxu0 0.0
    %1464 = vmatpush.msra.mxu0 0.0
    %1465 = vmatpush.msra.mxu0 0.0
    %1466 = vmatpush.msra.mxu0 0.0
    %1467 = vmatpush.msra.mxu0 0.0
    %1468 = vmatpush.msra.mxu0 0.0
    %1469 = vmatpush.msra.mxu0 0.0
    %1470 = vmatpush.msra.mxu0 0.0
    %1471 = vmatpush.msra.mxu0 0.0
    %1472 = vmatpush.msra.mxu0 0.0
    %1473 = vmatpush.msra.mxu0 0.0
    %v1474 = vand.u32 %v541, 4294901760
    %v1475 = vsub.f32 %v541, %v1474
    %v1476 = vand.u32 %v1475, 4294901760
    %1477 = vmatpush.msra.mxu0 %v1476
    %v1478 = vand.u32 %v1357, 4294901760
    %1479 = vmatmul.f32.gmra.mxu0 %v1478
    %v1480 = vpop.f32.mrf.mxu0
    %v1481 = vadd.f32 %v1457, %v1480
    %1482 = vdwg.mxu0
    %1483 = vmatpush.msra.mxu0 0.0
    %1484 = vmatpush.msra.mxu0 0.0
    %1485 = vmatpush.msra.mxu0 0.0
    %1486 = vmatpush.msra.mxu0 0.0
    %1487 = vmatpush.msra.mxu0 0.0
    %1488 = vmatpush.msra.mxu0 0.0
    %1489 = vmatpush.msra.mxu0 0.0
    %1490 = vmatpush.msra.mxu0 0.0
    %1491 = vmatpush.msra.mxu0 0.0
    %1492 = vmatpush.msra.mxu0 0.0
    %1493 = vmatpush.msra.mxu0 0.0
    %1494 = vmatpush.msra.mxu0 0.0
    %1495 = vmatpush.msra.mxu0 0.0
    %1496 = vmatpush.msra.mxu0 0.0
    %1497 = vmatpush.msra.mxu0 0.0
    %v1498 = vand.u32 %v541, 4294901760
    %1499 = vmatpush.msra.mxu0 %v1498
    %v1500 = vand.u32 %v1357, 4294901760
    %1501 = vmatmul.f32.gmra.mxu0 %v1500
    %v1502 = vpop.f32.mrf.mxu0
    %v1503 = vadd.f32 %v1481, %v1502
    %1504 = vdwg.mxu0
    %1505 = vrot.lane.b32.xlu0 %v307, 112
    %v1506 = vpop.permute.xlu0 %1505
    %1507 = vrot.lane.b32.xlu0 %v535, 112
    %v1508 = vpop.permute.xlu0 %1507
    %v1509 = vsel %vm546, %v1506, 0
    %v1511 = vsel %vm546, %v1508, 0
    %1513 = vmatpush.xpose.msra.mxu0 0.0
    %1514 = vmatpush.xpose.msra.mxu0 0.0
    %1515 = vmatpush.xpose.msra.mxu0 0.0
    %1516 = vmatpush.xpose.msra.mxu0 0.0
    %1517 = vmatpush.xpose.msra.mxu0 0.0
    %1518 = vmatpush.xpose.msra.mxu0 0.0
    %1519 = vmatpush.xpose.msra.mxu0 0.0
    %1520 = vmatpush.xpose.msra.mxu0 0.0
    %1521 = vmatpush.xpose.msra.mxu0 0.0
    %1522 = vmatpush.xpose.msra.mxu0 0.0
    %1523 = vmatpush.xpose.msra.mxu0 0.0
    %1524 = vmatpush.xpose.msra.mxu0 0.0
    %1525 = vmatpush.xpose.msra.mxu0 0.0
    %1526 = vmatpush.xpose.msra.mxu0 0.0
    %1527 = vmatpush.xpose.msra.mxu0 0.0
    %v1528 = vand.u32 %v1511, 4294901760
    %1529 = vmatpush.xpose.msra.mxu0 %v1528
    %v1530 = vand.u32 %v1509, 4294901760
    %v1531 = vsub.f32 %v1509, %v1530
    %v1532 = vand.u32 %v1531, 4294901760
    %v1533 = vsub.f32 %v1531, %v1532
    %v1534 = vand.u32 %v1533, 4294901760
    %1535 = vmatmul.f32.gmra.mxu0 %v1534
    %v1536 = vpop.f32.mrf.mxu0
    %v1537 = vadd.f32 0.0, %v1536
    %1538 = vdwg.mxu0
    %1539 = vmatpush.xpose.msra.mxu0 0.0
    %1540 = vmatpush.xpose.msra.mxu0 0.0
    %1541 = vmatpush.xpose.msra.mxu0 0.0
    %1542 = vmatpush.xpose.msra.mxu0 0.0
    %1543 = vmatpush.xpose.msra.mxu0 0.0
    %1544 = vmatpush.xpose.msra.mxu0 0.0
    %1545 = vmatpush.xpose.msra.mxu0 0.0
    %1546 = vmatpush.xpose.msra.mxu0 0.0
    %1547 = vmatpush.xpose.msra.mxu0 0.0
    %1548 = vmatpush.xpose.msra.mxu0 0.0
    %1549 = vmatpush.xpose.msra.mxu0 0.0
    %1550 = vmatpush.xpose.msra.mxu0 0.0
    %1551 = vmatpush.xpose.msra.mxu0 0.0
    %1552 = vmatpush.xpose.msra.mxu0 0.0
    %1553 = vmatpush.xpose.msra.mxu0 0.0
    %v1554 = vand.u32 %v1511, 4294901760
    %v1555 = vsub.f32 %v1511, %v1554
    %v1556 = vand.u32 %v1555, 4294901760
    %v1557 = vsub.f32 %v1555, %v1556
    %v1558 = vand.u32 %v1557, 4294901760
    %1559 = vmatpush.xpose.msra.mxu0 %v1558
    %v1560 = vand.u32 %v1509, 4294901760
    %1561 = vmatmul.f32.gmra.mxu0 %v1560
    %v1562 = vpop.f32.mrf.mxu0
    %v1563 = vadd.f32 %v1537, %v1562
    %1564 = vdwg.mxu0
    %1565 = vmatpush.xpose.msra.mxu0 0.0
    %1566 = vmatpush.xpose.msra.mxu0 0.0
    %1567 = vmatpush.xpose.msra.mxu0 0.0
    %1568 = vmatpush.xpose.msra.mxu0 0.0
    %1569 = vmatpush.xpose.msra.mxu0 0.0
    %1570 = vmatpush.xpose.msra.mxu0 0.0
    %1571 = vmatpush.xpose.msra.mxu0 0.0
    %1572 = vmatpush.xpose.msra.mxu0 0.0
    %1573 = vmatpush.xpose.msra.mxu0 0.0
    %1574 = vmatpush.xpose.msra.mxu0 0.0
    %1575 = vmatpush.xpose.msra.mxu0 0.0
    %1576 = vmatpush.xpose.msra.mxu0 0.0
    %1577 = vmatpush.xpose.msra.mxu0 0.0
    %1578 = vmatpush.xpose.msra.mxu0 0.0
    %1579 = vmatpush.xpose.msra.mxu0 0.0
    %v1580 = vand.u32 %v1511, 4294901760
    %v1581 = vsub.f32 %v1511, %v1580
    %1582 = vmatpush.xpose.msra.mxu0 %v1581
    %v1583 = vand.u32 %v1509, 4294901760
    %v1584 = vsub.f32 %v1509, %v1583
    %1585 = vmatmul.f32.gmra.mxu0 %v1584
    %v1586 = vpop.f32.mrf.mxu0
    %v1587 = vadd.f32 %v1563, %v1586
    %1588 = vdwg.mxu0
    %1589 = vmatpush.xpose.msra.mxu0 0.0
    %1590 = vmatpush.xpose.msra.mxu0 0.0
    %1591 = vmatpush.xpose.msra.mxu0 0.0
    %1592 = vmatpush.xpose.msra.mxu0 0.0
    %1593 = vmatpush.xpose.msra.mxu0 0.0
    %1594 = vmatpush.xpose.msra.mxu0 0.0
    %1595 = vmatpush.xpose.msra.mxu0 0.0
    %1596 = vmatpush.xpose.msra.mxu0 0.0
    %1597 = vmatpush.xpose.msra.mxu0 0.0
    %1598 = vmatpush.xpose.msra.mxu0 0.0
    %1599 = vmatpush.xpose.msra.mxu0 0.0
    %1600 = vmatpush.xpose.msra.mxu0 0.0
    %1601 = vmatpush.xpose.msra.mxu0 0.0
    %1602 = vmatpush.xpose.msra.mxu0 0.0
    %1603 = vmatpush.xpose.msra.mxu0 0.0
    %v1604 = vand.u32 %v1511, 4294901760
    %1605 = vmatpush.xpose.msra.mxu0 %v1604
    %v1606 = vand.u32 %v1509, 4294901760
    %v1607 = vsub.f32 %v1509, %v1606
    %v1608 = vand.u32 %v1607, 4294901760
    %1609 = vmatmul.f32.gmra.mxu0 %v1608
    %v1610 = vpop.f32.mrf.mxu0
    %v1611 = vadd.f32 %v1587, %v1610
    %1612 = vdwg.mxu0
    %1613 = vmatpush.xpose.msra.mxu0 0.0
    %1614 = vmatpush.xpose.msra.mxu0 0.0
    %1615 = vmatpush.xpose.msra.mxu0 0.0
    %1616 = vmatpush.xpose.msra.mxu0 0.0
    %1617 = vmatpush.xpose.msra.mxu0 0.0
    %1618 = vmatpush.xpose.msra.mxu0 0.0
    %1619 = vmatpush.xpose.msra.mxu0 0.0
    %1620 = vmatpush.xpose.msra.mxu0 0.0
    %1621 = vmatpush.xpose.msra.mxu0 0.0
    %1622 = vmatpush.xpose.msra.mxu0 0.0
    %1623 = vmatpush.xpose.msra.mxu0 0.0
    %1624 = vmatpush.xpose.msra.mxu0 0.0
    %1625 = vmatpush.xpose.msra.mxu0 0.0
    %1626 = vmatpush.xpose.msra.mxu0 0.0
    %1627 = vmatpush.xpose.msra.mxu0 0.0
    %v1628 = vand.u32 %v1511, 4294901760
    %v1629 = vsub.f32 %v1511, %v1628
    %v1630 = vand.u32 %v1629, 4294901760
    %1631 = vmatpush.xpose.msra.mxu0 %v1630
    %v1632 = vand.u32 %v1509, 4294901760
    %1633 = vmatmul.f32.gmra.mxu0 %v1632
    %v1634 = vpop.f32.mrf.mxu0
    %v1635 = vadd.f32 %v1611, %v1634
    %1636 = vdwg.mxu0
    %1637 = vmatpush.xpose.msra.mxu0 0.0
    %1638 = vmatpush.xpose.msra.mxu0 0.0
    %1639 = vmatpush.xpose.msra.mxu0 0.0
    %1640 = vmatpush.xpose.msra.mxu0 0.0
    %1641 = vmatpush.xpose.msra.mxu0 0.0
    %1642 = vmatpush.xpose.msra.mxu0 0.0
    %1643 = vmatpush.xpose.msra.mxu0 0.0
    %1644 = vmatpush.xpose.msra.mxu0 0.0
    %1645 = vmatpush.xpose.msra.mxu0 0.0
    %1646 = vmatpush.xpose.msra.mxu0 0.0
    %1647 = vmatpush.xpose.msra.mxu0 0.0
    %1648 = vmatpush.xpose.msra.mxu0 0.0
    %1649 = vmatpush.xpose.msra.mxu0 0.0
    %1650 = vmatpush.xpose.msra.mxu0 0.0
    %1651 = vmatpush.xpose.msra.mxu0 0.0
    %v1652 = vand.u32 %v1511, 4294901760
    %1653 = vmatpush.xpose.msra.mxu0 %v1652
    %v1654 = vand.u32 %v1509, 4294901760
    %1655 = vmatmul.f32.gmra.mxu0 %v1654
    %v1656 = vpop.f32.mrf.mxu0
    %v1657 = vadd.f32 %v1635, %v1656
    %1658 = vdwg.mxu0
    %v1659 = vmul.f32 %v1657, 0.35355338
    %v1660 = vsel %vm546, %v1659, -inf
    %1661 = vmax.xlane.f32.xlu0 %v1660
    %v1662 = vpop.xlane.xlu0 %1661
    %v1663 = vsub.f32 %v1659, %v1662
    %v1664 = vmul.f32 %v1663, 1.442695
    %v1665 = vpow.pop %v1664
    %v1666 = vsel %vm546, %v1665, 0.0
    %1667 = vadd.xlane.f32.xlu0 %v1666
    %v1668 = vpop.xlane.xlu0 %1667
    %v1669 = vrcp.pop %v1668
    %v1670 = vmul.f32 %v1668, %v1669
    %v1671 = vsub.f32 1.0, %v1670
    %v1672 = vmul.f32 %v1669, %v1671
    %v1673 = vadd.f32 %v1669, %v1672
    %vm1674 = vweird.f32 %v1668
    %vm1675 = vweird.f32 %v1669
    %vm1676 = vmor %vm1674, %vm1675
    %v1677 = vsel %vm1676, %v1669, %v1673
    %v1678 = vand.u32 2147483647, %v1668
    %vm1679 = vcmp.eq.f32.partialorder %v1678, 8.507059e+37
    %v1680 = vand.u32 %v1668, 2147483648
    %v1681 = vor.u32 1.1754944e-38, %v1680
    %v1682 = vsel %vm1679, %v1681, %v1677
    %v1683 = vmul.f32 %v1665, %v1682
    %1684 = vrot.lane.b32.xlu0 %v535, 80
    %v1685 = vpop.permute.xlu0 %1684
    %v1688 = vsel %vm546, %v1683, 0
    %1690 = vmatpush.msra.mxu0 0.0
    %1691 = vmatpush.msra.mxu0 0.0
    %1692 = vmatpush.msra.mxu0 0.0
    %1693 = vmatpush.msra.mxu0 0.0
    %1694 = vmatpush.msra.mxu0 0.0
    %1695 = vmatpush.msra.mxu0 0.0
    %1696 = vmatpush.msra.mxu0 0.0
    %1697 = vmatpush.msra.mxu0 0.0
    %1698 = vmatpush.msra.mxu0 0.0
    %1699 = vmatpush.msra.mxu0 0.0
    %1700 = vmatpush.msra.mxu0 0.0
    %1701 = vmatpush.msra.mxu0 0.0
    %1702 = vmatpush.msra.mxu0 0.0
    %1703 = vmatpush.msra.mxu0 0.0
    %1704 = vmatpush.msra.mxu0 0.0
    %v1705 = vand.u32 %v1685, 4294901760
    %1706 = vmatpush.msra.mxu0 %v1705
    %v1707 = vand.u32 %v1688, 4294901760
    %v1708 = vsub.f32 %v1688, %v1707
    %v1709 = vand.u32 %v1708, 4294901760
    %v1710 = vsub.f32 %v1708, %v1709
    %v1711 = vand.u32 %v1710, 4294901760
    %1712 = vmatmul.f32.gmra.mxu0 %v1711
    %v1713 = vpop.f32.mrf.mxu0
    %v1714 = vadd.f32 0.0, %v1713
    %1715 = vdwg.mxu0
    %1716 = vmatpush.msra.mxu0 0.0
    %1717 = vmatpush.msra.mxu0 0.0
    %1718 = vmatpush.msra.mxu0 0.0
    %1719 = vmatpush.msra.mxu0 0.0
    %1720 = vmatpush.msra.mxu0 0.0
    %1721 = vmatpush.msra.mxu0 0.0
    %1722 = vmatpush.msra.mxu0 0.0
    %1723 = vmatpush.msra.mxu0 0.0
    %1724 = vmatpush.msra.mxu0 0.0
    %1725 = vmatpush.msra.mxu0 0.0
    %1726 = vmatpush.msra.mxu0 0.0
    %1727 = vmatpush.msra.mxu0 0.0
    %1728 = vmatpush.msra.mxu0 0.0
    %1729 = vmatpush.msra.mxu0 0.0
    %1730 = vmatpush.msra.mxu0 0.0
    %v1731 = vand.u32 %v1685, 4294901760
    %v1732 = vsub.f32 %v1685, %v1731
    %v1733 = vand.u32 %v1732, 4294901760
    %v1734 = vsub.f32 %v1732, %v1733
    %v1735 = vand.u32 %v1734, 4294901760
    %1736 = vmatpush.msra.mxu0 %v1735
    %v1737 = vand.u32 %v1688, 4294901760
    %1738 = vmatmul.f32.gmra.mxu0 %v1737
    %v1739 = vpop.f32.mrf.mxu0
    %v1740 = vadd.f32 %v1714, %v1739
    %1741 = vdwg.mxu0
    %1742 = vmatpush.msra.mxu0 0.0
    %1743 = vmatpush.msra.mxu0 0.0
    %1744 = vmatpush.msra.mxu0 0.0
    %1745 = vmatpush.msra.mxu0 0.0
    %1746 = vmatpush.msra.mxu0 0.0
    %1747 = vmatpush.msra.mxu0 0.0
    %1748 = vmatpush.msra.mxu0 0.0
    %1749 = vmatpush.msra.mxu0 0.0
    %1750 = vmatpush.msra.mxu0 0.0
    %1751 = vmatpush.msra.mxu0 0.0
    %1752 = vmatpush.msra.mxu0 0.0
    %1753 = vmatpush.msra.mxu0 0.0
    %1754 = vmatpush.msra.mxu0 0.0
    %1755 = vmatpush.msra.mxu0 0.0
    %1756 = vmatpush.msra.mxu0 0.0
    %v1757 = vand.u32 %v1685, 4294901760
    %v1758 = vsub.f32 %v1685, %v1757
    %1759 = vmatpush.msra.mxu0 %v1758
    %v1760 = vand.u32 %v1688, 4294901760
    %v1761 = vsub.f32 %v1688, %v1760
    %1762 = vmatmul.f32.gmra.mxu0 %v1761
    %v1763 = vpop.f32.mrf.mxu0
    %v1764 = vadd.f32 %v1740, %v1763
    %1765 = vdwg.mxu0
    %1766 = vmatpush.msra.mxu0 0.0
    %1767 = vmatpush.msra.mxu0 0.0
    %1768 = vmatpush.msra.mxu0 0.0
    %1769 = vmatpush.msra.mxu0 0.0
    %1770 = vmatpush.msra.mxu0 0.0
    %1771 = vmatpush.msra.mxu0 0.0
    %1772 = vmatpush.msra.mxu0 0.0
    %1773 = vmatpush.msra.mxu0 0.0
    %1774 = vmatpush.msra.mxu0 0.0
    %1775 = vmatpush.msra.mxu0 0.0
    %1776 = vmatpush.msra.mxu0 0.0
    %1777 = vmatpush.msra.mxu0 0.0
    %1778 = vmatpush.msra.mxu0 0.0
    %1779 = vmatpush.msra.mxu0 0.0
    %1780 = vmatpush.msra.mxu0 0.0
    %v1781 = vand.u32 %v1685, 4294901760
    %1782 = vmatpush.msra.mxu0 %v1781
    %v1783 = vand.u32 %v1688, 4294901760
    %v1784 = vsub.f32 %v1688, %v1783
    %v1785 = vand.u32 %v1784, 4294901760
    %1786 = vmatmul.f32.gmra.mxu0 %v1785
    %v1787 = vpop.f32.mrf.mxu0
    %v1788 = vadd.f32 %v1764, %v1787
    %1789 = vdwg.mxu0
    %1790 = vmatpush.msra.mxu0 0.0
    %1791 = vmatpush.msra.mxu0 0.0
    %1792 = vmatpush.msra.mxu0 0.0
    %1793 = vmatpush.msra.mxu0 0.0
    %1794 = vmatpush.msra.mxu0 0.0
    %1795 = vmatpush.msra.mxu0 0.0
    %1796 = vmatpush.msra.mxu0 0.0
    %1797 = vmatpush.msra.mxu0 0.0
    %1798 = vmatpush.msra.mxu0 0.0
    %1799 = vmatpush.msra.mxu0 0.0
    %1800 = vmatpush.msra.mxu0 0.0
    %1801 = vmatpush.msra.mxu0 0.0
    %1802 = vmatpush.msra.mxu0 0.0
    %1803 = vmatpush.msra.mxu0 0.0
    %1804 = vmatpush.msra.mxu0 0.0
    %v1805 = vand.u32 %v1685, 4294901760
    %v1806 = vsub.f32 %v1685, %v1805
    %v1807 = vand.u32 %v1806, 4294901760
    %1808 = vmatpush.msra.mxu0 %v1807
    %v1809 = vand.u32 %v1688, 4294901760
    %1810 = vmatmul.f32.gmra.mxu0 %v1809
    %v1811 = vpop.f32.mrf.mxu0
    %v1812 = vadd.f32 %v1788, %v1811
    %1813 = vdwg.mxu0
    %1814 = vmatpush.msra.mxu0 0.0
    %1815 = vmatpush.msra.mxu0 0.0
    %1816 = vmatpush.msra.mxu0 0.0
    %1817 = vmatpush.msra.mxu0 0.0
    %1818 = vmatpush.msra.mxu0 0.0
    %1819 = vmatpush.msra.mxu0 0.0
    %1820 = vmatpush.msra.mxu0 0.0
    %1821 = vmatpush.msra.mxu0 0.0
    %1822 = vmatpush.msra.mxu0 0.0
    %1823 = vmatpush.msra.mxu0 0.0
    %1824 = vmatpush.msra.mxu0 0.0
    %1825 = vmatpush.msra.mxu0 0.0
    %1826 = vmatpush.msra.mxu0 0.0
    %1827 = vmatpush.msra.mxu0 0.0
    %1828 = vmatpush.msra.mxu0 0.0
    %v1829 = vand.u32 %v1685, 4294901760
    %1830 = vmatpush.msra.mxu0 %v1829
    %v1831 = vand.u32 %v1688, 4294901760
    %1832 = vmatmul.f32.gmra.mxu0 %v1831
    %v1833 = vpop.f32.mrf.mxu0
    %v1834 = vadd.f32 %v1812, %v1833
    %1835 = vdwg.mxu0
    %v1837 = vsel %vm546, %v1834, 0
    %1839 = vmatpush.msra.mxu0 0.0
    %1840 = vmatpush.msra.mxu0 0.0
    %1841 = vmatpush.msra.mxu0 0.0
    %1842 = vmatpush.msra.mxu0 0.0
    %1843 = vmatpush.msra.mxu0 0.0
    %1844 = vmatpush.msra.mxu0 0.0
    %1845 = vmatpush.msra.mxu0 0.0
    %1846 = vmatpush.msra.mxu0 0.0
    %1847 = vmatpush.msra.mxu0 0.0
    %1848 = vmatpush.msra.mxu0 0.0
    %1849 = vmatpush.msra.mxu0 0.0
    %1850 = vmatpush.msra.mxu0 0.0
    %1851 = vmatpush.msra.mxu0 0.0
    %1852 = vmatpush.msra.mxu0 0.0
    %1853 = vmatpush.msra.mxu0 0.0
    %v1854 = vand.u32 %v543, 4294901760
    %1855 = vmatpush.msra.mxu0 %v1854
    %v1856 = vand.u32 %v1837, 4294901760
    %v1857 = vsub.f32 %v1837, %v1856
    %v1858 = vand.u32 %v1857, 4294901760
    %v1859 = vsub.f32 %v1857, %v1858
    %v1860 = vand.u32 %v1859, 4294901760
    %1861 = vmatmul.f32.gmra.mxu0 %v1860
    %v1862 = vpop.f32.mrf.mxu0
    %v1863 = vadd.f32 0.0, %v1862
    %1864 = vdwg.mxu0
    %1865 = vmatpush.msra.mxu0 0.0
    %1866 = vmatpush.msra.mxu0 0.0
    %1867 = vmatpush.msra.mxu0 0.0
    %1868 = vmatpush.msra.mxu0 0.0
    %1869 = vmatpush.msra.mxu0 0.0
    %1870 = vmatpush.msra.mxu0 0.0
    %1871 = vmatpush.msra.mxu0 0.0
    %1872 = vmatpush.msra.mxu0 0.0
    %1873 = vmatpush.msra.mxu0 0.0
    %1874 = vmatpush.msra.mxu0 0.0
    %1875 = vmatpush.msra.mxu0 0.0
    %1876 = vmatpush.msra.mxu0 0.0
    %1877 = vmatpush.msra.mxu0 0.0
    %1878 = vmatpush.msra.mxu0 0.0
    %1879 = vmatpush.msra.mxu0 0.0
    %v1880 = vand.u32 %v543, 4294901760
    %v1881 = vsub.f32 %v543, %v1880
    %v1882 = vand.u32 %v1881, 4294901760
    %v1883 = vsub.f32 %v1881, %v1882
    %v1884 = vand.u32 %v1883, 4294901760
    %1885 = vmatpush.msra.mxu0 %v1884
    %v1886 = vand.u32 %v1837, 4294901760
    %1887 = vmatmul.f32.gmra.mxu0 %v1886
    %v1888 = vpop.f32.mrf.mxu0
    %v1889 = vadd.f32 %v1863, %v1888
    %1890 = vdwg.mxu0
    %1891 = vmatpush.msra.mxu0 0.0
    %1892 = vmatpush.msra.mxu0 0.0
    %1893 = vmatpush.msra.mxu0 0.0
    %1894 = vmatpush.msra.mxu0 0.0
    %1895 = vmatpush.msra.mxu0 0.0
    %1896 = vmatpush.msra.mxu0 0.0
    %1897 = vmatpush.msra.mxu0 0.0
    %1898 = vmatpush.msra.mxu0 0.0
    %1899 = vmatpush.msra.mxu0 0.0
    %1900 = vmatpush.msra.mxu0 0.0
    %1901 = vmatpush.msra.mxu0 0.0
    %1902 = vmatpush.msra.mxu0 0.0
    %1903 = vmatpush.msra.mxu0 0.0
    %1904 = vmatpush.msra.mxu0 0.0
    %1905 = vmatpush.msra.mxu0 0.0
    %v1906 = vand.u32 %v543, 4294901760
    %v1907 = vsub.f32 %v543, %v1906
    %1908 = vmatpush.msra.mxu0 %v1907
    %v1909 = vand.u32 %v1837, 4294901760
    %v1910 = vsub.f32 %v1837, %v1909
    %1911 = vmatmul.f32.gmra.mxu0 %v1910
    %v1912 = vpop.f32.mrf.mxu0
    %v1913 = vadd.f32 %v1889, %v1912
    %1914 = vdwg.mxu0
    %1915 = vmatpush.msra.mxu0 0.0
    %1916 = vmatpush.msra.mxu0 0.0
    %1917 = vmatpush.msra.mxu0 0.0
    %1918 = vmatpush.msra.mxu0 0.0
    %1919 = vmatpush.msra.mxu0 0.0
    %1920 = vmatpush.msra.mxu0 0.0
    %1921 = vmatpush.msra.mxu0 0.0
    %1922 = vmatpush.msra.mxu0 0.0
    %1923 = vmatpush.msra.mxu0 0.0
    %1924 = vmatpush.msra.mxu0 0.0
    %1925 = vmatpush.msra.mxu0 0.0
    %1926 = vmatpush.msra.mxu0 0.0
    %1927 = vmatpush.msra.mxu0 0.0
    %1928 = vmatpush.msra.mxu0 0.0
    %1929 = vmatpush.msra.mxu0 0.0
    %v1930 = vand.u32 %v543, 4294901760
    %1931 = vmatpush.msra.mxu0 %v1930
    %v1932 = vand.u32 %v1837, 4294901760
    %v1933 = vsub.f32 %v1837, %v1932
    %v1934 = vand.u32 %v1933, 4294901760
    %1935 = vmatmul.f32.gmra.mxu0 %v1934
    %v1936 = vpop.f32.mrf.mxu0
    %v1937 = vadd.f32 %v1913, %v1936
    %1938 = vdwg.mxu0
    %1939 = vmatpush.msra.mxu0 0.0
    %1940 = vmatpush.msra.mxu0 0.0
    %1941 = vmatpush.msra.mxu0 0.0
    %1942 = vmatpush.msra.mxu0 0.0
    %1943 = vmatpush.msra.mxu0 0.0
    %1944 = vmatpush.msra.mxu0 0.0
    %1945 = vmatpush.msra.mxu0 0.0
    %1946 = vmatpush.msra.mxu0 0.0
    %1947 = vmatpush.msra.mxu0 0.0
    %1948 = vmatpush.msra.mxu0 0.0
    %1949 = vmatpush.msra.mxu0 0.0
    %1950 = vmatpush.msra.mxu0 0.0
    %1951 = vmatpush.msra.mxu0 0.0
    %1952 = vmatpush.msra.mxu0 0.0
    %1953 = vmatpush.msra.mxu0 0.0
    %v1954 = vand.u32 %v543, 4294901760
    %v1955 = vsub.f32 %v543, %v1954
    %v1956 = vand.u32 %v1955, 4294901760
    %1957 = vmatpush.msra.mxu0 %v1956
    %v1958 = vand.u32 %v1837, 4294901760
    %1959 = vmatmul.f32.gmra.mxu0 %v1958
    %v1960 = vpop.f32.mrf.mxu0
    %v1961 = vadd.f32 %v1937, %v1960
    %1962 = vdwg.mxu0
    %1963 = vmatpush.msra.mxu0 0.0
    %1964 = vmatpush.msra.mxu0 0.0
    %1965 = vmatpush.msra.mxu0 0.0
    %1966 = vmatpush.msra.mxu0 0.0
    %1967 = vmatpush.msra.mxu0 0.0
    %1968 = vmatpush.msra.mxu0 0.0
    %1969 = vmatpush.msra.mxu0 0.0
    %1970 = vmatpush.msra.mxu0 0.0
    %1971 = vmatpush.msra.mxu0 0.0
    %1972 = vmatpush.msra.mxu0 0.0
    %1973 = vmatpush.msra.mxu0 0.0
    %1974 = vmatpush.msra.mxu0 0.0
    %1975 = vmatpush.msra.mxu0 0.0
    %1976 = vmatpush.msra.mxu0 0.0
    %1977 = vmatpush.msra.mxu0 0.0
    %v1978 = vand.u32 %v543, 4294901760
    %1979 = vmatpush.msra.mxu0 %v1978
    %v1980 = vand.u32 %v1837, 4294901760
    %1981 = vmatmul.f32.gmra.mxu0 %v1980
    %v1982 = vpop.f32.mrf.mxu0
    %v1983 = vadd.f32 %v1961, %v1982
    %1984 = vdwg.mxu0
    %v1985 = vadd.f32 %v1503, %v1983
    %1986 = vrot.lane.b32.xlu0 %v307, 104
    %v1987 = vpop.permute.xlu0 %1986
    %1988 = vrot.lane.b32.xlu0 %v535, 104
    %v1989 = vpop.permute.xlu0 %1988
    %v1990 = vsel %vm546, %v1987, 0
    %v1992 = vsel %vm546, %v1989, 0
    %1994 = vmatpush.xpose.msra.mxu0 0.0
    %1995 = vmatpush.xpose.msra.mxu0 0.0
    %1996 = vmatpush.xpose.msra.mxu0 0.0
    %1997 = vmatpush.xpose.msra.mxu0 0.0
    %1998 = vmatpush.xpose.msra.mxu0 0.0
    %1999 = vmatpush.xpose.msra.mxu0 0.0
    %2000 = vmatpush.xpose.msra.mxu0 0.0
    %2001 = vmatpush.xpose.msra.mxu0 0.0
    %2002 = vmatpush.xpose.msra.mxu0 0.0
    %2003 = vmatpush.xpose.msra.mxu0 0.0
    %2004 = vmatpush.xpose.msra.mxu0 0.0
    %2005 = vmatpush.xpose.msra.mxu0 0.0
    %2006 = vmatpush.xpose.msra.mxu0 0.0
    %2007 = vmatpush.xpose.msra.mxu0 0.0
    %2008 = vmatpush.xpose.msra.mxu0 0.0
    %v2009 = vand.u32 %v1992, 4294901760
    %2010 = vmatpush.xpose.msra.mxu0 %v2009
    %v2011 = vand.u32 %v1990, 4294901760
    %v2012 = vsub.f32 %v1990, %v2011
    %v2013 = vand.u32 %v2012, 4294901760
    %v2014 = vsub.f32 %v2012, %v2013
    %v2015 = vand.u32 %v2014, 4294901760
    %2016 = vmatmul.f32.gmra.mxu0 %v2015
    %v2017 = vpop.f32.mrf.mxu0
    %v2018 = vadd.f32 0.0, %v2017
    %2019 = vdwg.mxu0
    %2020 = vmatpush.xpose.msra.mxu0 0.0
    %2021 = vmatpush.xpose.msra.mxu0 0.0
    %2022 = vmatpush.xpose.msra.mxu0 0.0
    %2023 = vmatpush.xpose.msra.mxu0 0.0
    %2024 = vmatpush.xpose.msra.mxu0 0.0
    %2025 = vmatpush.xpose.msra.mxu0 0.0
    %2026 = vmatpush.xpose.msra.mxu0 0.0
    %2027 = vmatpush.xpose.msra.mxu0 0.0
    %2028 = vmatpush.xpose.msra.mxu0 0.0
    %2029 = vmatpush.xpose.msra.mxu0 0.0
    %2030 = vmatpush.xpose.msra.mxu0 0.0
    %2031 = vmatpush.xpose.msra.mxu0 0.0
    %2032 = vmatpush.xpose.msra.mxu0 0.0
    %2033 = vmatpush.xpose.msra.mxu0 0.0
    %2034 = vmatpush.xpose.msra.mxu0 0.0
    %v2035 = vand.u32 %v1992, 4294901760
    %v2036 = vsub.f32 %v1992, %v2035
    %v2037 = vand.u32 %v2036, 4294901760
    %v2038 = vsub.f32 %v2036, %v2037
    %v2039 = vand.u32 %v2038, 4294901760
    %2040 = vmatpush.xpose.msra.mxu0 %v2039
    %v2041 = vand.u32 %v1990, 4294901760
    %2042 = vmatmul.f32.gmra.mxu0 %v2041
    %v2043 = vpop.f32.mrf.mxu0
    %v2044 = vadd.f32 %v2018, %v2043
    %2045 = vdwg.mxu0
    %2046 = vmatpush.xpose.msra.mxu0 0.0
    %2047 = vmatpush.xpose.msra.mxu0 0.0
    %2048 = vmatpush.xpose.msra.mxu0 0.0
    %2049 = vmatpush.xpose.msra.mxu0 0.0
    %2050 = vmatpush.xpose.msra.mxu0 0.0
    %2051 = vmatpush.xpose.msra.mxu0 0.0
    %2052 = vmatpush.xpose.msra.mxu0 0.0
    %2053 = vmatpush.xpose.msra.mxu0 0.0
    %2054 = vmatpush.xpose.msra.mxu0 0.0
    %2055 = vmatpush.xpose.msra.mxu0 0.0
    %2056 = vmatpush.xpose.msra.mxu0 0.0
    %2057 = vmatpush.xpose.msra.mxu0 0.0
    %2058 = vmatpush.xpose.msra.mxu0 0.0
    %2059 = vmatpush.xpose.msra.mxu0 0.0
    %2060 = vmatpush.xpose.msra.mxu0 0.0
    %v2061 = vand.u32 %v1992, 4294901760
    %v2062 = vsub.f32 %v1992, %v2061
    %2063 = vmatpush.xpose.msra.mxu0 %v2062
    %v2064 = vand.u32 %v1990, 4294901760
    %v2065 = vsub.f32 %v1990, %v2064
    %2066 = vmatmul.f32.gmra.mxu0 %v2065
    %v2067 = vpop.f32.mrf.mxu0
    %v2068 = vadd.f32 %v2044, %v2067
    %2069 = vdwg.mxu0
    %2070 = vmatpush.xpose.msra.mxu0 0.0
    %2071 = vmatpush.xpose.msra.mxu0 0.0
    %2072 = vmatpush.xpose.msra.mxu0 0.0
    %2073 = vmatpush.xpose.msra.mxu0 0.0
    %2074 = vmatpush.xpose.msra.mxu0 0.0
    %2075 = vmatpush.xpose.msra.mxu0 0.0
    %2076 = vmatpush.xpose.msra.mxu0 0.0
    %2077 = vmatpush.xpose.msra.mxu0 0.0
    %2078 = vmatpush.xpose.msra.mxu0 0.0
    %2079 = vmatpush.xpose.msra.mxu0 0.0
    %2080 = vmatpush.xpose.msra.mxu0 0.0
    %2081 = vmatpush.xpose.msra.mxu0 0.0
    %2082 = vmatpush.xpose.msra.mxu0 0.0
    %2083 = vmatpush.xpose.msra.mxu0 0.0
    %2084 = vmatpush.xpose.msra.mxu0 0.0
    %v2085 = vand.u32 %v1992, 4294901760
    %2086 = vmatpush.xpose.msra.mxu0 %v2085
    %v2087 = vand.u32 %v1990, 4294901760
    %v2088 = vsub.f32 %v1990, %v2087
    %v2089 = vand.u32 %v2088, 4294901760
    %2090 = vmatmul.f32.gmra.mxu0 %v2089
    %v2091 = vpop.f32.mrf.mxu0
    %v2092 = vadd.f32 %v2068, %v2091
    %2093 = vdwg.mxu0
    %2094 = vmatpush.xpose.msra.mxu0 0.0
    %2095 = vmatpush.xpose.msra.mxu0 0.0
    %2096 = vmatpush.xpose.msra.mxu0 0.0
    %2097 = vmatpush.xpose.msra.mxu0 0.0
    %2098 = vmatpush.xpose.msra.mxu0 0.0
    %2099 = vmatpush.xpose.msra.mxu0 0.0
    %2100 = vmatpush.xpose.msra.mxu0 0.0
    %2101 = vmatpush.xpose.msra.mxu0 0.0
    %2102 = vmatpush.xpose.msra.mxu0 0.0
    %2103 = vmatpush.xpose.msra.mxu0 0.0
    %2104 = vmatpush.xpose.msra.mxu0 0.0
    %2105 = vmatpush.xpose.msra.mxu0 0.0
    %2106 = vmatpush.xpose.msra.mxu0 0.0
    %2107 = vmatpush.xpose.msra.mxu0 0.0
    %2108 = vmatpush.xpose.msra.mxu0 0.0
    %v2109 = vand.u32 %v1992, 4294901760
    %v2110 = vsub.f32 %v1992, %v2109
    %v2111 = vand.u32 %v2110, 4294901760
    %2112 = vmatpush.xpose.msra.mxu0 %v2111
    %v2113 = vand.u32 %v1990, 4294901760
    %2114 = vmatmul.f32.gmra.mxu0 %v2113
    %v2115 = vpop.f32.mrf.mxu0
    %v2116 = vadd.f32 %v2092, %v2115
    %2117 = vdwg.mxu0
    %2118 = vmatpush.xpose.msra.mxu0 0.0
    %2119 = vmatpush.xpose.msra.mxu0 0.0
    %2120 = vmatpush.xpose.msra.mxu0 0.0
    %2121 = vmatpush.xpose.msra.mxu0 0.0
    %2122 = vmatpush.xpose.msra.mxu0 0.0
    %2123 = vmatpush.xpose.msra.mxu0 0.0
    %2124 = vmatpush.xpose.msra.mxu0 0.0
    %2125 = vmatpush.xpose.msra.mxu0 0.0
    %2126 = vmatpush.xpose.msra.mxu0 0.0
    %2127 = vmatpush.xpose.msra.mxu0 0.0
    %2128 = vmatpush.xpose.msra.mxu0 0.0
    %2129 = vmatpush.xpose.msra.mxu0 0.0
    %2130 = vmatpush.xpose.msra.mxu0 0.0
    %2131 = vmatpush.xpose.msra.mxu0 0.0
    %2132 = vmatpush.xpose.msra.mxu0 0.0
    %v2133 = vand.u32 %v1992, 4294901760
    %2134 = vmatpush.xpose.msra.mxu0 %v2133
    %v2135 = vand.u32 %v1990, 4294901760
    %2136 = vmatmul.f32.gmra.mxu0 %v2135
    %v2137 = vpop.f32.mrf.mxu0
    %v2138 = vadd.f32 %v2116, %v2137
    %2139 = vdwg.mxu0
    %v2140 = vmul.f32 %v2138, 0.35355338
    %v2141 = vsel %vm546, %v2140, -inf
    %2142 = vmax.xlane.f32.xlu0 %v2141
    %v2143 = vpop.xlane.xlu0 %2142
    %v2144 = vsub.f32 %v2140, %v2143
    %v2145 = vmul.f32 %v2144, 1.442695
    %v2146 = vpow.pop %v2145
    %v2147 = vsel %vm546, %v2146, 0.0
    %2148 = vadd.xlane.f32.xlu0 %v2147
    %v2149 = vpop.xlane.xlu0 %2148
    %v2150 = vrcp.pop %v2149
    %v2151 = vmul.f32 %v2149, %v2150
    %v2152 = vsub.f32 1.0, %v2151
    %v2153 = vmul.f32 %v2150, %v2152
    %v2154 = vadd.f32 %v2150, %v2153
    %vm2155 = vweird.f32 %v2149
    %vm2156 = vweird.f32 %v2150
    %vm2157 = vmor %vm2155, %vm2156
    %v2158 = vsel %vm2157, %v2150, %v2154
    %v2159 = vand.u32 2147483647, %v2149
    %vm2160 = vcmp.eq.f32.partialorder %v2159, 8.507059e+37
    %v2161 = vand.u32 %v2149, 2147483648
    %v2162 = vor.u32 1.1754944e-38, %v2161
    %v2163 = vsel %vm2160, %v2162, %v2158
    %v2164 = vmul.f32 %v2146, %v2163
    %2165 = vrot.lane.b32.xlu0 %v535, 72
    %v2166 = vpop.permute.xlu0 %2165
    %v2169 = vsel %vm546, %v2164, 0
    %2171 = vmatpush.msra.mxu0 0.0
    %2172 = vmatpush.msra.mxu0 0.0
    %2173 = vmatpush.msra.mxu0 0.0
    %2174 = vmatpush.msra.mxu0 0.0
    %2175 = vmatpush.msra.mxu0 0.0
    %2176 = vmatpush.msra.mxu0 0.0
    %2177 = vmatpush.msra.mxu0 0.0
    %2178 = vmatpush.msra.mxu0 0.0
    %2179 = vmatpush.msra.mxu0 0.0
    %2180 = vmatpush.msra.mxu0 0.0
    %2181 = vmatpush.msra.mxu0 0.0
    %2182 = vmatpush.msra.mxu0 0.0
    %2183 = vmatpush.msra.mxu0 0.0
    %2184 = vmatpush.msra.mxu0 0.0
    %2185 = vmatpush.msra.mxu0 0.0
    %v2186 = vand.u32 %v2166, 4294901760
    %2187 = vmatpush.msra.mxu0 %v2186
    %v2188 = vand.u32 %v2169, 4294901760
    %v2189 = vsub.f32 %v2169, %v2188
    %v2190 = vand.u32 %v2189, 4294901760
    %v2191 = vsub.f32 %v2189, %v2190
    %v2192 = vand.u32 %v2191, 4294901760
    %2193 = vmatmul.f32.gmra.mxu0 %v2192
    %v2194 = vpop.f32.mrf.mxu0
    %v2195 = vadd.f32 0.0, %v2194
    %2196 = vdwg.mxu0
    %2197 = vmatpush.msra.mxu0 0.0
    %2198 = vmatpush.msra.mxu0 0.0
    %2199 = vmatpush.msra.mxu0 0.0
    %2200 = vmatpush.msra.mxu0 0.0
    %2201 = vmatpush.msra.mxu0 0.0
    %2202 = vmatpush.msra.mxu0 0.0
    %2203 = vmatpush.msra.mxu0 0.0
    %2204 = vmatpush.msra.mxu0 0.0
    %2205 = vmatpush.msra.mxu0 0.0
    %2206 = vmatpush.msra.mxu0 0.0
    %2207 = vmatpush.msra.mxu0 0.0
    %2208 = vmatpush.msra.mxu0 0.0
    %2209 = vmatpush.msra.mxu0 0.0
    %2210 = vmatpush.msra.mxu0 0.0
    %2211 = vmatpush.msra.mxu0 0.0
    %v2212 = vand.u32 %v2166, 4294901760
    %v2213 = vsub.f32 %v2166, %v2212
    %v2214 = vand.u32 %v2213, 4294901760
    %v2215 = vsub.f32 %v2213, %v2214
    %v2216 = vand.u32 %v2215, 4294901760
    %2217 = vmatpush.msra.mxu0 %v2216
    %v2218 = vand.u32 %v2169, 4294901760
    %2219 = vmatmul.f32.gmra.mxu0 %v2218
    %v2220 = vpop.f32.mrf.mxu0
    %v2221 = vadd.f32 %v2195, %v2220
    %2222 = vdwg.mxu0
    %2223 = vmatpush.msra.mxu0 0.0
    %2224 = vmatpush.msra.mxu0 0.0
    %2225 = vmatpush.msra.mxu0 0.0
    %2226 = vmatpush.msra.mxu0 0.0
    %2227 = vmatpush.msra.mxu0 0.0
    %2228 = vmatpush.msra.mxu0 0.0
    %2229 = vmatpush.msra.mxu0 0.0
    %2230 = vmatpush.msra.mxu0 0.0
    %2231 = vmatpush.msra.mxu0 0.0
    %2232 = vmatpush.msra.mxu0 0.0
    %2233 = vmatpush.msra.mxu0 0.0
    %2234 = vmatpush.msra.mxu0 0.0
    %2235 = vmatpush.msra.mxu0 0.0
    %2236 = vmatpush.msra.mxu0 0.0
    %2237 = vmatpush.msra.mxu0 0.0
    %v2238 = vand.u32 %v2166, 4294901760
    %v2239 = vsub.f32 %v2166, %v2238
    %2240 = vmatpush.msra.mxu0 %v2239
    %v2241 = vand.u32 %v2169, 4294901760
    %v2242 = vsub.f32 %v2169, %v2241
    %2243 = vmatmul.f32.gmra.mxu0 %v2242
    %v2244 = vpop.f32.mrf.mxu0
    %v2245 = vadd.f32 %v2221, %v2244
    %2246 = vdwg.mxu0
    %2247 = vmatpush.msra.mxu0 0.0
    %2248 = vmatpush.msra.mxu0 0.0
    %2249 = vmatpush.msra.mxu0 0.0
    %2250 = vmatpush.msra.mxu0 0.0
    %2251 = vmatpush.msra.mxu0 0.0
    %2252 = vmatpush.msra.mxu0 0.0
    %2253 = vmatpush.msra.mxu0 0.0
    %2254 = vmatpush.msra.mxu0 0.0
    %2255 = vmatpush.msra.mxu0 0.0
    %2256 = vmatpush.msra.mxu0 0.0
    %2257 = vmatpush.msra.mxu0 0.0
    %2258 = vmatpush.msra.mxu0 0.0
    %2259 = vmatpush.msra.mxu0 0.0
    %2260 = vmatpush.msra.mxu0 0.0
    %2261 = vmatpush.msra.mxu0 0.0
    %v2262 = vand.u32 %v2166, 4294901760
    %2263 = vmatpush.msra.mxu0 %v2262
    %v2264 = vand.u32 %v2169, 4294901760
    %v2265 = vsub.f32 %v2169, %v2264
    %v2266 = vand.u32 %v2265, 4294901760
    %2267 = vmatmul.f32.gmra.mxu0 %v2266
    %v2268 = vpop.f32.mrf.mxu0
    %v2269 = vadd.f32 %v2245, %v2268
    %2270 = vdwg.mxu0
    %2271 = vmatpush.msra.mxu0 0.0
    %2272 = vmatpush.msra.mxu0 0.0
    %2273 = vmatpush.msra.mxu0 0.0
    %2274 = vmatpush.msra.mxu0 0.0
    %2275 = vmatpush.msra.mxu0 0.0
    %2276 = vmatpush.msra.mxu0 0.0
    %2277 = vmatpush.msra.mxu0 0.0
    %2278 = vmatpush.msra.mxu0 0.0
    %2279 = vmatpush.msra.mxu0 0.0
    %2280 = vmatpush.msra.mxu0 0.0
    %2281 = vmatpush.msra.mxu0 0.0
    %2282 = vmatpush.msra.mxu0 0.0
    %2283 = vmatpush.msra.mxu0 0.0
    %2284 = vmatpush.msra.mxu0 0.0
    %2285 = vmatpush.msra.mxu0 0.0
    %v2286 = vand.u32 %v2166, 4294901760
    %v2287 = vsub.f32 %v2166, %v2286
    %v2288 = vand.u32 %v2287, 4294901760
    %2289 = vmatpush.msra.mxu0 %v2288
    %v2290 = vand.u32 %v2169, 4294901760
    %2291 = vmatmul.f32.gmra.mxu0 %v2290
    %v2292 = vpop.f32.mrf.mxu0
    %v2293 = vadd.f32 %v2269, %v2292
    %2294 = vdwg.mxu0
    %2295 = vmatpush.msra.mxu0 0.0
    %2296 = vmatpush.msra.mxu0 0.0
    %2297 = vmatpush.msra.mxu0 0.0
    %2298 = vmatpush.msra.mxu0 0.0
    %2299 = vmatpush.msra.mxu0 0.0
    %2300 = vmatpush.msra.mxu0 0.0
    %2301 = vmatpush.msra.mxu0 0.0
    %2302 = vmatpush.msra.mxu0 0.0
    %2303 = vmatpush.msra.mxu0 0.0
    %2304 = vmatpush.msra.mxu0 0.0
    %2305 = vmatpush.msra.mxu0 0.0
    %2306 = vmatpush.msra.mxu0 0.0
    %2307 = vmatpush.msra.mxu0 0.0
    %2308 = vmatpush.msra.mxu0 0.0
    %2309 = vmatpush.msra.mxu0 0.0
    %v2310 = vand.u32 %v2166, 4294901760
    %2311 = vmatpush.msra.mxu0 %v2310
    %v2312 = vand.u32 %v2169, 4294901760
    %2313 = vmatmul.f32.gmra.mxu0 %v2312
    %v2314 = vpop.f32.mrf.mxu0
    %v2315 = vadd.f32 %v2293, %v2314
    %2316 = vdwg.mxu0
    %v2318 = vsel %vm546, %v2315, 0
    %2320 = vmatpush.msra.mxu0 0.0
    %2321 = vmatpush.msra.mxu0 0.0
    %2322 = vmatpush.msra.mxu0 0.0
    %2323 = vmatpush.msra.mxu0 0.0
    %2324 = vmatpush.msra.mxu0 0.0
    %2325 = vmatpush.msra.mxu0 0.0
    %2326 = vmatpush.msra.mxu0 0.0
    %2327 = vmatpush.msra.mxu0 0.0
    %2328 = vmatpush.msra.mxu0 0.0
    %2329 = vmatpush.msra.mxu0 0.0
    %2330 = vmatpush.msra.mxu0 0.0
    %2331 = vmatpush.msra.mxu0 0.0
    %2332 = vmatpush.msra.mxu0 0.0
    %2333 = vmatpush.msra.mxu0 0.0
    %2334 = vmatpush.msra.mxu0 0.0
    %v2335 = vand.u32 %v544, 4294901760
    %2336 = vmatpush.msra.mxu0 %v2335
    %v2337 = vand.u32 %v2318, 4294901760
    %v2338 = vsub.f32 %v2318, %v2337
    %v2339 = vand.u32 %v2338, 4294901760
    %v2340 = vsub.f32 %v2338, %v2339
    %v2341 = vand.u32 %v2340, 4294901760
    %2342 = vmatmul.f32.gmra.mxu0 %v2341
    %v2343 = vpop.f32.mrf.mxu0
    %v2344 = vadd.f32 0.0, %v2343
    %2345 = vdwg.mxu0
    %2346 = vmatpush.msra.mxu0 0.0
    %2347 = vmatpush.msra.mxu0 0.0
    %2348 = vmatpush.msra.mxu0 0.0
    %2349 = vmatpush.msra.mxu0 0.0
    %2350 = vmatpush.msra.mxu0 0.0
    %2351 = vmatpush.msra.mxu0 0.0
    %2352 = vmatpush.msra.mxu0 0.0
    %2353 = vmatpush.msra.mxu0 0.0
    %2354 = vmatpush.msra.mxu0 0.0
    %2355 = vmatpush.msra.mxu0 0.0
    %2356 = vmatpush.msra.mxu0 0.0
    %2357 = vmatpush.msra.mxu0 0.0
    %2358 = vmatpush.msra.mxu0 0.0
    %2359 = vmatpush.msra.mxu0 0.0
    %2360 = vmatpush.msra.mxu0 0.0
    %v2361 = vand.u32 %v544, 4294901760
    %v2362 = vsub.f32 %v544, %v2361
    %v2363 = vand.u32 %v2362, 4294901760
    %v2364 = vsub.f32 %v2362, %v2363
    %v2365 = vand.u32 %v2364, 4294901760
    %2366 = vmatpush.msra.mxu0 %v2365
    %v2367 = vand.u32 %v2318, 4294901760
    %2368 = vmatmul.f32.gmra.mxu0 %v2367
    %v2369 = vpop.f32.mrf.mxu0
    %v2370 = vadd.f32 %v2344, %v2369
    %2371 = vdwg.mxu0
    %2372 = vmatpush.msra.mxu0 0.0
    %2373 = vmatpush.msra.mxu0 0.0
    %2374 = vmatpush.msra.mxu0 0.0
    %2375 = vmatpush.msra.mxu0 0.0
    %2376 = vmatpush.msra.mxu0 0.0
    %2377 = vmatpush.msra.mxu0 0.0
    %2378 = vmatpush.msra.mxu0 0.0
    %2379 = vmatpush.msra.mxu0 0.0
    %2380 = vmatpush.msra.mxu0 0.0
    %2381 = vmatpush.msra.mxu0 0.0
    %2382 = vmatpush.msra.mxu0 0.0
    %2383 = vmatpush.msra.mxu0 0.0
    %2384 = vmatpush.msra.mxu0 0.0
    %2385 = vmatpush.msra.mxu0 0.0
    %2386 = vmatpush.msra.mxu0 0.0
    %v2387 = vand.u32 %v544, 4294901760
    %v2388 = vsub.f32 %v544, %v2387
    %2389 = vmatpush.msra.mxu0 %v2388
    %v2390 = vand.u32 %v2318, 4294901760
    %v2391 = vsub.f32 %v2318, %v2390
    %2392 = vmatmul.f32.gmra.mxu0 %v2391
    %v2393 = vpop.f32.mrf.mxu0
    %v2394 = vadd.f32 %v2370, %v2393
    %2395 = vdwg.mxu0
    %2396 = vmatpush.msra.mxu0 0.0
    %2397 = vmatpush.msra.mxu0 0.0
    %2398 = vmatpush.msra.mxu0 0.0
    %2399 = vmatpush.msra.mxu0 0.0
    %2400 = vmatpush.msra.mxu0 0.0
    %2401 = vmatpush.msra.mxu0 0.0
    %2402 = vmatpush.msra.mxu0 0.0
    %2403 = vmatpush.msra.mxu0 0.0
    %2404 = vmatpush.msra.mxu0 0.0
    %2405 = vmatpush.msra.mxu0 0.0
    %2406 = vmatpush.msra.mxu0 0.0
    %2407 = vmatpush.msra.mxu0 0.0
    %2408 = vmatpush.msra.mxu0 0.0
    %2409 = vmatpush.msra.mxu0 0.0
    %2410 = vmatpush.msra.mxu0 0.0
    %v2411 = vand.u32 %v544, 4294901760
    %2412 = vmatpush.msra.mxu0 %v2411
    %v2413 = vand.u32 %v2318, 4294901760
    %v2414 = vsub.f32 %v2318, %v2413
    %v2415 = vand.u32 %v2414, 4294901760
    %2416 = vmatmul.f32.gmra.mxu0 %v2415
    %v2417 = vpop.f32.mrf.mxu0
    %v2418 = vadd.f32 %v2394, %v2417
    %2419 = vdwg.mxu0
    %2420 = vmatpush.msra.mxu0 0.0
    %2421 = vmatpush.msra.mxu0 0.0
    %2422 = vmatpush.msra.mxu0 0.0
    %2423 = vmatpush.msra.mxu0 0.0
    %2424 = vmatpush.msra.mxu0 0.0
    %2425 = vmatpush.msra.mxu0 0.0
    %2426 = vmatpush.msra.mxu0 0.0
    %2427 = vmatpush.msra.mxu0 0.0
    %2428 = vmatpush.msra.mxu0 0.0
    %2429 = vmatpush.msra.mxu0 0.0
    %2430 = vmatpush.msra.mxu0 0.0
    %2431 = vmatpush.msra.mxu0 0.0
    %2432 = vmatpush.msra.mxu0 0.0
    %2433 = vmatpush.msra.mxu0 0.0
    %2434 = vmatpush.msra.mxu0 0.0
    %v2435 = vand.u32 %v544, 4294901760
    %v2436 = vsub.f32 %v544, %v2435
    %v2437 = vand.u32 %v2436, 4294901760
    %2438 = vmatpush.msra.mxu0 %v2437
    %v2439 = vand.u32 %v2318, 4294901760
    %2440 = vmatmul.f32.gmra.mxu0 %v2439
    %v2441 = vpop.f32.mrf.mxu0
    %v2442 = vadd.f32 %v2418, %v2441
    %2443 = vdwg.mxu0
    %2444 = vmatpush.msra.mxu0 0.0
    %2445 = vmatpush.msra.mxu0 0.0
    %2446 = vmatpush.msra.mxu0 0.0
    %2447 = vmatpush.msra.mxu0 0.0
    %2448 = vmatpush.msra.mxu0 0.0
    %2449 = vmatpush.msra.mxu0 0.0
    %2450 = vmatpush.msra.mxu0 0.0
    %2451 = vmatpush.msra.mxu0 0.0
    %2452 = vmatpush.msra.mxu0 0.0
    %2453 = vmatpush.msra.mxu0 0.0
    %2454 = vmatpush.msra.mxu0 0.0
    %2455 = vmatpush.msra.mxu0 0.0
    %2456 = vmatpush.msra.mxu0 0.0
    %2457 = vmatpush.msra.mxu0 0.0
    %2458 = vmatpush.msra.mxu0 0.0
    %v2459 = vand.u32 %v544, 4294901760
    %2460 = vmatpush.msra.mxu0 %v2459
    %v2461 = vand.u32 %v2318, 4294901760
    %2462 = vmatmul.f32.gmra.mxu0 %v2461
    %v2463 = vpop.f32.mrf.mxu0
    %v2464 = vadd.f32 %v2442, %v2463
    %2465 = vdwg.mxu0
    %v2466 = vadd.f32 %v1985, %v2464
    %v2468 = vsel %vm546, %v311, 0
    %v2471 = vsel %vm546, %v539, 0
    %2473 = vmatpush.xpose.msra.mxu0 0.0
    %2474 = vmatpush.xpose.msra.mxu0 0.0
    %2475 = vmatpush.xpose.msra.mxu0 0.0
    %2476 = vmatpush.xpose.msra.mxu0 0.0
    %2477 = vmatpush.xpose.msra.mxu0 0.0
    %2478 = vmatpush.xpose.msra.mxu0 0.0
    %2479 = vmatpush.xpose.msra.mxu0 0.0
    %2480 = vmatpush.xpose.msra.mxu0 0.0
    %2481 = vmatpush.xpose.msra.mxu0 0.0
    %2482 = vmatpush.xpose.msra.mxu0 0.0
    %2483 = vmatpush.xpose.msra.mxu0 0.0
    %2484 = vmatpush.xpose.msra.mxu0 0.0
    %2485 = vmatpush.xpose.msra.mxu0 0.0
    %2486 = vmatpush.xpose.msra.mxu0 0.0
    %2487 = vmatpush.xpose.msra.mxu0 0.0
    %v2488 = vand.u32 %v2471, 4294901760
    %2489 = vmatpush.xpose.msra.mxu0 %v2488
    %v2490 = vand.u32 %v2468, 4294901760
    %v2491 = vsub.f32 %v2468, %v2490
    %v2492 = vand.u32 %v2491, 4294901760
    %v2493 = vsub.f32 %v2491, %v2492
    %v2494 = vand.u32 %v2493, 4294901760
    %2495 = vmatmul.f32.gmra.mxu0 %v2494
    %v2496 = vpop.f32.mrf.mxu0
    %v2497 = vadd.f32 0.0, %v2496
    %2498 = vdwg.mxu0
    %2499 = vmatpush.xpose.msra.mxu0 0.0
    %2500 = vmatpush.xpose.msra.mxu0 0.0
    %2501 = vmatpush.xpose.msra.mxu0 0.0
    %2502 = vmatpush.xpose.msra.mxu0 0.0
    %2503 = vmatpush.xpose.msra.mxu0 0.0
    %2504 = vmatpush.xpose.msra.mxu0 0.0
    %2505 = vmatpush.xpose.msra.mxu0 0.0
    %2506 = vmatpush.xpose.msra.mxu0 0.0
    %2507 = vmatpush.xpose.msra.mxu0 0.0
    %2508 = vmatpush.xpose.msra.mxu0 0.0
    %2509 = vmatpush.xpose.msra.mxu0 0.0
    %2510 = vmatpush.xpose.msra.mxu0 0.0
    %2511 = vmatpush.xpose.msra.mxu0 0.0
    %2512 = vmatpush.xpose.msra.mxu0 0.0
    %2513 = vmatpush.xpose.msra.mxu0 0.0
    %v2514 = vand.u32 %v2471, 4294901760
    %v2515 = vsub.f32 %v2471, %v2514
    %v2516 = vand.u32 %v2515, 4294901760
    %v2517 = vsub.f32 %v2515, %v2516
    %v2518 = vand.u32 %v2517, 4294901760
    %2519 = vmatpush.xpose.msra.mxu0 %v2518
    %v2520 = vand.u32 %v2468, 4294901760
    %2521 = vmatmul.f32.gmra.mxu0 %v2520
    %v2522 = vpop.f32.mrf.mxu0
    %v2523 = vadd.f32 %v2497, %v2522
    %2524 = vdwg.mxu0
    %2525 = vmatpush.xpose.msra.mxu0 0.0
    %2526 = vmatpush.xpose.msra.mxu0 0.0
    %2527 = vmatpush.xpose.msra.mxu0 0.0
    %2528 = vmatpush.xpose.msra.mxu0 0.0
    %2529 = vmatpush.xpose.msra.mxu0 0.0
    %2530 = vmatpush.xpose.msra.mxu0 0.0
    %2531 = vmatpush.xpose.msra.mxu0 0.0
    %2532 = vmatpush.xpose.msra.mxu0 0.0
    %2533 = vmatpush.xpose.msra.mxu0 0.0
    %2534 = vmatpush.xpose.msra.mxu0 0.0
    %2535 = vmatpush.xpose.msra.mxu0 0.0
    %2536 = vmatpush.xpose.msra.mxu0 0.0
    %2537 = vmatpush.xpose.msra.mxu0 0.0
    %2538 = vmatpush.xpose.msra.mxu0 0.0
    %2539 = vmatpush.xpose.msra.mxu0 0.0
    %v2540 = vand.u32 %v2471, 4294901760
    %v2541 = vsub.f32 %v2471, %v2540
    %2542 = vmatpush.xpose.msra.mxu0 %v2541
    %v2543 = vand.u32 %v2468, 4294901760
    %v2544 = vsub.f32 %v2468, %v2543
    %2545 = vmatmul.f32.gmra.mxu0 %v2544
    %v2546 = vpop.f32.mrf.mxu0
    %v2547 = vadd.f32 %v2523, %v2546
    %2548 = vdwg.mxu0
    %2549 = vmatpush.xpose.msra.mxu0 0.0
    %2550 = vmatpush.xpose.msra.mxu0 0.0
    %2551 = vmatpush.xpose.msra.mxu0 0.0
    %2552 = vmatpush.xpose.msra.mxu0 0.0
    %2553 = vmatpush.xpose.msra.mxu0 0.0
    %2554 = vmatpush.xpose.msra.mxu0 0.0
    %2555 = vmatpush.xpose.msra.mxu0 0.0
    %2556 = vmatpush.xpose.msra.mxu0 0.0
    %2557 = vmatpush.xpose.msra.mxu0 0.0
    %2558 = vmatpush.xpose.msra.mxu0 0.0
    %2559 = vmatpush.xpose.msra.mxu0 0.0
    %2560 = vmatpush.xpose.msra.mxu0 0.0
    %2561 = vmatpush.xpose.msra.mxu0 0.0
    %2562 = vmatpush.xpose.msra.mxu0 0.0
    %2563 = vmatpush.xpose.msra.mxu0 0.0
    %v2564 = vand.u32 %v2471, 4294901760
    %2565 = vmatpush.xpose.msra.mxu0 %v2564
    %v2566 = vand.u32 %v2468, 4294901760
    %v2567 = vsub.f32 %v2468, %v2566
    %v2568 = vand.u32 %v2567, 4294901760
    %2569 = vmatmul.f32.gmra.mxu0 %v2568
    %v2570 = vpop.f32.mrf.mxu0
    %v2571 = vadd.f32 %v2547, %v2570
    %2572 = vdwg.mxu0
    %2573 = vmatpush.xpose.msra.mxu0 0.0
    %2574 = vmatpush.xpose.msra.mxu0 0.0
    %2575 = vmatpush.xpose.msra.mxu0 0.0
    %2576 = vmatpush.xpose.msra.mxu0 0.0
    %2577 = vmatpush.xpose.msra.mxu0 0.0
    %2578 = vmatpush.xpose.msra.mxu0 0.0
    %2579 = vmatpush.xpose.msra.mxu0 0.0
    %2580 = vmatpush.xpose.msra.mxu0 0.0
    %2581 = vmatpush.xpose.msra.mxu0 0.0
    %2582 = vmatpush.xpose.msra.mxu0 0.0
    %2583 = vmatpush.xpose.msra.mxu0 0.0
    %2584 = vmatpush.xpose.msra.mxu0 0.0
    %2585 = vmatpush.xpose.msra.mxu0 0.0
    %2586 = vmatpush.xpose.msra.mxu0 0.0
    %2587 = vmatpush.xpose.msra.mxu0 0.0
    %v2588 = vand.u32 %v2471, 4294901760
    %v2589 = vsub.f32 %v2471, %v2588
    %v2590 = vand.u32 %v2589, 4294901760
    %2591 = vmatpush.xpose.msra.mxu0 %v2590
    %v2592 = vand.u32 %v2468, 4294901760
    %2593 = vmatmul.f32.gmra.mxu0 %v2592
    %v2594 = vpop.f32.mrf.mxu0
    %v2595 = vadd.f32 %v2571, %v2594
    %2596 = vdwg.mxu0
    %2597 = vmatpush.xpose.msra.mxu0 0.0
    %2598 = vmatpush.xpose.msra.mxu0 0.0
    %2599 = vmatpush.xpose.msra.mxu0 0.0
    %2600 = vmatpush.xpose.msra.mxu0 0.0
    %2601 = vmatpush.xpose.msra.mxu0 0.0
    %2602 = vmatpush.xpose.msra.mxu0 0.0
    %2603 = vmatpush.xpose.msra.mxu0 0.0
    %2604 = vmatpush.xpose.msra.mxu0 0.0
    %2605 = vmatpush.xpose.msra.mxu0 0.0
    %2606 = vmatpush.xpose.msra.mxu0 0.0
    %2607 = vmatpush.xpose.msra.mxu0 0.0
    %2608 = vmatpush.xpose.msra.mxu0 0.0
    %2609 = vmatpush.xpose.msra.mxu0 0.0
    %2610 = vmatpush.xpose.msra.mxu0 0.0
    %2611 = vmatpush.xpose.msra.mxu0 0.0
    %v2612 = vand.u32 %v2471, 4294901760
    %2613 = vmatpush.xpose.msra.mxu0 %v2612
    %v2614 = vand.u32 %v2468, 4294901760
    %2615 = vmatmul.f32.gmra.mxu0 %v2614
    %v2616 = vpop.f32.mrf.mxu0
    %v2617 = vadd.f32 %v2595, %v2616
    %2618 = vdwg.mxu0
    %v2619 = vmul.f32 %v2617, 0.35355338
    %v2620 = vsel %vm546, %v2619, -inf
    %2621 = vmax.xlane.f32.xlu0 %v2620
    %v2622 = vpop.xlane.xlu0 %2621
    %v2623 = vsub.f32 %v2619, %v2622
    %v2624 = vmul.f32 %v2623, 1.442695
    %v2625 = vpow.pop %v2624
    %v2626 = vsel %vm546, %v2625, 0.0
    %2627 = vadd.xlane.f32.xlu0 %v2626
    %v2628 = vpop.xlane.xlu0 %2627
    %v2629 = vrcp.pop %v2628
    %v2630 = vmul.f32 %v2628, %v2629
    %v2631 = vsub.f32 1.0, %v2630
    %v2632 = vmul.f32 %v2629, %v2631
    %v2633 = vadd.f32 %v2629, %v2632
    %vm2634 = vweird.f32 %v2628
    %vm2635 = vweird.f32 %v2629
    %vm2636 = vmor %vm2634, %vm2635
    %v2637 = vsel %vm2636, %v2629, %v2633
    %v2638 = vand.u32 2147483647, %v2628
    %vm2639 = vcmp.eq.f32.partialorder %v2638, 8.507059e+37
    %v2640 = vand.u32 %v2628, 2147483648
    %v2641 = vor.u32 1.1754944e-38, %v2640
    %v2642 = vsel %vm2639, %v2641, %v2637
    %v2643 = vmul.f32 %v2625, %v2642
    %2644 = vrot.lane.b32.xlu0 %v539, 96
    %v2645 = vpop.permute.xlu0 %2644
    %v2648 = vsel %vm546, %v2643, 0
    %2650 = vmatpush.msra.mxu0 0.0
    %2651 = vmatpush.msra.mxu0 0.0
    %2652 = vmatpush.msra.mxu0 0.0
    %2653 = vmatpush.msra.mxu0 0.0
    %2654 = vmatpush.msra.mxu0 0.0
    %2655 = vmatpush.msra.mxu0 0.0
    %2656 = vmatpush.msra.mxu0 0.0
    %2657 = vmatpush.msra.mxu0 0.0
    %2658 = vmatpush.msra.mxu0 0.0
    %2659 = vmatpush.msra.mxu0 0.0
    %2660 = vmatpush.msra.mxu0 0.0
    %2661 = vmatpush.msra.mxu0 0.0
    %2662 = vmatpush.msra.mxu0 0.0
    %2663 = vmatpush.msra.mxu0 0.0
    %2664 = vmatpush.msra.mxu0 0.0
    %v2665 = vand.u32 %v2645, 4294901760
    %2666 = vmatpush.msra.mxu0 %v2665
    %v2667 = vand.u32 %v2648, 4294901760
    %v2668 = vsub.f32 %v2648, %v2667
    %v2669 = vand.u32 %v2668, 4294901760
    %v2670 = vsub.f32 %v2668, %v2669
    %v2671 = vand.u32 %v2670, 4294901760
    %2672 = vmatmul.f32.gmra.mxu0 %v2671
    %v2673 = vpop.f32.mrf.mxu0
    %v2674 = vadd.f32 0.0, %v2673
    %2675 = vdwg.mxu0
    %2676 = vmatpush.msra.mxu0 0.0
    %2677 = vmatpush.msra.mxu0 0.0
    %2678 = vmatpush.msra.mxu0 0.0
    %2679 = vmatpush.msra.mxu0 0.0
    %2680 = vmatpush.msra.mxu0 0.0
    %2681 = vmatpush.msra.mxu0 0.0
    %2682 = vmatpush.msra.mxu0 0.0
    %2683 = vmatpush.msra.mxu0 0.0
    %2684 = vmatpush.msra.mxu0 0.0
    %2685 = vmatpush.msra.mxu0 0.0
    %2686 = vmatpush.msra.mxu0 0.0
    %2687 = vmatpush.msra.mxu0 0.0
    %2688 = vmatpush.msra.mxu0 0.0
    %2689 = vmatpush.msra.mxu0 0.0
    %2690 = vmatpush.msra.mxu0 0.0
    %v2691 = vand.u32 %v2645, 4294901760
    %v2692 = vsub.f32 %v2645, %v2691
    %v2693 = vand.u32 %v2692, 4294901760
    %v2694 = vsub.f32 %v2692, %v2693
    %v2695 = vand.u32 %v2694, 4294901760
    %2696 = vmatpush.msra.mxu0 %v2695
    %v2697 = vand.u32 %v2648, 4294901760
    %2698 = vmatmul.f32.gmra.mxu0 %v2697
    %v2699 = vpop.f32.mrf.mxu0
    %v2700 = vadd.f32 %v2674, %v2699
    %2701 = vdwg.mxu0
    %2702 = vmatpush.msra.mxu0 0.0
    %2703 = vmatpush.msra.mxu0 0.0
    %2704 = vmatpush.msra.mxu0 0.0
    %2705 = vmatpush.msra.mxu0 0.0
    %2706 = vmatpush.msra.mxu0 0.0
    %2707 = vmatpush.msra.mxu0 0.0
    %2708 = vmatpush.msra.mxu0 0.0
    %2709 = vmatpush.msra.mxu0 0.0
    %2710 = vmatpush.msra.mxu0 0.0
    %2711 = vmatpush.msra.mxu0 0.0
    %2712 = vmatpush.msra.mxu0 0.0
    %2713 = vmatpush.msra.mxu0 0.0
    %2714 = vmatpush.msra.mxu0 0.0
    %2715 = vmatpush.msra.mxu0 0.0
    %2716 = vmatpush.msra.mxu0 0.0
    %v2717 = vand.u32 %v2645, 4294901760
    %v2718 = vsub.f32 %v2645, %v2717
    %2719 = vmatpush.msra.mxu0 %v2718
    %v2720 = vand.u32 %v2648, 4294901760
    %v2721 = vsub.f32 %v2648, %v2720
    %2722 = vmatmul.f32.gmra.mxu0 %v2721
    %v2723 = vpop.f32.mrf.mxu0
    %v2724 = vadd.f32 %v2700, %v2723
    %2725 = vdwg.mxu0
    %2726 = vmatpush.msra.mxu0 0.0
    %2727 = vmatpush.msra.mxu0 0.0
    %2728 = vmatpush.msra.mxu0 0.0
    %2729 = vmatpush.msra.mxu0 0.0
    %2730 = vmatpush.msra.mxu0 0.0
    %2731 = vmatpush.msra.mxu0 0.0
    %2732 = vmatpush.msra.mxu0 0.0
    %2733 = vmatpush.msra.mxu0 0.0
    %2734 = vmatpush.msra.mxu0 0.0
    %2735 = vmatpush.msra.mxu0 0.0
    %2736 = vmatpush.msra.mxu0 0.0
    %2737 = vmatpush.msra.mxu0 0.0
    %2738 = vmatpush.msra.mxu0 0.0
    %2739 = vmatpush.msra.mxu0 0.0
    %2740 = vmatpush.msra.mxu0 0.0
    %v2741 = vand.u32 %v2645, 4294901760
    %2742 = vmatpush.msra.mxu0 %v2741
    %v2743 = vand.u32 %v2648, 4294901760
    %v2744 = vsub.f32 %v2648, %v2743
    %v2745 = vand.u32 %v2744, 4294901760
    %2746 = vmatmul.f32.gmra.mxu0 %v2745
    %v2747 = vpop.f32.mrf.mxu0
    %v2748 = vadd.f32 %v2724, %v2747
    %2749 = vdwg.mxu0
    %2750 = vmatpush.msra.mxu0 0.0
    %2751 = vmatpush.msra.mxu0 0.0
    %2752 = vmatpush.msra.mxu0 0.0
    %2753 = vmatpush.msra.mxu0 0.0
    %2754 = vmatpush.msra.mxu0 0.0
    %2755 = vmatpush.msra.mxu0 0.0
    %2756 = vmatpush.msra.mxu0 0.0
    %2757 = vmatpush.msra.mxu0 0.0
    %2758 = vmatpush.msra.mxu0 0.0
    %2759 = vmatpush.msra.mxu0 0.0
    %2760 = vmatpush.msra.mxu0 0.0
    %2761 = vmatpush.msra.mxu0 0.0
    %2762 = vmatpush.msra.mxu0 0.0
    %2763 = vmatpush.msra.mxu0 0.0
    %2764 = vmatpush.msra.mxu0 0.0
    %v2765 = vand.u32 %v2645, 4294901760
    %v2766 = vsub.f32 %v2645, %v2765
    %v2767 = vand.u32 %v2766, 4294901760
    %2768 = vmatpush.msra.mxu0 %v2767
    %v2769 = vand.u32 %v2648, 4294901760
    %2770 = vmatmul.f32.gmra.mxu0 %v2769
    %v2771 = vpop.f32.mrf.mxu0
    %v2772 = vadd.f32 %v2748, %v2771
    %2773 = vdwg.mxu0
    %2774 = vmatpush.msra.mxu0 0.0
    %2775 = vmatpush.msra.mxu0 0.0
    %2776 = vmatpush.msra.mxu0 0.0
    %2777 = vmatpush.msra.mxu0 0.0
    %2778 = vmatpush.msra.mxu0 0.0
    %2779 = vmatpush.msra.mxu0 0.0
    %2780 = vmatpush.msra.mxu0 0.0
    %2781 = vmatpush.msra.mxu0 0.0
    %2782 = vmatpush.msra.mxu0 0.0
    %2783 = vmatpush.msra.mxu0 0.0
    %2784 = vmatpush.msra.mxu0 0.0
    %2785 = vmatpush.msra.mxu0 0.0
    %2786 = vmatpush.msra.mxu0 0.0
    %2787 = vmatpush.msra.mxu0 0.0
    %2788 = vmatpush.msra.mxu0 0.0
    %v2789 = vand.u32 %v2645, 4294901760
    %2790 = vmatpush.msra.mxu0 %v2789
    %v2791 = vand.u32 %v2648, 4294901760
    %2792 = vmatmul.f32.gmra.mxu0 %v2791
    %v2793 = vpop.f32.mrf.mxu0
    %v2794 = vadd.f32 %v2772, %v2793
    %2795 = vdwg.mxu0
    %2796 = vrot.lane.b32.xlu0 %v311, 120
    %v2797 = vpop.permute.xlu0 %2796
    %2798 = vrot.lane.b32.xlu0 %v539, 120
    %v2799 = vpop.permute.xlu0 %2798
    %v2800 = vsel %vm546, %v2797, 0
    %v2802 = vsel %vm546, %v2799, 0
    %2804 = vmatpush.xpose.msra.mxu0 0.0
    %2805 = vmatpush.xpose.msra.mxu0 0.0
    %2806 = vmatpush.xpose.msra.mxu0 0.0
    %2807 = vmatpush.xpose.msra.mxu0 0.0
    %2808 = vmatpush.xpose.msra.mxu0 0.0
    %2809 = vmatpush.xpose.msra.mxu0 0.0
    %2810 = vmatpush.xpose.msra.mxu0 0.0
    %2811 = vmatpush.xpose.msra.mxu0 0.0
    %2812 = vmatpush.xpose.msra.mxu0 0.0
    %2813 = vmatpush.xpose.msra.mxu0 0.0
    %2814 = vmatpush.xpose.msra.mxu0 0.0
    %2815 = vmatpush.xpose.msra.mxu0 0.0
    %2816 = vmatpush.xpose.msra.mxu0 0.0
    %2817 = vmatpush.xpose.msra.mxu0 0.0
    %2818 = vmatpush.xpose.msra.mxu0 0.0
    %v2819 = vand.u32 %v2802, 4294901760
    %2820 = vmatpush.xpose.msra.mxu0 %v2819
    %v2821 = vand.u32 %v2800, 4294901760
    %v2822 = vsub.f32 %v2800, %v2821
    %v2823 = vand.u32 %v2822, 4294901760
    %v2824 = vsub.f32 %v2822, %v2823
    %v2825 = vand.u32 %v2824, 4294901760
    %2826 = vmatmul.f32.gmra.mxu0 %v2825
    %v2827 = vpop.f32.mrf.mxu0
    %v2828 = vadd.f32 0.0, %v2827
    %2829 = vdwg.mxu0
    %2830 = vmatpush.xpose.msra.mxu0 0.0
    %2831 = vmatpush.xpose.msra.mxu0 0.0
    %2832 = vmatpush.xpose.msra.mxu0 0.0
    %2833 = vmatpush.xpose.msra.mxu0 0.0
    %2834 = vmatpush.xpose.msra.mxu0 0.0
    %2835 = vmatpush.xpose.msra.mxu0 0.0
    %2836 = vmatpush.xpose.msra.mxu0 0.0
    %2837 = vmatpush.xpose.msra.mxu0 0.0
    %2838 = vmatpush.xpose.msra.mxu0 0.0
    %2839 = vmatpush.xpose.msra.mxu0 0.0
    %2840 = vmatpush.xpose.msra.mxu0 0.0
    %2841 = vmatpush.xpose.msra.mxu0 0.0
    %2842 = vmatpush.xpose.msra.mxu0 0.0
    %2843 = vmatpush.xpose.msra.mxu0 0.0
    %2844 = vmatpush.xpose.msra.mxu0 0.0
    %v2845 = vand.u32 %v2802, 4294901760
    %v2846 = vsub.f32 %v2802, %v2845
    %v2847 = vand.u32 %v2846, 4294901760
    %v2848 = vsub.f32 %v2846, %v2847
    %v2849 = vand.u32 %v2848, 4294901760
    %2850 = vmatpush.xpose.msra.mxu0 %v2849
    %v2851 = vand.u32 %v2800, 4294901760
    %2852 = vmatmul.f32.gmra.mxu0 %v2851
    %v2853 = vpop.f32.mrf.mxu0
    %v2854 = vadd.f32 %v2828, %v2853
    %2855 = vdwg.mxu0
    %2856 = vmatpush.xpose.msra.mxu0 0.0
    %2857 = vmatpush.xpose.msra.mxu0 0.0
    %2858 = vmatpush.xpose.msra.mxu0 0.0
    %2859 = vmatpush.xpose.msra.mxu0 0.0
    %2860 = vmatpush.xpose.msra.mxu0 0.0
    %2861 = vmatpush.xpose.msra.mxu0 0.0
    %2862 = vmatpush.xpose.msra.mxu0 0.0
    %2863 = vmatpush.xpose.msra.mxu0 0.0
    %2864 = vmatpush.xpose.msra.mxu0 0.0
    %2865 = vmatpush.xpose.msra.mxu0 0.0
    %2866 = vmatpush.xpose.msra.mxu0 0.0
    %2867 = vmatpush.xpose.msra.mxu0 0.0
    %2868 = vmatpush.xpose.msra.mxu0 0.0
    %2869 = vmatpush.xpose.msra.mxu0 0.0
    %2870 = vmatpush.xpose.msra.mxu0 0.0
    %v2871 = vand.u32 %v2802, 4294901760
    %v2872 = vsub.f32 %v2802, %v2871
    %2873 = vmatpush.xpose.msra.mxu0 %v2872
    %v2874 = vand.u32 %v2800, 4294901760
    %v2875 = vsub.f32 %v2800, %v2874
    %2876 = vmatmul.f32.gmra.mxu0 %v2875
    %v2877 = vpop.f32.mrf.mxu0
    %v2878 = vadd.f32 %v2854, %v2877
    %2879 = vdwg.mxu0
    %2880 = vmatpush.xpose.msra.mxu0 0.0
    %2881 = vmatpush.xpose.msra.mxu0 0.0
    %2882 = vmatpush.xpose.msra.mxu0 0.0
    %2883 = vmatpush.xpose.msra.mxu0 0.0
    %2884 = vmatpush.xpose.msra.mxu0 0.0
    %2885 = vmatpush.xpose.msra.mxu0 0.0
    %2886 = vmatpush.xpose.msra.mxu0 0.0
    %2887 = vmatpush.xpose.msra.mxu0 0.0
    %2888 = vmatpush.xpose.msra.mxu0 0.0
    %2889 = vmatpush.xpose.msra.mxu0 0.0
    %2890 = vmatpush.xpose.msra.mxu0 0.0
    %2891 = vmatpush.xpose.msra.mxu0 0.0
    %2892 = vmatpush.xpose.msra.mxu0 0.0
    %2893 = vmatpush.xpose.msra.mxu0 0.0
    %2894 = vmatpush.xpose.msra.mxu0 0.0
    %v2895 = vand.u32 %v2802, 4294901760
    %2896 = vmatpush.xpose.msra.mxu0 %v2895
    %v2897 = vand.u32 %v2800, 4294901760
    %v2898 = vsub.f32 %v2800, %v2897
    %v2899 = vand.u32 %v2898, 4294901760
    %2900 = vmatmul.f32.gmra.mxu0 %v2899
    %v2901 = vpop.f32.mrf.mxu0
    %v2902 = vadd.f32 %v2878, %v2901
    %2903 = vdwg.mxu0
    %2904 = vmatpush.xpose.msra.mxu0 0.0
    %2905 = vmatpush.xpose.msra.mxu0 0.0
    %2906 = vmatpush.xpose.msra.mxu0 0.0
    %2907 = vmatpush.xpose.msra.mxu0 0.0
    %2908 = vmatpush.xpose.msra.mxu0 0.0
    %2909 = vmatpush.xpose.msra.mxu0 0.0
    %2910 = vmatpush.xpose.msra.mxu0 0.0
    %2911 = vmatpush.xpose.msra.mxu0 0.0
    %2912 = vmatpush.xpose.msra.mxu0 0.0
    %2913 = vmatpush.xpose.msra.mxu0 0.0
    %2914 = vmatpush.xpose.msra.mxu0 0.0
    %2915 = vmatpush.xpose.msra.mxu0 0.0
    %2916 = vmatpush.xpose.msra.mxu0 0.0
    %2917 = vmatpush.xpose.msra.mxu0 0.0
    %2918 = vmatpush.xpose.msra.mxu0 0.0
    %v2919 = vand.u32 %v2802, 4294901760
    %v2920 = vsub.f32 %v2802, %v2919
    %v2921 = vand.u32 %v2920, 4294901760
    %2922 = vmatpush.xpose.msra.mxu0 %v2921
    %v2923 = vand.u32 %v2800, 4294901760
    %2924 = vmatmul.f32.gmra.mxu0 %v2923
    %v2925 = vpop.f32.mrf.mxu0
    %v2926 = vadd.f32 %v2902, %v2925
    %2927 = vdwg.mxu0
    %2928 = vmatpush.xpose.msra.mxu0 0.0
    %2929 = vmatpush.xpose.msra.mxu0 0.0
    %2930 = vmatpush.xpose.msra.mxu0 0.0
    %2931 = vmatpush.xpose.msra.mxu0 0.0
    %2932 = vmatpush.xpose.msra.mxu0 0.0
    %2933 = vmatpush.xpose.msra.mxu0 0.0
    %2934 = vmatpush.xpose.msra.mxu0 0.0
    %2935 = vmatpush.xpose.msra.mxu0 0.0
    %2936 = vmatpush.xpose.msra.mxu0 0.0
    %2937 = vmatpush.xpose.msra.mxu0 0.0
    %2938 = vmatpush.xpose.msra.mxu0 0.0
    %2939 = vmatpush.xpose.msra.mxu0 0.0
    %2940 = vmatpush.xpose.msra.mxu0 0.0
    %2941 = vmatpush.xpose.msra.mxu0 0.0
    %2942 = vmatpush.xpose.msra.mxu0 0.0
    %v2943 = vand.u32 %v2802, 4294901760
    %2944 = vmatpush.xpose.msra.mxu0 %v2943
    %v2945 = vand.u32 %v2800, 4294901760
    %2946 = vmatmul.f32.gmra.mxu0 %v2945
    %v2947 = vpop.f32.mrf.mxu0
    %v2948 = vadd.f32 %v2926, %v2947
    %2949 = vdwg.mxu0
    %v2950 = vmul.f32 %v2948, 0.35355338
    %v2951 = vsel %vm546, %v2950, -inf
    %2952 = vmax.xlane.f32.xlu0 %v2951
    %v2953 = vpop.xlane.xlu0 %2952
    %v2954 = vsub.f32 %v2950, %v2953
    %v2955 = vmul.f32 %v2954, 1.442695
    %v2956 = vpow.pop %v2955
    %v2957 = vsel %vm546, %v2956, 0.0
    %2958 = vadd.xlane.f32.xlu0 %v2957
    %v2959 = vpop.xlane.xlu0 %2958
    %v2960 = vrcp.pop %v2959
    %v2961 = vmul.f32 %v2959, %v2960
    %v2962 = vsub.f32 1.0, %v2961
    %v2963 = vmul.f32 %v2960, %v2962
    %v2964 = vadd.f32 %v2960, %v2963
    %vm2965 = vweird.f32 %v2959
    %vm2966 = vweird.f32 %v2960
    %vm2967 = vmor %vm2965, %vm2966
    %v2968 = vsel %vm2967, %v2960, %v2964
    %v2969 = vand.u32 2147483647, %v2959
    %vm2970 = vcmp.eq.f32.partialorder %v2969, 8.507059e+37
    %v2971 = vand.u32 %v2959, 2147483648
    %v2972 = vor.u32 1.1754944e-38, %v2971
    %v2973 = vsel %vm2970, %v2972, %v2968
    %v2974 = vmul.f32 %v2956, %v2973
    %2975 = vrot.lane.b32.xlu0 %v539, 88
    %v2976 = vpop.permute.xlu0 %2975
    %v2979 = vsel %vm546, %v2974, 0
    %2981 = vmatpush.msra.mxu0 0.0
    %2982 = vmatpush.msra.mxu0 0.0
    %2983 = vmatpush.msra.mxu0 0.0
    %2984 = vmatpush.msra.mxu0 0.0
    %2985 = vmatpush.msra.mxu0 0.0
    %2986 = vmatpush.msra.mxu0 0.0
    %2987 = vmatpush.msra.mxu0 0.0
    %2988 = vmatpush.msra.mxu0 0.0
    %2989 = vmatpush.msra.mxu0 0.0
    %2990 = vmatpush.msra.mxu0 0.0
    %2991 = vmatpush.msra.mxu0 0.0
    %2992 = vmatpush.msra.mxu0 0.0
    %2993 = vmatpush.msra.mxu0 0.0
    %2994 = vmatpush.msra.mxu0 0.0
    %2995 = vmatpush.msra.mxu0 0.0
    %v2996 = vand.u32 %v2976, 4294901760
    %2997 = vmatpush.msra.mxu0 %v2996
    %v2998 = vand.u32 %v2979, 4294901760
    %v2999 = vsub.f32 %v2979, %v2998
    %v3000 = vand.u32 %v2999, 4294901760
    %v3001 = vsub.f32 %v2999, %v3000
    %v3002 = vand.u32 %v3001, 4294901760
    %3003 = vmatmul.f32.gmra.mxu0 %v3002
    %v3004 = vpop.f32.mrf.mxu0
    %v3005 = vadd.f32 0.0, %v3004
    %3006 = vdwg.mxu0
    %3007 = vmatpush.msra.mxu0 0.0
    %3008 = vmatpush.msra.mxu0 0.0
    %3009 = vmatpush.msra.mxu0 0.0
    %3010 = vmatpush.msra.mxu0 0.0
    %3011 = vmatpush.msra.mxu0 0.0
    %3012 = vmatpush.msra.mxu0 0.0
    %3013 = vmatpush.msra.mxu0 0.0
    %3014 = vmatpush.msra.mxu0 0.0
    %3015 = vmatpush.msra.mxu0 0.0
    %3016 = vmatpush.msra.mxu0 0.0
    %3017 = vmatpush.msra.mxu0 0.0
    %3018 = vmatpush.msra.mxu0 0.0
    %3019 = vmatpush.msra.mxu0 0.0
    %3020 = vmatpush.msra.mxu0 0.0
    %3021 = vmatpush.msra.mxu0 0.0
    %v3022 = vand.u32 %v2976, 4294901760
    %v3023 = vsub.f32 %v2976, %v3022
    %v3024 = vand.u32 %v3023, 4294901760
    %v3025 = vsub.f32 %v3023, %v3024
    %v3026 = vand.u32 %v3025, 4294901760
    %3027 = vmatpush.msra.mxu0 %v3026
    %v3028 = vand.u32 %v2979, 4294901760
    %3029 = vmatmul.f32.gmra.mxu0 %v3028
    %v3030 = vpop.f32.mrf.mxu0
    %v3031 = vadd.f32 %v3005, %v3030
    %3032 = vdwg.mxu0
    %3033 = vmatpush.msra.mxu0 0.0
    %3034 = vmatpush.msra.mxu0 0.0
    %3035 = vmatpush.msra.mxu0 0.0
    %3036 = vmatpush.msra.mxu0 0.0
    %3037 = vmatpush.msra.mxu0 0.0
    %3038 = vmatpush.msra.mxu0 0.0
    %3039 = vmatpush.msra.mxu0 0.0
    %3040 = vmatpush.msra.mxu0 0.0
    %3041 = vmatpush.msra.mxu0 0.0
    %3042 = vmatpush.msra.mxu0 0.0
    %3043 = vmatpush.msra.mxu0 0.0
    %3044 = vmatpush.msra.mxu0 0.0
    %3045 = vmatpush.msra.mxu0 0.0
    %3046 = vmatpush.msra.mxu0 0.0
    %3047 = vmatpush.msra.mxu0 0.0
    %v3048 = vand.u32 %v2976, 4294901760
    %v3049 = vsub.f32 %v2976, %v3048
    %3050 = vmatpush.msra.mxu0 %v3049
    %v3051 = vand.u32 %v2979, 4294901760
    %v3052 = vsub.f32 %v2979, %v3051
    %3053 = vmatmul.f32.gmra.mxu0 %v3052
    %v3054 = vpop.f32.mrf.mxu0
    %v3055 = vadd.f32 %v3031, %v3054
    %3056 = vdwg.mxu0
    %3057 = vmatpush.msra.mxu0 0.0
    %3058 = vmatpush.msra.mxu0 0.0
    %3059 = vmatpush.msra.mxu0 0.0
    %3060 = vmatpush.msra.mxu0 0.0
    %3061 = vmatpush.msra.mxu0 0.0
    %3062 = vmatpush.msra.mxu0 0.0
    %3063 = vmatpush.msra.mxu0 0.0
    %3064 = vmatpush.msra.mxu0 0.0
    %3065 = vmatpush.msra.mxu0 0.0
    %3066 = vmatpush.msra.mxu0 0.0
    %3067 = vmatpush.msra.mxu0 0.0
    %3068 = vmatpush.msra.mxu0 0.0
    %3069 = vmatpush.msra.mxu0 0.0
    %3070 = vmatpush.msra.mxu0 0.0
    %3071 = vmatpush.msra.mxu0 0.0
    %v3072 = vand.u32 %v2976, 4294901760
    %3073 = vmatpush.msra.mxu0 %v3072
    %v3074 = vand.u32 %v2979, 4294901760
    %v3075 = vsub.f32 %v2979, %v3074
    %v3076 = vand.u32 %v3075, 4294901760
    %3077 = vmatmul.f32.gmra.mxu0 %v3076
    %v3078 = vpop.f32.mrf.mxu0
    %v3079 = vadd.f32 %v3055, %v3078
    %3080 = vdwg.mxu0
    %3081 = vmatpush.msra.mxu0 0.0
    %3082 = vmatpush.msra.mxu0 0.0
    %3083 = vmatpush.msra.mxu0 0.0
    %3084 = vmatpush.msra.mxu0 0.0
    %3085 = vmatpush.msra.mxu0 0.0
    %3086 = vmatpush.msra.mxu0 0.0
    %3087 = vmatpush.msra.mxu0 0.0
    %3088 = vmatpush.msra.mxu0 0.0
    %3089 = vmatpush.msra.mxu0 0.0
    %3090 = vmatpush.msra.mxu0 0.0
    %3091 = vmatpush.msra.mxu0 0.0
    %3092 = vmatpush.msra.mxu0 0.0
    %3093 = vmatpush.msra.mxu0 0.0
    %3094 = vmatpush.msra.mxu0 0.0
    %3095 = vmatpush.msra.mxu0 0.0
    %v3096 = vand.u32 %v2976, 4294901760
    %v3097 = vsub.f32 %v2976, %v3096
    %v3098 = vand.u32 %v3097, 4294901760
    %3099 = vmatpush.msra.mxu0 %v3098
    %v3100 = vand.u32 %v2979, 4294901760
    %3101 = vmatmul.f32.gmra.mxu0 %v3100
    %v3102 = vpop.f32.mrf.mxu0
    %v3103 = vadd.f32 %v3079, %v3102
    %3104 = vdwg.mxu0
    %3105 = vmatpush.msra.mxu0 0.0
    %3106 = vmatpush.msra.mxu0 0.0
    %3107 = vmatpush.msra.mxu0 0.0
    %3108 = vmatpush.msra.mxu0 0.0
    %3109 = vmatpush.msra.mxu0 0.0
    %3110 = vmatpush.msra.mxu0 0.0
    %3111 = vmatpush.msra.mxu0 0.0
    %3112 = vmatpush.msra.mxu0 0.0
    %3113 = vmatpush.msra.mxu0 0.0
    %3114 = vmatpush.msra.mxu0 0.0
    %3115 = vmatpush.msra.mxu0 0.0
    %3116 = vmatpush.msra.mxu0 0.0
    %3117 = vmatpush.msra.mxu0 0.0
    %3118 = vmatpush.msra.mxu0 0.0
    %3119 = vmatpush.msra.mxu0 0.0
    %v3120 = vand.u32 %v2976, 4294901760
    %3121 = vmatpush.msra.mxu0 %v3120
    %v3122 = vand.u32 %v2979, 4294901760
    %3123 = vmatmul.f32.gmra.mxu0 %v3122
    %v3124 = vpop.f32.mrf.mxu0
    %v3125 = vadd.f32 %v3103, %v3124
    %3126 = vdwg.mxu0
    %v3128 = vsel %vm546, %v3125, 0
    %3130 = vmatpush.msra.mxu0 0.0
    %3131 = vmatpush.msra.mxu0 0.0
    %3132 = vmatpush.msra.mxu0 0.0
    %3133 = vmatpush.msra.mxu0 0.0
    %3134 = vmatpush.msra.mxu0 0.0
    %3135 = vmatpush.msra.mxu0 0.0
    %3136 = vmatpush.msra.mxu0 0.0
    %3137 = vmatpush.msra.mxu0 0.0
    %3138 = vmatpush.msra.mxu0 0.0
    %3139 = vmatpush.msra.mxu0 0.0
    %3140 = vmatpush.msra.mxu0 0.0
    %3141 = vmatpush.msra.mxu0 0.0
    %3142 = vmatpush.msra.mxu0 0.0
    %3143 = vmatpush.msra.mxu0 0.0
    %3144 = vmatpush.msra.mxu0 0.0
    %v3145 = vand.u32 %v542, 4294901760
    %3146 = vmatpush.msra.mxu0 %v3145
    %v3147 = vand.u32 %v3128, 4294901760
    %v3148 = vsub.f32 %v3128, %v3147
    %v3149 = vand.u32 %v3148, 4294901760
    %v3150 = vsub.f32 %v3148, %v3149
    %v3151 = vand.u32 %v3150, 4294901760
    %3152 = vmatmul.f32.gmra.mxu0 %v3151
    %v3153 = vpop.f32.mrf.mxu0
    %v3154 = vadd.f32 0.0, %v3153
    %3155 = vdwg.mxu0
    %3156 = vmatpush.msra.mxu0 0.0
    %3157 = vmatpush.msra.mxu0 0.0
    %3158 = vmatpush.msra.mxu0 0.0
    %3159 = vmatpush.msra.mxu0 0.0
    %3160 = vmatpush.msra.mxu0 0.0
    %3161 = vmatpush.msra.mxu0 0.0
    %3162 = vmatpush.msra.mxu0 0.0
    %3163 = vmatpush.msra.mxu0 0.0
    %3164 = vmatpush.msra.mxu0 0.0
    %3165 = vmatpush.msra.mxu0 0.0
    %3166 = vmatpush.msra.mxu0 0.0
    %3167 = vmatpush.msra.mxu0 0.0
    %3168 = vmatpush.msra.mxu0 0.0
    %3169 = vmatpush.msra.mxu0 0.0
    %3170 = vmatpush.msra.mxu0 0.0
    %v3171 = vand.u32 %v542, 4294901760
    %v3172 = vsub.f32 %v542, %v3171
    %v3173 = vand.u32 %v3172, 4294901760
    %v3174 = vsub.f32 %v3172, %v3173
    %v3175 = vand.u32 %v3174, 4294901760
    %3176 = vmatpush.msra.mxu0 %v3175
    %v3177 = vand.u32 %v3128, 4294901760
    %3178 = vmatmul.f32.gmra.mxu0 %v3177
    %v3179 = vpop.f32.mrf.mxu0
    %v3180 = vadd.f32 %v3154, %v3179
    %3181 = vdwg.mxu0
    %3182 = vmatpush.msra.mxu0 0.0
    %3183 = vmatpush.msra.mxu0 0.0
    %3184 = vmatpush.msra.mxu0 0.0
    %3185 = vmatpush.msra.mxu0 0.0
    %3186 = vmatpush.msra.mxu0 0.0
    %3187 = vmatpush.msra.mxu0 0.0
    %3188 = vmatpush.msra.mxu0 0.0
    %3189 = vmatpush.msra.mxu0 0.0
    %3190 = vmatpush.msra.mxu0 0.0
    %3191 = vmatpush.msra.mxu0 0.0
    %3192 = vmatpush.msra.mxu0 0.0
    %3193 = vmatpush.msra.mxu0 0.0
    %3194 = vmatpush.msra.mxu0 0.0
    %3195 = vmatpush.msra.mxu0 0.0
    %3196 = vmatpush.msra.mxu0 0.0
    %v3197 = vand.u32 %v542, 4294901760
    %v3198 = vsub.f32 %v542, %v3197
    %3199 = vmatpush.msra.mxu0 %v3198
    %v3200 = vand.u32 %v3128, 4294901760
    %v3201 = vsub.f32 %v3128, %v3200
    %3202 = vmatmul.f32.gmra.mxu0 %v3201
    %v3203 = vpop.f32.mrf.mxu0
    %v3204 = vadd.f32 %v3180, %v3203
    %3205 = vdwg.mxu0
    %3206 = vmatpush.msra.mxu0 0.0
    %3207 = vmatpush.msra.mxu0 0.0
    %3208 = vmatpush.msra.mxu0 0.0
    %3209 = vmatpush.msra.mxu0 0.0
    %3210 = vmatpush.msra.mxu0 0.0
    %3211 = vmatpush.msra.mxu0 0.0
    %3212 = vmatpush.msra.mxu0 0.0
    %3213 = vmatpush.msra.mxu0 0.0
    %3214 = vmatpush.msra.mxu0 0.0
    %3215 = vmatpush.msra.mxu0 0.0
    %3216 = vmatpush.msra.mxu0 0.0
    %3217 = vmatpush.msra.mxu0 0.0
    %3218 = vmatpush.msra.mxu0 0.0
    %3219 = vmatpush.msra.mxu0 0.0
    %3220 = vmatpush.msra.mxu0 0.0
    %v3221 = vand.u32 %v542, 4294901760
    %3222 = vmatpush.msra.mxu0 %v3221
    %v3223 = vand.u32 %v3128, 4294901760
    %v3224 = vsub.f32 %v3128, %v3223
    %v3225 = vand.u32 %v3224, 4294901760
    %3226 = vmatmul.f32.gmra.mxu0 %v3225
    %v3227 = vpop.f32.mrf.mxu0
    %v3228 = vadd.f32 %v3204, %v3227
    %3229 = vdwg.mxu0
    %3230 = vmatpush.msra.mxu0 0.0
    %3231 = vmatpush.msra.mxu0 0.0
    %3232 = vmatpush.msra.mxu0 0.0
    %3233 = vmatpush.msra.mxu0 0.0
    %3234 = vmatpush.msra.mxu0 0.0
    %3235 = vmatpush.msra.mxu0 0.0
    %3236 = vmatpush.msra.mxu0 0.0
    %3237 = vmatpush.msra.mxu0 0.0
    %3238 = vmatpush.msra.mxu0 0.0
    %3239 = vmatpush.msra.mxu0 0.0
    %3240 = vmatpush.msra.mxu0 0.0
    %3241 = vmatpush.msra.mxu0 0.0
    %3242 = vmatpush.msra.mxu0 0.0
    %3243 = vmatpush.msra.mxu0 0.0
    %3244 = vmatpush.msra.mxu0 0.0
    %v3245 = vand.u32 %v542, 4294901760
    %v3246 = vsub.f32 %v542, %v3245
    %v3247 = vand.u32 %v3246, 4294901760
    %3248 = vmatpush.msra.mxu0 %v3247
    %v3249 = vand.u32 %v3128, 4294901760
    %3250 = vmatmul.f32.gmra.mxu0 %v3249
    %v3251 = vpop.f32.mrf.mxu0
    %v3252 = vadd.f32 %v3228, %v3251
    %3253 = vdwg.mxu0
    %3254 = vmatpush.msra.mxu0 0.0
    %3255 = vmatpush.msra.mxu0 0.0
    %3256 = vmatpush.msra.mxu0 0.0
    %3257 = vmatpush.msra.mxu0 0.0
    %3258 = vmatpush.msra.mxu0 0.0
    %3259 = vmatpush.msra.mxu0 0.0
    %3260 = vmatpush.msra.mxu0 0.0
    %3261 = vmatpush.msra.mxu0 0.0
    %3262 = vmatpush.msra.mxu0 0.0
    %3263 = vmatpush.msra.mxu0 0.0
    %3264 = vmatpush.msra.mxu0 0.0
    %3265 = vmatpush.msra.mxu0 0.0
    %3266 = vmatpush.msra.mxu0 0.0
    %3267 = vmatpush.msra.mxu0 0.0
    %3268 = vmatpush.msra.mxu0 0.0
    %v3269 = vand.u32 %v542, 4294901760
    %3270 = vmatpush.msra.mxu0 %v3269
    %v3271 = vand.u32 %v3128, 4294901760
    %3272 = vmatmul.f32.gmra.mxu0 %v3271
    %v3273 = vpop.f32.mrf.mxu0
    %v3274 = vadd.f32 %v3252, %v3273
    %3275 = vdwg.mxu0
    %v3277 = vsel %vm546, %v2794, 0
    %3279 = vmatpush.msra.mxu0 0.0
    %3280 = vmatpush.msra.mxu0 0.0
    %3281 = vmatpush.msra.mxu0 0.0
    %3282 = vmatpush.msra.mxu0 0.0
    %3283 = vmatpush.msra.mxu0 0.0
    %3284 = vmatpush.msra.mxu0 0.0
    %3285 = vmatpush.msra.mxu0 0.0
    %3286 = vmatpush.msra.mxu0 0.0
    %3287 = vmatpush.msra.mxu0 0.0
    %3288 = vmatpush.msra.mxu0 0.0
    %3289 = vmatpush.msra.mxu0 0.0
    %3290 = vmatpush.msra.mxu0 0.0
    %3291 = vmatpush.msra.mxu0 0.0
    %3292 = vmatpush.msra.mxu0 0.0
    %3293 = vmatpush.msra.mxu0 0.0
    %v3294 = vand.u32 %v541, 4294901760
    %3295 = vmatpush.msra.mxu0 %v3294
    %v3296 = vand.u32 %v3277, 4294901760
    %v3297 = vsub.f32 %v3277, %v3296
    %v3298 = vand.u32 %v3297, 4294901760
    %v3299 = vsub.f32 %v3297, %v3298
    %v3300 = vand.u32 %v3299, 4294901760
    %3301 = vmatmul.f32.gmra.mxu0 %v3300
    %v3302 = vpop.f32.mrf.mxu0
    %v3303 = vadd.f32 %v3274, %v3302
    %3304 = vdwg.mxu0
    %3305 = vmatpush.msra.mxu0 0.0
    %3306 = vmatpush.msra.mxu0 0.0
    %3307 = vmatpush.msra.mxu0 0.0
    %3308 = vmatpush.msra.mxu0 0.0
    %3309 = vmatpush.msra.mxu0 0.0
    %3310 = vmatpush.msra.mxu0 0.0
    %3311 = vmatpush.msra.mxu0 0.0
    %3312 = vmatpush.msra.mxu0 0.0
    %3313 = vmatpush.msra.mxu0 0.0
    %3314 = vmatpush.msra.mxu0 0.0
    %3315 = vmatpush.msra.mxu0 0.0
    %3316 = vmatpush.msra.mxu0 0.0
    %3317 = vmatpush.msra.mxu0 0.0
    %3318 = vmatpush.msra.mxu0 0.0
    %3319 = vmatpush.msra.mxu0 0.0
    %v3320 = vand.u32 %v541, 4294901760
    %v3321 = vsub.f32 %v541, %v3320
    %v3322 = vand.u32 %v3321, 4294901760
    %v3323 = vsub.f32 %v3321, %v3322
    %v3324 = vand.u32 %v3323, 4294901760
    %3325 = vmatpush.msra.mxu0 %v3324
    %v3326 = vand.u32 %v3277, 4294901760
    %3327 = vmatmul.f32.gmra.mxu0 %v3326
    %v3328 = vpop.f32.mrf.mxu0
    %v3329 = vadd.f32 %v3303, %v3328
    %3330 = vdwg.mxu0
    %3331 = vmatpush.msra.mxu0 0.0
    %3332 = vmatpush.msra.mxu0 0.0
    %3333 = vmatpush.msra.mxu0 0.0
    %3334 = vmatpush.msra.mxu0 0.0
    %3335 = vmatpush.msra.mxu0 0.0
    %3336 = vmatpush.msra.mxu0 0.0
    %3337 = vmatpush.msra.mxu0 0.0
    %3338 = vmatpush.msra.mxu0 0.0
    %3339 = vmatpush.msra.mxu0 0.0
    %3340 = vmatpush.msra.mxu0 0.0
    %3341 = vmatpush.msra.mxu0 0.0
    %3342 = vmatpush.msra.mxu0 0.0
    %3343 = vmatpush.msra.mxu0 0.0
    %3344 = vmatpush.msra.mxu0 0.0
    %3345 = vmatpush.msra.mxu0 0.0
    %v3346 = vand.u32 %v541, 4294901760
    %v3347 = vsub.f32 %v541, %v3346
    %3348 = vmatpush.msra.mxu0 %v3347
    %v3349 = vand.u32 %v3277, 4294901760
    %v3350 = vsub.f32 %v3277, %v3349
    %3351 = vmatmul.f32.gmra.mxu0 %v3350
    %v3352 = vpop.f32.mrf.mxu0
    %v3353 = vadd.f32 %v3329, %v3352
    %3354 = vdwg.mxu0
    %3355 = vmatpush.msra.mxu0 0.0
    %3356 = vmatpush.msra.mxu0 0.0
    %3357 = vmatpush.msra.mxu0 0.0
    %3358 = vmatpush.msra.mxu0 0.0
    %3359 = vmatpush.msra.mxu0 0.0
    %3360 = vmatpush.msra.mxu0 0.0
    %3361 = vmatpush.msra.mxu0 0.0
    %3362 = vmatpush.msra.mxu0 0.0
    %3363 = vmatpush.msra.mxu0 0.0
    %3364 = vmatpush.msra.mxu0 0.0
    %3365 = vmatpush.msra.mxu0 0.0
    %3366 = vmatpush.msra.mxu0 0.0
    %3367 = vmatpush.msra.mxu0 0.0
    %3368 = vmatpush.msra.mxu0 0.0
    %3369 = vmatpush.msra.mxu0 0.0
    %v3370 = vand.u32 %v541, 4294901760
    %3371 = vmatpush.msra.mxu0 %v3370
    %v3372 = vand.u32 %v3277, 4294901760
    %v3373 = vsub.f32 %v3277, %v3372
    %v3374 = vand.u32 %v3373, 4294901760
    %3375 = vmatmul.f32.gmra.mxu0 %v3374
    %v3376 = vpop.f32.mrf.mxu0
    %v3377 = vadd.f32 %v3353, %v3376
    %3378 = vdwg.mxu0
    %3379 = vmatpush.msra.mxu0 0.0
    %3380 = vmatpush.msra.mxu0 0.0
    %3381 = vmatpush.msra.mxu0 0.0
    %3382 = vmatpush.msra.mxu0 0.0
    %3383 = vmatpush.msra.mxu0 0.0
    %3384 = vmatpush.msra.mxu0 0.0
    %3385 = vmatpush.msra.mxu0 0.0
    %3386 = vmatpush.msra.mxu0 0.0
    %3387 = vmatpush.msra.mxu0 0.0
    %3388 = vmatpush.msra.mxu0 0.0
    %3389 = vmatpush.msra.mxu0 0.0
    %3390 = vmatpush.msra.mxu0 0.0
    %3391 = vmatpush.msra.mxu0 0.0
    %3392 = vmatpush.msra.mxu0 0.0
    %3393 = vmatpush.msra.mxu0 0.0
    %v3394 = vand.u32 %v541, 4294901760
    %v3395 = vsub.f32 %v541, %v3394
    %v3396 = vand.u32 %v3395, 4294901760
    %3397 = vmatpush.msra.mxu0 %v3396
    %v3398 = vand.u32 %v3277, 4294901760
    %3399 = vmatmul.f32.gmra.mxu0 %v3398
    %v3400 = vpop.f32.mrf.mxu0
    %v3401 = vadd.f32 %v3377, %v3400
    %3402 = vdwg.mxu0
    %3403 = vmatpush.msra.mxu0 0.0
    %3404 = vmatpush.msra.mxu0 0.0
    %3405 = vmatpush.msra.mxu0 0.0
    %3406 = vmatpush.msra.mxu0 0.0
    %3407 = vmatpush.msra.mxu0 0.0
    %3408 = vmatpush.msra.mxu0 0.0
    %3409 = vmatpush.msra.mxu0 0.0
    %3410 = vmatpush.msra.mxu0 0.0
    %3411 = vmatpush.msra.mxu0 0.0
    %3412 = vmatpush.msra.mxu0 0.0
    %3413 = vmatpush.msra.mxu0 0.0
    %3414 = vmatpush.msra.mxu0 0.0
    %3415 = vmatpush.msra.mxu0 0.0
    %3416 = vmatpush.msra.mxu0 0.0
    %3417 = vmatpush.msra.mxu0 0.0
    %v3418 = vand.u32 %v541, 4294901760
    %3419 = vmatpush.msra.mxu0 %v3418
    %v3420 = vand.u32 %v3277, 4294901760
    %3421 = vmatmul.f32.gmra.mxu0 %v3420
    %v3422 = vpop.f32.mrf.mxu0
    %v3423 = vadd.f32 %v3401, %v3422
    %3424 = vdwg.mxu0
    %3425 = vrot.lane.b32.xlu0 %v311, 112
    %v3426 = vpop.permute.xlu0 %3425
    %3427 = vrot.lane.b32.xlu0 %v539, 112
    %v3428 = vpop.permute.xlu0 %3427
    %v3429 = vsel %vm546, %v3426, 0
    %v3431 = vsel %vm546, %v3428, 0
    %3433 = vmatpush.xpose.msra.mxu0 0.0
    %3434 = vmatpush.xpose.msra.mxu0 0.0
    %3435 = vmatpush.xpose.msra.mxu0 0.0
    %3436 = vmatpush.xpose.msra.mxu0 0.0
    %3437 = vmatpush.xpose.msra.mxu0 0.0
    %3438 = vmatpush.xpose.msra.mxu0 0.0
    %3439 = vmatpush.xpose.msra.mxu0 0.0
    %3440 = vmatpush.xpose.msra.mxu0 0.0
    %3441 = vmatpush.xpose.msra.mxu0 0.0
    %3442 = vmatpush.xpose.msra.mxu0 0.0
    %3443 = vmatpush.xpose.msra.mxu0 0.0
    %3444 = vmatpush.xpose.msra.mxu0 0.0
    %3445 = vmatpush.xpose.msra.mxu0 0.0
    %3446 = vmatpush.xpose.msra.mxu0 0.0
    %3447 = vmatpush.xpose.msra.mxu0 0.0
    %v3448 = vand.u32 %v3431, 4294901760
    %3449 = vmatpush.xpose.msra.mxu0 %v3448
    %v3450 = vand.u32 %v3429, 4294901760
    %v3451 = vsub.f32 %v3429, %v3450
    %v3452 = vand.u32 %v3451, 4294901760
    %v3453 = vsub.f32 %v3451, %v3452
    %v3454 = vand.u32 %v3453, 4294901760
    %3455 = vmatmul.f32.gmra.mxu0 %v3454
    %v3456 = vpop.f32.mrf.mxu0
    %v3457 = vadd.f32 0.0, %v3456
    %3458 = vdwg.mxu0
    %3459 = vmatpush.xpose.msra.mxu0 0.0
    %3460 = vmatpush.xpose.msra.mxu0 0.0
    %3461 = vmatpush.xpose.msra.mxu0 0.0
    %3462 = vmatpush.xpose.msra.mxu0 0.0
    %3463 = vmatpush.xpose.msra.mxu0 0.0
    %3464 = vmatpush.xpose.msra.mxu0 0.0
    %3465 = vmatpush.xpose.msra.mxu0 0.0
    %3466 = vmatpush.xpose.msra.mxu0 0.0
    %3467 = vmatpush.xpose.msra.mxu0 0.0
    %3468 = vmatpush.xpose.msra.mxu0 0.0
    %3469 = vmatpush.xpose.msra.mxu0 0.0
    %3470 = vmatpush.xpose.msra.mxu0 0.0
    %3471 = vmatpush.xpose.msra.mxu0 0.0
    %3472 = vmatpush.xpose.msra.mxu0 0.0
    %3473 = vmatpush.xpose.msra.mxu0 0.0
    %v3474 = vand.u32 %v3431, 4294901760
    %v3475 = vsub.f32 %v3431, %v3474
    %v3476 = vand.u32 %v3475, 4294901760
    %v3477 = vsub.f32 %v3475, %v3476
    %v3478 = vand.u32 %v3477, 4294901760
    %3479 = vmatpush.xpose.msra.mxu0 %v3478
    %v3480 = vand.u32 %v3429, 4294901760
    %3481 = vmatmul.f32.gmra.mxu0 %v3480
    %v3482 = vpop.f32.mrf.mxu0
    %v3483 = vadd.f32 %v3457, %v3482
    %3484 = vdwg.mxu0
    %3485 = vmatpush.xpose.msra.mxu0 0.0
    %3486 = vmatpush.xpose.msra.mxu0 0.0
    %3487 = vmatpush.xpose.msra.mxu0 0.0
    %3488 = vmatpush.xpose.msra.mxu0 0.0
    %3489 = vmatpush.xpose.msra.mxu0 0.0
    %3490 = vmatpush.xpose.msra.mxu0 0.0
    %3491 = vmatpush.xpose.msra.mxu0 0.0
    %3492 = vmatpush.xpose.msra.mxu0 0.0
    %3493 = vmatpush.xpose.msra.mxu0 0.0
    %3494 = vmatpush.xpose.msra.mxu0 0.0
    %3495 = vmatpush.xpose.msra.mxu0 0.0
    %3496 = vmatpush.xpose.msra.mxu0 0.0
    %3497 = vmatpush.xpose.msra.mxu0 0.0
    %3498 = vmatpush.xpose.msra.mxu0 0.0
    %3499 = vmatpush.xpose.msra.mxu0 0.0
    %v3500 = vand.u32 %v3431, 4294901760
    %v3501 = vsub.f32 %v3431, %v3500
    %3502 = vmatpush.xpose.msra.mxu0 %v3501
    %v3503 = vand.u32 %v3429, 4294901760
    %v3504 = vsub.f32 %v3429, %v3503
    %3505 = vmatmul.f32.gmra.mxu0 %v3504
    %v3506 = vpop.f32.mrf.mxu0
    %v3507 = vadd.f32 %v3483, %v3506
    %3508 = vdwg.mxu0
    %3509 = vmatpush.xpose.msra.mxu0 0.0
    %3510 = vmatpush.xpose.msra.mxu0 0.0
    %3511 = vmatpush.xpose.msra.mxu0 0.0
    %3512 = vmatpush.xpose.msra.mxu0 0.0
    %3513 = vmatpush.xpose.msra.mxu0 0.0
    %3514 = vmatpush.xpose.msra.mxu0 0.0
    %3515 = vmatpush.xpose.msra.mxu0 0.0
    %3516 = vmatpush.xpose.msra.mxu0 0.0
    %3517 = vmatpush.xpose.msra.mxu0 0.0
    %3518 = vmatpush.xpose.msra.mxu0 0.0
    %3519 = vmatpush.xpose.msra.mxu0 0.0
    %3520 = vmatpush.xpose.msra.mxu0 0.0
    %3521 = vmatpush.xpose.msra.mxu0 0.0
    %3522 = vmatpush.xpose.msra.mxu0 0.0
    %3523 = vmatpush.xpose.msra.mxu0 0.0
    %v3524 = vand.u32 %v3431, 4294901760
    %3525 = vmatpush.xpose.msra.mxu0 %v3524
    %v3526 = vand.u32 %v3429, 4294901760
    %v3527 = vsub.f32 %v3429, %v3526
    %v3528 = vand.u32 %v3527, 4294901760
    %3529 = vmatmul.f32.gmra.mxu0 %v3528
    %v3530 = vpop.f32.mrf.mxu0
    %v3531 = vadd.f32 %v3507, %v3530
    %3532 = vdwg.mxu0
    %3533 = vmatpush.xpose.msra.mxu0 0.0
    %3534 = vmatpush.xpose.msra.mxu0 0.0
    %3535 = vmatpush.xpose.msra.mxu0 0.0
    %3536 = vmatpush.xpose.msra.mxu0 0.0
    %3537 = vmatpush.xpose.msra.mxu0 0.0
    %3538 = vmatpush.xpose.msra.mxu0 0.0
    %3539 = vmatpush.xpose.msra.mxu0 0.0
    %3540 = vmatpush.xpose.msra.mxu0 0.0
    %3541 = vmatpush.xpose.msra.mxu0 0.0
    %3542 = vmatpush.xpose.msra.mxu0 0.0
    %3543 = vmatpush.xpose.msra.mxu0 0.0
    %3544 = vmatpush.xpose.msra.mxu0 0.0
    %3545 = vmatpush.xpose.msra.mxu0 0.0
    %3546 = vmatpush.xpose.msra.mxu0 0.0
    %3547 = vmatpush.xpose.msra.mxu0 0.0
    %v3548 = vand.u32 %v3431, 4294901760
    %v3549 = vsub.f32 %v3431, %v3548
    %v3550 = vand.u32 %v3549, 4294901760
    %3551 = vmatpush.xpose.msra.mxu0 %v3550
    %v3552 = vand.u32 %v3429, 4294901760
    %3553 = vmatmul.f32.gmra.mxu0 %v3552
    %v3554 = vpop.f32.mrf.mxu0
    %v3555 = vadd.f32 %v3531, %v3554
    %3556 = vdwg.mxu0
    %3557 = vmatpush.xpose.msra.mxu0 0.0
    %3558 = vmatpush.xpose.msra.mxu0 0.0
    %3559 = vmatpush.xpose.msra.mxu0 0.0
    %3560 = vmatpush.xpose.msra.mxu0 0.0
    %3561 = vmatpush.xpose.msra.mxu0 0.0
    %3562 = vmatpush.xpose.msra.mxu0 0.0
    %3563 = vmatpush.xpose.msra.mxu0 0.0
    %3564 = vmatpush.xpose.msra.mxu0 0.0
    %3565 = vmatpush.xpose.msra.mxu0 0.0
    %3566 = vmatpush.xpose.msra.mxu0 0.0
    %3567 = vmatpush.xpose.msra.mxu0 0.0
    %3568 = vmatpush.xpose.msra.mxu0 0.0
    %3569 = vmatpush.xpose.msra.mxu0 0.0
    %3570 = vmatpush.xpose.msra.mxu0 0.0
    %3571 = vmatpush.xpose.msra.mxu0 0.0
    %v3572 = vand.u32 %v3431, 4294901760
    %3573 = vmatpush.xpose.msra.mxu0 %v3572
    %v3574 = vand.u32 %v3429, 4294901760
    %3575 = vmatmul.f32.gmra.mxu0 %v3574
    %v3576 = vpop.f32.mrf.mxu0
    %v3577 = vadd.f32 %v3555, %v3576
    %3578 = vdwg.mxu0
    %v3579 = vmul.f32 %v3577, 0.35355338
    %v3580 = vsel %vm546, %v3579, -inf
    %3581 = vmax.xlane.f32.xlu0 %v3580
    %v3582 = vpop.xlane.xlu0 %3581
    %v3583 = vsub.f32 %v3579, %v3582
    %v3584 = vmul.f32 %v3583, 1.442695
    %v3585 = vpow.pop %v3584
    %v3586 = vsel %vm546, %v3585, 0.0
    %3587 = vadd.xlane.f32.xlu0 %v3586
    %v3588 = vpop.xlane.xlu0 %3587
    %v3589 = vrcp.pop %v3588
    %v3590 = vmul.f32 %v3588, %v3589
    %v3591 = vsub.f32 1.0, %v3590
    %v3592 = vmul.f32 %v3589, %v3591
    %v3593 = vadd.f32 %v3589, %v3592
    %vm3594 = vweird.f32 %v3588
    %vm3595 = vweird.f32 %v3589
    %vm3596 = vmor %vm3594, %vm3595
    %v3597 = vsel %vm3596, %v3589, %v3593
    %v3598 = vand.u32 2147483647, %v3588
    %vm3599 = vcmp.eq.f32.partialorder %v3598, 8.507059e+37
    %v3600 = vand.u32 %v3588, 2147483648
    %v3601 = vor.u32 1.1754944e-38, %v3600
    %v3602 = vsel %vm3599, %v3601, %v3597
    %v3603 = vmul.f32 %v3585, %v3602
    %3604 = vrot.lane.b32.xlu0 %v539, 80
    %v3605 = vpop.permute.xlu0 %3604
    %v3608 = vsel %vm546, %v3603, 0
    %3610 = vmatpush.msra.mxu0 0.0
    %3611 = vmatpush.msra.mxu0 0.0
    %3612 = vmatpush.msra.mxu0 0.0
    %3613 = vmatpush.msra.mxu0 0.0
    %3614 = vmatpush.msra.mxu0 0.0
    %3615 = vmatpush.msra.mxu0 0.0
    %3616 = vmatpush.msra.mxu0 0.0
    %3617 = vmatpush.msra.mxu0 0.0
    %3618 = vmatpush.msra.mxu0 0.0
    %3619 = vmatpush.msra.mxu0 0.0
    %3620 = vmatpush.msra.mxu0 0.0
    %3621 = vmatpush.msra.mxu0 0.0
    %3622 = vmatpush.msra.mxu0 0.0
    %3623 = vmatpush.msra.mxu0 0.0
    %3624 = vmatpush.msra.mxu0 0.0
    %v3625 = vand.u32 %v3605, 4294901760
    %3626 = vmatpush.msra.mxu0 %v3625
    %v3627 = vand.u32 %v3608, 4294901760
    %v3628 = vsub.f32 %v3608, %v3627
    %v3629 = vand.u32 %v3628, 4294901760
    %v3630 = vsub.f32 %v3628, %v3629
    %v3631 = vand.u32 %v3630, 4294901760
    %3632 = vmatmul.f32.gmra.mxu0 %v3631
    %v3633 = vpop.f32.mrf.mxu0
    %v3634 = vadd.f32 0.0, %v3633
    %3635 = vdwg.mxu0
    %3636 = vmatpush.msra.mxu0 0.0
    %3637 = vmatpush.msra.mxu0 0.0
    %3638 = vmatpush.msra.mxu0 0.0
    %3639 = vmatpush.msra.mxu0 0.0
    %3640 = vmatpush.msra.mxu0 0.0
    %3641 = vmatpush.msra.mxu0 0.0
    %3642 = vmatpush.msra.mxu0 0.0
    %3643 = vmatpush.msra.mxu0 0.0
    %3644 = vmatpush.msra.mxu0 0.0
    %3645 = vmatpush.msra.mxu0 0.0
    %3646 = vmatpush.msra.mxu0 0.0
    %3647 = vmatpush.msra.mxu0 0.0
    %3648 = vmatpush.msra.mxu0 0.0
    %3649 = vmatpush.msra.mxu0 0.0
    %3650 = vmatpush.msra.mxu0 0.0
    %v3651 = vand.u32 %v3605, 4294901760
    %v3652 = vsub.f32 %v3605, %v3651
    %v3653 = vand.u32 %v3652, 4294901760
    %v3654 = vsub.f32 %v3652, %v3653
    %v3655 = vand.u32 %v3654, 4294901760
    %3656 = vmatpush.msra.mxu0 %v3655
    %v3657 = vand.u32 %v3608, 4294901760
    %3658 = vmatmul.f32.gmra.mxu0 %v3657
    %v3659 = vpop.f32.mrf.mxu0
    %v3660 = vadd.f32 %v3634, %v3659
    %3661 = vdwg.mxu0
    %3662 = vmatpush.msra.mxu0 0.0
    %3663 = vmatpush.msra.mxu0 0.0
    %3664 = vmatpush.msra.mxu0 0.0
    %3665 = vmatpush.msra.mxu0 0.0
    %3666 = vmatpush.msra.mxu0 0.0
    %3667 = vmatpush.msra.mxu0 0.0
    %3668 = vmatpush.msra.mxu0 0.0
    %3669 = vmatpush.msra.mxu0 0.0
    %3670 = vmatpush.msra.mxu0 0.0
    %3671 = vmatpush.msra.mxu0 0.0
    %3672 = vmatpush.msra.mxu0 0.0
    %3673 = vmatpush.msra.mxu0 0.0
    %3674 = vmatpush.msra.mxu0 0.0
    %3675 = vmatpush.msra.mxu0 0.0
    %3676 = vmatpush.msra.mxu0 0.0
    %v3677 = vand.u32 %v3605, 4294901760
    %v3678 = vsub.f32 %v3605, %v3677
    %3679 = vmatpush.msra.mxu0 %v3678
    %v3680 = vand.u32 %v3608, 4294901760
    %v3681 = vsub.f32 %v3608, %v3680
    %3682 = vmatmul.f32.gmra.mxu0 %v3681
    %v3683 = vpop.f32.mrf.mxu0
    %v3684 = vadd.f32 %v3660, %v3683
    %3685 = vdwg.mxu0
    %3686 = vmatpush.msra.mxu0 0.0
    %3687 = vmatpush.msra.mxu0 0.0
    %3688 = vmatpush.msra.mxu0 0.0
    %3689 = vmatpush.msra.mxu0 0.0
    %3690 = vmatpush.msra.mxu0 0.0
    %3691 = vmatpush.msra.mxu0 0.0
    %3692 = vmatpush.msra.mxu0 0.0
    %3693 = vmatpush.msra.mxu0 0.0
    %3694 = vmatpush.msra.mxu0 0.0
    %3695 = vmatpush.msra.mxu0 0.0
    %3696 = vmatpush.msra.mxu0 0.0
    %3697 = vmatpush.msra.mxu0 0.0
    %3698 = vmatpush.msra.mxu0 0.0
    %3699 = vmatpush.msra.mxu0 0.0
    %3700 = vmatpush.msra.mxu0 0.0
    %v3701 = vand.u32 %v3605, 4294901760
    %3702 = vmatpush.msra.mxu0 %v3701
    %v3703 = vand.u32 %v3608, 4294901760
    %v3704 = vsub.f32 %v3608, %v3703
    %v3705 = vand.u32 %v3704, 4294901760
    %3706 = vmatmul.f32.gmra.mxu0 %v3705
    %v3707 = vpop.f32.mrf.mxu0
    %v3708 = vadd.f32 %v3684, %v3707
    %3709 = vdwg.mxu0
    %3710 = vmatpush.msra.mxu0 0.0
    %3711 = vmatpush.msra.mxu0 0.0
    %3712 = vmatpush.msra.mxu0 0.0
    %3713 = vmatpush.msra.mxu0 0.0
    %3714 = vmatpush.msra.mxu0 0.0
    %3715 = vmatpush.msra.mxu0 0.0
    %3716 = vmatpush.msra.mxu0 0.0
    %3717 = vmatpush.msra.mxu0 0.0
    %3718 = vmatpush.msra.mxu0 0.0
    %3719 = vmatpush.msra.mxu0 0.0
    %3720 = vmatpush.msra.mxu0 0.0
    %3721 = vmatpush.msra.mxu0 0.0
    %3722 = vmatpush.msra.mxu0 0.0
    %3723 = vmatpush.msra.mxu0 0.0
    %3724 = vmatpush.msra.mxu0 0.0
    %v3725 = vand.u32 %v3605, 4294901760
    %v3726 = vsub.f32 %v3605, %v3725
    %v3727 = vand.u32 %v3726, 4294901760
    %3728 = vmatpush.msra.mxu0 %v3727
    %v3729 = vand.u32 %v3608, 4294901760
    %3730 = vmatmul.f32.gmra.mxu0 %v3729
    %v3731 = vpop.f32.mrf.mxu0
    %v3732 = vadd.f32 %v3708, %v3731
    %3733 = vdwg.mxu0
    %3734 = vmatpush.msra.mxu0 0.0
    %3735 = vmatpush.msra.mxu0 0.0
    %3736 = vmatpush.msra.mxu0 0.0
    %3737 = vmatpush.msra.mxu0 0.0
    %3738 = vmatpush.msra.mxu0 0.0
    %3739 = vmatpush.msra.mxu0 0.0
    %3740 = vmatpush.msra.mxu0 0.0
    %3741 = vmatpush.msra.mxu0 0.0
    %3742 = vmatpush.msra.mxu0 0.0
    %3743 = vmatpush.msra.mxu0 0.0
    %3744 = vmatpush.msra.mxu0 0.0
    %3745 = vmatpush.msra.mxu0 0.0
    %3746 = vmatpush.msra.mxu0 0.0
    %3747 = vmatpush.msra.mxu0 0.0
    %3748 = vmatpush.msra.mxu0 0.0
    %v3749 = vand.u32 %v3605, 4294901760
    %3750 = vmatpush.msra.mxu0 %v3749
    %v3751 = vand.u32 %v3608, 4294901760
    %3752 = vmatmul.f32.gmra.mxu0 %v3751
    %v3753 = vpop.f32.mrf.mxu0
    %v3754 = vadd.f32 %v3732, %v3753
    %3755 = vdwg.mxu0
    %v3757 = vsel %vm546, %v3754, 0
    %3759 = vmatpush.msra.mxu0 0.0
    %3760 = vmatpush.msra.mxu0 0.0
    %3761 = vmatpush.msra.mxu0 0.0
    %3762 = vmatpush.msra.mxu0 0.0
    %3763 = vmatpush.msra.mxu0 0.0
    %3764 = vmatpush.msra.mxu0 0.0
    %3765 = vmatpush.msra.mxu0 0.0
    %3766 = vmatpush.msra.mxu0 0.0
    %3767 = vmatpush.msra.mxu0 0.0
    %3768 = vmatpush.msra.mxu0 0.0
    %3769 = vmatpush.msra.mxu0 0.0
    %3770 = vmatpush.msra.mxu0 0.0
    %3771 = vmatpush.msra.mxu0 0.0
    %3772 = vmatpush.msra.mxu0 0.0
    %3773 = vmatpush.msra.mxu0 0.0
    %v3774 = vand.u32 %v543, 4294901760
    %3775 = vmatpush.msra.mxu0 %v3774
    %v3776 = vand.u32 %v3757, 4294901760
    %v3777 = vsub.f32 %v3757, %v3776
    %v3778 = vand.u32 %v3777, 4294901760
    %v3779 = vsub.f32 %v3777, %v3778
    %v3780 = vand.u32 %v3779, 4294901760
    %3781 = vmatmul.f32.gmra.mxu0 %v3780
    %v3782 = vpop.f32.mrf.mxu0
    %v3783 = vadd.f32 0.0, %v3782
    %3784 = vdwg.mxu0
    %3785 = vmatpush.msra.mxu0 0.0
    %3786 = vmatpush.msra.mxu0 0.0
    %3787 = vmatpush.msra.mxu0 0.0
    %3788 = vmatpush.msra.mxu0 0.0
    %3789 = vmatpush.msra.mxu0 0.0
    %3790 = vmatpush.msra.mxu0 0.0
    %3791 = vmatpush.msra.mxu0 0.0
    %3792 = vmatpush.msra.mxu0 0.0
    %3793 = vmatpush.msra.mxu0 0.0
    %3794 = vmatpush.msra.mxu0 0.0
    %3795 = vmatpush.msra.mxu0 0.0
    %3796 = vmatpush.msra.mxu0 0.0
    %3797 = vmatpush.msra.mxu0 0.0
    %3798 = vmatpush.msra.mxu0 0.0
    %3799 = vmatpush.msra.mxu0 0.0
    %v3800 = vand.u32 %v543, 4294901760
    %v3801 = vsub.f32 %v543, %v3800
    %v3802 = vand.u32 %v3801, 4294901760
    %v3803 = vsub.f32 %v3801, %v3802
    %v3804 = vand.u32 %v3803, 4294901760
    %3805 = vmatpush.msra.mxu0 %v3804
    %v3806 = vand.u32 %v3757, 4294901760
    %3807 = vmatmul.f32.gmra.mxu0 %v3806
    %v3808 = vpop.f32.mrf.mxu0
    %v3809 = vadd.f32 %v3783, %v3808
    %3810 = vdwg.mxu0
    %3811 = vmatpush.msra.mxu0 0.0
    %3812 = vmatpush.msra.mxu0 0.0
    %3813 = vmatpush.msra.mxu0 0.0
    %3814 = vmatpush.msra.mxu0 0.0
    %3815 = vmatpush.msra.mxu0 0.0
    %3816 = vmatpush.msra.mxu0 0.0
    %3817 = vmatpush.msra.mxu0 0.0
    %3818 = vmatpush.msra.mxu0 0.0
    %3819 = vmatpush.msra.mxu0 0.0
    %3820 = vmatpush.msra.mxu0 0.0
    %3821 = vmatpush.msra.mxu0 0.0
    %3822 = vmatpush.msra.mxu0 0.0
    %3823 = vmatpush.msra.mxu0 0.0
    %3824 = vmatpush.msra.mxu0 0.0
    %3825 = vmatpush.msra.mxu0 0.0
    %v3826 = vand.u32 %v543, 4294901760
    %v3827 = vsub.f32 %v543, %v3826
    %3828 = vmatpush.msra.mxu0 %v3827
    %v3829 = vand.u32 %v3757, 4294901760
    %v3830 = vsub.f32 %v3757, %v3829
    %3831 = vmatmul.f32.gmra.mxu0 %v3830
    %v3832 = vpop.f32.mrf.mxu0
    %v3833 = vadd.f32 %v3809, %v3832
    %3834 = vdwg.mxu0
    %3835 = vmatpush.msra.mxu0 0.0
    %3836 = vmatpush.msra.mxu0 0.0
    %3837 = vmatpush.msra.mxu0 0.0
    %3838 = vmatpush.msra.mxu0 0.0
    %3839 = vmatpush.msra.mxu0 0.0
    %3840 = vmatpush.msra.mxu0 0.0
    %3841 = vmatpush.msra.mxu0 0.0
    %3842 = vmatpush.msra.mxu0 0.0
    %3843 = vmatpush.msra.mxu0 0.0
    %3844 = vmatpush.msra.mxu0 0.0
    %3845 = vmatpush.msra.mxu0 0.0
    %3846 = vmatpush.msra.mxu0 0.0
    %3847 = vmatpush.msra.mxu0 0.0
    %3848 = vmatpush.msra.mxu0 0.0
    %3849 = vmatpush.msra.mxu0 0.0
    %v3850 = vand.u32 %v543, 4294901760
    %3851 = vmatpush.msra.mxu0 %v3850
    %v3852 = vand.u32 %v3757, 4294901760
    %v3853 = vsub.f32 %v3757, %v3852
    %v3854 = vand.u32 %v3853, 4294901760
    %3855 = vmatmul.f32.gmra.mxu0 %v3854
    %v3856 = vpop.f32.mrf.mxu0
    %v3857 = vadd.f32 %v3833, %v3856
    %3858 = vdwg.mxu0
    %3859 = vmatpush.msra.mxu0 0.0
    %3860 = vmatpush.msra.mxu0 0.0
    %3861 = vmatpush.msra.mxu0 0.0
    %3862 = vmatpush.msra.mxu0 0.0
    %3863 = vmatpush.msra.mxu0 0.0
    %3864 = vmatpush.msra.mxu0 0.0
    %3865 = vmatpush.msra.mxu0 0.0
    %3866 = vmatpush.msra.mxu0 0.0
    %3867 = vmatpush.msra.mxu0 0.0
    %3868 = vmatpush.msra.mxu0 0.0
    %3869 = vmatpush.msra.mxu0 0.0
    %3870 = vmatpush.msra.mxu0 0.0
    %3871 = vmatpush.msra.mxu0 0.0
    %3872 = vmatpush.msra.mxu0 0.0
    %3873 = vmatpush.msra.mxu0 0.0
    %v3874 = vand.u32 %v543, 4294901760
    %v3875 = vsub.f32 %v543, %v3874
    %v3876 = vand.u32 %v3875, 4294901760
    %3877 = vmatpush.msra.mxu0 %v3876
    %v3878 = vand.u32 %v3757, 4294901760
    %3879 = vmatmul.f32.gmra.mxu0 %v3878
    %v3880 = vpop.f32.mrf.mxu0
    %v3881 = vadd.f32 %v3857, %v3880
    %3882 = vdwg.mxu0
    %3883 = vmatpush.msra.mxu0 0.0
    %3884 = vmatpush.msra.mxu0 0.0
    %3885 = vmatpush.msra.mxu0 0.0
    %3886 = vmatpush.msra.mxu0 0.0
    %3887 = vmatpush.msra.mxu0 0.0
    %3888 = vmatpush.msra.mxu0 0.0
    %3889 = vmatpush.msra.mxu0 0.0
    %3890 = vmatpush.msra.mxu0 0.0
    %3891 = vmatpush.msra.mxu0 0.0
    %3892 = vmatpush.msra.mxu0 0.0
    %3893 = vmatpush.msra.mxu0 0.0
    %3894 = vmatpush.msra.mxu0 0.0
    %3895 = vmatpush.msra.mxu0 0.0
    %3896 = vmatpush.msra.mxu0 0.0
    %3897 = vmatpush.msra.mxu0 0.0
    %v3898 = vand.u32 %v543, 4294901760
    %3899 = vmatpush.msra.mxu0 %v3898
    %v3900 = vand.u32 %v3757, 4294901760
    %3901 = vmatmul.f32.gmra.mxu0 %v3900
    %v3902 = vpop.f32.mrf.mxu0
    %v3903 = vadd.f32 %v3881, %v3902
    %3904 = vdwg.mxu0
    %v3905 = vadd.f32 %v3423, %v3903
    %3906 = vrot.lane.b32.xlu0 %v311, 104
    %v3907 = vpop.permute.xlu0 %3906
    %3908 = vrot.lane.b32.xlu0 %v539, 104
    %v3909 = vpop.permute.xlu0 %3908
    %v3910 = vsel %vm546, %v3907, 0
    %v3912 = vsel %vm546, %v3909, 0
    %3914 = vmatpush.xpose.msra.mxu0 0.0
    %3915 = vmatpush.xpose.msra.mxu0 0.0
    %3916 = vmatpush.xpose.msra.mxu0 0.0
    %3917 = vmatpush.xpose.msra.mxu0 0.0
    %3918 = vmatpush.xpose.msra.mxu0 0.0
    %3919 = vmatpush.xpose.msra.mxu0 0.0
    %3920 = vmatpush.xpose.msra.mxu0 0.0
    %3921 = vmatpush.xpose.msra.mxu0 0.0
    %3922 = vmatpush.xpose.msra.mxu0 0.0
    %3923 = vmatpush.xpose.msra.mxu0 0.0
    %3924 = vmatpush.xpose.msra.mxu0 0.0
    %3925 = vmatpush.xpose.msra.mxu0 0.0
    %3926 = vmatpush.xpose.msra.mxu0 0.0
    %3927 = vmatpush.xpose.msra.mxu0 0.0
    %3928 = vmatpush.xpose.msra.mxu0 0.0
    %v3929 = vand.u32 %v3912, 4294901760
    %3930 = vmatpush.xpose.msra.mxu0 %v3929
    %v3931 = vand.u32 %v3910, 4294901760
    %v3932 = vsub.f32 %v3910, %v3931
    %v3933 = vand.u32 %v3932, 4294901760
    %v3934 = vsub.f32 %v3932, %v3933
    %v3935 = vand.u32 %v3934, 4294901760
    %3936 = vmatmul.f32.gmra.mxu0 %v3935
    %v3937 = vpop.f32.mrf.mxu0
    %v3938 = vadd.f32 0.0, %v3937
    %3939 = vdwg.mxu0
    %3940 = vmatpush.xpose.msra.mxu0 0.0
    %3941 = vmatpush.xpose.msra.mxu0 0.0
    %3942 = vmatpush.xpose.msra.mxu0 0.0
    %3943 = vmatpush.xpose.msra.mxu0 0.0
    %3944 = vmatpush.xpose.msra.mxu0 0.0
    %3945 = vmatpush.xpose.msra.mxu0 0.0
    %3946 = vmatpush.xpose.msra.mxu0 0.0
    %3947 = vmatpush.xpose.msra.mxu0 0.0
    %3948 = vmatpush.xpose.msra.mxu0 0.0
    %3949 = vmatpush.xpose.msra.mxu0 0.0
    %3950 = vmatpush.xpose.msra.mxu0 0.0
    %3951 = vmatpush.xpose.msra.mxu0 0.0
    %3952 = vmatpush.xpose.msra.mxu0 0.0
    %3953 = vmatpush.xpose.msra.mxu0 0.0
    %3954 = vmatpush.xpose.msra.mxu0 0.0
    %v3955 = vand.u32 %v3912, 4294901760
    %v3956 = vsub.f32 %v3912, %v3955
    %v3957 = vand.u32 %v3956, 4294901760
    %v3958 = vsub.f32 %v3956, %v3957
    %v3959 = vand.u32 %v3958, 4294901760
    %3960 = vmatpush.xpose.msra.mxu0 %v3959
    %v3961 = vand.u32 %v3910, 4294901760
    %3962 = vmatmul.f32.gmra.mxu0 %v3961
    %v3963 = vpop.f32.mrf.mxu0
    %v3964 = vadd.f32 %v3938, %v3963
    %3965 = vdwg.mxu0
    %3966 = vmatpush.xpose.msra.mxu0 0.0
    %3967 = vmatpush.xpose.msra.mxu0 0.0
    %3968 = vmatpush.xpose.msra.mxu0 0.0
    %3969 = vmatpush.xpose.msra.mxu0 0.0
    %3970 = vmatpush.xpose.msra.mxu0 0.0
    %3971 = vmatpush.xpose.msra.mxu0 0.0
    %3972 = vmatpush.xpose.msra.mxu0 0.0
    %3973 = vmatpush.xpose.msra.mxu0 0.0
    %3974 = vmatpush.xpose.msra.mxu0 0.0
    %3975 = vmatpush.xpose.msra.mxu0 0.0
    %3976 = vmatpush.xpose.msra.mxu0 0.0
    %3977 = vmatpush.xpose.msra.mxu0 0.0
    %3978 = vmatpush.xpose.msra.mxu0 0.0
    %3979 = vmatpush.xpose.msra.mxu0 0.0
    %3980 = vmatpush.xpose.msra.mxu0 0.0
    %v3981 = vand.u32 %v3912, 4294901760
    %v3982 = vsub.f32 %v3912, %v3981
    %3983 = vmatpush.xpose.msra.mxu0 %v3982
    %v3984 = vand.u32 %v3910, 4294901760
    %v3985 = vsub.f32 %v3910, %v3984
    %3986 = vmatmul.f32.gmra.mxu0 %v3985
    %v3987 = vpop.f32.mrf.mxu0
    %v3988 = vadd.f32 %v3964, %v3987
    %3989 = vdwg.mxu0
    %3990 = vmatpush.xpose.msra.mxu0 0.0
    %3991 = vmatpush.xpose.msra.mxu0 0.0
    %3992 = vmatpush.xpose.msra.mxu0 0.0
    %3993 = vmatpush.xpose.msra.mxu0 0.0
    %3994 = vmatpush.xpose.msra.mxu0 0.0
    %3995 = vmatpush.xpose.msra.mxu0 0.0
    %3996 = vmatpush.xpose.msra.mxu0 0.0
    %3997 = vmatpush.xpose.msra.mxu0 0.0
    %3998 = vmatpush.xpose.msra.mxu0 0.0
    %3999 = vmatpush.xpose.msra.mxu0 0.0
    %4000 = vmatpush.xpose.msra.mxu0 0.0
    %4001 = vmatpush.xpose.msra.mxu0 0.0
    %4002 = vmatpush.xpose.msra.mxu0 0.0
    %4003 = vmatpush.xpose.msra.mxu0 0.0
    %4004 = vmatpush.xpose.msra.mxu0 0.0
    %v4005 = vand.u32 %v3912, 4294901760
    %4006 = vmatpush.xpose.msra.mxu0 %v4005
    %v4007 = vand.u32 %v3910, 4294901760
    %v4008 = vsub.f32 %v3910, %v4007
    %v4009 = vand.u32 %v4008, 4294901760
    %4010 = vmatmul.f32.gmra.mxu0 %v4009
    %v4011 = vpop.f32.mrf.mxu0
    %v4012 = vadd.f32 %v3988, %v4011
    %4013 = vdwg.mxu0
    %4014 = vmatpush.xpose.msra.mxu0 0.0
    %4015 = vmatpush.xpose.msra.mxu0 0.0
    %4016 = vmatpush.xpose.msra.mxu0 0.0
    %4017 = vmatpush.xpose.msra.mxu0 0.0
    %4018 = vmatpush.xpose.msra.mxu0 0.0
    %4019 = vmatpush.xpose.msra.mxu0 0.0
    %4020 = vmatpush.xpose.msra.mxu0 0.0
    %4021 = vmatpush.xpose.msra.mxu0 0.0
    %4022 = vmatpush.xpose.msra.mxu0 0.0
    %4023 = vmatpush.xpose.msra.mxu0 0.0
    %4024 = vmatpush.xpose.msra.mxu0 0.0
    %4025 = vmatpush.xpose.msra.mxu0 0.0
    %4026 = vmatpush.xpose.msra.mxu0 0.0
    %4027 = vmatpush.xpose.msra.mxu0 0.0
    %4028 = vmatpush.xpose.msra.mxu0 0.0
    %v4029 = vand.u32 %v3912, 4294901760
    %v4030 = vsub.f32 %v3912, %v4029
    %v4031 = vand.u32 %v4030, 4294901760
    %4032 = vmatpush.xpose.msra.mxu0 %v4031
    %v4033 = vand.u32 %v3910, 4294901760
    %4034 = vmatmul.f32.gmra.mxu0 %v4033
    %v4035 = vpop.f32.mrf.mxu0
    %v4036 = vadd.f32 %v4012, %v4035
    %4037 = vdwg.mxu0
    %4038 = vmatpush.xpose.msra.mxu0 0.0
    %4039 = vmatpush.xpose.msra.mxu0 0.0
    %4040 = vmatpush.xpose.msra.mxu0 0.0
    %4041 = vmatpush.xpose.msra.mxu0 0.0
    %4042 = vmatpush.xpose.msra.mxu0 0.0
    %4043 = vmatpush.xpose.msra.mxu0 0.0
    %4044 = vmatpush.xpose.msra.mxu0 0.0
    %4045 = vmatpush.xpose.msra.mxu0 0.0
    %4046 = vmatpush.xpose.msra.mxu0 0.0
    %4047 = vmatpush.xpose.msra.mxu0 0.0
    %4048 = vmatpush.xpose.msra.mxu0 0.0
    %4049 = vmatpush.xpose.msra.mxu0 0.0
    %4050 = vmatpush.xpose.msra.mxu0 0.0
    %4051 = vmatpush.xpose.msra.mxu0 0.0
    %4052 = vmatpush.xpose.msra.mxu0 0.0
    %v4053 = vand.u32 %v3912, 4294901760
    %4054 = vmatpush.xpose.msra.mxu0 %v4053
    %v4055 = vand.u32 %v3910, 4294901760
    %4056 = vmatmul.f32.gmra.mxu0 %v4055
    %v4057 = vpop.f32.mrf.mxu0
    %v4058 = vadd.f32 %v4036, %v4057
    %4059 = vdwg.mxu0
    %v4060 = vmul.f32 %v4058, 0.35355338
    %v4061 = vsel %vm546, %v4060, -inf
    %4062 = vmax.xlane.f32.xlu0 %v4061
    %v4063 = vpop.xlane.xlu0 %4062
    %v4064 = vsub.f32 %v4060, %v4063
    %v4065 = vmul.f32 %v4064, 1.442695
    %v4066 = vpow.pop %v4065
    %v4067 = vsel %vm546, %v4066, 0.0
    %4068 = vadd.xlane.f32.xlu0 %v4067
    %v4069 = vpop.xlane.xlu0 %4068
    %v4070 = vrcp.pop %v4069
    %v4071 = vmul.f32 %v4069, %v4070
    %v4072 = vsub.f32 1.0, %v4071
    %v4073 = vmul.f32 %v4070, %v4072
    %v4074 = vadd.f32 %v4070, %v4073
    %vm4075 = vweird.f32 %v4069
    %vm4076 = vweird.f32 %v4070
    %vm4077 = vmor %vm4075, %vm4076
    %v4078 = vsel %vm4077, %v4070, %v4074
    %v4079 = vand.u32 2147483647, %v4069
    %vm4080 = vcmp.eq.f32.partialorder %v4079, 8.507059e+37
    %v4081 = vand.u32 %v4069, 2147483648
    %v4082 = vor.u32 1.1754944e-38, %v4081
    %v4083 = vsel %vm4080, %v4082, %v4078
    %v4084 = vmul.f32 %v4066, %v4083
    %4085 = vrot.lane.b32.xlu0 %v539, 72
    %v4086 = vpop.permute.xlu0 %4085
    %v4089 = vsel %vm546, %v4084, 0
    %4091 = vmatpush.msra.mxu0 0.0
    %4092 = vmatpush.msra.mxu0 0.0
    %4093 = vmatpush.msra.mxu0 0.0
    %4094 = vmatpush.msra.mxu0 0.0
    %4095 = vmatpush.msra.mxu0 0.0
    %4096 = vmatpush.msra.mxu0 0.0
    %4097 = vmatpush.msra.mxu0 0.0
    %4098 = vmatpush.msra.mxu0 0.0
    %4099 = vmatpush.msra.mxu0 0.0
    %4100 = vmatpush.msra.mxu0 0.0
    %4101 = vmatpush.msra.mxu0 0.0
    %4102 = vmatpush.msra.mxu0 0.0
    %4103 = vmatpush.msra.mxu0 0.0
    %4104 = vmatpush.msra.mxu0 0.0
    %4105 = vmatpush.msra.mxu0 0.0
    %v4106 = vand.u32 %v4086, 4294901760
    %4107 = vmatpush.msra.mxu0 %v4106
    %v4108 = vand.u32 %v4089, 4294901760
    %v4109 = vsub.f32 %v4089, %v4108
    %v4110 = vand.u32 %v4109, 4294901760
    %v4111 = vsub.f32 %v4109, %v4110
    %v4112 = vand.u32 %v4111, 4294901760
    %4113 = vmatmul.f32.gmra.mxu0 %v4112
    %v4114 = vpop.f32.mrf.mxu0
    %v4115 = vadd.f32 0.0, %v4114
    %4116 = vdwg.mxu0
    %4117 = vmatpush.msra.mxu0 0.0
    %4118 = vmatpush.msra.mxu0 0.0
    %4119 = vmatpush.msra.mxu0 0.0
    %4120 = vmatpush.msra.mxu0 0.0
    %4121 = vmatpush.msra.mxu0 0.0
    %4122 = vmatpush.msra.mxu0 0.0
    %4123 = vmatpush.msra.mxu0 0.0
    %4124 = vmatpush.msra.mxu0 0.0
    %4125 = vmatpush.msra.mxu0 0.0
    %4126 = vmatpush.msra.mxu0 0.0
    %4127 = vmatpush.msra.mxu0 0.0
    %4128 = vmatpush.msra.mxu0 0.0
    %4129 = vmatpush.msra.mxu0 0.0
    %4130 = vmatpush.msra.mxu0 0.0
    %4131 = vmatpush.msra.mxu0 0.0
    %v4132 = vand.u32 %v4086, 4294901760
    %v4133 = vsub.f32 %v4086, %v4132
    %v4134 = vand.u32 %v4133, 4294901760
    %v4135 = vsub.f32 %v4133, %v4134
    %v4136 = vand.u32 %v4135, 4294901760
    %4137 = vmatpush.msra.mxu0 %v4136
    %v4138 = vand.u32 %v4089, 4294901760
    %4139 = vmatmul.f32.gmra.mxu0 %v4138
    %v4140 = vpop.f32.mrf.mxu0
    %v4141 = vadd.f32 %v4115, %v4140
    %4142 = vdwg.mxu0
    %4143 = vmatpush.msra.mxu0 0.0
    %4144 = vmatpush.msra.mxu0 0.0
    %4145 = vmatpush.msra.mxu0 0.0
    %4146 = vmatpush.msra.mxu0 0.0
    %4147 = vmatpush.msra.mxu0 0.0
    %4148 = vmatpush.msra.mxu0 0.0
    %4149 = vmatpush.msra.mxu0 0.0
    %4150 = vmatpush.msra.mxu0 0.0
    %4151 = vmatpush.msra.mxu0 0.0
    %4152 = vmatpush.msra.mxu0 0.0
    %4153 = vmatpush.msra.mxu0 0.0
    %4154 = vmatpush.msra.mxu0 0.0
    %4155 = vmatpush.msra.mxu0 0.0
    %4156 = vmatpush.msra.mxu0 0.0
    %4157 = vmatpush.msra.mxu0 0.0
    %v4158 = vand.u32 %v4086, 4294901760
    %v4159 = vsub.f32 %v4086, %v4158
    %4160 = vmatpush.msra.mxu0 %v4159
    %v4161 = vand.u32 %v4089, 4294901760
    %v4162 = vsub.f32 %v4089, %v4161
    %4163 = vmatmul.f32.gmra.mxu0 %v4162
    %v4164 = vpop.f32.mrf.mxu0
    %v4165 = vadd.f32 %v4141, %v4164
    %4166 = vdwg.mxu0
    %4167 = vmatpush.msra.mxu0 0.0
    %4168 = vmatpush.msra.mxu0 0.0
    %4169 = vmatpush.msra.mxu0 0.0
    %4170 = vmatpush.msra.mxu0 0.0
    %4171 = vmatpush.msra.mxu0 0.0
    %4172 = vmatpush.msra.mxu0 0.0
    %4173 = vmatpush.msra.mxu0 0.0
    %4174 = vmatpush.msra.mxu0 0.0
    %4175 = vmatpush.msra.mxu0 0.0
    %4176 = vmatpush.msra.mxu0 0.0
    %4177 = vmatpush.msra.mxu0 0.0
    %4178 = vmatpush.msra.mxu0 0.0
    %4179 = vmatpush.msra.mxu0 0.0
    %4180 = vmatpush.msra.mxu0 0.0
    %4181 = vmatpush.msra.mxu0 0.0
    %v4182 = vand.u32 %v4086, 4294901760
    %4183 = vmatpush.msra.mxu0 %v4182
    %v4184 = vand.u32 %v4089, 4294901760
    %v4185 = vsub.f32 %v4089, %v4184
    %v4186 = vand.u32 %v4185, 4294901760
    %4187 = vmatmul.f32.gmra.mxu0 %v4186
    %v4188 = vpop.f32.mrf.mxu0
    %v4189 = vadd.f32 %v4165, %v4188
    %4190 = vdwg.mxu0
    %4191 = vmatpush.msra.mxu0 0.0
    %4192 = vmatpush.msra.mxu0 0.0
    %4193 = vmatpush.msra.mxu0 0.0
    %4194 = vmatpush.msra.mxu0 0.0
    %4195 = vmatpush.msra.mxu0 0.0
    %4196 = vmatpush.msra.mxu0 0.0
    %4197 = vmatpush.msra.mxu0 0.0
    %4198 = vmatpush.msra.mxu0 0.0
    %4199 = vmatpush.msra.mxu0 0.0
    %4200 = vmatpush.msra.mxu0 0.0
    %4201 = vmatpush.msra.mxu0 0.0
    %4202 = vmatpush.msra.mxu0 0.0
    %4203 = vmatpush.msra.mxu0 0.0
    %4204 = vmatpush.msra.mxu0 0.0
    %4205 = vmatpush.msra.mxu0 0.0
    %v4206 = vand.u32 %v4086, 4294901760
    %v4207 = vsub.f32 %v4086, %v4206
    %v4208 = vand.u32 %v4207, 4294901760
    %4209 = vmatpush.msra.mxu0 %v4208
    %v4210 = vand.u32 %v4089, 4294901760
    %4211 = vmatmul.f32.gmra.mxu0 %v4210
    %v4212 = vpop.f32.mrf.mxu0
    %v4213 = vadd.f32 %v4189, %v4212
    %4214 = vdwg.mxu0
    %4215 = vmatpush.msra.mxu0 0.0
    %4216 = vmatpush.msra.mxu0 0.0
    %4217 = vmatpush.msra.mxu0 0.0
    %4218 = vmatpush.msra.mxu0 0.0
    %4219 = vmatpush.msra.mxu0 0.0
    %4220 = vmatpush.msra.mxu0 0.0
    %4221 = vmatpush.msra.mxu0 0.0
    %4222 = vmatpush.msra.mxu0 0.0
    %4223 = vmatpush.msra.mxu0 0.0
    %4224 = vmatpush.msra.mxu0 0.0
    %4225 = vmatpush.msra.mxu0 0.0
    %4226 = vmatpush.msra.mxu0 0.0
    %4227 = vmatpush.msra.mxu0 0.0
    %4228 = vmatpush.msra.mxu0 0.0
    %4229 = vmatpush.msra.mxu0 0.0
    %v4230 = vand.u32 %v4086, 4294901760
    %4231 = vmatpush.msra.mxu0 %v4230
    %v4232 = vand.u32 %v4089, 4294901760
    %4233 = vmatmul.f32.gmra.mxu0 %v4232
    %v4234 = vpop.f32.mrf.mxu0
    %v4235 = vadd.f32 %v4213, %v4234
    %4236 = vdwg.mxu0
    %v4238 = vsel %vm546, %v4235, 0
    %4240 = vmatpush.msra.mxu0 0.0
    %4241 = vmatpush.msra.mxu0 0.0
    %4242 = vmatpush.msra.mxu0 0.0
    %4243 = vmatpush.msra.mxu0 0.0
    %4244 = vmatpush.msra.mxu0 0.0
    %4245 = vmatpush.msra.mxu0 0.0
    %4246 = vmatpush.msra.mxu0 0.0
    %4247 = vmatpush.msra.mxu0 0.0
    %4248 = vmatpush.msra.mxu0 0.0
    %4249 = vmatpush.msra.mxu0 0.0
    %4250 = vmatpush.msra.mxu0 0.0
    %4251 = vmatpush.msra.mxu0 0.0
    %4252 = vmatpush.msra.mxu0 0.0
    %4253 = vmatpush.msra.mxu0 0.0
    %4254 = vmatpush.msra.mxu0 0.0
    %v4255 = vand.u32 %v544, 4294901760
    %4256 = vmatpush.msra.mxu0 %v4255
    %v4257 = vand.u32 %v4238, 4294901760
    %v4258 = vsub.f32 %v4238, %v4257
    %v4259 = vand.u32 %v4258, 4294901760
    %v4260 = vsub.f32 %v4258, %v4259
    %v4261 = vand.u32 %v4260, 4294901760
    %4262 = vmatmul.f32.gmra.mxu0 %v4261
    %v4263 = vpop.f32.mrf.mxu0
    %v4264 = vadd.f32 0.0, %v4263
    %4265 = vdwg.mxu0
    %4266 = vmatpush.msra.mxu0 0.0
    %4267 = vmatpush.msra.mxu0 0.0
    %4268 = vmatpush.msra.mxu0 0.0
    %4269 = vmatpush.msra.mxu0 0.0
    %4270 = vmatpush.msra.mxu0 0.0
    %4271 = vmatpush.msra.mxu0 0.0
    %4272 = vmatpush.msra.mxu0 0.0
    %4273 = vmatpush.msra.mxu0 0.0
    %4274 = vmatpush.msra.mxu0 0.0
    %4275 = vmatpush.msra.mxu0 0.0
    %4276 = vmatpush.msra.mxu0 0.0
    %4277 = vmatpush.msra.mxu0 0.0
    %4278 = vmatpush.msra.mxu0 0.0
    %4279 = vmatpush.msra.mxu0 0.0
    %4280 = vmatpush.msra.mxu0 0.0
    %v4281 = vand.u32 %v544, 4294901760
    %v4282 = vsub.f32 %v544, %v4281
    %v4283 = vand.u32 %v4282, 4294901760
    %v4284 = vsub.f32 %v4282, %v4283
    %v4285 = vand.u32 %v4284, 4294901760
    %4286 = vmatpush.msra.mxu0 %v4285
    %v4287 = vand.u32 %v4238, 4294901760
    %4288 = vmatmul.f32.gmra.mxu0 %v4287
    %v4289 = vpop.f32.mrf.mxu0
    %v4290 = vadd.f32 %v4264, %v4289
    %4291 = vdwg.mxu0
    %4292 = vmatpush.msra.mxu0 0.0
    %4293 = vmatpush.msra.mxu0 0.0
    %4294 = vmatpush.msra.mxu0 0.0
    %4295 = vmatpush.msra.mxu0 0.0
    %4296 = vmatpush.msra.mxu0 0.0
    %4297 = vmatpush.msra.mxu0 0.0
    %4298 = vmatpush.msra.mxu0 0.0
    %4299 = vmatpush.msra.mxu0 0.0
    %4300 = vmatpush.msra.mxu0 0.0
    %4301 = vmatpush.msra.mxu0 0.0
    %4302 = vmatpush.msra.mxu0 0.0
    %4303 = vmatpush.msra.mxu0 0.0
    %4304 = vmatpush.msra.mxu0 0.0
    %4305 = vmatpush.msra.mxu0 0.0
    %4306 = vmatpush.msra.mxu0 0.0
    %v4307 = vand.u32 %v544, 4294901760
    %v4308 = vsub.f32 %v544, %v4307
    %4309 = vmatpush.msra.mxu0 %v4308
    %v4310 = vand.u32 %v4238, 4294901760
    %v4311 = vsub.f32 %v4238, %v4310
    %4312 = vmatmul.f32.gmra.mxu0 %v4311
    %v4313 = vpop.f32.mrf.mxu0
    %v4314 = vadd.f32 %v4290, %v4313
    %4315 = vdwg.mxu0
    %4316 = vmatpush.msra.mxu0 0.0
    %4317 = vmatpush.msra.mxu0 0.0
    %4318 = vmatpush.msra.mxu0 0.0
    %4319 = vmatpush.msra.mxu0 0.0
    %4320 = vmatpush.msra.mxu0 0.0
    %4321 = vmatpush.msra.mxu0 0.0
    %4322 = vmatpush.msra.mxu0 0.0
    %4323 = vmatpush.msra.mxu0 0.0
    %4324 = vmatpush.msra.mxu0 0.0
    %4325 = vmatpush.msra.mxu0 0.0
    %4326 = vmatpush.msra.mxu0 0.0
    %4327 = vmatpush.msra.mxu0 0.0
    %4328 = vmatpush.msra.mxu0 0.0
    %4329 = vmatpush.msra.mxu0 0.0
    %4330 = vmatpush.msra.mxu0 0.0
    %v4331 = vand.u32 %v544, 4294901760
    %4332 = vmatpush.msra.mxu0 %v4331
    %v4333 = vand.u32 %v4238, 4294901760
    %v4334 = vsub.f32 %v4238, %v4333
    %v4335 = vand.u32 %v4334, 4294901760
    %4336 = vmatmul.f32.gmra.mxu0 %v4335
    %v4337 = vpop.f32.mrf.mxu0
    %v4338 = vadd.f32 %v4314, %v4337
    %4339 = vdwg.mxu0
    %4340 = vmatpush.msra.mxu0 0.0
    %4341 = vmatpush.msra.mxu0 0.0
    %4342 = vmatpush.msra.mxu0 0.0
    %4343 = vmatpush.msra.mxu0 0.0
    %4344 = vmatpush.msra.mxu0 0.0
    %4345 = vmatpush.msra.mxu0 0.0
    %4346 = vmatpush.msra.mxu0 0.0
    %4347 = vmatpush.msra.mxu0 0.0
    %4348 = vmatpush.msra.mxu0 0.0
    %4349 = vmatpush.msra.mxu0 0.0
    %4350 = vmatpush.msra.mxu0 0.0
    %4351 = vmatpush.msra.mxu0 0.0
    %4352 = vmatpush.msra.mxu0 0.0
    %4353 = vmatpush.msra.mxu0 0.0
    %4354 = vmatpush.msra.mxu0 0.0
    %v4355 = vand.u32 %v544, 4294901760
    %v4356 = vsub.f32 %v544, %v4355
    %v4357 = vand.u32 %v4356, 4294901760
    %4358 = vmatpush.msra.mxu0 %v4357
    %v4359 = vand.u32 %v4238, 4294901760
    %4360 = vmatmul.f32.gmra.mxu0 %v4359
    %v4361 = vpop.f32.mrf.mxu0
    %v4362 = vadd.f32 %v4338, %v4361
    %4363 = vdwg.mxu0
    %4364 = vmatpush.msra.mxu0 0.0
    %4365 = vmatpush.msra.mxu0 0.0
    %4366 = vmatpush.msra.mxu0 0.0
    %4367 = vmatpush.msra.mxu0 0.0
    %4368 = vmatpush.msra.mxu0 0.0
    %4369 = vmatpush.msra.mxu0 0.0
    %4370 = vmatpush.msra.mxu0 0.0
    %4371 = vmatpush.msra.mxu0 0.0
    %4372 = vmatpush.msra.mxu0 0.0
    %4373 = vmatpush.msra.mxu0 0.0
    %4374 = vmatpush.msra.mxu0 0.0
    %4375 = vmatpush.msra.mxu0 0.0
    %4376 = vmatpush.msra.mxu0 0.0
    %4377 = vmatpush.msra.mxu0 0.0
    %4378 = vmatpush.msra.mxu0 0.0
    %v4379 = vand.u32 %v544, 4294901760
    %4380 = vmatpush.msra.mxu0 %v4379
    %v4381 = vand.u32 %v4238, 4294901760
    %4382 = vmatmul.f32.gmra.mxu0 %v4381
    %v4383 = vpop.f32.mrf.mxu0
    %v4384 = vadd.f32 %v4362, %v4383
    %4385 = vdwg.mxu0
    %v4386 = vadd.f32 %v3905, %v4384
    %v4387 = vperm.slane %v545, 0
    %v4388 = vadd.f32 %v2466, %v4387
    %v4389 = vadd.f32 %v4386, %v4387
    %v4390 = vadd.f32 %v80, %v4388
    %v4391 = vadd.f32 %v81, %v4389
    %v4392 = vld [vmem:[#allocation7 + $0x3] sm:$0x1]
    %v4393 = vld [vmem:[#allocation7 + $0x4] sm:$0x1]
    %v4394 = vsel %vm90, %v4390, 0.0
    %4395 = vadd.xlane.f32.xlu0 %v4394
    %v4396 = vpop.xlane.xlu0 %4395
    %v4397 = vsel %vm90, %v4391, 0.0
    %4398 = vadd.xlane.f32.xlu0 %v4397
    %v4399 = vpop.xlane.xlu0 %4398
    %v4400 = vrcp.pop 32.0
    %v4401 = vmul.f32 32.0, %v4400
    %v4402 = vsub.f32 1.0, %v4401
    %v4403 = vmul.f32 %v4400, %v4402
    %v4404 = vadd.f32 %v4400, %v4403
    %vm4405 = vweird.f32 %v4400
    %v4406 = vsel %vm4405, %v4400, %v4404
    %v4407 = vmul.f32 %v4396, %v4406
    %v4408 = vmul.f32 %v4399, %v4406
    %v4409 = vsub.f32 %v4390, %v4407
    %v4410 = vsub.f32 %v4391, %v4408
    %v4411 = vmul.f32 %v4409, %v4409
    %v4412 = vmul.f32 %v4410, %v4410
    %v4413 = vsel %vm90, %v4411, 0.0
    %4414 = vadd.xlane.f32.xlu0 %v4413
    %v4415 = vpop.xlane.xlu0 %4414
    %v4416 = vsel %vm90, %v4412, 0.0
    %4417 = vadd.xlane.f32.xlu0 %v4416
    %v4418 = vpop.xlane.xlu0 %4417
    %v4419 = vmul.f32 %v4415, %v4406
    %v4420 = vmul.f32 %v4418, %v4406
    %v4421 = vadd.f32 %v4419, 1e-05
    %v4422 = vadd.f32 %v4420, 1e-05
    %v4423 = vrsqrt.pop %v4421
    %v4424 = vmul.f32 %v4423, %v4421
    %v4425 = vmul.f32 %v4424, %v4423
    %v4426 = vmul.f32 0.5, %v4425
    %v4427 = vsub.f32 1.5, %v4426
    %v4428 = vmul.f32 %v4423, %v4427
    %vm4429 = vweird.f32 %v4421
    %vm4430 = vweird.f32 %v4423
    %vm4431 = vmor %vm4429, %vm4430
    %v4432 = vsel %vm4431, %v4423, %v4428
    %v4433 = vrsqrt.pop %v4422
    %v4434 = vmul.f32 %v4433, %v4422
    %v4435 = vmul.f32 %v4434, %v4433
    %v4436 = vmul.f32 0.5, %v4435
    %v4437 = vsub.f32 1.5, %v4436
    %v4438 = vmul.f32 %v4433, %v4437
    %vm4439 = vweird.f32 %v4422
    %vm4440 = vweird.f32 %v4433
    %vm4441 = vmor %vm4439, %vm4440
    %v4442 = vsel %vm4441, %v4433, %v4438
    %v4443 = vmul.f32 %v4409, %v4432
    %v4444 = vmul.f32 %v4410, %v4442
    %v4445 = vperm.slane %v4392, 0
    %v4446 = vmul.f32 %v4443, %v4445
    %v4447 = vmul.f32 %v4444, %v4445
    %v4448 = vperm.slane %v4393, 0
    %v4449 = vadd.f32 %v4446, %v4448
    %v4450 = vadd.f32 %v4447, %v4448
    %v4451 = vld [vmem:[#allocation7 + $0x5] sm:$0x1]
    %v4452 = vld [vmem:[#allocation7 + $0x6] sm:$0x1]
    %v4453 = vsel %vm90, %v4449, 0.0
    %4454 = vadd.xlane.f32.xlu0 %v4453
    %v4455 = vpop.xlane.xlu0 %4454
    %v4456 = vsel %vm90, %v4450, 0.0
    %4457 = vadd.xlane.f32.xlu0 %v4456
    %v4458 = vpop.xlane.xlu0 %4457
    %v4459 = vmul.f32 %v4455, %v4406
    %v4460 = vmul.f32 %v4458, %v4406
    %v4461 = vsub.f32 %v4449, %v4459
    %v4462 = vsub.f32 %v4450, %v4460
    %v4463 = vmul.f32 %v4461, %v4461
    %v4464 = vmul.f32 %v4462, %v4462
    %v4465 = vsel %vm90, %v4463, 0.0
    %4466 = vadd.xlane.f32.xlu0 %v4465
    %v4467 = vpop.xlane.xlu0 %4466
    %v4468 = vsel %vm90, %v4464, 0.0
    %4469 = vadd.xlane.f32.xlu0 %v4468
    %v4470 = vpop.xlane.xlu0 %4469
    %v4471 = vmul.f32 %v4467, %v4406
    %v4472 = vmul.f32 %v4470, %v4406
    %v4473 = vadd.f32 %v4471, 1e-05
    %v4474 = vadd.f32 %v4472, 1e-05
    %v4475 = vrsqrt.pop %v4473
    %v4476 = vmul.f32 %v4475, %v4473
    %v4477 = vmul.f32 %v4476, %v4475
    %v4478 = vmul.f32 0.5, %v4477
    %v4479 = vsub.f32 1.5, %v4478
    %v4480 = vmul.f32 %v4475, %v4479
    %vm4481 = vweird.f32 %v4473
    %vm4482 = vweird.f32 %v4475
    %vm4483 = vmor %vm4481, %vm4482
    %v4484 = vsel %vm4483, %v4475, %v4480
    %v4485 = vrsqrt.pop %v4474
    %v4486 = vmul.f32 %v4485, %v4474
    %v4487 = vmul.f32 %v4486, %v4485
    %v4488 = vmul.f32 0.5, %v4487
    %v4489 = vsub.f32 1.5, %v4488
    %v4490 = vmul.f32 %v4485, %v4489
    %vm4491 = vweird.f32 %v4474
    %vm4492 = vweird.f32 %v4485
    %vm4493 = vmor %vm4491, %vm4492
    %v4494 = vsel %vm4493, %v4485, %v4490
    %v4495 = vmul.f32 %v4461, %v4484
    %v4496 = vmul.f32 %v4462, %v4494
    %v4497 = vperm.slane %v4451, 0
    %v4498 = vmul.f32 %v4495, %v4497
    %v4499 = vmul.f32 %v4496, %v4497
    %v4500 = vperm.slane %v4452, 0
    %v4501 = vadd.f32 %v4498, %v4500
    %v4502 = vadd.f32 %v4499, %v4500
    %v4503 = vld [vmem:[#allocation6 + $0x60] sm:$0xff]
    %v4504 = vld [vmem:[#allocation6 + $0x68] sm:$0xff]
    %v4505 = vld [vmem:[#allocation6 + $0x70] sm:$0xff]
    %v4506 = vld [vmem:[#allocation6 + $0x78] sm:$0xff]
    %v4507 = vld [vmem:[#allocation7 + $0x7] sm:$0x1]
    %v4508 = vperm.slane %v4507, 0
    %v4510 = vsel %vm90, %v4501, 0
    %v4513 = vsel %vm90, %v4502, 0
    %4515 = vmatpush.msra.mxu0 0.0
    %4516 = vmatpush.msra.mxu0 0.0
    %4517 = vmatpush.msra.mxu0 0.0
    %4518 = vmatpush.msra.mxu0 0.0
    %4519 = vmatpush.msra.mxu0 0.0
    %4520 = vmatpush.msra.mxu0 0.0
    %4521 = vmatpush.msra.mxu0 0.0
    %4522 = vmatpush.msra.mxu0 0.0
    %4523 = vmatpush.msra.mxu0 0.0
    %4524 = vmatpush.msra.mxu0 0.0
    %4525 = vmatpush.msra.mxu0 0.0
    %4526 = vmatpush.msra.mxu0 0.0
    %v4527 = vand.u32 %v4506, 4294901760
    %4528 = vmatpush.msra.mxu0 %v4527
    %v4529 = vand.u32 %v4505, 4294901760
    %4530 = vmatpush.msra.mxu0 %v4529
    %v4531 = vand.u32 %v4504, 4294901760
    %4532 = vmatpush.msra.mxu0 %v4531
    %v4533 = vand.u32 %v4503, 4294901760
    %4534 = vmatpush.msra.mxu0 %v4533
    %v4535 = vand.u32 %v4510, 4294901760
    %v4536 = vsub.f32 %v4510, %v4535
    %v4537 = vand.u32 %v4536, 4294901760
    %v4538 = vsub.f32 %v4536, %v4537
    %v4539 = vand.u32 %v4538, 4294901760
    %4540 = vmatmul.f32.gmra.mxu0 %v4539
    %v4541 = vpop.f32.mrf.mxu0
    %v4542 = vadd.f32 %v4508, %v4541
    %v4543 = vand.u32 %v4513, 4294901760
    %v4544 = vsub.f32 %v4513, %v4543
    %v4545 = vand.u32 %v4544, 4294901760
    %v4546 = vsub.f32 %v4544, %v4545
    %v4547 = vand.u32 %v4546, 4294901760
    %4548 = vmatmul.f32.gmra.mxu0 %v4547
    %v4549 = vpop.f32.mrf.mxu0
    %v4550 = vadd.f32 %v4508, %v4549
    %4551 = vdwg.mxu0
    %4552 = vmatpush.msra.mxu0 0.0
    %4553 = vmatpush.msra.mxu0 0.0
    %4554 = vmatpush.msra.mxu0 0.0
    %4555 = vmatpush.msra.mxu0 0.0
    %4556 = vmatpush.msra.mxu0 0.0
    %4557 = vmatpush.msra.mxu0 0.0
    %4558 = vmatpush.msra.mxu0 0.0
    %4559 = vmatpush.msra.mxu0 0.0
    %4560 = vmatpush.msra.mxu0 0.0
    %4561 = vmatpush.msra.mxu0 0.0
    %4562 = vmatpush.msra.mxu0 0.0
    %4563 = vmatpush.msra.mxu0 0.0
    %v4564 = vand.u32 %v4506, 4294901760
    %v4565 = vsub.f32 %v4506, %v4564
    %v4566 = vand.u32 %v4565, 4294901760
    %v4567 = vsub.f32 %v4565, %v4566
    %v4568 = vand.u32 %v4567, 4294901760
    %4569 = vmatpush.msra.mxu0 %v4568
    %v4570 = vand.u32 %v4505, 4294901760
    %v4571 = vsub.f32 %v4505, %v4570
    %v4572 = vand.u32 %v4571, 4294901760
    %v4573 = vsub.f32 %v4571, %v4572
    %v4574 = vand.u32 %v4573, 4294901760
    %4575 = vmatpush.msra.mxu0 %v4574
    %v4576 = vand.u32 %v4504, 4294901760
    %v4577 = vsub.f32 %v4504, %v4576
    %v4578 = vand.u32 %v4577, 4294901760
    %v4579 = vsub.f32 %v4577, %v4578
    %v4580 = vand.u32 %v4579, 4294901760
    %4581 = vmatpush.msra.mxu0 %v4580
    %v4582 = vand.u32 %v4503, 4294901760
    %v4583 = vsub.f32 %v4503, %v4582
    %v4584 = vand.u32 %v4583, 4294901760
    %v4585 = vsub.f32 %v4583, %v4584
    %v4586 = vand.u32 %v4585, 4294901760
    %4587 = vmatpush.msra.mxu0 %v4586
    %v4588 = vand.u32 %v4510, 4294901760
    %4589 = vmatmul.f32.gmra.mxu0 %v4588
    %v4590 = vpop.f32.mrf.mxu0
    %v4591 = vadd.f32 %v4542, %v4590
    %v4592 = vand.u32 %v4513, 4294901760
    %4593 = vmatmul.f32.gmra.mxu0 %v4592
    %v4594 = vpop.f32.mrf.mxu0
    %v4595 = vadd.f32 %v4550, %v4594
    %4596 = vdwg.mxu0
    %4597 = vmatpush.msra.mxu0 0.0
    %4598 = vmatpush.msra.mxu0 0.0
    %4599 = vmatpush.msra.mxu0 0.0
    %4600 = vmatpush.msra.mxu0 0.0
    %4601 = vmatpush.msra.mxu0 0.0
    %4602 = vmatpush.msra.mxu0 0.0
    %4603 = vmatpush.msra.mxu0 0.0
    %4604 = vmatpush.msra.mxu0 0.0
    %4605 = vmatpush.msra.mxu0 0.0
    %4606 = vmatpush.msra.mxu0 0.0
    %4607 = vmatpush.msra.mxu0 0.0
    %4608 = vmatpush.msra.mxu0 0.0
    %v4609 = vand.u32 %v4506, 4294901760
    %v4610 = vsub.f32 %v4506, %v4609
    %4611 = vmatpush.msra.mxu0 %v4610
    %v4612 = vand.u32 %v4505, 4294901760
    %v4613 = vsub.f32 %v4505, %v4612
    %4614 = vmatpush.msra.mxu0 %v4613
    %v4615 = vand.u32 %v4504, 4294901760
    %v4616 = vsub.f32 %v4504, %v4615
    %4617 = vmatpush.msra.mxu0 %v4616
    %v4618 = vand.u32 %v4503, 4294901760
    %v4619 = vsub.f32 %v4503, %v4618
    %4620 = vmatpush.msra.mxu0 %v4619
    %v4621 = vand.u32 %v4510, 4294901760
    %v4622 = vsub.f32 %v4510, %v4621
    %4623 = vmatmul.f32.gmra.mxu0 %v4622
    %v4624 = vpop.f32.mrf.mxu0
    %v4625 = vadd.f32 %v4591, %v4624
    %v4626 = vand.u32 %v4513, 4294901760
    %v4627 = vsub.f32 %v4513, %v4626
    %4628 = vmatmul.f32.gmra.mxu0 %v4627
    %v4629 = vpop.f32.mrf.mxu0
    %v4630 = vadd.f32 %v4595, %v4629
    %4631 = vdwg.mxu0
    %4632 = vmatpush.msra.mxu0 0.0
    %4633 = vmatpush.msra.mxu0 0.0
    %4634 = vmatpush.msra.mxu0 0.0
    %4635 = vmatpush.msra.mxu0 0.0
    %4636 = vmatpush.msra.mxu0 0.0
    %4637 = vmatpush.msra.mxu0 0.0
    %4638 = vmatpush.msra.mxu0 0.0
    %4639 = vmatpush.msra.mxu0 0.0
    %4640 = vmatpush.msra.mxu0 0.0
    %4641 = vmatpush.msra.mxu0 0.0
    %4642 = vmatpush.msra.mxu0 0.0
    %4643 = vmatpush.msra.mxu0 0.0
    %v4644 = vand.u32 %v4506, 4294901760
    %4645 = vmatpush.msra.mxu0 %v4644
    %v4646 = vand.u32 %v4505, 4294901760
    %4647 = vmatpush.msra.mxu0 %v4646
    %v4648 = vand.u32 %v4504, 4294901760
    %4649 = vmatpush.msra.mxu0 %v4648
    %v4650 = vand.u32 %v4503, 4294901760
    %4651 = vmatpush.msra.mxu0 %v4650
    %v4652 = vand.u32 %v4510, 4294901760
    %v4653 = vsub.f32 %v4510, %v4652
    %v4654 = vand.u32 %v4653, 4294901760
    %4655 = vmatmul.f32.gmra.mxu0 %v4654
    %v4656 = vpop.f32.mrf.mxu0
    %v4657 = vadd.f32 %v4625, %v4656
    %v4658 = vand.u32 %v4513, 4294901760
    %v4659 = vsub.f32 %v4513, %v4658
    %v4660 = vand.u32 %v4659, 4294901760
    %4661 = vmatmul.f32.gmra.mxu0 %v4660
    %v4662 = vpop.f32.mrf.mxu0
    %v4663 = vadd.f32 %v4630, %v4662
    %4664 = vdwg.mxu0
    %4665 = vmatpush.msra.mxu0 0.0
    %4666 = vmatpush.msra.mxu0 0.0
    %4667 = vmatpush.msra.mxu0 0.0
    %4668 = vmatpush.msra.mxu0 0.0
    %4669 = vmatpush.msra.mxu0 0.0
    %4670 = vmatpush.msra.mxu0 0.0
    %4671 = vmatpush.msra.mxu0 0.0
    %4672 = vmatpush.msra.mxu0 0.0
    %4673 = vmatpush.msra.mxu0 0.0
    %4674 = vmatpush.msra.mxu0 0.0
    %4675 = vmatpush.msra.mxu0 0.0
    %4676 = vmatpush.msra.mxu0 0.0
    %v4677 = vand.u32 %v4506, 4294901760
    %v4678 = vsub.f32 %v4506, %v4677
    %v4679 = vand.u32 %v4678, 4294901760
    %4680 = vmatpush.msra.mxu0 %v4679
    %v4681 = vand.u32 %v4505, 4294901760
    %v4682 = vsub.f32 %v4505, %v4681
    %v4683 = vand.u32 %v4682, 4294901760
    %4684 = vmatpush.msra.mxu0 %v4683
    %v4685 = vand.u32 %v4504, 4294901760
    %v4686 = vsub.f32 %v4504, %v4685
    %v4687 = vand.u32 %v4686, 4294901760
    %4688 = vmatpush.msra.mxu0 %v4687
    %v4689 = vand.u32 %v4503, 4294901760
    %v4690 = vsub.f32 %v4503, %v4689
    %v4691 = vand.u32 %v4690, 4294901760
    %4692 = vmatpush.msra.mxu0 %v4691
    %v4693 = vand.u32 %v4510, 4294901760
    %4694 = vmatmul.f32.gmra.mxu0 %v4693
    %v4695 = vpop.f32.mrf.mxu0
    %v4696 = vadd.f32 %v4657, %v4695
    %v4697 = vand.u32 %v4513, 4294901760
    %4698 = vmatmul.f32.gmra.mxu0 %v4697
    %v4699 = vpop.f32.mrf.mxu0
    %v4700 = vadd.f32 %v4663, %v4699
    %4701 = vdwg.mxu0
    %4702 = vmatpush.msra.mxu0 0.0
    %4703 = vmatpush.msra.mxu0 0.0
    %4704 = vmatpush.msra.mxu0 0.0
    %4705 = vmatpush.msra.mxu0 0.0
    %4706 = vmatpush.msra.mxu0 0.0
    %4707 = vmatpush.msra.mxu0 0.0
    %4708 = vmatpush.msra.mxu0 0.0
    %4709 = vmatpush.msra.mxu0 0.0
    %4710 = vmatpush.msra.mxu0 0.0
    %4711 = vmatpush.msra.mxu0 0.0
    %4712 = vmatpush.msra.mxu0 0.0
    %4713 = vmatpush.msra.mxu0 0.0
    %v4714 = vand.u32 %v4506, 4294901760
    %4715 = vmatpush.msra.mxu0 %v4714
    %v4716 = vand.u32 %v4505, 4294901760
    %4717 = vmatpush.msra.mxu0 %v4716
    %v4718 = vand.u32 %v4504, 4294901760
    %4719 = vmatpush.msra.mxu0 %v4718
    %v4720 = vand.u32 %v4503, 4294901760
    %4721 = vmatpush.msra.mxu0 %v4720
    %v4722 = vand.u32 %v4510, 4294901760
    %4723 = vmatmul.f32.gmra.mxu0 %v4722
    %v4724 = vpop.f32.mrf.mxu0
    %v4725 = vadd.f32 %v4696, %v4724
    %v4726 = vand.u32 %v4513, 4294901760
    %4727 = vmatmul.f32.gmra.mxu0 %v4726
    %v4728 = vpop.f32.mrf.mxu0
    %v4729 = vadd.f32 %v4700, %v4728
    %4730 = vdwg.mxu0
    %v4731 = vld [vmem:[#allocation6 + $0x80] sm:$0xff]
    %v4732 = vld [vmem:[#allocation6 + $0x88] sm:$0xff]
    %v4733 = vld [vmem:[#allocation6 + $0x90] sm:$0xff]
    %v4734 = vld [vmem:[#allocation6 + $0x98] sm:$0xff]
    %v4735 = vld [vmem:[#allocation7 + $0x8] sm:$0x1]
    %4737 = vrot.lane.b32.xlu0 %v4725, 96
    %v4738 = vpop.permute.xlu0 %4737
    %v4739 = vsel %vm546, %v4725, 0
    %v4741 = vsel %vm546, %v4738, 0
    %4743 = vmatpush.xpose.msra.mxu0 0.0
    %4744 = vmatpush.xpose.msra.mxu0 0.0
    %4745 = vmatpush.xpose.msra.mxu0 0.0
    %4746 = vmatpush.xpose.msra.mxu0 0.0
    %4747 = vmatpush.xpose.msra.mxu0 0.0
    %4748 = vmatpush.xpose.msra.mxu0 0.0
    %4749 = vmatpush.xpose.msra.mxu0 0.0
    %4750 = vmatpush.xpose.msra.mxu0 0.0
    %4751 = vmatpush.xpose.msra.mxu0 0.0
    %4752 = vmatpush.xpose.msra.mxu0 0.0
    %4753 = vmatpush.xpose.msra.mxu0 0.0
    %4754 = vmatpush.xpose.msra.mxu0 0.0
    %4755 = vmatpush.xpose.msra.mxu0 0.0
    %4756 = vmatpush.xpose.msra.mxu0 0.0
    %4757 = vmatpush.xpose.msra.mxu0 0.0
    %v4758 = vand.u32 %v4741, 4294901760
    %4759 = vmatpush.xpose.msra.mxu0 %v4758
    %v4760 = vand.u32 %v4739, 4294901760
    %v4761 = vsub.f32 %v4739, %v4760
    %v4762 = vand.u32 %v4761, 4294901760
    %v4763 = vsub.f32 %v4761, %v4762
    %v4764 = vand.u32 %v4763, 4294901760
    %4765 = vmatmul.f32.gmra.mxu0 %v4764
    %v4766 = vpop.f32.mrf.mxu0
    %v4767 = vadd.f32 0.0, %v4766
    %4768 = vdwg.mxu0
    %4769 = vmatpush.xpose.msra.mxu0 0.0
    %4770 = vmatpush.xpose.msra.mxu0 0.0
    %4771 = vmatpush.xpose.msra.mxu0 0.0
    %4772 = vmatpush.xpose.msra.mxu0 0.0
    %4773 = vmatpush.xpose.msra.mxu0 0.0
    %4774 = vmatpush.xpose.msra.mxu0 0.0
    %4775 = vmatpush.xpose.msra.mxu0 0.0
    %4776 = vmatpush.xpose.msra.mxu0 0.0
    %4777 = vmatpush.xpose.msra.mxu0 0.0
    %4778 = vmatpush.xpose.msra.mxu0 0.0
    %4779 = vmatpush.xpose.msra.mxu0 0.0
    %4780 = vmatpush.xpose.msra.mxu0 0.0
    %4781 = vmatpush.xpose.msra.mxu0 0.0
    %4782 = vmatpush.xpose.msra.mxu0 0.0
    %4783 = vmatpush.xpose.msra.mxu0 0.0
    %v4784 = vand.u32 %v4741, 4294901760
    %v4785 = vsub.f32 %v4741, %v4784
    %v4786 = vand.u32 %v4785, 4294901760
    %v4787 = vsub.f32 %v4785, %v4786
    %v4788 = vand.u32 %v4787, 4294901760
    %4789 = vmatpush.xpose.msra.mxu0 %v4788
    %v4790 = vand.u32 %v4739, 4294901760
    %4791 = vmatmul.f32.gmra.mxu0 %v4790
    %v4792 = vpop.f32.mrf.mxu0
    %v4793 = vadd.f32 %v4767, %v4792
    %4794 = vdwg.mxu0
    %4795 = vmatpush.xpose.msra.mxu0 0.0
    %4796 = vmatpush.xpose.msra.mxu0 0.0
    %4797 = vmatpush.xpose.msra.mxu0 0.0
    %4798 = vmatpush.xpose.msra.mxu0 0.0
    %4799 = vmatpush.xpose.msra.mxu0 0.0
    %4800 = vmatpush.xpose.msra.mxu0 0.0
    %4801 = vmatpush.xpose.msra.mxu0 0.0
    %4802 = vmatpush.xpose.msra.mxu0 0.0
    %4803 = vmatpush.xpose.msra.mxu0 0.0
    %4804 = vmatpush.xpose.msra.mxu0 0.0
    %4805 = vmatpush.xpose.msra.mxu0 0.0
    %4806 = vmatpush.xpose.msra.mxu0 0.0
    %4807 = vmatpush.xpose.msra.mxu0 0.0
    %4808 = vmatpush.xpose.msra.mxu0 0.0
    %4809 = vmatpush.xpose.msra.mxu0 0.0
    %v4810 = vand.u32 %v4741, 4294901760
    %v4811 = vsub.f32 %v4741, %v4810
    %4812 = vmatpush.xpose.msra.mxu0 %v4811
    %v4813 = vand.u32 %v4739, 4294901760
    %v4814 = vsub.f32 %v4739, %v4813
    %4815 = vmatmul.f32.gmra.mxu0 %v4814
    %v4816 = vpop.f32.mrf.mxu0
    %v4817 = vadd.f32 %v4793, %v4816
    %4818 = vdwg.mxu0
    %4819 = vmatpush.xpose.msra.mxu0 0.0
    %4820 = vmatpush.xpose.msra.mxu0 0.0
    %4821 = vmatpush.xpose.msra.mxu0 0.0
    %4822 = vmatpush.xpose.msra.mxu0 0.0
    %4823 = vmatpush.xpose.msra.mxu0 0.0
    %4824 = vmatpush.xpose.msra.mxu0 0.0
    %4825 = vmatpush.xpose.msra.mxu0 0.0
    %4826 = vmatpush.xpose.msra.mxu0 0.0
    %4827 = vmatpush.xpose.msra.mxu0 0.0
    %4828 = vmatpush.xpose.msra.mxu0 0.0
    %4829 = vmatpush.xpose.msra.mxu0 0.0
    %4830 = vmatpush.xpose.msra.mxu0 0.0
    %4831 = vmatpush.xpose.msra.mxu0 0.0
    %4832 = vmatpush.xpose.msra.mxu0 0.0
    %4833 = vmatpush.xpose.msra.mxu0 0.0
    %v4834 = vand.u32 %v4741, 4294901760
    %4835 = vmatpush.xpose.msra.mxu0 %v4834
    %v4836 = vand.u32 %v4739, 4294901760
    %v4837 = vsub.f32 %v4739, %v4836
    %v4838 = vand.u32 %v4837, 4294901760
    %4839 = vmatmul.f32.gmra.mxu0 %v4838
    %v4840 = vpop.f32.mrf.mxu0
    %v4841 = vadd.f32 %v4817, %v4840
    %4842 = vdwg.mxu0
    %4843 = vmatpush.xpose.msra.mxu0 0.0
    %4844 = vmatpush.xpose.msra.mxu0 0.0
    %4845 = vmatpush.xpose.msra.mxu0 0.0
    %4846 = vmatpush.xpose.msra.mxu0 0.0
    %4847 = vmatpush.xpose.msra.mxu0 0.0
    %4848 = vmatpush.xpose.msra.mxu0 0.0
    %4849 = vmatpush.xpose.msra.mxu0 0.0
    %4850 = vmatpush.xpose.msra.mxu0 0.0
    %4851 = vmatpush.xpose.msra.mxu0 0.0
    %4852 = vmatpush.xpose.msra.mxu0 0.0
    %4853 = vmatpush.xpose.msra.mxu0 0.0
    %4854 = vmatpush.xpose.msra.mxu0 0.0
    %4855 = vmatpush.xpose.msra.mxu0 0.0
    %4856 = vmatpush.xpose.msra.mxu0 0.0
    %4857 = vmatpush.xpose.msra.mxu0 0.0
    %v4858 = vand.u32 %v4741, 4294901760
    %v4859 = vsub.f32 %v4741, %v4858
    %v4860 = vand.u32 %v4859, 4294901760
    %4861 = vmatpush.xpose.msra.mxu0 %v4860
    %v4862 = vand.u32 %v4739, 4294901760
    %4863 = vmatmul.f32.gmra.mxu0 %v4862
    %v4864 = vpop.f32.mrf.mxu0
    %v4865 = vadd.f32 %v4841, %v4864
    %4866 = vdwg.mxu0
    %4867 = vmatpush.xpose.msra.mxu0 0.0
    %4868 = vmatpush.xpose.msra.mxu0 0.0
    %4869 = vmatpush.xpose.msra.mxu0 0.0
    %4870 = vmatpush.xpose.msra.mxu0 0.0
    %4871 = vmatpush.xpose.msra.mxu0 0.0
    %4872 = vmatpush.xpose.msra.mxu0 0.0
    %4873 = vmatpush.xpose.msra.mxu0 0.0
    %4874 = vmatpush.xpose.msra.mxu0 0.0
    %4875 = vmatpush.xpose.msra.mxu0 0.0
    %4876 = vmatpush.xpose.msra.mxu0 0.0
    %4877 = vmatpush.xpose.msra.mxu0 0.0
    %4878 = vmatpush.xpose.msra.mxu0 0.0
    %4879 = vmatpush.xpose.msra.mxu0 0.0
    %4880 = vmatpush.xpose.msra.mxu0 0.0
    %4881 = vmatpush.xpose.msra.mxu0 0.0
    %v4882 = vand.u32 %v4741, 4294901760
    %4883 = vmatpush.xpose.msra.mxu0 %v4882
    %v4884 = vand.u32 %v4739, 4294901760
    %4885 = vmatmul.f32.gmra.mxu0 %v4884
    %v4886 = vpop.f32.mrf.mxu0
    %v4887 = vadd.f32 %v4865, %v4886
    %4888 = vdwg.mxu0
    %v4889 = vmul.f32 %v4887, 0.35355338
    %v4890 = vsel %vm546, %v4889, -inf
    %4891 = vmax.xlane.f32.xlu0 %v4890
    %v4892 = vpop.xlane.xlu0 %4891
    %v4893 = vsub.f32 %v4889, %v4892
    %v4894 = vmul.f32 %v4893, 1.442695
    %v4895 = vpow.pop %v4894
    %v4896 = vsel %vm546, %v4895, 0.0
    %4897 = vadd.xlane.f32.xlu0 %v4896
    %v4898 = vpop.xlane.xlu0 %4897
    %v4899 = vrcp.pop %v4898
    %v4900 = vmul.f32 %v4898, %v4899
    %v4901 = vsub.f32 1.0, %v4900
    %v4902 = vmul.f32 %v4899, %v4901
    %v4903 = vadd.f32 %v4899, %v4902
    %vm4904 = vweird.f32 %v4898
    %vm4905 = vweird.f32 %v4899
    %vm4906 = vmor %vm4904, %vm4905
    %v4907 = vsel %vm4906, %v4899, %v4903
    %v4908 = vand.u32 2147483647, %v4898
    %vm4909 = vcmp.eq.f32.partialorder %v4908, 8.507059e+37
    %v4910 = vand.u32 %v4898, 2147483648
    %v4911 = vor.u32 1.1754944e-38, %v4910
    %v4912 = vsel %vm4909, %v4911, %v4907
    %v4913 = vmul.f32 %v4895, %v4912
    %4914 = vrot.lane.b32.xlu0 %v4725, 64
    %v4915 = vpop.permute.xlu0 %4914
    %v4918 = vsel %vm546, %v4913, 0
    %4920 = vmatpush.msra.mxu0 0.0
    %4921 = vmatpush.msra.mxu0 0.0
    %4922 = vmatpush.msra.mxu0 0.0
    %4923 = vmatpush.msra.mxu0 0.0
    %4924 = vmatpush.msra.mxu0 0.0
    %4925 = vmatpush.msra.mxu0 0.0
    %4926 = vmatpush.msra.mxu0 0.0
    %4927 = vmatpush.msra.mxu0 0.0
    %4928 = vmatpush.msra.mxu0 0.0
    %4929 = vmatpush.msra.mxu0 0.0
    %4930 = vmatpush.msra.mxu0 0.0
    %4931 = vmatpush.msra.mxu0 0.0
    %4932 = vmatpush.msra.mxu0 0.0
    %4933 = vmatpush.msra.mxu0 0.0
    %4934 = vmatpush.msra.mxu0 0.0
    %v4935 = vand.u32 %v4915, 4294901760
    %4936 = vmatpush.msra.mxu0 %v4935
    %v4937 = vand.u32 %v4918, 4294901760
    %v4938 = vsub.f32 %v4918, %v4937
    %v4939 = vand.u32 %v4938, 4294901760
    %v4940 = vsub.f32 %v4938, %v4939
    %v4941 = vand.u32 %v4940, 4294901760
    %4942 = vmatmul.f32.gmra.mxu0 %v4941
    %v4943 = vpop.f32.mrf.mxu0
    %v4944 = vadd.f32 0.0, %v4943
    %4945 = vdwg.mxu0
    %4946 = vmatpush.msra.mxu0 0.0
    %4947 = vmatpush.msra.mxu0 0.0
    %4948 = vmatpush.msra.mxu0 0.0
    %4949 = vmatpush.msra.mxu0 0.0
    %4950 = vmatpush.msra.mxu0 0.0
    %4951 = vmatpush.msra.mxu0 0.0
    %4952 = vmatpush.msra.mxu0 0.0
    %4953 = vmatpush.msra.mxu0 0.0
    %4954 = vmatpush.msra.mxu0 0.0
    %4955 = vmatpush.msra.mxu0 0.0
    %4956 = vmatpush.msra.mxu0 0.0
    %4957 = vmatpush.msra.mxu0 0.0
    %4958 = vmatpush.msra.mxu0 0.0
    %4959 = vmatpush.msra.mxu0 0.0
    %4960 = vmatpush.msra.mxu0 0.0
    %v4961 = vand.u32 %v4915, 4294901760
    %v4962 = vsub.f32 %v4915, %v4961
    %v4963 = vand.u32 %v4962, 4294901760
    %v4964 = vsub.f32 %v4962, %v4963
    %v4965 = vand.u32 %v4964, 4294901760
    %4966 = vmatpush.msra.mxu0 %v4965
    %v4967 = vand.u32 %v4918, 4294901760
    %4968 = vmatmul.f32.gmra.mxu0 %v4967
    %v4969 = vpop.f32.mrf.mxu0
    %v4970 = vadd.f32 %v4944, %v4969
    %4971 = vdwg.mxu0
    %4972 = vmatpush.msra.mxu0 0.0
    %4973 = vmatpush.msra.mxu0 0.0
    %4974 = vmatpush.msra.mxu0 0.0
    %4975 = vmatpush.msra.mxu0 0.0
    %4976 = vmatpush.msra.mxu0 0.0
    %4977 = vmatpush.msra.mxu0 0.0
    %4978 = vmatpush.msra.mxu0 0.0
    %4979 = vmatpush.msra.mxu0 0.0
    %4980 = vmatpush.msra.mxu0 0.0
    %4981 = vmatpush.msra.mxu0 0.0
    %4982 = vmatpush.msra.mxu0 0.0
    %4983 = vmatpush.msra.mxu0 0.0
    %4984 = vmatpush.msra.mxu0 0.0
    %4985 = vmatpush.msra.mxu0 0.0
    %4986 = vmatpush.msra.mxu0 0.0
    %v4987 = vand.u32 %v4915, 4294901760
    %v4988 = vsub.f32 %v4915, %v4987
    %4989 = vmatpush.msra.mxu0 %v4988
    %v4990 = vand.u32 %v4918, 4294901760
    %v4991 = vsub.f32 %v4918, %v4990
    %4992 = vmatmul.f32.gmra.mxu0 %v4991
    %v4993 = vpop.f32.mrf.mxu0
    %v4994 = vadd.f32 %v4970, %v4993
    %4995 = vdwg.mxu0
    %4996 = vmatpush.msra.mxu0 0.0
    %4997 = vmatpush.msra.mxu0 0.0
    %4998 = vmatpush.msra.mxu0 0.0
    %4999 = vmatpush.msra.mxu0 0.0
    %5000 = vmatpush.msra.mxu0 0.0
    %5001 = vmatpush.msra.mxu0 0.0
    %5002 = vmatpush.msra.mxu0 0.0
    %5003 = vmatpush.msra.mxu0 0.0
    %5004 = vmatpush.msra.mxu0 0.0
    %5005 = vmatpush.msra.mxu0 0.0
    %5006 = vmatpush.msra.mxu0 0.0
    %5007 = vmatpush.msra.mxu0 0.0
    %5008 = vmatpush.msra.mxu0 0.0
    %5009 = vmatpush.msra.mxu0 0.0
    %5010 = vmatpush.msra.mxu0 0.0
    %v5011 = vand.u32 %v4915, 4294901760
    %5012 = vmatpush.msra.mxu0 %v5011
    %v5013 = vand.u32 %v4918, 4294901760
    %v5014 = vsub.f32 %v4918, %v5013
    %v5015 = vand.u32 %v5014, 4294901760
    %5016 = vmatmul.f32.gmra.mxu0 %v5015
    %v5017 = vpop.f32.mrf.mxu0
    %v5018 = vadd.f32 %v4994, %v5017
    %5019 = vdwg.mxu0
    %5020 = vmatpush.msra.mxu0 0.0
    %5021 = vmatpush.msra.mxu0 0.0
    %5022 = vmatpush.msra.mxu0 0.0
    %5023 = vmatpush.msra.mxu0 0.0
    %5024 = vmatpush.msra.mxu0 0.0
    %5025 = vmatpush.msra.mxu0 0.0
    %5026 = vmatpush.msra.mxu0 0.0
    %5027 = vmatpush.msra.mxu0 0.0
    %5028 = vmatpush.msra.mxu0 0.0
    %5029 = vmatpush.msra.mxu0 0.0
    %5030 = vmatpush.msra.mxu0 0.0
    %5031 = vmatpush.msra.mxu0 0.0
    %5032 = vmatpush.msra.mxu0 0.0
    %5033 = vmatpush.msra.mxu0 0.0
    %5034 = vmatpush.msra.mxu0 0.0
    %v5035 = vand.u32 %v4915, 4294901760
    %v5036 = vsub.f32 %v4915, %v5035
    %v5037 = vand.u32 %v5036, 4294901760
    %5038 = vmatpush.msra.mxu0 %v5037
    %v5039 = vand.u32 %v4918, 4294901760
    %5040 = vmatmul.f32.gmra.mxu0 %v5039
    %v5041 = vpop.f32.mrf.mxu0
    %v5042 = vadd.f32 %v5018, %v5041
    %5043 = vdwg.mxu0
    %5044 = vmatpush.msra.mxu0 0.0
    %5045 = vmatpush.msra.mxu0 0.0
    %5046 = vmatpush.msra.mxu0 0.0
    %5047 = vmatpush.msra.mxu0 0.0
    %5048 = vmatpush.msra.mxu0 0.0
    %5049 = vmatpush.msra.mxu0 0.0
    %5050 = vmatpush.msra.mxu0 0.0
    %5051 = vmatpush.msra.mxu0 0.0
    %5052 = vmatpush.msra.mxu0 0.0
    %5053 = vmatpush.msra.mxu0 0.0
    %5054 = vmatpush.msra.mxu0 0.0
    %5055 = vmatpush.msra.mxu0 0.0
    %5056 = vmatpush.msra.mxu0 0.0
    %5057 = vmatpush.msra.mxu0 0.0
    %5058 = vmatpush.msra.mxu0 0.0
    %v5059 = vand.u32 %v4915, 4294901760
    %5060 = vmatpush.msra.mxu0 %v5059
    %v5061 = vand.u32 %v4918, 4294901760
    %5062 = vmatmul.f32.gmra.mxu0 %v5061
    %v5063 = vpop.f32.mrf.mxu0
    %v5064 = vadd.f32 %v5042, %v5063
    %5065 = vdwg.mxu0
    %5066 = vrot.lane.b32.xlu0 %v4725, 120
    %v5067 = vpop.permute.xlu0 %5066
    %5068 = vrot.lane.b32.xlu0 %v4725, 88
    %v5069 = vpop.permute.xlu0 %5068
    %v5070 = vsel %vm546, %v5067, 0
    %v5072 = vsel %vm546, %v5069, 0
    %5074 = vmatpush.xpose.msra.mxu0 0.0
    %5075 = vmatpush.xpose.msra.mxu0 0.0
    %5076 = vmatpush.xpose.msra.mxu0 0.0
    %5077 = vmatpush.xpose.msra.mxu0 0.0
    %5078 = vmatpush.xpose.msra.mxu0 0.0
    %5079 = vmatpush.xpose.msra.mxu0 0.0
    %5080 = vmatpush.xpose.msra.mxu0 0.0
    %5081 = vmatpush.xpose.msra.mxu0 0.0
    %5082 = vmatpush.xpose.msra.mxu0 0.0
    %5083 = vmatpush.xpose.msra.mxu0 0.0
    %5084 = vmatpush.xpose.msra.mxu0 0.0
    %5085 = vmatpush.xpose.msra.mxu0 0.0
    %5086 = vmatpush.xpose.msra.mxu0 0.0
    %5087 = vmatpush.xpose.msra.mxu0 0.0
    %5088 = vmatpush.xpose.msra.mxu0 0.0
    %v5089 = vand.u32 %v5072, 4294901760
    %5090 = vmatpush.xpose.msra.mxu0 %v5089
    %v5091 = vand.u32 %v5070, 4294901760
    %v5092 = vsub.f32 %v5070, %v5091
    %v5093 = vand.u32 %v5092, 4294901760
    %v5094 = vsub.f32 %v5092, %v5093
    %v5095 = vand.u32 %v5094, 4294901760
    %5096 = vmatmul.f32.gmra.mxu0 %v5095
    %v5097 = vpop.f32.mrf.mxu0
    %v5098 = vadd.f32 0.0, %v5097
    %5099 = vdwg.mxu0
    %5100 = vmatpush.xpose.msra.mxu0 0.0
    %5101 = vmatpush.xpose.msra.mxu0 0.0
    %5102 = vmatpush.xpose.msra.mxu0 0.0
    %5103 = vmatpush.xpose.msra.mxu0 0.0
    %5104 = vmatpush.xpose.msra.mxu0 0.0
    %5105 = vmatpush.xpose.msra.mxu0 0.0
    %5106 = vmatpush.xpose.msra.mxu0 0.0
    %5107 = vmatpush.xpose.msra.mxu0 0.0
    %5108 = vmatpush.xpose.msra.mxu0 0.0
    %5109 = vmatpush.xpose.msra.mxu0 0.0
    %5110 = vmatpush.xpose.msra.mxu0 0.0
    %5111 = vmatpush.xpose.msra.mxu0 0.0
    %5112 = vmatpush.xpose.msra.mxu0 0.0
    %5113 = vmatpush.xpose.msra.mxu0 0.0
    %5114 = vmatpush.xpose.msra.mxu0 0.0
    %v5115 = vand.u32 %v5072, 4294901760
    %v5116 = vsub.f32 %v5072, %v5115
    %v5117 = vand.u32 %v5116, 4294901760
    %v5118 = vsub.f32 %v5116, %v5117
    %v5119 = vand.u32 %v5118, 4294901760
    %5120 = vmatpush.xpose.msra.mxu0 %v5119
    %v5121 = vand.u32 %v5070, 4294901760
    %5122 = vmatmul.f32.gmra.mxu0 %v5121
    %v5123 = vpop.f32.mrf.mxu0
    %v5124 = vadd.f32 %v5098, %v5123
    %5125 = vdwg.mxu0
    %5126 = vmatpush.xpose.msra.mxu0 0.0
    %5127 = vmatpush.xpose.msra.mxu0 0.0
    %5128 = vmatpush.xpose.msra.mxu0 0.0
    %5129 = vmatpush.xpose.msra.mxu0 0.0
    %5130 = vmatpush.xpose.msra.mxu0 0.0
    %5131 = vmatpush.xpose.msra.mxu0 0.0
    %5132 = vmatpush.xpose.msra.mxu0 0.0
    %5133 = vmatpush.xpose.msra.mxu0 0.0
    %5134 = vmatpush.xpose.msra.mxu0 0.0
    %5135 = vmatpush.xpose.msra.mxu0 0.0
    %5136 = vmatpush.xpose.msra.mxu0 0.0
    %5137 = vmatpush.xpose.msra.mxu0 0.0
    %5138 = vmatpush.xpose.msra.mxu0 0.0
    %5139 = vmatpush.xpose.msra.mxu0 0.0
    %5140 = vmatpush.xpose.msra.mxu0 0.0
    %v5141 = vand.u32 %v5072, 4294901760
    %v5142 = vsub.f32 %v5072, %v5141
    %5143 = vmatpush.xpose.msra.mxu0 %v5142
    %v5144 = vand.u32 %v5070, 4294901760
    %v5145 = vsub.f32 %v5070, %v5144
    %5146 = vmatmul.f32.gmra.mxu0 %v5145
    %v5147 = vpop.f32.mrf.mxu0
    %v5148 = vadd.f32 %v5124, %v5147
    %5149 = vdwg.mxu0
    %5150 = vmatpush.xpose.msra.mxu0 0.0
    %5151 = vmatpush.xpose.msra.mxu0 0.0
    %5152 = vmatpush.xpose.msra.mxu0 0.0
    %5153 = vmatpush.xpose.msra.mxu0 0.0
    %5154 = vmatpush.xpose.msra.mxu0 0.0
    %5155 = vmatpush.xpose.msra.mxu0 0.0
    %5156 = vmatpush.xpose.msra.mxu0 0.0
    %5157 = vmatpush.xpose.msra.mxu0 0.0
    %5158 = vmatpush.xpose.msra.mxu0 0.0
    %5159 = vmatpush.xpose.msra.mxu0 0.0
    %5160 = vmatpush.xpose.msra.mxu0 0.0
    %5161 = vmatpush.xpose.msra.mxu0 0.0
    %5162 = vmatpush.xpose.msra.mxu0 0.0
    %5163 = vmatpush.xpose.msra.mxu0 0.0
    %5164 = vmatpush.xpose.msra.mxu0 0.0
    %v5165 = vand.u32 %v5072, 4294901760
    %5166 = vmatpush.xpose.msra.mxu0 %v5165
    %v5167 = vand.u32 %v5070, 4294901760
    %v5168 = vsub.f32 %v5070, %v5167
    %v5169 = vand.u32 %v5168, 4294901760
    %5170 = vmatmul.f32.gmra.mxu0 %v5169
    %v5171 = vpop.f32.mrf.mxu0
    %v5172 = vadd.f32 %v5148, %v5171
    %5173 = vdwg.mxu0
    %5174 = vmatpush.xpose.msra.mxu0 0.0
    %5175 = vmatpush.xpose.msra.mxu0 0.0
    %5176 = vmatpush.xpose.msra.mxu0 0.0
    %5177 = vmatpush.xpose.msra.mxu0 0.0
    %5178 = vmatpush.xpose.msra.mxu0 0.0
    %5179 = vmatpush.xpose.msra.mxu0 0.0
    %5180 = vmatpush.xpose.msra.mxu0 0.0
    %5181 = vmatpush.xpose.msra.mxu0 0.0
    %5182 = vmatpush.xpose.msra.mxu0 0.0
    %5183 = vmatpush.xpose.msra.mxu0 0.0
    %5184 = vmatpush.xpose.msra.mxu0 0.0
    %5185 = vmatpush.xpose.msra.mxu0 0.0
    %5186 = vmatpush.xpose.msra.mxu0 0.0
    %5187 = vmatpush.xpose.msra.mxu0 0.0
    %5188 = vmatpush.xpose.msra.mxu0 0.0
    %v5189 = vand.u32 %v5072, 4294901760
    %v5190 = vsub.f32 %v5072, %v5189
    %v5191 = vand.u32 %v5190, 4294901760
    %5192 = vmatpush.xpose.msra.mxu0 %v5191
    %v5193 = vand.u32 %v5070, 4294901760
    %5194 = vmatmul.f32.gmra.mxu0 %v5193
    %v5195 = vpop.f32.mrf.mxu0
    %v5196 = vadd.f32 %v5172, %v5195
    %5197 = vdwg.mxu0
    %5198 = vmatpush.xpose.msra.mxu0 0.0
    %5199 = vmatpush.xpose.msra.mxu0 0.0
    %5200 = vmatpush.xpose.msra.mxu0 0.0
    %5201 = vmatpush.xpose.msra.mxu0 0.0
    %5202 = vmatpush.xpose.msra.mxu0 0.0
    %5203 = vmatpush.xpose.msra.mxu0 0.0
    %5204 = vmatpush.xpose.msra.mxu0 0.0
    %5205 = vmatpush.xpose.msra.mxu0 0.0
    %5206 = vmatpush.xpose.msra.mxu0 0.0
    %5207 = vmatpush.xpose.msra.mxu0 0.0
    %5208 = vmatpush.xpose.msra.mxu0 0.0
    %5209 = vmatpush.xpose.msra.mxu0 0.0
    %5210 = vmatpush.xpose.msra.mxu0 0.0
    %5211 = vmatpush.xpose.msra.mxu0 0.0
    %5212 = vmatpush.xpose.msra.mxu0 0.0
    %v5213 = vand.u32 %v5072, 4294901760
    %5214 = vmatpush.xpose.msra.mxu0 %v5213
    %v5215 = vand.u32 %v5070, 4294901760
    %5216 = vmatmul.f32.gmra.mxu0 %v5215
    %v5217 = vpop.f32.mrf.mxu0
    %v5218 = vadd.f32 %v5196, %v5217
    %5219 = vdwg.mxu0
    %v5220 = vmul.f32 %v5218, 0.35355338
    %v5221 = vsel %vm546, %v5220, -inf
    %5222 = vmax.xlane.f32.xlu0 %v5221
    %v5223 = vpop.xlane.xlu0 %5222
    %v5224 = vsub.f32 %v5220, %v5223
    %v5225 = vmul.f32 %v5224, 1.442695
    %v5226 = vpow.pop %v5225
    %v5227 = vsel %vm546, %v5226, 0.0
    %5228 = vadd.xlane.f32.xlu0 %v5227
    %v5229 = vpop.xlane.xlu0 %5228
    %v5230 = vrcp.pop %v5229
    %v5231 = vmul.f32 %v5229, %v5230
    %v5232 = vsub.f32 1.0, %v5231
    %v5233 = vmul.f32 %v5230, %v5232
    %v5234 = vadd.f32 %v5230, %v5233
    %vm5235 = vweird.f32 %v5229
    %vm5236 = vweird.f32 %v5230
    %vm5237 = vmor %vm5235, %vm5236
    %v5238 = vsel %vm5237, %v5230, %v5234
    %v5239 = vand.u32 2147483647, %v5229
    %vm5240 = vcmp.eq.f32.partialorder %v5239, 8.507059e+37
    %v5241 = vand.u32 %v5229, 2147483648
    %v5242 = vor.u32 1.1754944e-38, %v5241
    %v5243 = vsel %vm5240, %v5242, %v5238
    %v5244 = vmul.f32 %v5226, %v5243
    %5245 = vrot.lane.b32.xlu0 %v4725, 56
    %v5246 = vpop.permute.xlu0 %5245
    %v5249 = vsel %vm546, %v5244, 0
    %5251 = vmatpush.msra.mxu0 0.0
    %5252 = vmatpush.msra.mxu0 0.0
    %5253 = vmatpush.msra.mxu0 0.0
    %5254 = vmatpush.msra.mxu0 0.0
    %5255 = vmatpush.msra.mxu0 0.0
    %5256 = vmatpush.msra.mxu0 0.0
    %5257 = vmatpush.msra.mxu0 0.0
    %5258 = vmatpush.msra.mxu0 0.0
    %5259 = vmatpush.msra.mxu0 0.0
    %5260 = vmatpush.msra.mxu0 0.0
    %5261 = vmatpush.msra.mxu0 0.0
    %5262 = vmatpush.msra.mxu0 0.0
    %5263 = vmatpush.msra.mxu0 0.0
    %5264 = vmatpush.msra.mxu0 0.0
    %5265 = vmatpush.msra.mxu0 0.0
    %v5266 = vand.u32 %v5246, 4294901760
    %5267 = vmatpush.msra.mxu0 %v5266
    %v5268 = vand.u32 %v5249, 4294901760
    %v5269 = vsub.f32 %v5249, %v5268
    %v5270 = vand.u32 %v5269, 4294901760
    %v5271 = vsub.f32 %v5269, %v5270
    %v5272 = vand.u32 %v5271, 4294901760
    %5273 = vmatmul.f32.gmra.mxu0 %v5272
    %v5274 = vpop.f32.mrf.mxu0
    %v5275 = vadd.f32 0.0, %v5274
    %5276 = vdwg.mxu0
    %5277 = vmatpush.msra.mxu0 0.0
    %5278 = vmatpush.msra.mxu0 0.0
    %5279 = vmatpush.msra.mxu0 0.0
    %5280 = vmatpush.msra.mxu0 0.0
    %5281 = vmatpush.msra.mxu0 0.0
    %5282 = vmatpush.msra.mxu0 0.0
    %5283 = vmatpush.msra.mxu0 0.0
    %5284 = vmatpush.msra.mxu0 0.0
    %5285 = vmatpush.msra.mxu0 0.0
    %5286 = vmatpush.msra.mxu0 0.0
    %5287 = vmatpush.msra.mxu0 0.0
    %5288 = vmatpush.msra.mxu0 0.0
    %5289 = vmatpush.msra.mxu0 0.0
    %5290 = vmatpush.msra.mxu0 0.0
    %5291 = vmatpush.msra.mxu0 0.0
    %v5292 = vand.u32 %v5246, 4294901760
    %v5293 = vsub.f32 %v5246, %v5292
    %v5294 = vand.u32 %v5293, 4294901760
    %v5295 = vsub.f32 %v5293, %v5294
    %v5296 = vand.u32 %v5295, 4294901760
    %5297 = vmatpush.msra.mxu0 %v5296
    %v5298 = vand.u32 %v5249, 4294901760
    %5299 = vmatmul.f32.gmra.mxu0 %v5298
    %v5300 = vpop.f32.mrf.mxu0
    %v5301 = vadd.f32 %v5275, %v5300
    %5302 = vdwg.mxu0
    %5303 = vmatpush.msra.mxu0 0.0
    %5304 = vmatpush.msra.mxu0 0.0
    %5305 = vmatpush.msra.mxu0 0.0
    %5306 = vmatpush.msra.mxu0 0.0
    %5307 = vmatpush.msra.mxu0 0.0
    %5308 = vmatpush.msra.mxu0 0.0
    %5309 = vmatpush.msra.mxu0 0.0
    %5310 = vmatpush.msra.mxu0 0.0
    %5311 = vmatpush.msra.mxu0 0.0
    %5312 = vmatpush.msra.mxu0 0.0
    %5313 = vmatpush.msra.mxu0 0.0
    %5314 = vmatpush.msra.mxu0 0.0
    %5315 = vmatpush.msra.mxu0 0.0
    %5316 = vmatpush.msra.mxu0 0.0
    %5317 = vmatpush.msra.mxu0 0.0
    %v5318 = vand.u32 %v5246, 4294901760
    %v5319 = vsub.f32 %v5246, %v5318
    %5320 = vmatpush.msra.mxu0 %v5319
    %v5321 = vand.u32 %v5249, 4294901760
    %v5322 = vsub.f32 %v5249, %v5321
    %5323 = vmatmul.f32.gmra.mxu0 %v5322
    %v5324 = vpop.f32.mrf.mxu0
    %v5325 = vadd.f32 %v5301, %v5324
    %5326 = vdwg.mxu0
    %5327 = vmatpush.msra.mxu0 0.0
    %5328 = vmatpush.msra.mxu0 0.0
    %5329 = vmatpush.msra.mxu0 0.0
    %5330 = vmatpush.msra.mxu0 0.0
    %5331 = vmatpush.msra.mxu0 0.0
    %5332 = vmatpush.msra.mxu0 0.0
    %5333 = vmatpush.msra.mxu0 0.0
    %5334 = vmatpush.msra.mxu0 0.0
    %5335 = vmatpush.msra.mxu0 0.0
    %5336 = vmatpush.msra.mxu0 0.0
    %5337 = vmatpush.msra.mxu0 0.0
    %5338 = vmatpush.msra.mxu0 0.0
    %5339 = vmatpush.msra.mxu0 0.0
    %5340 = vmatpush.msra.mxu0 0.0
    %5341 = vmatpush.msra.mxu0 0.0
    %v5342 = vand.u32 %v5246, 4294901760
    %5343 = vmatpush.msra.mxu0 %v5342
    %v5344 = vand.u32 %v5249, 4294901760
    %v5345 = vsub.f32 %v5249, %v5344
    %v5346 = vand.u32 %v5345, 4294901760
    %5347 = vmatmul.f32.gmra.mxu0 %v5346
    %v5348 = vpop.f32.mrf.mxu0
    %v5349 = vadd.f32 %v5325, %v5348
    %5350 = vdwg.mxu0
    %5351 = vmatpush.msra.mxu0 0.0
    %5352 = vmatpush.msra.mxu0 0.0
    %5353 = vmatpush.msra.mxu0 0.0
    %5354 = vmatpush.msra.mxu0 0.0
    %5355 = vmatpush.msra.mxu0 0.0
    %5356 = vmatpush.msra.mxu0 0.0
    %5357 = vmatpush.msra.mxu0 0.0
    %5358 = vmatpush.msra.mxu0 0.0
    %5359 = vmatpush.msra.mxu0 0.0
    %5360 = vmatpush.msra.mxu0 0.0
    %5361 = vmatpush.msra.mxu0 0.0
    %5362 = vmatpush.msra.mxu0 0.0
    %5363 = vmatpush.msra.mxu0 0.0
    %5364 = vmatpush.msra.mxu0 0.0
    %5365 = vmatpush.msra.mxu0 0.0
    %v5366 = vand.u32 %v5246, 4294901760
    %v5367 = vsub.f32 %v5246, %v5366
    %v5368 = vand.u32 %v5367, 4294901760
    %5369 = vmatpush.msra.mxu0 %v5368
    %v5370 = vand.u32 %v5249, 4294901760
    %5371 = vmatmul.f32.gmra.mxu0 %v5370
    %v5372 = vpop.f32.mrf.mxu0
    %v5373 = vadd.f32 %v5349, %v5372
    %5374 = vdwg.mxu0
    %5375 = vmatpush.msra.mxu0 0.0
    %5376 = vmatpush.msra.mxu0 0.0
    %5377 = vmatpush.msra.mxu0 0.0
    %5378 = vmatpush.msra.mxu0 0.0
    %5379 = vmatpush.msra.mxu0 0.0
    %5380 = vmatpush.msra.mxu0 0.0
    %5381 = vmatpush.msra.mxu0 0.0
    %5382 = vmatpush.msra.mxu0 0.0
    %5383 = vmatpush.msra.mxu0 0.0
    %5384 = vmatpush.msra.mxu0 0.0
    %5385 = vmatpush.msra.mxu0 0.0
    %5386 = vmatpush.msra.mxu0 0.0
    %5387 = vmatpush.msra.mxu0 0.0
    %5388 = vmatpush.msra.mxu0 0.0
    %5389 = vmatpush.msra.mxu0 0.0
    %v5390 = vand.u32 %v5246, 4294901760
    %5391 = vmatpush.msra.mxu0 %v5390
    %v5392 = vand.u32 %v5249, 4294901760
    %5393 = vmatmul.f32.gmra.mxu0 %v5392
    %v5394 = vpop.f32.mrf.mxu0
    %v5395 = vadd.f32 %v5373, %v5394
    %5396 = vdwg.mxu0
    %v5398 = vsel %vm546, %v5395, 0
    %5400 = vmatpush.msra.mxu0 0.0
    %5401 = vmatpush.msra.mxu0 0.0
    %5402 = vmatpush.msra.mxu0 0.0
    %5403 = vmatpush.msra.mxu0 0.0
    %5404 = vmatpush.msra.mxu0 0.0
    %5405 = vmatpush.msra.mxu0 0.0
    %5406 = vmatpush.msra.mxu0 0.0
    %5407 = vmatpush.msra.mxu0 0.0
    %5408 = vmatpush.msra.mxu0 0.0
    %5409 = vmatpush.msra.mxu0 0.0
    %5410 = vmatpush.msra.mxu0 0.0
    %5411 = vmatpush.msra.mxu0 0.0
    %5412 = vmatpush.msra.mxu0 0.0
    %5413 = vmatpush.msra.mxu0 0.0
    %5414 = vmatpush.msra.mxu0 0.0
    %v5415 = vand.u32 %v4732, 4294901760
    %5416 = vmatpush.msra.mxu0 %v5415
    %v5417 = vand.u32 %v5398, 4294901760
    %v5418 = vsub.f32 %v5398, %v5417
    %v5419 = vand.u32 %v5418, 4294901760
    %v5420 = vsub.f32 %v5418, %v5419
    %v5421 = vand.u32 %v5420, 4294901760
    %5422 = vmatmul.f32.gmra.mxu0 %v5421
    %v5423 = vpop.f32.mrf.mxu0
    %v5424 = vadd.f32 0.0, %v5423
    %5425 = vdwg.mxu0
    %5426 = vmatpush.msra.mxu0 0.0
    %5427 = vmatpush.msra.mxu0 0.0
    %5428 = vmatpush.msra.mxu0 0.0
    %5429 = vmatpush.msra.mxu0 0.0
    %5430 = vmatpush.msra.mxu0 0.0
    %5431 = vmatpush.msra.mxu0 0.0
    %5432 = vmatpush.msra.mxu0 0.0
    %5433 = vmatpush.msra.mxu0 0.0
    %5434 = vmatpush.msra.mxu0 0.0
    %5435 = vmatpush.msra.mxu0 0.0
    %5436 = vmatpush.msra.mxu0 0.0
    %5437 = vmatpush.msra.mxu0 0.0
    %5438 = vmatpush.msra.mxu0 0.0
    %5439 = vmatpush.msra.mxu0 0.0
    %5440 = vmatpush.msra.mxu0 0.0
    %v5441 = vand.u32 %v4732, 4294901760
    %v5442 = vsub.f32 %v4732, %v5441
    %v5443 = vand.u32 %v5442, 4294901760
    %v5444 = vsub.f32 %v5442, %v5443
    %v5445 = vand.u32 %v5444, 4294901760
    %5446 = vmatpush.msra.mxu0 %v5445
    %v5447 = vand.u32 %v5398, 4294901760
    %5448 = vmatmul.f32.gmra.mxu0 %v5447
    %v5449 = vpop.f32.mrf.mxu0
    %v5450 = vadd.f32 %v5424, %v5449
    %5451 = vdwg.mxu0
    %5452 = vmatpush.msra.mxu0 0.0
    %5453 = vmatpush.msra.mxu0 0.0
    %5454 = vmatpush.msra.mxu0 0.0
    %5455 = vmatpush.msra.mxu0 0.0
    %5456 = vmatpush.msra.mxu0 0.0
    %5457 = vmatpush.msra.mxu0 0.0
    %5458 = vmatpush.msra.mxu0 0.0
    %5459 = vmatpush.msra.mxu0 0.0
    %5460 = vmatpush.msra.mxu0 0.0
    %5461 = vmatpush.msra.mxu0 0.0
    %5462 = vmatpush.msra.mxu0 0.0
    %5463 = vmatpush.msra.mxu0 0.0
    %5464 = vmatpush.msra.mxu0 0.0
    %5465 = vmatpush.msra.mxu0 0.0
    %5466 = vmatpush.msra.mxu0 0.0
    %v5467 = vand.u32 %v4732, 4294901760
    %v5468 = vsub.f32 %v4732, %v5467
    %5469 = vmatpush.msra.mxu0 %v5468
    %v5470 = vand.u32 %v5398, 4294901760
    %v5471 = vsub.f32 %v5398, %v5470
    %5472 = vmatmul.f32.gmra.mxu0 %v5471
    %v5473 = vpop.f32.mrf.mxu0
    %v5474 = vadd.f32 %v5450, %v5473
    %5475 = vdwg.mxu0
    %5476 = vmatpush.msra.mxu0 0.0
    %5477 = vmatpush.msra.mxu0 0.0
    %5478 = vmatpush.msra.mxu0 0.0
    %5479 = vmatpush.msra.mxu0 0.0
    %5480 = vmatpush.msra.mxu0 0.0
    %5481 = vmatpush.msra.mxu0 0.0
    %5482 = vmatpush.msra.mxu0 0.0
    %5483 = vmatpush.msra.mxu0 0.0
    %5484 = vmatpush.msra.mxu0 0.0
    %5485 = vmatpush.msra.mxu0 0.0
    %5486 = vmatpush.msra.mxu0 0.0
    %5487 = vmatpush.msra.mxu0 0.0
    %5488 = vmatpush.msra.mxu0 0.0
    %5489 = vmatpush.msra.mxu0 0.0
    %5490 = vmatpush.msra.mxu0 0.0
    %v5491 = vand.u32 %v4732, 4294901760
    %5492 = vmatpush.msra.mxu0 %v5491
    %v5493 = vand.u32 %v5398, 4294901760
    %v5494 = vsub.f32 %v5398, %v5493
    %v5495 = vand.u32 %v5494, 4294901760
    %5496 = vmatmul.f32.gmra.mxu0 %v5495
    %v5497 = vpop.f32.mrf.mxu0
    %v5498 = vadd.f32 %v5474, %v5497
    %5499 = vdwg.mxu0
    %5500 = vmatpush.msra.mxu0 0.0
    %5501 = vmatpush.msra.mxu0 0.0
    %5502 = vmatpush.msra.mxu0 0.0
    %5503 = vmatpush.msra.mxu0 0.0
    %5504 = vmatpush.msra.mxu0 0.0
    %5505 = vmatpush.msra.mxu0 0.0
    %5506 = vmatpush.msra.mxu0 0.0
    %5507 = vmatpush.msra.mxu0 0.0
    %5508 = vmatpush.msra.mxu0 0.0
    %5509 = vmatpush.msra.mxu0 0.0
    %5510 = vmatpush.msra.mxu0 0.0
    %5511 = vmatpush.msra.mxu0 0.0
    %5512 = vmatpush.msra.mxu0 0.0
    %5513 = vmatpush.msra.mxu0 0.0
    %5514 = vmatpush.msra.mxu0 0.0
    %v5515 = vand.u32 %v4732, 4294901760
    %v5516 = vsub.f32 %v4732, %v5515
    %v5517 = vand.u32 %v5516, 4294901760
    %5518 = vmatpush.msra.mxu0 %v5517
    %v5519 = vand.u32 %v5398, 4294901760
    %5520 = vmatmul.f32.gmra.mxu0 %v5519
    %v5521 = vpop.f32.mrf.mxu0
    %v5522 = vadd.f32 %v5498, %v5521
    %5523 = vdwg.mxu0
    %5524 = vmatpush.msra.mxu0 0.0
    %5525 = vmatpush.msra.mxu0 0.0
    %5526 = vmatpush.msra.mxu0 0.0
    %5527 = vmatpush.msra.mxu0 0.0
    %5528 = vmatpush.msra.mxu0 0.0
    %5529 = vmatpush.msra.mxu0 0.0
    %5530 = vmatpush.msra.mxu0 0.0
    %5531 = vmatpush.msra.mxu0 0.0
    %5532 = vmatpush.msra.mxu0 0.0
    %5533 = vmatpush.msra.mxu0 0.0
    %5534 = vmatpush.msra.mxu0 0.0
    %5535 = vmatpush.msra.mxu0 0.0
    %5536 = vmatpush.msra.mxu0 0.0
    %5537 = vmatpush.msra.mxu0 0.0
    %5538 = vmatpush.msra.mxu0 0.0
    %v5539 = vand.u32 %v4732, 4294901760
    %5540 = vmatpush.msra.mxu0 %v5539
    %v5541 = vand.u32 %v5398, 4294901760
    %5542 = vmatmul.f32.gmra.mxu0 %v5541
    %v5543 = vpop.f32.mrf.mxu0
    %v5544 = vadd.f32 %v5522, %v5543
    %5545 = vdwg.mxu0
    %v5547 = vsel %vm546, %v5064, 0
    %5549 = vmatpush.msra.mxu0 0.0
    %5550 = vmatpush.msra.mxu0 0.0
    %5551 = vmatpush.msra.mxu0 0.0
    %5552 = vmatpush.msra.mxu0 0.0
    %5553 = vmatpush.msra.mxu0 0.0
    %5554 = vmatpush.msra.mxu0 0.0
    %5555 = vmatpush.msra.mxu0 0.0
    %5556 = vmatpush.msra.mxu0 0.0
    %5557 = vmatpush.msra.mxu0 0.0
    %5558 = vmatpush.msra.mxu0 0.0
    %5559 = vmatpush.msra.mxu0 0.0
    %5560 = vmatpush.msra.mxu0 0.0
    %5561 = vmatpush.msra.mxu0 0.0
    %5562 = vmatpush.msra.mxu0 0.0
    %5563 = vmatpush.msra.mxu0 0.0
    %v5564 = vand.u32 %v4731, 4294901760
    %5565 = vmatpush.msra.mxu0 %v5564
    %v5566 = vand.u32 %v5547, 4294901760
    %v5567 = vsub.f32 %v5547, %v5566
    %v5568 = vand.u32 %v5567, 4294901760
    %v5569 = vsub.f32 %v5567, %v5568
    %v5570 = vand.u32 %v5569, 4294901760
    %5571 = vmatmul.f32.gmra.mxu0 %v5570
    %v5572 = vpop.f32.mrf.mxu0
    %v5573 = vadd.f32 %v5544, %v5572
    %5574 = vdwg.mxu0
    %5575 = vmatpush.msra.mxu0 0.0
    %5576 = vmatpush.msra.mxu0 0.0
    %5577 = vmatpush.msra.mxu0 0.0
    %5578 = vmatpush.msra.mxu0 0.0
    %5579 = vmatpush.msra.mxu0 0.0
    %5580 = vmatpush.msra.mxu0 0.0
    %5581 = vmatpush.msra.mxu0 0.0
    %5582 = vmatpush.msra.mxu0 0.0
    %5583 = vmatpush.msra.mxu0 0.0
    %5584 = vmatpush.msra.mxu0 0.0
    %5585 = vmatpush.msra.mxu0 0.0
    %5586 = vmatpush.msra.mxu0 0.0
    %5587 = vmatpush.msra.mxu0 0.0
    %5588 = vmatpush.msra.mxu0 0.0
    %5589 = vmatpush.msra.mxu0 0.0
    %v5590 = vand.u32 %v4731, 4294901760
    %v5591 = vsub.f32 %v4731, %v5590
    %v5592 = vand.u32 %v5591, 4294901760
    %v5593 = vsub.f32 %v5591, %v5592
    %v5594 = vand.u32 %v5593, 4294901760
    %5595 = vmatpush.msra.mxu0 %v5594
    %v5596 = vand.u32 %v5547, 4294901760
    %5597 = vmatmul.f32.gmra.mxu0 %v5596
    %v5598 = vpop.f32.mrf.mxu0
    %v5599 = vadd.f32 %v5573, %v5598
    %5600 = vdwg.mxu0
    %5601 = vmatpush.msra.mxu0 0.0
    %5602 = vmatpush.msra.mxu0 0.0
    %5603 = vmatpush.msra.mxu0 0.0
    %5604 = vmatpush.msra.mxu0 0.0
    %5605 = vmatpush.msra.mxu0 0.0
    %5606 = vmatpush.msra.mxu0 0.0
    %5607 = vmatpush.msra.mxu0 0.0
    %5608 = vmatpush.msra.mxu0 0.0
    %5609 = vmatpush.msra.mxu0 0.0
    %5610 = vmatpush.msra.mxu0 0.0
    %5611 = vmatpush.msra.mxu0 0.0
    %5612 = vmatpush.msra.mxu0 0.0
    %5613 = vmatpush.msra.mxu0 0.0
    %5614 = vmatpush.msra.mxu0 0.0
    %5615 = vmatpush.msra.mxu0 0.0
    %v5616 = vand.u32 %v4731, 4294901760
    %v5617 = vsub.f32 %v4731, %v5616
    %5618 = vmatpush.msra.mxu0 %v5617
    %v5619 = vand.u32 %v5547, 4294901760
    %v5620 = vsub.f32 %v5547, %v5619
    %5621 = vmatmul.f32.gmra.mxu0 %v5620
    %v5622 = vpop.f32.mrf.mxu0
    %v5623 = vadd.f32 %v5599, %v5622
    %5624 = vdwg.mxu0
    %5625 = vmatpush.msra.mxu0 0.0
    %5626 = vmatpush.msra.mxu0 0.0
    %5627 = vmatpush.msra.mxu0 0.0
    %5628 = vmatpush.msra.mxu0 0.0
    %5629 = vmatpush.msra.mxu0 0.0
    %5630 = vmatpush.msra.mxu0 0.0
    %5631 = vmatpush.msra.mxu0 0.0
    %5632 = vmatpush.msra.mxu0 0.0
    %5633 = vmatpush.msra.mxu0 0.0
    %5634 = vmatpush.msra.mxu0 0.0
    %5635 = vmatpush.msra.mxu0 0.0
    %5636 = vmatpush.msra.mxu0 0.0
    %5637 = vmatpush.msra.mxu0 0.0
    %5638 = vmatpush.msra.mxu0 0.0
    %5639 = vmatpush.msra.mxu0 0.0
    %v5640 = vand.u32 %v4731, 4294901760
    %5641 = vmatpush.msra.mxu0 %v5640
    %v5642 = vand.u32 %v5547, 4294901760
    %v5643 = vsub.f32 %v5547, %v5642
    %v5644 = vand.u32 %v5643, 4294901760
    %5645 = vmatmul.f32.gmra.mxu0 %v5644
    %v5646 = vpop.f32.mrf.mxu0
    %v5647 = vadd.f32 %v5623, %v5646
    %5648 = vdwg.mxu0
    %5649 = vmatpush.msra.mxu0 0.0
    %5650 = vmatpush.msra.mxu0 0.0
    %5651 = vmatpush.msra.mxu0 0.0
    %5652 = vmatpush.msra.mxu0 0.0
    %5653 = vmatpush.msra.mxu0 0.0
    %5654 = vmatpush.msra.mxu0 0.0
    %5655 = vmatpush.msra.mxu0 0.0
    %5656 = vmatpush.msra.mxu0 0.0
    %5657 = vmatpush.msra.mxu0 0.0
    %5658 = vmatpush.msra.mxu0 0.0
    %5659 = vmatpush.msra.mxu0 0.0
    %5660 = vmatpush.msra.mxu0 0.0
    %5661 = vmatpush.msra.mxu0 0.0
    %5662 = vmatpush.msra.mxu0 0.0
    %5663 = vmatpush.msra.mxu0 0.0
    %v5664 = vand.u32 %v4731, 4294901760
    %v5665 = vsub.f32 %v4731, %v5664
    %v5666 = vand.u32 %v5665, 4294901760
    %5667 = vmatpush.msra.mxu0 %v5666
    %v5668 = vand.u32 %v5547, 4294901760
    %5669 = vmatmul.f32.gmra.mxu0 %v5668
    %v5670 = vpop.f32.mrf.mxu0
    %v5671 = vadd.f32 %v5647, %v5670
    %5672 = vdwg.mxu0
    %5673 = vmatpush.msra.mxu0 0.0
    %5674 = vmatpush.msra.mxu0 0.0
    %5675 = vmatpush.msra.mxu0 0.0
    %5676 = vmatpush.msra.mxu0 0.0
    %5677 = vmatpush.msra.mxu0 0.0
    %5678 = vmatpush.msra.mxu0 0.0
    %5679 = vmatpush.msra.mxu0 0.0
    %5680 = vmatpush.msra.mxu0 0.0
    %5681 = vmatpush.msra.mxu0 0.0
    %5682 = vmatpush.msra.mxu0 0.0
    %5683 = vmatpush.msra.mxu0 0.0
    %5684 = vmatpush.msra.mxu0 0.0
    %5685 = vmatpush.msra.mxu0 0.0
    %5686 = vmatpush.msra.mxu0 0.0
    %5687 = vmatpush.msra.mxu0 0.0
    %v5688 = vand.u32 %v4731, 4294901760
    %5689 = vmatpush.msra.mxu0 %v5688
    %v5690 = vand.u32 %v5547, 4294901760
    %5691 = vmatmul.f32.gmra.mxu0 %v5690
    %v5692 = vpop.f32.mrf.mxu0
    %v5693 = vadd.f32 %v5671, %v5692
    %5694 = vdwg.mxu0
    %5695 = vrot.lane.b32.xlu0 %v4725, 112
    %v5696 = vpop.permute.xlu0 %5695
    %5697 = vrot.lane.b32.xlu0 %v4725, 80
    %v5698 = vpop.permute.xlu0 %5697
    %v5699 = vsel %vm546, %v5696, 0
    %v5701 = vsel %vm546, %v5698, 0
    %5703 = vmatpush.xpose.msra.mxu0 0.0
    %5704 = vmatpush.xpose.msra.mxu0 0.0
    %5705 = vmatpush.xpose.msra.mxu0 0.0
    %5706 = vmatpush.xpose.msra.mxu0 0.0
    %5707 = vmatpush.xpose.msra.mxu0 0.0
    %5708 = vmatpush.xpose.msra.mxu0 0.0
    %5709 = vmatpush.xpose.msra.mxu0 0.0
    %5710 = vmatpush.xpose.msra.mxu0 0.0
    %5711 = vmatpush.xpose.msra.mxu0 0.0
    %5712 = vmatpush.xpose.msra.mxu0 0.0
    %5713 = vmatpush.xpose.msra.mxu0 0.0
    %5714 = vmatpush.xpose.msra.mxu0 0.0
    %5715 = vmatpush.xpose.msra.mxu0 0.0
    %5716 = vmatpush.xpose.msra.mxu0 0.0
    %5717 = vmatpush.xpose.msra.mxu0 0.0
    %v5718 = vand.u32 %v5701, 4294901760
    %5719 = vmatpush.xpose.msra.mxu0 %v5718
    %v5720 = vand.u32 %v5699, 4294901760
    %v5721 = vsub.f32 %v5699, %v5720
    %v5722 = vand.u32 %v5721, 4294901760
    %v5723 = vsub.f32 %v5721, %v5722
    %v5724 = vand.u32 %v5723, 4294901760
    %5725 = vmatmul.f32.gmra.mxu0 %v5724
    %v5726 = vpop.f32.mrf.mxu0
    %v5727 = vadd.f32 0.0, %v5726
    %5728 = vdwg.mxu0
    %5729 = vmatpush.xpose.msra.mxu0 0.0
    %5730 = vmatpush.xpose.msra.mxu0 0.0
    %5731 = vmatpush.xpose.msra.mxu0 0.0
    %5732 = vmatpush.xpose.msra.mxu0 0.0
    %5733 = vmatpush.xpose.msra.mxu0 0.0
    %5734 = vmatpush.xpose.msra.mxu0 0.0
    %5735 = vmatpush.xpose.msra.mxu0 0.0
    %5736 = vmatpush.xpose.msra.mxu0 0.0
    %5737 = vmatpush.xpose.msra.mxu0 0.0
    %5738 = vmatpush.xpose.msra.mxu0 0.0
    %5739 = vmatpush.xpose.msra.mxu0 0.0
    %5740 = vmatpush.xpose.msra.mxu0 0.0
    %5741 = vmatpush.xpose.msra.mxu0 0.0
    %5742 = vmatpush.xpose.msra.mxu0 0.0
    %5743 = vmatpush.xpose.msra.mxu0 0.0
    %v5744 = vand.u32 %v5701, 4294901760
    %v5745 = vsub.f32 %v5701, %v5744
    %v5746 = vand.u32 %v5745, 4294901760
    %v5747 = vsub.f32 %v5745, %v5746
    %v5748 = vand.u32 %v5747, 4294901760
    %5749 = vmatpush.xpose.msra.mxu0 %v5748
    %v5750 = vand.u32 %v5699, 4294901760
    %5751 = vmatmul.f32.gmra.mxu0 %v5750
    %v5752 = vpop.f32.mrf.mxu0
    %v5753 = vadd.f32 %v5727, %v5752
    %5754 = vdwg.mxu0
    %5755 = vmatpush.xpose.msra.mxu0 0.0
    %5756 = vmatpush.xpose.msra.mxu0 0.0
    %5757 = vmatpush.xpose.msra.mxu0 0.0
    %5758 = vmatpush.xpose.msra.mxu0 0.0
    %5759 = vmatpush.xpose.msra.mxu0 0.0
    %5760 = vmatpush.xpose.msra.mxu0 0.0
    %5761 = vmatpush.xpose.msra.mxu0 0.0
    %5762 = vmatpush.xpose.msra.mxu0 0.0
    %5763 = vmatpush.xpose.msra.mxu0 0.0
    %5764 = vmatpush.xpose.msra.mxu0 0.0
    %5765 = vmatpush.xpose.msra.mxu0 0.0
    %5766 = vmatpush.xpose.msra.mxu0 0.0
    %5767 = vmatpush.xpose.msra.mxu0 0.0
    %5768 = vmatpush.xpose.msra.mxu0 0.0
    %5769 = vmatpush.xpose.msra.mxu0 0.0
    %v5770 = vand.u32 %v5701, 4294901760
    %v5771 = vsub.f32 %v5701, %v5770
    %5772 = vmatpush.xpose.msra.mxu0 %v5771
    %v5773 = vand.u32 %v5699, 4294901760
    %v5774 = vsub.f32 %v5699, %v5773
    %5775 = vmatmul.f32.gmra.mxu0 %v5774
    %v5776 = vpop.f32.mrf.mxu0
    %v5777 = vadd.f32 %v5753, %v5776
    %5778 = vdwg.mxu0
    %5779 = vmatpush.xpose.msra.mxu0 0.0
    %5780 = vmatpush.xpose.msra.mxu0 0.0
    %5781 = vmatpush.xpose.msra.mxu0 0.0
    %5782 = vmatpush.xpose.msra.mxu0 0.0
    %5783 = vmatpush.xpose.msra.mxu0 0.0
    %5784 = vmatpush.xpose.msra.mxu0 0.0
    %5785 = vmatpush.xpose.msra.mxu0 0.0
    %5786 = vmatpush.xpose.msra.mxu0 0.0
    %5787 = vmatpush.xpose.msra.mxu0 0.0
    %5788 = vmatpush.xpose.msra.mxu0 0.0
    %5789 = vmatpush.xpose.msra.mxu0 0.0
    %5790 = vmatpush.xpose.msra.mxu0 0.0
    %5791 = vmatpush.xpose.msra.mxu0 0.0
    %5792 = vmatpush.xpose.msra.mxu0 0.0
    %5793 = vmatpush.xpose.msra.mxu0 0.0
    %v5794 = vand.u32 %v5701, 4294901760
    %5795 = vmatpush.xpose.msra.mxu0 %v5794
    %v5796 = vand.u32 %v5699, 4294901760
    %v5797 = vsub.f32 %v5699, %v5796
    %v5798 = vand.u32 %v5797, 4294901760
    %5799 = vmatmul.f32.gmra.mxu0 %v5798
    %v5800 = vpop.f32.mrf.mxu0
    %v5801 = vadd.f32 %v5777, %v5800
    %5802 = vdwg.mxu0
    %5803 = vmatpush.xpose.msra.mxu0 0.0
    %5804 = vmatpush.xpose.msra.mxu0 0.0
    %5805 = vmatpush.xpose.msra.mxu0 0.0
    %5806 = vmatpush.xpose.msra.mxu0 0.0
    %5807 = vmatpush.xpose.msra.mxu0 0.0
    %5808 = vmatpush.xpose.msra.mxu0 0.0
    %5809 = vmatpush.xpose.msra.mxu0 0.0
    %5810 = vmatpush.xpose.msra.mxu0 0.0
    %5811 = vmatpush.xpose.msra.mxu0 0.0
    %5812 = vmatpush.xpose.msra.mxu0 0.0
    %5813 = vmatpush.xpose.msra.mxu0 0.0
    %5814 = vmatpush.xpose.msra.mxu0 0.0
    %5815 = vmatpush.xpose.msra.mxu0 0.0
    %5816 = vmatpush.xpose.msra.mxu0 0.0
    %5817 = vmatpush.xpose.msra.mxu0 0.0
    %v5818 = vand.u32 %v5701, 4294901760
    %v5819 = vsub.f32 %v5701, %v5818
    %v5820 = vand.u32 %v5819, 4294901760
    %5821 = vmatpush.xpose.msra.mxu0 %v5820
    %v5822 = vand.u32 %v5699, 4294901760
    %5823 = vmatmul.f32.gmra.mxu0 %v5822
    %v5824 = vpop.f32.mrf.mxu0
    %v5825 = vadd.f32 %v5801, %v5824
    %5826 = vdwg.mxu0
    %5827 = vmatpush.xpose.msra.mxu0 0.0
    %5828 = vmatpush.xpose.msra.mxu0 0.0
    %5829 = vmatpush.xpose.msra.mxu0 0.0
    %5830 = vmatpush.xpose.msra.mxu0 0.0
    %5831 = vmatpush.xpose.msra.mxu0 0.0
    %5832 = vmatpush.xpose.msra.mxu0 0.0
    %5833 = vmatpush.xpose.msra.mxu0 0.0
    %5834 = vmatpush.xpose.msra.mxu0 0.0
    %5835 = vmatpush.xpose.msra.mxu0 0.0
    %5836 = vmatpush.xpose.msra.mxu0 0.0
    %5837 = vmatpush.xpose.msra.mxu0 0.0
    %5838 = vmatpush.xpose.msra.mxu0 0.0
    %5839 = vmatpush.xpose.msra.mxu0 0.0
    %5840 = vmatpush.xpose.msra.mxu0 0.0
    %5841 = vmatpush.xpose.msra.mxu0 0.0
    %v5842 = vand.u32 %v5701, 4294901760
    %5843 = vmatpush.xpose.msra.mxu0 %v5842
    %v5844 = vand.u32 %v5699, 4294901760
    %5845 = vmatmul.f32.gmra.mxu0 %v5844
    %v5846 = vpop.f32.mrf.mxu0
    %v5847 = vadd.f32 %v5825, %v5846
    %5848 = vdwg.mxu0
    %v5849 = vmul.f32 %v5847, 0.35355338
    %v5850 = vsel %vm546, %v5849, -inf
    %5851 = vmax.xlane.f32.xlu0 %v5850
    %v5852 = vpop.xlane.xlu0 %5851
    %v5853 = vsub.f32 %v5849, %v5852
    %v5854 = vmul.f32 %v5853, 1.442695
    %v5855 = vpow.pop %v5854
    %v5856 = vsel %vm546, %v5855, 0.0
    %5857 = vadd.xlane.f32.xlu0 %v5856
    %v5858 = vpop.xlane.xlu0 %5857
    %v5859 = vrcp.pop %v5858
    %v5860 = vmul.f32 %v5858, %v5859
    %v5861 = vsub.f32 1.0, %v5860
    %v5862 = vmul.f32 %v5859, %v5861
    %v5863 = vadd.f32 %v5859, %v5862
    %vm5864 = vweird.f32 %v5858
    %vm5865 = vweird.f32 %v5859
    %vm5866 = vmor %vm5864, %vm5865
    %v5867 = vsel %vm5866, %v5859, %v5863
    %v5868 = vand.u32 2147483647, %v5858
    %vm5869 = vcmp.eq.f32.partialorder %v5868, 8.507059e+37
    %v5870 = vand.u32 %v5858, 2147483648
    %v5871 = vor.u32 1.1754944e-38, %v5870
    %v5872 = vsel %vm5869, %v5871, %v5867
    %v5873 = vmul.f32 %v5855, %v5872
    %5874 = vrot.lane.b32.xlu0 %v4725, 48
    %v5875 = vpop.permute.xlu0 %5874
    %v5878 = vsel %vm546, %v5873, 0
    %5880 = vmatpush.msra.mxu0 0.0
    %5881 = vmatpush.msra.mxu0 0.0
    %5882 = vmatpush.msra.mxu0 0.0
    %5883 = vmatpush.msra.mxu0 0.0
    %5884 = vmatpush.msra.mxu0 0.0
    %5885 = vmatpush.msra.mxu0 0.0
    %5886 = vmatpush.msra.mxu0 0.0
    %5887 = vmatpush.msra.mxu0 0.0
    %5888 = vmatpush.msra.mxu0 0.0
    %5889 = vmatpush.msra.mxu0 0.0
    %5890 = vmatpush.msra.mxu0 0.0
    %5891 = vmatpush.msra.mxu0 0.0
    %5892 = vmatpush.msra.mxu0 0.0
    %5893 = vmatpush.msra.mxu0 0.0
    %5894 = vmatpush.msra.mxu0 0.0
    %v5895 = vand.u32 %v5875, 4294901760
    %5896 = vmatpush.msra.mxu0 %v5895
    %v5897 = vand.u32 %v5878, 4294901760
    %v5898 = vsub.f32 %v5878, %v5897
    %v5899 = vand.u32 %v5898, 4294901760
    %v5900 = vsub.f32 %v5898, %v5899
    %v5901 = vand.u32 %v5900, 4294901760
    %5902 = vmatmul.f32.gmra.mxu0 %v5901
    %v5903 = vpop.f32.mrf.mxu0
    %v5904 = vadd.f32 0.0, %v5903
    %5905 = vdwg.mxu0
    %5906 = vmatpush.msra.mxu0 0.0
    %5907 = vmatpush.msra.mxu0 0.0
    %5908 = vmatpush.msra.mxu0 0.0
    %5909 = vmatpush.msra.mxu0 0.0
    %5910 = vmatpush.msra.mxu0 0.0
    %5911 = vmatpush.msra.mxu0 0.0
    %5912 = vmatpush.msra.mxu0 0.0
    %5913 = vmatpush.msra.mxu0 0.0
    %5914 = vmatpush.msra.mxu0 0.0
    %5915 = vmatpush.msra.mxu0 0.0
    %5916 = vmatpush.msra.mxu0 0.0
    %5917 = vmatpush.msra.mxu0 0.0
    %5918 = vmatpush.msra.mxu0 0.0
    %5919 = vmatpush.msra.mxu0 0.0
    %5920 = vmatpush.msra.mxu0 0.0
    %v5921 = vand.u32 %v5875, 4294901760
    %v5922 = vsub.f32 %v5875, %v5921
    %v5923 = vand.u32 %v5922, 4294901760
    %v5924 = vsub.f32 %v5922, %v5923
    %v5925 = vand.u32 %v5924, 4294901760
    %5926 = vmatpush.msra.mxu0 %v5925
    %v5927 = vand.u32 %v5878, 4294901760
    %5928 = vmatmul.f32.gmra.mxu0 %v5927
    %v5929 = vpop.f32.mrf.mxu0
    %v5930 = vadd.f32 %v5904, %v5929
    %5931 = vdwg.mxu0
    %5932 = vmatpush.msra.mxu0 0.0
    %5933 = vmatpush.msra.mxu0 0.0
    %5934 = vmatpush.msra.mxu0 0.0
    %5935 = vmatpush.msra.mxu0 0.0
    %5936 = vmatpush.msra.mxu0 0.0
    %5937 = vmatpush.msra.mxu0 0.0
    %5938 = vmatpush.msra.mxu0 0.0
    %5939 = vmatpush.msra.mxu0 0.0
    %5940 = vmatpush.msra.mxu0 0.0
    %5941 = vmatpush.msra.mxu0 0.0
    %5942 = vmatpush.msra.mxu0 0.0
    %5943 = vmatpush.msra.mxu0 0.0
    %5944 = vmatpush.msra.mxu0 0.0
    %5945 = vmatpush.msra.mxu0 0.0
    %5946 = vmatpush.msra.mxu0 0.0
    %v5947 = vand.u32 %v5875, 4294901760
    %v5948 = vsub.f32 %v5875, %v5947
    %5949 = vmatpush.msra.mxu0 %v5948
    %v5950 = vand.u32 %v5878, 4294901760
    %v5951 = vsub.f32 %v5878, %v5950
    %5952 = vmatmul.f32.gmra.mxu0 %v5951
    %v5953 = vpop.f32.mrf.mxu0
    %v5954 = vadd.f32 %v5930, %v5953
    %5955 = vdwg.mxu0
    %5956 = vmatpush.msra.mxu0 0.0
    %5957 = vmatpush.msra.mxu0 0.0
    %5958 = vmatpush.msra.mxu0 0.0
    %5959 = vmatpush.msra.mxu0 0.0
    %5960 = vmatpush.msra.mxu0 0.0
    %5961 = vmatpush.msra.mxu0 0.0
    %5962 = vmatpush.msra.mxu0 0.0
    %5963 = vmatpush.msra.mxu0 0.0
    %5964 = vmatpush.msra.mxu0 0.0
    %5965 = vmatpush.msra.mxu0 0.0
    %5966 = vmatpush.msra.mxu0 0.0
    %5967 = vmatpush.msra.mxu0 0.0
    %5968 = vmatpush.msra.mxu0 0.0
    %5969 = vmatpush.msra.mxu0 0.0
    %5970 = vmatpush.msra.mxu0 0.0
    %v5971 = vand.u32 %v5875, 4294901760
    %5972 = vmatpush.msra.mxu0 %v5971
    %v5973 = vand.u32 %v5878, 4294901760
    %v5974 = vsub.f32 %v5878, %v5973
    %v5975 = vand.u32 %v5974, 4294901760
    %5976 = vmatmul.f32.gmra.mxu0 %v5975
    %v5977 = vpop.f32.mrf.mxu0
    %v5978 = vadd.f32 %v5954, %v5977
    %5979 = vdwg.mxu0
    %5980 = vmatpush.msra.mxu0 0.0
    %5981 = vmatpush.msra.mxu0 0.0
    %5982 = vmatpush.msra.mxu0 0.0
    %5983 = vmatpush.msra.mxu0 0.0
    %5984 = vmatpush.msra.mxu0 0.0
    %5985 = vmatpush.msra.mxu0 0.0
    %5986 = vmatpush.msra.mxu0 0.0
    %5987 = vmatpush.msra.mxu0 0.0
    %5988 = vmatpush.msra.mxu0 0.0
    %5989 = vmatpush.msra.mxu0 0.0
    %5990 = vmatpush.msra.mxu0 0.0
    %5991 = vmatpush.msra.mxu0 0.0
    %5992 = vmatpush.msra.mxu0 0.0
    %5993 = vmatpush.msra.mxu0 0.0
    %5994 = vmatpush.msra.mxu0 0.0
    %v5995 = vand.u32 %v5875, 4294901760
    %v5996 = vsub.f32 %v5875, %v5995
    %v5997 = vand.u32 %v5996, 4294901760
    %5998 = vmatpush.msra.mxu0 %v5997
    %v5999 = vand.u32 %v5878, 4294901760
    %6000 = vmatmul.f32.gmra.mxu0 %v5999
    %v6001 = vpop.f32.mrf.mxu0
    %v6002 = vadd.f32 %v5978, %v6001
    %6003 = vdwg.mxu0
    %6004 = vmatpush.msra.mxu0 0.0
    %6005 = vmatpush.msra.mxu0 0.0
    %6006 = vmatpush.msra.mxu0 0.0
    %6007 = vmatpush.msra.mxu0 0.0
    %6008 = vmatpush.msra.mxu0 0.0
    %6009 = vmatpush.msra.mxu0 0.0
    %6010 = vmatpush.msra.mxu0 0.0
    %6011 = vmatpush.msra.mxu0 0.0
    %6012 = vmatpush.msra.mxu0 0.0
    %6013 = vmatpush.msra.mxu0 0.0
    %6014 = vmatpush.msra.mxu0 0.0
    %6015 = vmatpush.msra.mxu0 0.0
    %6016 = vmatpush.msra.mxu0 0.0
    %6017 = vmatpush.msra.mxu0 0.0
    %6018 = vmatpush.msra.mxu0 0.0
    %v6019 = vand.u32 %v5875, 4294901760
    %6020 = vmatpush.msra.mxu0 %v6019
    %v6021 = vand.u32 %v5878, 4294901760
    %6022 = vmatmul.f32.gmra.mxu0 %v6021
    %v6023 = vpop.f32.mrf.mxu0
    %v6024 = vadd.f32 %v6002, %v6023
    %6025 = vdwg.mxu0
    %v6027 = vsel %vm546, %v6024, 0
    %6029 = vmatpush.msra.mxu0 0.0
    %6030 = vmatpush.msra.mxu0 0.0
    %6031 = vmatpush.msra.mxu0 0.0
    %6032 = vmatpush.msra.mxu0 0.0
    %6033 = vmatpush.msra.mxu0 0.0
    %6034 = vmatpush.msra.mxu0 0.0
    %6035 = vmatpush.msra.mxu0 0.0
    %6036 = vmatpush.msra.mxu0 0.0
    %6037 = vmatpush.msra.mxu0 0.0
    %6038 = vmatpush.msra.mxu0 0.0
    %6039 = vmatpush.msra.mxu0 0.0
    %6040 = vmatpush.msra.mxu0 0.0
    %6041 = vmatpush.msra.mxu0 0.0
    %6042 = vmatpush.msra.mxu0 0.0
    %6043 = vmatpush.msra.mxu0 0.0
    %v6044 = vand.u32 %v4733, 4294901760
    %6045 = vmatpush.msra.mxu0 %v6044
    %v6046 = vand.u32 %v6027, 4294901760
    %v6047 = vsub.f32 %v6027, %v6046
    %v6048 = vand.u32 %v6047, 4294901760
    %v6049 = vsub.f32 %v6047, %v6048
    %v6050 = vand.u32 %v6049, 4294901760
    %6051 = vmatmul.f32.gmra.mxu0 %v6050
    %v6052 = vpop.f32.mrf.mxu0
    %v6053 = vadd.f32 0.0, %v6052
    %6054 = vdwg.mxu0
    %6055 = vmatpush.msra.mxu0 0.0
    %6056 = vmatpush.msra.mxu0 0.0
    %6057 = vmatpush.msra.mxu0 0.0
    %6058 = vmatpush.msra.mxu0 0.0
    %6059 = vmatpush.msra.mxu0 0.0
    %6060 = vmatpush.msra.mxu0 0.0
    %6061 = vmatpush.msra.mxu0 0.0
    %6062 = vmatpush.msra.mxu0 0.0
    %6063 = vmatpush.msra.mxu0 0.0
    %6064 = vmatpush.msra.mxu0 0.0
    %6065 = vmatpush.msra.mxu0 0.0
    %6066 = vmatpush.msra.mxu0 0.0
    %6067 = vmatpush.msra.mxu0 0.0
    %6068 = vmatpush.msra.mxu0 0.0
    %6069 = vmatpush.msra.mxu0 0.0
    %v6070 = vand.u32 %v4733, 4294901760
    %v6071 = vsub.f32 %v4733, %v6070
    %v6072 = vand.u32 %v6071, 4294901760
    %v6073 = vsub.f32 %v6071, %v6072
    %v6074 = vand.u32 %v6073, 4294901760
    %6075 = vmatpush.msra.mxu0 %v6074
    %v6076 = vand.u32 %v6027, 4294901760
    %6077 = vmatmul.f32.gmra.mxu0 %v6076
    %v6078 = vpop.f32.mrf.mxu0
    %v6079 = vadd.f32 %v6053, %v6078
    %6080 = vdwg.mxu0
    %6081 = vmatpush.msra.mxu0 0.0
    %6082 = vmatpush.msra.mxu0 0.0
    %6083 = vmatpush.msra.mxu0 0.0
    %6084 = vmatpush.msra.mxu0 0.0
    %6085 = vmatpush.msra.mxu0 0.0
    %6086 = vmatpush.msra.mxu0 0.0
    %6087 = vmatpush.msra.mxu0 0.0
    %6088 = vmatpush.msra.mxu0 0.0
    %6089 = vmatpush.msra.mxu0 0.0
    %6090 = vmatpush.msra.mxu0 0.0
    %6091 = vmatpush.msra.mxu0 0.0
    %6092 = vmatpush.msra.mxu0 0.0
    %6093 = vmatpush.msra.mxu0 0.0
    %6094 = vmatpush.msra.mxu0 0.0
    %6095 = vmatpush.msra.mxu0 0.0
    %v6096 = vand.u32 %v4733, 4294901760
    %v6097 = vsub.f32 %v4733, %v6096
    %6098 = vmatpush.msra.mxu0 %v6097
    %v6099 = vand.u32 %v6027, 4294901760
    %v6100 = vsub.f32 %v6027, %v6099
    %6101 = vmatmul.f32.gmra.mxu0 %v6100
    %v6102 = vpop.f32.mrf.mxu0
    %v6103 = vadd.f32 %v6079, %v6102
    %6104 = vdwg.mxu0
    %6105 = vmatpush.msra.mxu0 0.0
    %6106 = vmatpush.msra.mxu0 0.0
    %6107 = vmatpush.msra.mxu0 0.0
    %6108 = vmatpush.msra.mxu0 0.0
    %6109 = vmatpush.msra.mxu0 0.0
    %6110 = vmatpush.msra.mxu0 0.0
    %6111 = vmatpush.msra.mxu0 0.0
    %6112 = vmatpush.msra.mxu0 0.0
    %6113 = vmatpush.msra.mxu0 0.0
    %6114 = vmatpush.msra.mxu0 0.0
    %6115 = vmatpush.msra.mxu0 0.0
    %6116 = vmatpush.msra.mxu0 0.0
    %6117 = vmatpush.msra.mxu0 0.0
    %6118 = vmatpush.msra.mxu0 0.0
    %6119 = vmatpush.msra.mxu0 0.0
    %v6120 = vand.u32 %v4733, 4294901760
    %6121 = vmatpush.msra.mxu0 %v6120
    %v6122 = vand.u32 %v6027, 4294901760
    %v6123 = vsub.f32 %v6027, %v6122
    %v6124 = vand.u32 %v6123, 4294901760
    %6125 = vmatmul.f32.gmra.mxu0 %v6124
    %v6126 = vpop.f32.mrf.mxu0
    %v6127 = vadd.f32 %v6103, %v6126
    %6128 = vdwg.mxu0
    %6129 = vmatpush.msra.mxu0 0.0
    %6130 = vmatpush.msra.mxu0 0.0
    %6131 = vmatpush.msra.mxu0 0.0
    %6132 = vmatpush.msra.mxu0 0.0
    %6133 = vmatpush.msra.mxu0 0.0
    %6134 = vmatpush.msra.mxu0 0.0
    %6135 = vmatpush.msra.mxu0 0.0
    %6136 = vmatpush.msra.mxu0 0.0
    %6137 = vmatpush.msra.mxu0 0.0
    %6138 = vmatpush.msra.mxu0 0.0
    %6139 = vmatpush.msra.mxu0 0.0
    %6140 = vmatpush.msra.mxu0 0.0
    %6141 = vmatpush.msra.mxu0 0.0
    %6142 = vmatpush.msra.mxu0 0.0
    %6143 = vmatpush.msra.mxu0 0.0
    %v6144 = vand.u32 %v4733, 4294901760
    %v6145 = vsub.f32 %v4733, %v6144
    %v6146 = vand.u32 %v6145, 4294901760
    %6147 = vmatpush.msra.mxu0 %v6146
    %v6148 = vand.u32 %v6027, 4294901760
    %6149 = vmatmul.f32.gmra.mxu0 %v6148
    %v6150 = vpop.f32.mrf.mxu0
    %v6151 = vadd.f32 %v6127, %v6150
    %6152 = vdwg.mxu0
    %6153 = vmatpush.msra.mxu0 0.0
    %6154 = vmatpush.msra.mxu0 0.0
    %6155 = vmatpush.msra.mxu0 0.0
    %6156 = vmatpush.msra.mxu0 0.0
    %6157 = vmatpush.msra.mxu0 0.0
    %6158 = vmatpush.msra.mxu0 0.0
    %6159 = vmatpush.msra.mxu0 0.0
    %6160 = vmatpush.msra.mxu0 0.0
    %6161 = vmatpush.msra.mxu0 0.0
    %6162 = vmatpush.msra.mxu0 0.0
    %6163 = vmatpush.msra.mxu0 0.0
    %6164 = vmatpush.msra.mxu0 0.0
    %6165 = vmatpush.msra.mxu0 0.0
    %6166 = vmatpush.msra.mxu0 0.0
    %6167 = vmatpush.msra.mxu0 0.0
    %v6168 = vand.u32 %v4733, 4294901760
    %6169 = vmatpush.msra.mxu0 %v6168
    %v6170 = vand.u32 %v6027, 4294901760
    %6171 = vmatmul.f32.gmra.mxu0 %v6170
    %v6172 = vpop.f32.mrf.mxu0
    %v6173 = vadd.f32 %v6151, %v6172
    %6174 = vdwg.mxu0
    %v6175 = vadd.f32 %v5693, %v6173
    %6176 = vrot.lane.b32.xlu0 %v4725, 104
    %v6177 = vpop.permute.xlu0 %6176
    %6178 = vrot.lane.b32.xlu0 %v4725, 72
    %v6179 = vpop.permute.xlu0 %6178
    %v6180 = vsel %vm546, %v6177, 0
    %v6182 = vsel %vm546, %v6179, 0
    %6184 = vmatpush.xpose.msra.mxu0 0.0
    %6185 = vmatpush.xpose.msra.mxu0 0.0
    %6186 = vmatpush.xpose.msra.mxu0 0.0
    %6187 = vmatpush.xpose.msra.mxu0 0.0
    %6188 = vmatpush.xpose.msra.mxu0 0.0
    %6189 = vmatpush.xpose.msra.mxu0 0.0
    %6190 = vmatpush.xpose.msra.mxu0 0.0
    %6191 = vmatpush.xpose.msra.mxu0 0.0
    %6192 = vmatpush.xpose.msra.mxu0 0.0
    %6193 = vmatpush.xpose.msra.mxu0 0.0
    %6194 = vmatpush.xpose.msra.mxu0 0.0
    %6195 = vmatpush.xpose.msra.mxu0 0.0
    %6196 = vmatpush.xpose.msra.mxu0 0.0
    %6197 = vmatpush.xpose.msra.mxu0 0.0
    %6198 = vmatpush.xpose.msra.mxu0 0.0
    %v6199 = vand.u32 %v6182, 4294901760
    %6200 = vmatpush.xpose.msra.mxu0 %v6199
    %v6201 = vand.u32 %v6180, 4294901760
    %v6202 = vsub.f32 %v6180, %v6201
    %v6203 = vand.u32 %v6202, 4294901760
    %v6204 = vsub.f32 %v6202, %v6203
    %v6205 = vand.u32 %v6204, 4294901760
    %6206 = vmatmul.f32.gmra.mxu0 %v6205
    %v6207 = vpop.f32.mrf.mxu0
    %v6208 = vadd.f32 0.0, %v6207
    %6209 = vdwg.mxu0
    %6210 = vmatpush.xpose.msra.mxu0 0.0
    %6211 = vmatpush.xpose.msra.mxu0 0.0
    %6212 = vmatpush.xpose.msra.mxu0 0.0
    %6213 = vmatpush.xpose.msra.mxu0 0.0
    %6214 = vmatpush.xpose.msra.mxu0 0.0
    %6215 = vmatpush.xpose.msra.mxu0 0.0
    %6216 = vmatpush.xpose.msra.mxu0 0.0
    %6217 = vmatpush.xpose.msra.mxu0 0.0
    %6218 = vmatpush.xpose.msra.mxu0 0.0
    %6219 = vmatpush.xpose.msra.mxu0 0.0
    %6220 = vmatpush.xpose.msra.mxu0 0.0
    %6221 = vmatpush.xpose.msra.mxu0 0.0
    %6222 = vmatpush.xpose.msra.mxu0 0.0
    %6223 = vmatpush.xpose.msra.mxu0 0.0
    %6224 = vmatpush.xpose.msra.mxu0 0.0
    %v6225 = vand.u32 %v6182, 4294901760
    %v6226 = vsub.f32 %v6182, %v6225
    %v6227 = vand.u32 %v6226, 4294901760
    %v6228 = vsub.f32 %v6226, %v6227
    %v6229 = vand.u32 %v6228, 4294901760
    %6230 = vmatpush.xpose.msra.mxu0 %v6229
    %v6231 = vand.u32 %v6180, 4294901760
    %6232 = vmatmul.f32.gmra.mxu0 %v6231
    %v6233 = vpop.f32.mrf.mxu0
    %v6234 = vadd.f32 %v6208, %v6233
    %6235 = vdwg.mxu0
    %6236 = vmatpush.xpose.msra.mxu0 0.0
    %6237 = vmatpush.xpose.msra.mxu0 0.0
    %6238 = vmatpush.xpose.msra.mxu0 0.0
    %6239 = vmatpush.xpose.msra.mxu0 0.0
    %6240 = vmatpush.xpose.msra.mxu0 0.0
    %6241 = vmatpush.xpose.msra.mxu0 0.0
    %6242 = vmatpush.xpose.msra.mxu0 0.0
    %6243 = vmatpush.xpose.msra.mxu0 0.0
    %6244 = vmatpush.xpose.msra.mxu0 0.0
    %6245 = vmatpush.xpose.msra.mxu0 0.0
    %6246 = vmatpush.xpose.msra.mxu0 0.0
    %6247 = vmatpush.xpose.msra.mxu0 0.0
    %6248 = vmatpush.xpose.msra.mxu0 0.0
    %6249 = vmatpush.xpose.msra.mxu0 0.0
    %6250 = vmatpush.xpose.msra.mxu0 0.0
    %v6251 = vand.u32 %v6182, 4294901760
    %v6252 = vsub.f32 %v6182, %v6251
    %6253 = vmatpush.xpose.msra.mxu0 %v6252
    %v6254 = vand.u32 %v6180, 4294901760
    %v6255 = vsub.f32 %v6180, %v6254
    %6256 = vmatmul.f32.gmra.mxu0 %v6255
    %v6257 = vpop.f32.mrf.mxu0
    %v6258 = vadd.f32 %v6234, %v6257
    %6259 = vdwg.mxu0
    %6260 = vmatpush.xpose.msra.mxu0 0.0
    %6261 = vmatpush.xpose.msra.mxu0 0.0
    %6262 = vmatpush.xpose.msra.mxu0 0.0
    %6263 = vmatpush.xpose.msra.mxu0 0.0
    %6264 = vmatpush.xpose.msra.mxu0 0.0
    %6265 = vmatpush.xpose.msra.mxu0 0.0
    %6266 = vmatpush.xpose.msra.mxu0 0.0
    %6267 = vmatpush.xpose.msra.mxu0 0.0
    %6268 = vmatpush.xpose.msra.mxu0 0.0
    %6269 = vmatpush.xpose.msra.mxu0 0.0
    %6270 = vmatpush.xpose.msra.mxu0 0.0
    %6271 = vmatpush.xpose.msra.mxu0 0.0
    %6272 = vmatpush.xpose.msra.mxu0 0.0
    %6273 = vmatpush.xpose.msra.mxu0 0.0
    %6274 = vmatpush.xpose.msra.mxu0 0.0
    %v6275 = vand.u32 %v6182, 4294901760
    %6276 = vmatpush.xpose.msra.mxu0 %v6275
    %v6277 = vand.u32 %v6180, 4294901760
    %v6278 = vsub.f32 %v6180, %v6277
    %v6279 = vand.u32 %v6278, 4294901760
    %6280 = vmatmul.f32.gmra.mxu0 %v6279
    %v6281 = vpop.f32.mrf.mxu0
    %v6282 = vadd.f32 %v6258, %v6281
    %6283 = vdwg.mxu0
    %6284 = vmatpush.xpose.msra.mxu0 0.0
    %6285 = vmatpush.xpose.msra.mxu0 0.0
    %6286 = vmatpush.xpose.msra.mxu0 0.0
    %6287 = vmatpush.xpose.msra.mxu0 0.0
    %6288 = vmatpush.xpose.msra.mxu0 0.0
    %6289 = vmatpush.xpose.msra.mxu0 0.0
    %6290 = vmatpush.xpose.msra.mxu0 0.0
    %6291 = vmatpush.xpose.msra.mxu0 0.0
    %6292 = vmatpush.xpose.msra.mxu0 0.0
    %6293 = vmatpush.xpose.msra.mxu0 0.0
    %6294 = vmatpush.xpose.msra.mxu0 0.0
    %6295 = vmatpush.xpose.msra.mxu0 0.0
    %6296 = vmatpush.xpose.msra.mxu0 0.0
    %6297 = vmatpush.xpose.msra.mxu0 0.0
    %6298 = vmatpush.xpose.msra.mxu0 0.0
    %v6299 = vand.u32 %v6182, 4294901760
    %v6300 = vsub.f32 %v6182, %v6299
    %v6301 = vand.u32 %v6300, 4294901760
    %6302 = vmatpush.xpose.msra.mxu0 %v6301
    %v6303 = vand.u32 %v6180, 4294901760
    %6304 = vmatmul.f32.gmra.mxu0 %v6303
    %v6305 = vpop.f32.mrf.mxu0
    %v6306 = vadd.f32 %v6282, %v6305
    %6307 = vdwg.mxu0
    %6308 = vmatpush.xpose.msra.mxu0 0.0
    %6309 = vmatpush.xpose.msra.mxu0 0.0
    %6310 = vmatpush.xpose.msra.mxu0 0.0
    %6311 = vmatpush.xpose.msra.mxu0 0.0
    %6312 = vmatpush.xpose.msra.mxu0 0.0
    %6313 = vmatpush.xpose.msra.mxu0 0.0
    %6314 = vmatpush.xpose.msra.mxu0 0.0
    %6315 = vmatpush.xpose.msra.mxu0 0.0
    %6316 = vmatpush.xpose.msra.mxu0 0.0
    %6317 = vmatpush.xpose.msra.mxu0 0.0
    %6318 = vmatpush.xpose.msra.mxu0 0.0
    %6319 = vmatpush.xpose.msra.mxu0 0.0
    %6320 = vmatpush.xpose.msra.mxu0 0.0
    %6321 = vmatpush.xpose.msra.mxu0 0.0
    %6322 = vmatpush.xpose.msra.mxu0 0.0
    %v6323 = vand.u32 %v6182, 4294901760
    %6324 = vmatpush.xpose.msra.mxu0 %v6323
    %v6325 = vand.u32 %v6180, 4294901760
    %6326 = vmatmul.f32.gmra.mxu0 %v6325
    %v6327 = vpop.f32.mrf.mxu0
    %v6328 = vadd.f32 %v6306, %v6327
    %6329 = vdwg.mxu0
    %v6330 = vmul.f32 %v6328, 0.35355338
    %v6331 = vsel %vm546, %v6330, -inf
    %6332 = vmax.xlane.f32.xlu0 %v6331
    %v6333 = vpop.xlane.xlu0 %6332
    %v6334 = vsub.f32 %v6330, %v6333
    %v6335 = vmul.f32 %v6334, 1.442695
    %v6336 = vpow.pop %v6335
    %v6337 = vsel %vm546, %v6336, 0.0
    %6338 = vadd.xlane.f32.xlu0 %v6337
    %v6339 = vpop.xlane.xlu0 %6338
    %v6340 = vrcp.pop %v6339
    %v6341 = vmul.f32 %v6339, %v6340
    %v6342 = vsub.f32 1.0, %v6341
    %v6343 = vmul.f32 %v6340, %v6342
    %v6344 = vadd.f32 %v6340, %v6343
    %vm6345 = vweird.f32 %v6339
    %vm6346 = vweird.f32 %v6340
    %vm6347 = vmor %vm6345, %vm6346
    %v6348 = vsel %vm6347, %v6340, %v6344
    %v6349 = vand.u32 2147483647, %v6339
    %vm6350 = vcmp.eq.f32.partialorder %v6349, 8.507059e+37
    %v6351 = vand.u32 %v6339, 2147483648
    %v6352 = vor.u32 1.1754944e-38, %v6351
    %v6353 = vsel %vm6350, %v6352, %v6348
    %v6354 = vmul.f32 %v6336, %v6353
    %6355 = vrot.lane.b32.xlu0 %v4725, 40
    %v6356 = vpop.permute.xlu0 %6355
    %v6359 = vsel %vm546, %v6354, 0
    %6361 = vmatpush.msra.mxu0 0.0
    %6362 = vmatpush.msra.mxu0 0.0
    %6363 = vmatpush.msra.mxu0 0.0
    %6364 = vmatpush.msra.mxu0 0.0
    %6365 = vmatpush.msra.mxu0 0.0
    %6366 = vmatpush.msra.mxu0 0.0
    %6367 = vmatpush.msra.mxu0 0.0
    %6368 = vmatpush.msra.mxu0 0.0
    %6369 = vmatpush.msra.mxu0 0.0
    %6370 = vmatpush.msra.mxu0 0.0
    %6371 = vmatpush.msra.mxu0 0.0
    %6372 = vmatpush.msra.mxu0 0.0
    %6373 = vmatpush.msra.mxu0 0.0
    %6374 = vmatpush.msra.mxu0 0.0
    %6375 = vmatpush.msra.mxu0 0.0
    %v6376 = vand.u32 %v6356, 4294901760
    %6377 = vmatpush.msra.mxu0 %v6376
    %v6378 = vand.u32 %v6359, 4294901760
    %v6379 = vsub.f32 %v6359, %v6378
    %v6380 = vand.u32 %v6379, 4294901760
    %v6381 = vsub.f32 %v6379, %v6380
    %v6382 = vand.u32 %v6381, 4294901760
    %6383 = vmatmul.f32.gmra.mxu0 %v6382
    %v6384 = vpop.f32.mrf.mxu0
    %v6385 = vadd.f32 0.0, %v6384
    %6386 = vdwg.mxu0
    %6387 = vmatpush.msra.mxu0 0.0
    %6388 = vmatpush.msra.mxu0 0.0
    %6389 = vmatpush.msra.mxu0 0.0
    %6390 = vmatpush.msra.mxu0 0.0
    %6391 = vmatpush.msra.mxu0 0.0
    %6392 = vmatpush.msra.mxu0 0.0
    %6393 = vmatpush.msra.mxu0 0.0
    %6394 = vmatpush.msra.mxu0 0.0
    %6395 = vmatpush.msra.mxu0 0.0
    %6396 = vmatpush.msra.mxu0 0.0
    %6397 = vmatpush.msra.mxu0 0.0
    %6398 = vmatpush.msra.mxu0 0.0
    %6399 = vmatpush.msra.mxu0 0.0
    %6400 = vmatpush.msra.mxu0 0.0
    %6401 = vmatpush.msra.mxu0 0.0
    %v6402 = vand.u32 %v6356, 4294901760
    %v6403 = vsub.f32 %v6356, %v6402
    %v6404 = vand.u32 %v6403, 4294901760
    %v6405 = vsub.f32 %v6403, %v6404
    %v6406 = vand.u32 %v6405, 4294901760
    %6407 = vmatpush.msra.mxu0 %v6406
    %v6408 = vand.u32 %v6359, 4294901760
    %6409 = vmatmul.f32.gmra.mxu0 %v6408
    %v6410 = vpop.f32.mrf.mxu0
    %v6411 = vadd.f32 %v6385, %v6410
    %6412 = vdwg.mxu0
    %6413 = vmatpush.msra.mxu0 0.0
    %6414 = vmatpush.msra.mxu0 0.0
    %6415 = vmatpush.msra.mxu0 0.0
    %6416 = vmatpush.msra.mxu0 0.0
    %6417 = vmatpush.msra.mxu0 0.0
    %6418 = vmatpush.msra.mxu0 0.0
    %6419 = vmatpush.msra.mxu0 0.0
    %6420 = vmatpush.msra.mxu0 0.0
    %6421 = vmatpush.msra.mxu0 0.0
    %6422 = vmatpush.msra.mxu0 0.0
    %6423 = vmatpush.msra.mxu0 0.0
    %6424 = vmatpush.msra.mxu0 0.0
    %6425 = vmatpush.msra.mxu0 0.0
    %6426 = vmatpush.msra.mxu0 0.0
    %6427 = vmatpush.msra.mxu0 0.0
    %v6428 = vand.u32 %v6356, 4294901760
    %v6429 = vsub.f32 %v6356, %v6428
    %6430 = vmatpush.msra.mxu0 %v6429
    %v6431 = vand.u32 %v6359, 4294901760
    %v6432 = vsub.f32 %v6359, %v6431
    %6433 = vmatmul.f32.gmra.mxu0 %v6432
    %v6434 = vpop.f32.mrf.mxu0
    %v6435 = vadd.f32 %v6411, %v6434
    %6436 = vdwg.mxu0
    %6437 = vmatpush.msra.mxu0 0.0
    %6438 = vmatpush.msra.mxu0 0.0
    %6439 = vmatpush.msra.mxu0 0.0
    %6440 = vmatpush.msra.mxu0 0.0
    %6441 = vmatpush.msra.mxu0 0.0
    %6442 = vmatpush.msra.mxu0 0.0
    %6443 = vmatpush.msra.mxu0 0.0
    %6444 = vmatpush.msra.mxu0 0.0
    %6445 = vmatpush.msra.mxu0 0.0
    %6446 = vmatpush.msra.mxu0 0.0
    %6447 = vmatpush.msra.mxu0 0.0
    %6448 = vmatpush.msra.mxu0 0.0
    %6449 = vmatpush.msra.mxu0 0.0
    %6450 = vmatpush.msra.mxu0 0.0
    %6451 = vmatpush.msra.mxu0 0.0
    %v6452 = vand.u32 %v6356, 4294901760
    %6453 = vmatpush.msra.mxu0 %v6452
    %v6454 = vand.u32 %v6359, 4294901760
    %v6455 = vsub.f32 %v6359, %v6454
    %v6456 = vand.u32 %v6455, 4294901760
    %6457 = vmatmul.f32.gmra.mxu0 %v6456
    %v6458 = vpop.f32.mrf.mxu0
    %v6459 = vadd.f32 %v6435, %v6458
    %6460 = vdwg.mxu0
    %6461 = vmatpush.msra.mxu0 0.0
    %6462 = vmatpush.msra.mxu0 0.0
    %6463 = vmatpush.msra.mxu0 0.0
    %6464 = vmatpush.msra.mxu0 0.0
    %6465 = vmatpush.msra.mxu0 0.0
    %6466 = vmatpush.msra.mxu0 0.0
    %6467 = vmatpush.msra.mxu0 0.0
    %6468 = vmatpush.msra.mxu0 0.0
    %6469 = vmatpush.msra.mxu0 0.0
    %6470 = vmatpush.msra.mxu0 0.0
    %6471 = vmatpush.msra.mxu0 0.0
    %6472 = vmatpush.msra.mxu0 0.0
    %6473 = vmatpush.msra.mxu0 0.0
    %6474 = vmatpush.msra.mxu0 0.0
    %6475 = vmatpush.msra.mxu0 0.0
    %v6476 = vand.u32 %v6356, 4294901760
    %v6477 = vsub.f32 %v6356, %v6476
    %v6478 = vand.u32 %v6477, 4294901760
    %6479 = vmatpush.msra.mxu0 %v6478
    %v6480 = vand.u32 %v6359, 4294901760
    %6481 = vmatmul.f32.gmra.mxu0 %v6480
    %v6482 = vpop.f32.mrf.mxu0
    %v6483 = vadd.f32 %v6459, %v6482
    %6484 = vdwg.mxu0
    %6485 = vmatpush.msra.mxu0 0.0
    %6486 = vmatpush.msra.mxu0 0.0
    %6487 = vmatpush.msra.mxu0 0.0
    %6488 = vmatpush.msra.mxu0 0.0
    %6489 = vmatpush.msra.mxu0 0.0
    %6490 = vmatpush.msra.mxu0 0.0
    %6491 = vmatpush.msra.mxu0 0.0
    %6492 = vmatpush.msra.mxu0 0.0
    %6493 = vmatpush.msra.mxu0 0.0
    %6494 = vmatpush.msra.mxu0 0.0
    %6495 = vmatpush.msra.mxu0 0.0
    %6496 = vmatpush.msra.mxu0 0.0
    %6497 = vmatpush.msra.mxu0 0.0
    %6498 = vmatpush.msra.mxu0 0.0
    %6499 = vmatpush.msra.mxu0 0.0
    %v6500 = vand.u32 %v6356, 4294901760
    %6501 = vmatpush.msra.mxu0 %v6500
    %v6502 = vand.u32 %v6359, 4294901760
    %6503 = vmatmul.f32.gmra.mxu0 %v6502
    %v6504 = vpop.f32.mrf.mxu0
    %v6505 = vadd.f32 %v6483, %v6504
    %6506 = vdwg.mxu0
    %v6508 = vsel %vm546, %v6505, 0
    %6510 = vmatpush.msra.mxu0 0.0
    %6511 = vmatpush.msra.mxu0 0.0
    %6512 = vmatpush.msra.mxu0 0.0
    %6513 = vmatpush.msra.mxu0 0.0
    %6514 = vmatpush.msra.mxu0 0.0
    %6515 = vmatpush.msra.mxu0 0.0
    %6516 = vmatpush.msra.mxu0 0.0
    %6517 = vmatpush.msra.mxu0 0.0
    %6518 = vmatpush.msra.mxu0 0.0
    %6519 = vmatpush.msra.mxu0 0.0
    %6520 = vmatpush.msra.mxu0 0.0
    %6521 = vmatpush.msra.mxu0 0.0
    %6522 = vmatpush.msra.mxu0 0.0
    %6523 = vmatpush.msra.mxu0 0.0
    %6524 = vmatpush.msra.mxu0 0.0
    %v6525 = vand.u32 %v4734, 4294901760
    %6526 = vmatpush.msra.mxu0 %v6525
    %v6527 = vand.u32 %v6508, 4294901760
    %v6528 = vsub.f32 %v6508, %v6527
    %v6529 = vand.u32 %v6528, 4294901760
    %v6530 = vsub.f32 %v6528, %v6529
    %v6531 = vand.u32 %v6530, 4294901760
    %6532 = vmatmul.f32.gmra.mxu0 %v6531
    %v6533 = vpop.f32.mrf.mxu0
    %v6534 = vadd.f32 0.0, %v6533
    %6535 = vdwg.mxu0
    %6536 = vmatpush.msra.mxu0 0.0
    %6537 = vmatpush.msra.mxu0 0.0
    %6538 = vmatpush.msra.mxu0 0.0
    %6539 = vmatpush.msra.mxu0 0.0
    %6540 = vmatpush.msra.mxu0 0.0
    %6541 = vmatpush.msra.mxu0 0.0
    %6542 = vmatpush.msra.mxu0 0.0
    %6543 = vmatpush.msra.mxu0 0.0
    %6544 = vmatpush.msra.mxu0 0.0
    %6545 = vmatpush.msra.mxu0 0.0
    %6546 = vmatpush.msra.mxu0 0.0
    %6547 = vmatpush.msra.mxu0 0.0
    %6548 = vmatpush.msra.mxu0 0.0
    %6549 = vmatpush.msra.mxu0 0.0
    %6550 = vmatpush.msra.mxu0 0.0
    %v6551 = vand.u32 %v4734, 4294901760
    %v6552 = vsub.f32 %v4734, %v6551
    %v6553 = vand.u32 %v6552, 4294901760
    %v6554 = vsub.f32 %v6552, %v6553
    %v6555 = vand.u32 %v6554, 4294901760
    %6556 = vmatpush.msra.mxu0 %v6555
    %v6557 = vand.u32 %v6508, 4294901760
    %6558 = vmatmul.f32.gmra.mxu0 %v6557
    %v6559 = vpop.f32.mrf.mxu0
    %v6560 = vadd.f32 %v6534, %v6559
    %6561 = vdwg.mxu0
    %6562 = vmatpush.msra.mxu0 0.0
    %6563 = vmatpush.msra.mxu0 0.0
    %6564 = vmatpush.msra.mxu0 0.0
    %6565 = vmatpush.msra.mxu0 0.0
    %6566 = vmatpush.msra.mxu0 0.0
    %6567 = vmatpush.msra.mxu0 0.0
    %6568 = vmatpush.msra.mxu0 0.0
    %6569 = vmatpush.msra.mxu0 0.0
    %6570 = vmatpush.msra.mxu0 0.0
    %6571 = vmatpush.msra.mxu0 0.0
    %6572 = vmatpush.msra.mxu0 0.0
    %6573 = vmatpush.msra.mxu0 0.0
    %6574 = vmatpush.msra.mxu0 0.0
    %6575 = vmatpush.msra.mxu0 0.0
    %6576 = vmatpush.msra.mxu0 0.0
    %v6577 = vand.u32 %v4734, 4294901760
    %v6578 = vsub.f32 %v4734, %v6577
    %6579 = vmatpush.msra.mxu0 %v6578
    %v6580 = vand.u32 %v6508, 4294901760
    %v6581 = vsub.f32 %v6508, %v6580
    %6582 = vmatmul.f32.gmra.mxu0 %v6581
    %v6583 = vpop.f32.mrf.mxu0
    %v6584 = vadd.f32 %v6560, %v6583
    %6585 = vdwg.mxu0
    %6586 = vmatpush.msra.mxu0 0.0
    %6587 = vmatpush.msra.mxu0 0.0
    %6588 = vmatpush.msra.mxu0 0.0
    %6589 = vmatpush.msra.mxu0 0.0
    %6590 = vmatpush.msra.mxu0 0.0
    %6591 = vmatpush.msra.mxu0 0.0
    %6592 = vmatpush.msra.mxu0 0.0
    %6593 = vmatpush.msra.mxu0 0.0
    %6594 = vmatpush.msra.mxu0 0.0
    %6595 = vmatpush.msra.mxu0 0.0
    %6596 = vmatpush.msra.mxu0 0.0
    %6597 = vmatpush.msra.mxu0 0.0
    %6598 = vmatpush.msra.mxu0 0.0
    %6599 = vmatpush.msra.mxu0 0.0
    %6600 = vmatpush.msra.mxu0 0.0
    %v6601 = vand.u32 %v4734, 4294901760
    %6602 = vmatpush.msra.mxu0 %v6601
    %v6603 = vand.u32 %v6508, 4294901760
    %v6604 = vsub.f32 %v6508, %v6603
    %v6605 = vand.u32 %v6604, 4294901760
    %6606 = vmatmul.f32.gmra.mxu0 %v6605
    %v6607 = vpop.f32.mrf.mxu0
    %v6608 = vadd.f32 %v6584, %v6607
    %6609 = vdwg.mxu0
    %6610 = vmatpush.msra.mxu0 0.0
    %6611 = vmatpush.msra.mxu0 0.0
    %6612 = vmatpush.msra.mxu0 0.0
    %6613 = vmatpush.msra.mxu0 0.0
    %6614 = vmatpush.msra.mxu0 0.0
    %6615 = vmatpush.msra.mxu0 0.0
    %6616 = vmatpush.msra.mxu0 0.0
    %6617 = vmatpush.msra.mxu0 0.0
    %6618 = vmatpush.msra.mxu0 0.0
    %6619 = vmatpush.msra.mxu0 0.0
    %6620 = vmatpush.msra.mxu0 0.0
    %6621 = vmatpush.msra.mxu0 0.0
    %6622 = vmatpush.msra.mxu0 0.0
    %6623 = vmatpush.msra.mxu0 0.0
    %6624 = vmatpush.msra.mxu0 0.0
    %v6625 = vand.u32 %v4734, 4294901760
    %v6626 = vsub.f32 %v4734, %v6625
    %v6627 = vand.u32 %v6626, 4294901760
    %6628 = vmatpush.msra.mxu0 %v6627
    %v6629 = vand.u32 %v6508, 4294901760
    %6630 = vmatmul.f32.gmra.mxu0 %v6629
    %v6631 = vpop.f32.mrf.mxu0
    %v6632 = vadd.f32 %v6608, %v6631
    %6633 = vdwg.mxu0
    %6634 = vmatpush.msra.mxu0 0.0
    %6635 = vmatpush.msra.mxu0 0.0
    %6636 = vmatpush.msra.mxu0 0.0
    %6637 = vmatpush.msra.mxu0 0.0
    %6638 = vmatpush.msra.mxu0 0.0
    %6639 = vmatpush.msra.mxu0 0.0
    %6640 = vmatpush.msra.mxu0 0.0
    %6641 = vmatpush.msra.mxu0 0.0
    %6642 = vmatpush.msra.mxu0 0.0
    %6643 = vmatpush.msra.mxu0 0.0
    %6644 = vmatpush.msra.mxu0 0.0
    %6645 = vmatpush.msra.mxu0 0.0
    %6646 = vmatpush.msra.mxu0 0.0
    %6647 = vmatpush.msra.mxu0 0.0
    %6648 = vmatpush.msra.mxu0 0.0
    %v6649 = vand.u32 %v4734, 4294901760
    %6650 = vmatpush.msra.mxu0 %v6649
    %v6651 = vand.u32 %v6508, 4294901760
    %6652 = vmatmul.f32.gmra.mxu0 %v6651
    %v6653 = vpop.f32.mrf.mxu0
    %v6654 = vadd.f32 %v6632, %v6653
    %6655 = vdwg.mxu0
    %v6656 = vadd.f32 %v6175, %v6654
    %6658 = vrot.lane.b32.xlu0 %v4729, 96
    %v6659 = vpop.permute.xlu0 %6658
    %v6660 = vsel %vm546, %v4729, 0
    %v6662 = vsel %vm546, %v6659, 0
    %6664 = vmatpush.xpose.msra.mxu0 0.0
    %6665 = vmatpush.xpose.msra.mxu0 0.0
    %6666 = vmatpush.xpose.msra.mxu0 0.0
    %6667 = vmatpush.xpose.msra.mxu0 0.0
    %6668 = vmatpush.xpose.msra.mxu0 0.0
    %6669 = vmatpush.xpose.msra.mxu0 0.0
    %6670 = vmatpush.xpose.msra.mxu0 0.0
    %6671 = vmatpush.xpose.msra.mxu0 0.0
    %6672 = vmatpush.xpose.msra.mxu0 0.0
    %6673 = vmatpush.xpose.msra.mxu0 0.0
    %6674 = vmatpush.xpose.msra.mxu0 0.0
    %6675 = vmatpush.xpose.msra.mxu0 0.0
    %6676 = vmatpush.xpose.msra.mxu0 0.0
    %6677 = vmatpush.xpose.msra.mxu0 0.0
    %6678 = vmatpush.xpose.msra.mxu0 0.0
    %v6679 = vand.u32 %v6662, 4294901760
    %6680 = vmatpush.xpose.msra.mxu0 %v6679
    %v6681 = vand.u32 %v6660, 4294901760
    %v6682 = vsub.f32 %v6660, %v6681
    %v6683 = vand.u32 %v6682, 4294901760
    %v6684 = vsub.f32 %v6682, %v6683
    %v6685 = vand.u32 %v6684, 4294901760
    %6686 = vmatmul.f32.gmra.mxu0 %v6685
    %v6687 = vpop.f32.mrf.mxu0
    %v6688 = vadd.f32 0.0, %v6687
    %6689 = vdwg.mxu0
    %6690 = vmatpush.xpose.msra.mxu0 0.0
    %6691 = vmatpush.xpose.msra.mxu0 0.0
    %6692 = vmatpush.xpose.msra.mxu0 0.0
    %6693 = vmatpush.xpose.msra.mxu0 0.0
    %6694 = vmatpush.xpose.msra.mxu0 0.0
    %6695 = vmatpush.xpose.msra.mxu0 0.0
    %6696 = vmatpush.xpose.msra.mxu0 0.0
    %6697 = vmatpush.xpose.msra.mxu0 0.0
    %6698 = vmatpush.xpose.msra.mxu0 0.0
    %6699 = vmatpush.xpose.msra.mxu0 0.0
    %6700 = vmatpush.xpose.msra.mxu0 0.0
    %6701 = vmatpush.xpose.msra.mxu0 0.0
    %6702 = vmatpush.xpose.msra.mxu0 0.0
    %6703 = vmatpush.xpose.msra.mxu0 0.0
    %6704 = vmatpush.xpose.msra.mxu0 0.0
    %v6705 = vand.u32 %v6662, 4294901760
    %v6706 = vsub.f32 %v6662, %v6705
    %v6707 = vand.u32 %v6706, 4294901760
    %v6708 = vsub.f32 %v6706, %v6707
    %v6709 = vand.u32 %v6708, 4294901760
    %6710 = vmatpush.xpose.msra.mxu0 %v6709
    %v6711 = vand.u32 %v6660, 4294901760
    %6712 = vmatmul.f32.gmra.mxu0 %v6711
    %v6713 = vpop.f32.mrf.mxu0
    %v6714 = vadd.f32 %v6688, %v6713
    %6715 = vdwg.mxu0
    %6716 = vmatpush.xpose.msra.mxu0 0.0
    %6717 = vmatpush.xpose.msra.mxu0 0.0
    %6718 = vmatpush.xpose.msra.mxu0 0.0
    %6719 = vmatpush.xpose.msra.mxu0 0.0
    %6720 = vmatpush.xpose.msra.mxu0 0.0
    %6721 = vmatpush.xpose.msra.mxu0 0.0
    %6722 = vmatpush.xpose.msra.mxu0 0.0
    %6723 = vmatpush.xpose.msra.mxu0 0.0
    %6724 = vmatpush.xpose.msra.mxu0 0.0
    %6725 = vmatpush.xpose.msra.mxu0 0.0
    %6726 = vmatpush.xpose.msra.mxu0 0.0
    %6727 = vmatpush.xpose.msra.mxu0 0.0
    %6728 = vmatpush.xpose.msra.mxu0 0.0
    %6729 = vmatpush.xpose.msra.mxu0 0.0
    %6730 = vmatpush.xpose.msra.mxu0 0.0
    %v6731 = vand.u32 %v6662, 4294901760
    %v6732 = vsub.f32 %v6662, %v6731
    %6733 = vmatpush.xpose.msra.mxu0 %v6732
    %v6734 = vand.u32 %v6660, 4294901760
    %v6735 = vsub.f32 %v6660, %v6734
    %6736 = vmatmul.f32.gmra.mxu0 %v6735
    %v6737 = vpop.f32.mrf.mxu0
    %v6738 = vadd.f32 %v6714, %v6737
    %6739 = vdwg.mxu0
    %6740 = vmatpush.xpose.msra.mxu0 0.0
    %6741 = vmatpush.xpose.msra.mxu0 0.0
    %6742 = vmatpush.xpose.msra.mxu0 0.0
    %6743 = vmatpush.xpose.msra.mxu0 0.0
    %6744 = vmatpush.xpose.msra.mxu0 0.0
    %6745 = vmatpush.xpose.msra.mxu0 0.0
    %6746 = vmatpush.xpose.msra.mxu0 0.0
    %6747 = vmatpush.xpose.msra.mxu0 0.0
    %6748 = vmatpush.xpose.msra.mxu0 0.0
    %6749 = vmatpush.xpose.msra.mxu0 0.0
    %6750 = vmatpush.xpose.msra.mxu0 0.0
    %6751 = vmatpush.xpose.msra.mxu0 0.0
    %6752 = vmatpush.xpose.msra.mxu0 0.0
    %6753 = vmatpush.xpose.msra.mxu0 0.0
    %6754 = vmatpush.xpose.msra.mxu0 0.0
    %v6755 = vand.u32 %v6662, 4294901760
    %6756 = vmatpush.xpose.msra.mxu0 %v6755
    %v6757 = vand.u32 %v6660, 4294901760
    %v6758 = vsub.f32 %v6660, %v6757
    %v6759 = vand.u32 %v6758, 4294901760
    %6760 = vmatmul.f32.gmra.mxu0 %v6759
    %v6761 = vpop.f32.mrf.mxu0
    %v6762 = vadd.f32 %v6738, %v6761
    %6763 = vdwg.mxu0
    %6764 = vmatpush.xpose.msra.mxu0 0.0
    %6765 = vmatpush.xpose.msra.mxu0 0.0
    %6766 = vmatpush.xpose.msra.mxu0 0.0
    %6767 = vmatpush.xpose.msra.mxu0 0.0
    %6768 = vmatpush.xpose.msra.mxu0 0.0
    %6769 = vmatpush.xpose.msra.mxu0 0.0
    %6770 = vmatpush.xpose.msra.mxu0 0.0
    %6771 = vmatpush.xpose.msra.mxu0 0.0
    %6772 = vmatpush.xpose.msra.mxu0 0.0
    %6773 = vmatpush.xpose.msra.mxu0 0.0
    %6774 = vmatpush.xpose.msra.mxu0 0.0
    %6775 = vmatpush.xpose.msra.mxu0 0.0
    %6776 = vmatpush.xpose.msra.mxu0 0.0
    %6777 = vmatpush.xpose.msra.mxu0 0.0
    %6778 = vmatpush.xpose.msra.mxu0 0.0
    %v6779 = vand.u32 %v6662, 4294901760
    %v6780 = vsub.f32 %v6662, %v6779
    %v6781 = vand.u32 %v6780, 4294901760
    %6782 = vmatpush.xpose.msra.mxu0 %v6781
    %v6783 = vand.u32 %v6660, 4294901760
    %6784 = vmatmul.f32.gmra.mxu0 %v6783
    %v6785 = vpop.f32.mrf.mxu0
    %v6786 = vadd.f32 %v6762, %v6785
    %6787 = vdwg.mxu0
    %6788 = vmatpush.xpose.msra.mxu0 0.0
    %6789 = vmatpush.xpose.msra.mxu0 0.0
    %6790 = vmatpush.xpose.msra.mxu0 0.0
    %6791 = vmatpush.xpose.msra.mxu0 0.0
    %6792 = vmatpush.xpose.msra.mxu0 0.0
    %6793 = vmatpush.xpose.msra.mxu0 0.0
    %6794 = vmatpush.xpose.msra.mxu0 0.0
    %6795 = vmatpush.xpose.msra.mxu0 0.0
    %6796 = vmatpush.xpose.msra.mxu0 0.0
    %6797 = vmatpush.xpose.msra.mxu0 0.0
    %6798 = vmatpush.xpose.msra.mxu0 0.0
    %6799 = vmatpush.xpose.msra.mxu0 0.0
    %6800 = vmatpush.xpose.msra.mxu0 0.0
    %6801 = vmatpush.xpose.msra.mxu0 0.0
    %6802 = vmatpush.xpose.msra.mxu0 0.0
    %v6803 = vand.u32 %v6662, 4294901760
    %6804 = vmatpush.xpose.msra.mxu0 %v6803
    %v6805 = vand.u32 %v6660, 4294901760
    %6806 = vmatmul.f32.gmra.mxu0 %v6805
    %v6807 = vpop.f32.mrf.mxu0
    %v6808 = vadd.f32 %v6786, %v6807
    %6809 = vdwg.mxu0
    %v6810 = vmul.f32 %v6808, 0.35355338
    %v6811 = vsel %vm546, %v6810, -inf
    %6812 = vmax.xlane.f32.xlu0 %v6811
    %v6813 = vpop.xlane.xlu0 %6812
    %v6814 = vsub.f32 %v6810, %v6813
    %v6815 = vmul.f32 %v6814, 1.442695
    %v6816 = vpow.pop %v6815
    %v6817 = vsel %vm546, %v6816, 0.0
    %6818 = vadd.xlane.f32.xlu0 %v6817
    %v6819 = vpop.xlane.xlu0 %6818
    %v6820 = vrcp.pop %v6819
    %v6821 = vmul.f32 %v6819, %v6820
    %v6822 = vsub.f32 1.0, %v6821
    %v6823 = vmul.f32 %v6820, %v6822
    %v6824 = vadd.f32 %v6820, %v6823
    %vm6825 = vweird.f32 %v6819
    %vm6826 = vweird.f32 %v6820
    %vm6827 = vmor %vm6825, %vm6826
    %v6828 = vsel %vm6827, %v6820, %v6824
    %v6829 = vand.u32 2147483647, %v6819
    %vm6830 = vcmp.eq.f32.partialorder %v6829, 8.507059e+37
    %v6831 = vand.u32 %v6819, 2147483648
    %v6832 = vor.u32 1.1754944e-38, %v6831
    %v6833 = vsel %vm6830, %v6832, %v6828
    %v6834 = vmul.f32 %v6816, %v6833
    %6835 = vrot.lane.b32.xlu0 %v4729, 64
    %v6836 = vpop.permute.xlu0 %6835
    %v6839 = vsel %vm546, %v6834, 0
    %6841 = vmatpush.msra.mxu0 0.0
    %6842 = vmatpush.msra.mxu0 0.0
    %6843 = vmatpush.msra.mxu0 0.0
    %6844 = vmatpush.msra.mxu0 0.0
    %6845 = vmatpush.msra.mxu0 0.0
    %6846 = vmatpush.msra.mxu0 0.0
    %6847 = vmatpush.msra.mxu0 0.0
    %6848 = vmatpush.msra.mxu0 0.0
    %6849 = vmatpush.msra.mxu0 0.0
    %6850 = vmatpush.msra.mxu0 0.0
    %6851 = vmatpush.msra.mxu0 0.0
    %6852 = vmatpush.msra.mxu0 0.0
    %6853 = vmatpush.msra.mxu0 0.0
    %6854 = vmatpush.msra.mxu0 0.0
    %6855 = vmatpush.msra.mxu0 0.0
    %v6856 = vand.u32 %v6836, 4294901760
    %6857 = vmatpush.msra.mxu0 %v6856
    %v6858 = vand.u32 %v6839, 4294901760
    %v6859 = vsub.f32 %v6839, %v6858
    %v6860 = vand.u32 %v6859, 4294901760
    %v6861 = vsub.f32 %v6859, %v6860
    %v6862 = vand.u32 %v6861, 4294901760
    %6863 = vmatmul.f32.gmra.mxu0 %v6862
    %v6864 = vpop.f32.mrf.mxu0
    %v6865 = vadd.f32 0.0, %v6864
    %6866 = vdwg.mxu0
    %6867 = vmatpush.msra.mxu0 0.0
    %6868 = vmatpush.msra.mxu0 0.0
    %6869 = vmatpush.msra.mxu0 0.0
    %6870 = vmatpush.msra.mxu0 0.0
    %6871 = vmatpush.msra.mxu0 0.0
    %6872 = vmatpush.msra.mxu0 0.0
    %6873 = vmatpush.msra.mxu0 0.0
    %6874 = vmatpush.msra.mxu0 0.0
    %6875 = vmatpush.msra.mxu0 0.0
    %6876 = vmatpush.msra.mxu0 0.0
    %6877 = vmatpush.msra.mxu0 0.0
    %6878 = vmatpush.msra.mxu0 0.0
    %6879 = vmatpush.msra.mxu0 0.0
    %6880 = vmatpush.msra.mxu0 0.0
    %6881 = vmatpush.msra.mxu0 0.0
    %v6882 = vand.u32 %v6836, 4294901760
    %v6883 = vsub.f32 %v6836, %v6882
    %v6884 = vand.u32 %v6883, 4294901760
    %v6885 = vsub.f32 %v6883, %v6884
    %v6886 = vand.u32 %v6885, 4294901760
    %6887 = vmatpush.msra.mxu0 %v6886
    %v6888 = vand.u32 %v6839, 4294901760
    %6889 = vmatmul.f32.gmra.mxu0 %v6888
    %v6890 = vpop.f32.mrf.mxu0
    %v6891 = vadd.f32 %v6865, %v6890
    %6892 = vdwg.mxu0
    %6893 = vmatpush.msra.mxu0 0.0
    %6894 = vmatpush.msra.mxu0 0.0
    %6895 = vmatpush.msra.mxu0 0.0
    %6896 = vmatpush.msra.mxu0 0.0
    %6897 = vmatpush.msra.mxu0 0.0
    %6898 = vmatpush.msra.mxu0 0.0
    %6899 = vmatpush.msra.mxu0 0.0
    %6900 = vmatpush.msra.mxu0 0.0
    %6901 = vmatpush.msra.mxu0 0.0
    %6902 = vmatpush.msra.mxu0 0.0
    %6903 = vmatpush.msra.mxu0 0.0
    %6904 = vmatpush.msra.mxu0 0.0
    %6905 = vmatpush.msra.mxu0 0.0
    %6906 = vmatpush.msra.mxu0 0.0
    %6907 = vmatpush.msra.mxu0 0.0
    %v6908 = vand.u32 %v6836, 4294901760
    %v6909 = vsub.f32 %v6836, %v6908
    %6910 = vmatpush.msra.mxu0 %v6909
    %v6911 = vand.u32 %v6839, 4294901760
    %v6912 = vsub.f32 %v6839, %v6911
    %6913 = vmatmul.f32.gmra.mxu0 %v6912
    %v6914 = vpop.f32.mrf.mxu0
    %v6915 = vadd.f32 %v6891, %v6914
    %6916 = vdwg.mxu0
    %6917 = vmatpush.msra.mxu0 0.0
    %6918 = vmatpush.msra.mxu0 0.0
    %6919 = vmatpush.msra.mxu0 0.0
    %6920 = vmatpush.msra.mxu0 0.0
    %6921 = vmatpush.msra.mxu0 0.0
    %6922 = vmatpush.msra.mxu0 0.0
    %6923 = vmatpush.msra.mxu0 0.0
    %6924 = vmatpush.msra.mxu0 0.0
    %6925 = vmatpush.msra.mxu0 0.0
    %6926 = vmatpush.msra.mxu0 0.0
    %6927 = vmatpush.msra.mxu0 0.0
    %6928 = vmatpush.msra.mxu0 0.0
    %6929 = vmatpush.msra.mxu0 0.0
    %6930 = vmatpush.msra.mxu0 0.0
    %6931 = vmatpush.msra.mxu0 0.0
    %v6932 = vand.u32 %v6836, 4294901760
    %6933 = vmatpush.msra.mxu0 %v6932
    %v6934 = vand.u32 %v6839, 4294901760
    %v6935 = vsub.f32 %v6839, %v6934
    %v6936 = vand.u32 %v6935, 4294901760
    %6937 = vmatmul.f32.gmra.mxu0 %v6936
    %v6938 = vpop.f32.mrf.mxu0
    %v6939 = vadd.f32 %v6915, %v6938
    %6940 = vdwg.mxu0
    %6941 = vmatpush.msra.mxu0 0.0
    %6942 = vmatpush.msra.mxu0 0.0
    %6943 = vmatpush.msra.mxu0 0.0
    %6944 = vmatpush.msra.mxu0 0.0
    %6945 = vmatpush.msra.mxu0 0.0
    %6946 = vmatpush.msra.mxu0 0.0
    %6947 = vmatpush.msra.mxu0 0.0
    %6948 = vmatpush.msra.mxu0 0.0
    %6949 = vmatpush.msra.mxu0 0.0
    %6950 = vmatpush.msra.mxu0 0.0
    %6951 = vmatpush.msra.mxu0 0.0
    %6952 = vmatpush.msra.mxu0 0.0
    %6953 = vmatpush.msra.mxu0 0.0
    %6954 = vmatpush.msra.mxu0 0.0
    %6955 = vmatpush.msra.mxu0 0.0
    %v6956 = vand.u32 %v6836, 4294901760
    %v6957 = vsub.f32 %v6836, %v6956
    %v6958 = vand.u32 %v6957, 4294901760
    %6959 = vmatpush.msra.mxu0 %v6958
    %v6960 = vand.u32 %v6839, 4294901760
    %6961 = vmatmul.f32.gmra.mxu0 %v6960
    %v6962 = vpop.f32.mrf.mxu0
    %v6963 = vadd.f32 %v6939, %v6962
    %6964 = vdwg.mxu0
    %6965 = vmatpush.msra.mxu0 0.0
    %6966 = vmatpush.msra.mxu0 0.0
    %6967 = vmatpush.msra.mxu0 0.0
    %6968 = vmatpush.msra.mxu0 0.0
    %6969 = vmatpush.msra.mxu0 0.0
    %6970 = vmatpush.msra.mxu0 0.0
    %6971 = vmatpush.msra.mxu0 0.0
    %6972 = vmatpush.msra.mxu0 0.0
    %6973 = vmatpush.msra.mxu0 0.0
    %6974 = vmatpush.msra.mxu0 0.0
    %6975 = vmatpush.msra.mxu0 0.0
    %6976 = vmatpush.msra.mxu0 0.0
    %6977 = vmatpush.msra.mxu0 0.0
    %6978 = vmatpush.msra.mxu0 0.0
    %6979 = vmatpush.msra.mxu0 0.0
    %v6980 = vand.u32 %v6836, 4294901760
    %6981 = vmatpush.msra.mxu0 %v6980
    %v6982 = vand.u32 %v6839, 4294901760
    %6983 = vmatmul.f32.gmra.mxu0 %v6982
    %v6984 = vpop.f32.mrf.mxu0
    %v6985 = vadd.f32 %v6963, %v6984
    %6986 = vdwg.mxu0
    %6987 = vrot.lane.b32.xlu0 %v4729, 120
    %v6988 = vpop.permute.xlu0 %6987
    %6989 = vrot.lane.b32.xlu0 %v4729, 88
    %v6990 = vpop.permute.xlu0 %6989
    %v6991 = vsel %vm546, %v6988, 0
    %v6993 = vsel %vm546, %v6990, 0
    %6995 = vmatpush.xpose.msra.mxu0 0.0
    %6996 = vmatpush.xpose.msra.mxu0 0.0
    %6997 = vmatpush.xpose.msra.mxu0 0.0
    %6998 = vmatpush.xpose.msra.mxu0 0.0
    %6999 = vmatpush.xpose.msra.mxu0 0.0
    %7000 = vmatpush.xpose.msra.mxu0 0.0
    %7001 = vmatpush.xpose.msra.mxu0 0.0
    %7002 = vmatpush.xpose.msra.mxu0 0.0
    %7003 = vmatpush.xpose.msra.mxu0 0.0
    %7004 = vmatpush.xpose.msra.mxu0 0.0
    %7005 = vmatpush.xpose.msra.mxu0 0.0
    %7006 = vmatpush.xpose.msra.mxu0 0.0
    %7007 = vmatpush.xpose.msra.mxu0 0.0
    %7008 = vmatpush.xpose.msra.mxu0 0.0
    %7009 = vmatpush.xpose.msra.mxu0 0.0
    %v7010 = vand.u32 %v6993, 4294901760
    %7011 = vmatpush.xpose.msra.mxu0 %v7010
    %v7012 = vand.u32 %v6991, 4294901760
    %v7013 = vsub.f32 %v6991, %v7012
    %v7014 = vand.u32 %v7013, 4294901760
    %v7015 = vsub.f32 %v7013, %v7014
    %v7016 = vand.u32 %v7015, 4294901760
    %7017 = vmatmul.f32.gmra.mxu0 %v7016
    %v7018 = vpop.f32.mrf.mxu0
    %v7019 = vadd.f32 0.0, %v7018
    %7020 = vdwg.mxu0
    %7021 = vmatpush.xpose.msra.mxu0 0.0
    %7022 = vmatpush.xpose.msra.mxu0 0.0
    %7023 = vmatpush.xpose.msra.mxu0 0.0
    %7024 = vmatpush.xpose.msra.mxu0 0.0
    %7025 = vmatpush.xpose.msra.mxu0 0.0
    %7026 = vmatpush.xpose.msra.mxu0 0.0
    %7027 = vmatpush.xpose.msra.mxu0 0.0
    %7028 = vmatpush.xpose.msra.mxu0 0.0
    %7029 = vmatpush.xpose.msra.mxu0 0.0
    %7030 = vmatpush.xpose.msra.mxu0 0.0
    %7031 = vmatpush.xpose.msra.mxu0 0.0
    %7032 = vmatpush.xpose.msra.mxu0 0.0
    %7033 = vmatpush.xpose.msra.mxu0 0.0
    %7034 = vmatpush.xpose.msra.mxu0 0.0
    %7035 = vmatpush.xpose.msra.mxu0 0.0
    %v7036 = vand.u32 %v6993, 4294901760
    %v7037 = vsub.f32 %v6993, %v7036
    %v7038 = vand.u32 %v7037, 4294901760
    %v7039 = vsub.f32 %v7037, %v7038
    %v7040 = vand.u32 %v7039, 4294901760
    %7041 = vmatpush.xpose.msra.mxu0 %v7040
    %v7042 = vand.u32 %v6991, 4294901760
    %7043 = vmatmul.f32.gmra.mxu0 %v7042
    %v7044 = vpop.f32.mrf.mxu0
    %v7045 = vadd.f32 %v7019, %v7044
    %7046 = vdwg.mxu0
    %7047 = vmatpush.xpose.msra.mxu0 0.0
    %7048 = vmatpush.xpose.msra.mxu0 0.0
    %7049 = vmatpush.xpose.msra.mxu0 0.0
    %7050 = vmatpush.xpose.msra.mxu0 0.0
    %7051 = vmatpush.xpose.msra.mxu0 0.0
    %7052 = vmatpush.xpose.msra.mxu0 0.0
    %7053 = vmatpush.xpose.msra.mxu0 0.0
    %7054 = vmatpush.xpose.msra.mxu0 0.0
    %7055 = vmatpush.xpose.msra.mxu0 0.0
    %7056 = vmatpush.xpose.msra.mxu0 0.0
    %7057 = vmatpush.xpose.msra.mxu0 0.0
    %7058 = vmatpush.xpose.msra.mxu0 0.0
    %7059 = vmatpush.xpose.msra.mxu0 0.0
    %7060 = vmatpush.xpose.msra.mxu0 0.0
    %7061 = vmatpush.xpose.msra.mxu0 0.0
    %v7062 = vand.u32 %v6993, 4294901760
    %v7063 = vsub.f32 %v6993, %v7062
    %7064 = vmatpush.xpose.msra.mxu0 %v7063
    %v7065 = vand.u32 %v6991, 4294901760
    %v7066 = vsub.f32 %v6991, %v7065
    %7067 = vmatmul.f32.gmra.mxu0 %v7066
    %v7068 = vpop.f32.mrf.mxu0
    %v7069 = vadd.f32 %v7045, %v7068
    %7070 = vdwg.mxu0
    %7071 = vmatpush.xpose.msra.mxu0 0.0
    %7072 = vmatpush.xpose.msra.mxu0 0.0
    %7073 = vmatpush.xpose.msra.mxu0 0.0
    %7074 = vmatpush.xpose.msra.mxu0 0.0
    %7075 = vmatpush.xpose.msra.mxu0 0.0
    %7076 = vmatpush.xpose.msra.mxu0 0.0
    %7077 = vmatpush.xpose.msra.mxu0 0.0
    %7078 = vmatpush.xpose.msra.mxu0 0.0
    %7079 = vmatpush.xpose.msra.mxu0 0.0
    %7080 = vmatpush.xpose.msra.mxu0 0.0
    %7081 = vmatpush.xpose.msra.mxu0 0.0
    %7082 = vmatpush.xpose.msra.mxu0 0.0
    %7083 = vmatpush.xpose.msra.mxu0 0.0
    %7084 = vmatpush.xpose.msra.mxu0 0.0
    %7085 = vmatpush.xpose.msra.mxu0 0.0
    %v7086 = vand.u32 %v6993, 4294901760
    %7087 = vmatpush.xpose.msra.mxu0 %v7086
    %v7088 = vand.u32 %v6991, 4294901760
    %v7089 = vsub.f32 %v6991, %v7088
    %v7090 = vand.u32 %v7089, 4294901760
    %7091 = vmatmul.f32.gmra.mxu0 %v7090
    %v7092 = vpop.f32.mrf.mxu0
    %v7093 = vadd.f32 %v7069, %v7092
    %7094 = vdwg.mxu0
    %7095 = vmatpush.xpose.msra.mxu0 0.0
    %7096 = vmatpush.xpose.msra.mxu0 0.0
    %7097 = vmatpush.xpose.msra.mxu0 0.0
    %7098 = vmatpush.xpose.msra.mxu0 0.0
    %7099 = vmatpush.xpose.msra.mxu0 0.0
    %7100 = vmatpush.xpose.msra.mxu0 0.0
    %7101 = vmatpush.xpose.msra.mxu0 0.0
    %7102 = vmatpush.xpose.msra.mxu0 0.0
    %7103 = vmatpush.xpose.msra.mxu0 0.0
    %7104 = vmatpush.xpose.msra.mxu0 0.0
    %7105 = vmatpush.xpose.msra.mxu0 0.0
    %7106 = vmatpush.xpose.msra.mxu0 0.0
    %7107 = vmatpush.xpose.msra.mxu0 0.0
    %7108 = vmatpush.xpose.msra.mxu0 0.0
    %7109 = vmatpush.xpose.msra.mxu0 0.0
    %v7110 = vand.u32 %v6993, 4294901760
    %v7111 = vsub.f32 %v6993, %v7110
    %v7112 = vand.u32 %v7111, 4294901760
    %7113 = vmatpush.xpose.msra.mxu0 %v7112
    %v7114 = vand.u32 %v6991, 4294901760
    %7115 = vmatmul.f32.gmra.mxu0 %v7114
    %v7116 = vpop.f32.mrf.mxu0
    %v7117 = vadd.f32 %v7093, %v7116
    %7118 = vdwg.mxu0
    %7119 = vmatpush.xpose.msra.mxu0 0.0
    %7120 = vmatpush.xpose.msra.mxu0 0.0
    %7121 = vmatpush.xpose.msra.mxu0 0.0
    %7122 = vmatpush.xpose.msra.mxu0 0.0
    %7123 = vmatpush.xpose.msra.mxu0 0.0
    %7124 = vmatpush.xpose.msra.mxu0 0.0
    %7125 = vmatpush.xpose.msra.mxu0 0.0
    %7126 = vmatpush.xpose.msra.mxu0 0.0
    %7127 = vmatpush.xpose.msra.mxu0 0.0
    %7128 = vmatpush.xpose.msra.mxu0 0.0
    %7129 = vmatpush.xpose.msra.mxu0 0.0
    %7130 = vmatpush.xpose.msra.mxu0 0.0
    %7131 = vmatpush.xpose.msra.mxu0 0.0
    %7132 = vmatpush.xpose.msra.mxu0 0.0
    %7133 = vmatpush.xpose.msra.mxu0 0.0
    %v7134 = vand.u32 %v6993, 4294901760
    %7135 = vmatpush.xpose.msra.mxu0 %v7134
    %v7136 = vand.u32 %v6991, 4294901760
    %7137 = vmatmul.f32.gmra.mxu0 %v7136
    %v7138 = vpop.f32.mrf.mxu0
    %v7139 = vadd.f32 %v7117, %v7138
    %7140 = vdwg.mxu0
    %v7141 = vmul.f32 %v7139, 0.35355338
    %v7142 = vsel %vm546, %v7141, -inf
    %7143 = vmax.xlane.f32.xlu0 %v7142
    %v7144 = vpop.xlane.xlu0 %7143
    %v7145 = vsub.f32 %v7141, %v7144
    %v7146 = vmul.f32 %v7145, 1.442695
    %v7147 = vpow.pop %v7146
    %v7148 = vsel %vm546, %v7147, 0.0
    %7149 = vadd.xlane.f32.xlu0 %v7148
    %v7150 = vpop.xlane.xlu0 %7149
    %v7151 = vrcp.pop %v7150
    %v7152 = vmul.f32 %v7150, %v7151
    %v7153 = vsub.f32 1.0, %v7152
    %v7154 = vmul.f32 %v7151, %v7153
    %v7155 = vadd.f32 %v7151, %v7154
    %vm7156 = vweird.f32 %v7150
    %vm7157 = vweird.f32 %v7151
    %vm7158 = vmor %vm7156, %vm7157
    %v7159 = vsel %vm7158, %v7151, %v7155
    %v7160 = vand.u32 2147483647, %v7150
    %vm7161 = vcmp.eq.f32.partialorder %v7160, 8.507059e+37
    %v7162 = vand.u32 %v7150, 2147483648
    %v7163 = vor.u32 1.1754944e-38, %v7162
    %v7164 = vsel %vm7161, %v7163, %v7159
    %v7165 = vmul.f32 %v7147, %v7164
    %7166 = vrot.lane.b32.xlu0 %v4729, 56
    %v7167 = vpop.permute.xlu0 %7166
    %v7170 = vsel %vm546, %v7165, 0
    %7172 = vmatpush.msra.mxu0 0.0
    %7173 = vmatpush.msra.mxu0 0.0
    %7174 = vmatpush.msra.mxu0 0.0
    %7175 = vmatpush.msra.mxu0 0.0
    %7176 = vmatpush.msra.mxu0 0.0
    %7177 = vmatpush.msra.mxu0 0.0
    %7178 = vmatpush.msra.mxu0 0.0
    %7179 = vmatpush.msra.mxu0 0.0
    %7180 = vmatpush.msra.mxu0 0.0
    %7181 = vmatpush.msra.mxu0 0.0
    %7182 = vmatpush.msra.mxu0 0.0
    %7183 = vmatpush.msra.mxu0 0.0
    %7184 = vmatpush.msra.mxu0 0.0
    %7185 = vmatpush.msra.mxu0 0.0
    %7186 = vmatpush.msra.mxu0 0.0
    %v7187 = vand.u32 %v7167, 4294901760
    %7188 = vmatpush.msra.mxu0 %v7187
    %v7189 = vand.u32 %v7170, 4294901760
    %v7190 = vsub.f32 %v7170, %v7189
    %v7191 = vand.u32 %v7190, 4294901760
    %v7192 = vsub.f32 %v7190, %v7191
    %v7193 = vand.u32 %v7192, 4294901760
    %7194 = vmatmul.f32.gmra.mxu0 %v7193
    %v7195 = vpop.f32.mrf.mxu0
    %v7196 = vadd.f32 0.0, %v7195
    %7197 = vdwg.mxu0
    %7198 = vmatpush.msra.mxu0 0.0
    %7199 = vmatpush.msra.mxu0 0.0
    %7200 = vmatpush.msra.mxu0 0.0
    %7201 = vmatpush.msra.mxu0 0.0
    %7202 = vmatpush.msra.mxu0 0.0
    %7203 = vmatpush.msra.mxu0 0.0
    %7204 = vmatpush.msra.mxu0 0.0
    %7205 = vmatpush.msra.mxu0 0.0
    %7206 = vmatpush.msra.mxu0 0.0
    %7207 = vmatpush.msra.mxu0 0.0
    %7208 = vmatpush.msra.mxu0 0.0
    %7209 = vmatpush.msra.mxu0 0.0
    %7210 = vmatpush.msra.mxu0 0.0
    %7211 = vmatpush.msra.mxu0 0.0
    %7212 = vmatpush.msra.mxu0 0.0
    %v7213 = vand.u32 %v7167, 4294901760
    %v7214 = vsub.f32 %v7167, %v7213
    %v7215 = vand.u32 %v7214, 4294901760
    %v7216 = vsub.f32 %v7214, %v7215
    %v7217 = vand.u32 %v7216, 4294901760
    %7218 = vmatpush.msra.mxu0 %v7217
    %v7219 = vand.u32 %v7170, 4294901760
    %7220 = vmatmul.f32.gmra.mxu0 %v7219
    %v7221 = vpop.f32.mrf.mxu0
    %v7222 = vadd.f32 %v7196, %v7221
    %7223 = vdwg.mxu0
    %7224 = vmatpush.msra.mxu0 0.0
    %7225 = vmatpush.msra.mxu0 0.0
    %7226 = vmatpush.msra.mxu0 0.0
    %7227 = vmatpush.msra.mxu0 0.0
    %7228 = vmatpush.msra.mxu0 0.0
    %7229 = vmatpush.msra.mxu0 0.0
    %7230 = vmatpush.msra.mxu0 0.0
    %7231 = vmatpush.msra.mxu0 0.0
    %7232 = vmatpush.msra.mxu0 0.0
    %7233 = vmatpush.msra.mxu0 0.0
    %7234 = vmatpush.msra.mxu0 0.0
    %7235 = vmatpush.msra.mxu0 0.0
    %7236 = vmatpush.msra.mxu0 0.0
    %7237 = vmatpush.msra.mxu0 0.0
    %7238 = vmatpush.msra.mxu0 0.0
    %v7239 = vand.u32 %v7167, 4294901760
    %v7240 = vsub.f32 %v7167, %v7239
    %7241 = vmatpush.msra.mxu0 %v7240
    %v7242 = vand.u32 %v7170, 4294901760
    %v7243 = vsub.f32 %v7170, %v7242
    %7244 = vmatmul.f32.gmra.mxu0 %v7243
    %v7245 = vpop.f32.mrf.mxu0
    %v7246 = vadd.f32 %v7222, %v7245
    %7247 = vdwg.mxu0
    %7248 = vmatpush.msra.mxu0 0.0
    %7249 = vmatpush.msra.mxu0 0.0
    %7250 = vmatpush.msra.mxu0 0.0
    %7251 = vmatpush.msra.mxu0 0.0
    %7252 = vmatpush.msra.mxu0 0.0
    %7253 = vmatpush.msra.mxu0 0.0
    %7254 = vmatpush.msra.mxu0 0.0
    %7255 = vmatpush.msra.mxu0 0.0
    %7256 = vmatpush.msra.mxu0 0.0
    %7257 = vmatpush.msra.mxu0 0.0
    %7258 = vmatpush.msra.mxu0 0.0
    %7259 = vmatpush.msra.mxu0 0.0
    %7260 = vmatpush.msra.mxu0 0.0
    %7261 = vmatpush.msra.mxu0 0.0
    %7262 = vmatpush.msra.mxu0 0.0
    %v7263 = vand.u32 %v7167, 4294901760
    %7264 = vmatpush.msra.mxu0 %v7263
    %v7265 = vand.u32 %v7170, 4294901760
    %v7266 = vsub.f32 %v7170, %v7265
    %v7267 = vand.u32 %v7266, 4294901760
    %7268 = vmatmul.f32.gmra.mxu0 %v7267
    %v7269 = vpop.f32.mrf.mxu0
    %v7270 = vadd.f32 %v7246, %v7269
    %7271 = vdwg.mxu0
    %7272 = vmatpush.msra.mxu0 0.0
    %7273 = vmatpush.msra.mxu0 0.0
    %7274 = vmatpush.msra.mxu0 0.0
    %7275 = vmatpush.msra.mxu0 0.0
    %7276 = vmatpush.msra.mxu0 0.0
    %7277 = vmatpush.msra.mxu0 0.0
    %7278 = vmatpush.msra.mxu0 0.0
    %7279 = vmatpush.msra.mxu0 0.0
    %7280 = vmatpush.msra.mxu0 0.0
    %7281 = vmatpush.msra.mxu0 0.0
    %7282 = vmatpush.msra.mxu0 0.0
    %7283 = vmatpush.msra.mxu0 0.0
    %7284 = vmatpush.msra.mxu0 0.0
    %7285 = vmatpush.msra.mxu0 0.0
    %7286 = vmatpush.msra.mxu0 0.0
    %v7287 = vand.u32 %v7167, 4294901760
    %v7288 = vsub.f32 %v7167, %v7287
    %v7289 = vand.u32 %v7288, 4294901760
    %7290 = vmatpush.msra.mxu0 %v7289
    %v7291 = vand.u32 %v7170, 4294901760
    %7292 = vmatmul.f32.gmra.mxu0 %v7291
    %v7293 = vpop.f32.mrf.mxu0
    %v7294 = vadd.f32 %v7270, %v7293
    %7295 = vdwg.mxu0
    %7296 = vmatpush.msra.mxu0 0.0
    %7297 = vmatpush.msra.mxu0 0.0
    %7298 = vmatpush.msra.mxu0 0.0
    %7299 = vmatpush.msra.mxu0 0.0
    %7300 = vmatpush.msra.mxu0 0.0
    %7301 = vmatpush.msra.mxu0 0.0
    %7302 = vmatpush.msra.mxu0 0.0
    %7303 = vmatpush.msra.mxu0 0.0
    %7304 = vmatpush.msra.mxu0 0.0
    %7305 = vmatpush.msra.mxu0 0.0
    %7306 = vmatpush.msra.mxu0 0.0
    %7307 = vmatpush.msra.mxu0 0.0
    %7308 = vmatpush.msra.mxu0 0.0
    %7309 = vmatpush.msra.mxu0 0.0
    %7310 = vmatpush.msra.mxu0 0.0
    %v7311 = vand.u32 %v7167, 4294901760
    %7312 = vmatpush.msra.mxu0 %v7311
    %v7313 = vand.u32 %v7170, 4294901760
    %7314 = vmatmul.f32.gmra.mxu0 %v7313
    %v7315 = vpop.f32.mrf.mxu0
    %v7316 = vadd.f32 %v7294, %v7315
    %7317 = vdwg.mxu0
    %v7319 = vsel %vm546, %v7316, 0
    %7321 = vmatpush.msra.mxu0 0.0
    %7322 = vmatpush.msra.mxu0 0.0
    %7323 = vmatpush.msra.mxu0 0.0
    %7324 = vmatpush.msra.mxu0 0.0
    %7325 = vmatpush.msra.mxu0 0.0
    %7326 = vmatpush.msra.mxu0 0.0
    %7327 = vmatpush.msra.mxu0 0.0
    %7328 = vmatpush.msra.mxu0 0.0
    %7329 = vmatpush.msra.mxu0 0.0
    %7330 = vmatpush.msra.mxu0 0.0
    %7331 = vmatpush.msra.mxu0 0.0
    %7332 = vmatpush.msra.mxu0 0.0
    %7333 = vmatpush.msra.mxu0 0.0
    %7334 = vmatpush.msra.mxu0 0.0
    %7335 = vmatpush.msra.mxu0 0.0
    %v7336 = vand.u32 %v4732, 4294901760
    %7337 = vmatpush.msra.mxu0 %v7336
    %v7338 = vand.u32 %v7319, 4294901760
    %v7339 = vsub.f32 %v7319, %v7338
    %v7340 = vand.u32 %v7339, 4294901760
    %v7341 = vsub.f32 %v7339, %v7340
    %v7342 = vand.u32 %v7341, 4294901760
    %7343 = vmatmul.f32.gmra.mxu0 %v7342
    %v7344 = vpop.f32.mrf.mxu0
    %v7345 = vadd.f32 0.0, %v7344
    %7346 = vdwg.mxu0
    %7347 = vmatpush.msra.mxu0 0.0
    %7348 = vmatpush.msra.mxu0 0.0
    %7349 = vmatpush.msra.mxu0 0.0
    %7350 = vmatpush.msra.mxu0 0.0
    %7351 = vmatpush.msra.mxu0 0.0
    %7352 = vmatpush.msra.mxu0 0.0
    %7353 = vmatpush.msra.mxu0 0.0
    %7354 = vmatpush.msra.mxu0 0.0
    %7355 = vmatpush.msra.mxu0 0.0
    %7356 = vmatpush.msra.mxu0 0.0
    %7357 = vmatpush.msra.mxu0 0.0
    %7358 = vmatpush.msra.mxu0 0.0
    %7359 = vmatpush.msra.mxu0 0.0
    %7360 = vmatpush.msra.mxu0 0.0
    %7361 = vmatpush.msra.mxu0 0.0
    %v7362 = vand.u32 %v4732, 4294901760
    %v7363 = vsub.f32 %v4732, %v7362
    %v7364 = vand.u32 %v7363, 4294901760
    %v7365 = vsub.f32 %v7363, %v7364
    %v7366 = vand.u32 %v7365, 4294901760
    %7367 = vmatpush.msra.mxu0 %v7366
    %v7368 = vand.u32 %v7319, 4294901760
    %7369 = vmatmul.f32.gmra.mxu0 %v7368
    %v7370 = vpop.f32.mrf.mxu0
    %v7371 = vadd.f32 %v7345, %v7370
    %7372 = vdwg.mxu0
    %7373 = vmatpush.msra.mxu0 0.0
    %7374 = vmatpush.msra.mxu0 0.0
    %7375 = vmatpush.msra.mxu0 0.0
    %7376 = vmatpush.msra.mxu0 0.0
    %7377 = vmatpush.msra.mxu0 0.0
    %7378 = vmatpush.msra.mxu0 0.0
    %7379 = vmatpush.msra.mxu0 0.0
    %7380 = vmatpush.msra.mxu0 0.0
    %7381 = vmatpush.msra.mxu0 0.0
    %7382 = vmatpush.msra.mxu0 0.0
    %7383 = vmatpush.msra.mxu0 0.0
    %7384 = vmatpush.msra.mxu0 0.0
    %7385 = vmatpush.msra.mxu0 0.0
    %7386 = vmatpush.msra.mxu0 0.0
    %7387 = vmatpush.msra.mxu0 0.0
    %v7388 = vand.u32 %v4732, 4294901760
    %v7389 = vsub.f32 %v4732, %v7388
    %7390 = vmatpush.msra.mxu0 %v7389
    %v7391 = vand.u32 %v7319, 4294901760
    %v7392 = vsub.f32 %v7319, %v7391
    %7393 = vmatmul.f32.gmra.mxu0 %v7392
    %v7394 = vpop.f32.mrf.mxu0
    %v7395 = vadd.f32 %v7371, %v7394
    %7396 = vdwg.mxu0
    %7397 = vmatpush.msra.mxu0 0.0
    %7398 = vmatpush.msra.mxu0 0.0
    %7399 = vmatpush.msra.mxu0 0.0
    %7400 = vmatpush.msra.mxu0 0.0
    %7401 = vmatpush.msra.mxu0 0.0
    %7402 = vmatpush.msra.mxu0 0.0
    %7403 = vmatpush.msra.mxu0 0.0
    %7404 = vmatpush.msra.mxu0 0.0
    %7405 = vmatpush.msra.mxu0 0.0
    %7406 = vmatpush.msra.mxu0 0.0
    %7407 = vmatpush.msra.mxu0 0.0
    %7408 = vmatpush.msra.mxu0 0.0
    %7409 = vmatpush.msra.mxu0 0.0
    %7410 = vmatpush.msra.mxu0 0.0
    %7411 = vmatpush.msra.mxu0 0.0
    %v7412 = vand.u32 %v4732, 4294901760
    %7413 = vmatpush.msra.mxu0 %v7412
    %v7414 = vand.u32 %v7319, 4294901760
    %v7415 = vsub.f32 %v7319, %v7414
    %v7416 = vand.u32 %v7415, 4294901760
    %7417 = vmatmul.f32.gmra.mxu0 %v7416
    %v7418 = vpop.f32.mrf.mxu0
    %v7419 = vadd.f32 %v7395, %v7418
    %7420 = vdwg.mxu0
    %7421 = vmatpush.msra.mxu0 0.0
    %7422 = vmatpush.msra.mxu0 0.0
    %7423 = vmatpush.msra.mxu0 0.0
    %7424 = vmatpush.msra.mxu0 0.0
    %7425 = vmatpush.msra.mxu0 0.0
    %7426 = vmatpush.msra.mxu0 0.0
    %7427 = vmatpush.msra.mxu0 0.0
    %7428 = vmatpush.msra.mxu0 0.0
    %7429 = vmatpush.msra.mxu0 0.0
    %7430 = vmatpush.msra.mxu0 0.0
    %7431 = vmatpush.msra.mxu0 0.0
    %7432 = vmatpush.msra.mxu0 0.0
    %7433 = vmatpush.msra.mxu0 0.0
    %7434 = vmatpush.msra.mxu0 0.0
    %7435 = vmatpush.msra.mxu0 0.0
    %v7436 = vand.u32 %v4732, 4294901760
    %v7437 = vsub.f32 %v4732, %v7436
    %v7438 = vand.u32 %v7437, 4294901760
    %7439 = vmatpush.msra.mxu0 %v7438
    %v7440 = vand.u32 %v7319, 4294901760
    %7441 = vmatmul.f32.gmra.mxu0 %v7440
    %v7442 = vpop.f32.mrf.mxu0
    %v7443 = vadd.f32 %v7419, %v7442
    %7444 = vdwg.mxu0
    %7445 = vmatpush.msra.mxu0 0.0
    %7446 = vmatpush.msra.mxu0 0.0
    %7447 = vmatpush.msra.mxu0 0.0
    %7448 = vmatpush.msra.mxu0 0.0
    %7449 = vmatpush.msra.mxu0 0.0
    %7450 = vmatpush.msra.mxu0 0.0
    %7451 = vmatpush.msra.mxu0 0.0
    %7452 = vmatpush.msra.mxu0 0.0
    %7453 = vmatpush.msra.mxu0 0.0
    %7454 = vmatpush.msra.mxu0 0.0
    %7455 = vmatpush.msra.mxu0 0.0
    %7456 = vmatpush.msra.mxu0 0.0
    %7457 = vmatpush.msra.mxu0 0.0
    %7458 = vmatpush.msra.mxu0 0.0
    %7459 = vmatpush.msra.mxu0 0.0
    %v7460 = vand.u32 %v4732, 4294901760
    %7461 = vmatpush.msra.mxu0 %v7460
    %v7462 = vand.u32 %v7319, 4294901760
    %7463 = vmatmul.f32.gmra.mxu0 %v7462
    %v7464 = vpop.f32.mrf.mxu0
    %v7465 = vadd.f32 %v7443, %v7464
    %7466 = vdwg.mxu0
    %v7468 = vsel %vm546, %v6985, 0
    %7470 = vmatpush.msra.mxu0 0.0
    %7471 = vmatpush.msra.mxu0 0.0
    %7472 = vmatpush.msra.mxu0 0.0
    %7473 = vmatpush.msra.mxu0 0.0
    %7474 = vmatpush.msra.mxu0 0.0
    %7475 = vmatpush.msra.mxu0 0.0
    %7476 = vmatpush.msra.mxu0 0.0
    %7477 = vmatpush.msra.mxu0 0.0
    %7478 = vmatpush.msra.mxu0 0.0
    %7479 = vmatpush.msra.mxu0 0.0
    %7480 = vmatpush.msra.mxu0 0.0
    %7481 = vmatpush.msra.mxu0 0.0
    %7482 = vmatpush.msra.mxu0 0.0
    %7483 = vmatpush.msra.mxu0 0.0
    %7484 = vmatpush.msra.mxu0 0.0
    %v7485 = vand.u32 %v4731, 4294901760
    %7486 = vmatpush.msra.mxu0 %v7485
    %v7487 = vand.u32 %v7468, 4294901760
    %v7488 = vsub.f32 %v7468, %v7487
    %v7489 = vand.u32 %v7488, 4294901760
    %v7490 = vsub.f32 %v7488, %v7489
    %v7491 = vand.u32 %v7490, 4294901760
    %7492 = vmatmul.f32.gmra.mxu0 %v7491
    %v7493 = vpop.f32.mrf.mxu0
    %v7494 = vadd.f32 %v7465, %v7493
    %7495 = vdwg.mxu0
    %7496 = vmatpush.msra.mxu0 0.0
    %7497 = vmatpush.msra.mxu0 0.0
    %7498 = vmatpush.msra.mxu0 0.0
    %7499 = vmatpush.msra.mxu0 0.0
    %7500 = vmatpush.msra.mxu0 0.0
    %7501 = vmatpush.msra.mxu0 0.0
    %7502 = vmatpush.msra.mxu0 0.0
    %7503 = vmatpush.msra.mxu0 0.0
    %7504 = vmatpush.msra.mxu0 0.0
    %7505 = vmatpush.msra.mxu0 0.0
    %7506 = vmatpush.msra.mxu0 0.0
    %7507 = vmatpush.msra.mxu0 0.0
    %7508 = vmatpush.msra.mxu0 0.0
    %7509 = vmatpush.msra.mxu0 0.0
    %7510 = vmatpush.msra.mxu0 0.0
    %v7511 = vand.u32 %v4731, 4294901760
    %v7512 = vsub.f32 %v4731, %v7511
    %v7513 = vand.u32 %v7512, 4294901760
    %v7514 = vsub.f32 %v7512, %v7513
    %v7515 = vand.u32 %v7514, 4294901760
    %7516 = vmatpush.msra.mxu0 %v7515
    %v7517 = vand.u32 %v7468, 4294901760
    %7518 = vmatmul.f32.gmra.mxu0 %v7517
    %v7519 = vpop.f32.mrf.mxu0
    %v7520 = vadd.f32 %v7494, %v7519
    %7521 = vdwg.mxu0
    %7522 = vmatpush.msra.mxu0 0.0
    %7523 = vmatpush.msra.mxu0 0.0
    %7524 = vmatpush.msra.mxu0 0.0
    %7525 = vmatpush.msra.mxu0 0.0
    %7526 = vmatpush.msra.mxu0 0.0
    %7527 = vmatpush.msra.mxu0 0.0
    %7528 = vmatpush.msra.mxu0 0.0
    %7529 = vmatpush.msra.mxu0 0.0
    %7530 = vmatpush.msra.mxu0 0.0
    %7531 = vmatpush.msra.mxu0 0.0
    %7532 = vmatpush.msra.mxu0 0.0
    %7533 = vmatpush.msra.mxu0 0.0
    %7534 = vmatpush.msra.mxu0 0.0
    %7535 = vmatpush.msra.mxu0 0.0
    %7536 = vmatpush.msra.mxu0 0.0
    %v7537 = vand.u32 %v4731, 4294901760
    %v7538 = vsub.f32 %v4731, %v7537
    %7539 = vmatpush.msra.mxu0 %v7538
    %v7540 = vand.u32 %v7468, 4294901760
    %v7541 = vsub.f32 %v7468, %v7540
    %7542 = vmatmul.f32.gmra.mxu0 %v7541
    %v7543 = vpop.f32.mrf.mxu0
    %v7544 = vadd.f32 %v7520, %v7543
    %7545 = vdwg.mxu0
    %7546 = vmatpush.msra.mxu0 0.0
    %7547 = vmatpush.msra.mxu0 0.0
    %7548 = vmatpush.msra.mxu0 0.0
    %7549 = vmatpush.msra.mxu0 0.0
    %7550 = vmatpush.msra.mxu0 0.0
    %7551 = vmatpush.msra.mxu0 0.0
    %7552 = vmatpush.msra.mxu0 0.0
    %7553 = vmatpush.msra.mxu0 0.0
    %7554 = vmatpush.msra.mxu0 0.0
    %7555 = vmatpush.msra.mxu0 0.0
    %7556 = vmatpush.msra.mxu0 0.0
    %7557 = vmatpush.msra.mxu0 0.0
    %7558 = vmatpush.msra.mxu0 0.0
    %7559 = vmatpush.msra.mxu0 0.0
    %7560 = vmatpush.msra.mxu0 0.0
    %v7561 = vand.u32 %v4731, 4294901760
    %7562 = vmatpush.msra.mxu0 %v7561
    %v7563 = vand.u32 %v7468, 4294901760
    %v7564 = vsub.f32 %v7468, %v7563
    %v7565 = vand.u32 %v7564, 4294901760
    %7566 = vmatmul.f32.gmra.mxu0 %v7565
    %v7567 = vpop.f32.mrf.mxu0
    %v7568 = vadd.f32 %v7544, %v7567
    %7569 = vdwg.mxu0
    %7570 = vmatpush.msra.mxu0 0.0
    %7571 = vmatpush.msra.mxu0 0.0
    %7572 = vmatpush.msra.mxu0 0.0
    %7573 = vmatpush.msra.mxu0 0.0
    %7574 = vmatpush.msra.mxu0 0.0
    %7575 = vmatpush.msra.mxu0 0.0
    %7576 = vmatpush.msra.mxu0 0.0
    %7577 = vmatpush.msra.mxu0 0.0
    %7578 = vmatpush.msra.mxu0 0.0
    %7579 = vmatpush.msra.mxu0 0.0
    %7580 = vmatpush.msra.mxu0 0.0
    %7581 = vmatpush.msra.mxu0 0.0
    %7582 = vmatpush.msra.mxu0 0.0
    %7583 = vmatpush.msra.mxu0 0.0
    %7584 = vmatpush.msra.mxu0 0.0
    %v7585 = vand.u32 %v4731, 4294901760
    %v7586 = vsub.f32 %v4731, %v7585
    %v7587 = vand.u32 %v7586, 4294901760
    %7588 = vmatpush.msra.mxu0 %v7587
    %v7589 = vand.u32 %v7468, 4294901760
    %7590 = vmatmul.f32.gmra.mxu0 %v7589
    %v7591 = vpop.f32.mrf.mxu0
    %v7592 = vadd.f32 %v7568, %v7591
    %7593 = vdwg.mxu0
    %7594 = vmatpush.msra.mxu0 0.0
    %7595 = vmatpush.msra.mxu0 0.0
    %7596 = vmatpush.msra.mxu0 0.0
    %7597 = vmatpush.msra.mxu0 0.0
    %7598 = vmatpush.msra.mxu0 0.0
    %7599 = vmatpush.msra.mxu0 0.0
    %7600 = vmatpush.msra.mxu0 0.0
    %7601 = vmatpush.msra.mxu0 0.0
    %7602 = vmatpush.msra.mxu0 0.0
    %7603 = vmatpush.msra.mxu0 0.0
    %7604 = vmatpush.msra.mxu0 0.0
    %7605 = vmatpush.msra.mxu0 0.0
    %7606 = vmatpush.msra.mxu0 0.0
    %7607 = vmatpush.msra.mxu0 0.0
    %7608 = vmatpush.msra.mxu0 0.0
    %v7609 = vand.u32 %v4731, 4294901760
    %7610 = vmatpush.msra.mxu0 %v7609
    %v7611 = vand.u32 %v7468, 4294901760
    %7612 = vmatmul.f32.gmra.mxu0 %v7611
    %v7613 = vpop.f32.mrf.mxu0
    %v7614 = vadd.f32 %v7592, %v7613
    %7615 = vdwg.mxu0
    %7616 = vrot.lane.b32.xlu0 %v4729, 112
    %v7617 = vpop.permute.xlu0 %7616
    %7618 = vrot.lane.b32.xlu0 %v4729, 80
    %v7619 = vpop.permute.xlu0 %7618
    %v7620 = vsel %vm546, %v7617, 0
    %v7622 = vsel %vm546, %v7619, 0
    %7624 = vmatpush.xpose.msra.mxu0 0.0
    %7625 = vmatpush.xpose.msra.mxu0 0.0
    %7626 = vmatpush.xpose.msra.mxu0 0.0
    %7627 = vmatpush.xpose.msra.mxu0 0.0
    %7628 = vmatpush.xpose.msra.mxu0 0.0
    %7629 = vmatpush.xpose.msra.mxu0 0.0
    %7630 = vmatpush.xpose.msra.mxu0 0.0
    %7631 = vmatpush.xpose.msra.mxu0 0.0
    %7632 = vmatpush.xpose.msra.mxu0 0.0
    %7633 = vmatpush.xpose.msra.mxu0 0.0
    %7634 = vmatpush.xpose.msra.mxu0 0.0
    %7635 = vmatpush.xpose.msra.mxu0 0.0
    %7636 = vmatpush.xpose.msra.mxu0 0.0
    %7637 = vmatpush.xpose.msra.mxu0 0.0
    %7638 = vmatpush.xpose.msra.mxu0 0.0
    %v7639 = vand.u32 %v7622, 4294901760
    %7640 = vmatpush.xpose.msra.mxu0 %v7639
    %v7641 = vand.u32 %v7620, 4294901760
    %v7642 = vsub.f32 %v7620, %v7641
    %v7643 = vand.u32 %v7642, 4294901760
    %v7644 = vsub.f32 %v7642, %v7643
    %v7645 = vand.u32 %v7644, 4294901760
    %7646 = vmatmul.f32.gmra.mxu0 %v7645
    %v7647 = vpop.f32.mrf.mxu0
    %v7648 = vadd.f32 0.0, %v7647
    %7649 = vdwg.mxu0
    %7650 = vmatpush.xpose.msra.mxu0 0.0
    %7651 = vmatpush.xpose.msra.mxu0 0.0
    %7652 = vmatpush.xpose.msra.mxu0 0.0
    %7653 = vmatpush.xpose.msra.mxu0 0.0
    %7654 = vmatpush.xpose.msra.mxu0 0.0
    %7655 = vmatpush.xpose.msra.mxu0 0.0
    %7656 = vmatpush.xpose.msra.mxu0 0.0
    %7657 = vmatpush.xpose.msra.mxu0 0.0
    %7658 = vmatpush.xpose.msra.mxu0 0.0
    %7659 = vmatpush.xpose.msra.mxu0 0.0
    %7660 = vmatpush.xpose.msra.mxu0 0.0
    %7661 = vmatpush.xpose.msra.mxu0 0.0
    %7662 = vmatpush.xpose.msra.mxu0 0.0
    %7663 = vmatpush.xpose.msra.mxu0 0.0
    %7664 = vmatpush.xpose.msra.mxu0 0.0
    %v7665 = vand.u32 %v7622, 4294901760
    %v7666 = vsub.f32 %v7622, %v7665
    %v7667 = vand.u32 %v7666, 4294901760
    %v7668 = vsub.f32 %v7666, %v7667
    %v7669 = vand.u32 %v7668, 4294901760
    %7670 = vmatpush.xpose.msra.mxu0 %v7669
    %v7671 = vand.u32 %v7620, 4294901760
    %7672 = vmatmul.f32.gmra.mxu0 %v7671
    %v7673 = vpop.f32.mrf.mxu0
    %v7674 = vadd.f32 %v7648, %v7673
    %7675 = vdwg.mxu0
    %7676 = vmatpush.xpose.msra.mxu0 0.0
    %7677 = vmatpush.xpose.msra.mxu0 0.0
    %7678 = vmatpush.xpose.msra.mxu0 0.0
    %7679 = vmatpush.xpose.msra.mxu0 0.0
    %7680 = vmatpush.xpose.msra.mxu0 0.0
    %7681 = vmatpush.xpose.msra.mxu0 0.0
    %7682 = vmatpush.xpose.msra.mxu0 0.0
    %7683 = vmatpush.xpose.msra.mxu0 0.0
    %7684 = vmatpush.xpose.msra.mxu0 0.0
    %7685 = vmatpush.xpose.msra.mxu0 0.0
    %7686 = vmatpush.xpose.msra.mxu0 0.0
    %7687 = vmatpush.xpose.msra.mxu0 0.0
    %7688 = vmatpush.xpose.msra.mxu0 0.0
    %7689 = vmatpush.xpose.msra.mxu0 0.0
    %7690 = vmatpush.xpose.msra.mxu0 0.0
    %v7691 = vand.u32 %v7622, 4294901760
    %v7692 = vsub.f32 %v7622, %v7691
    %7693 = vmatpush.xpose.msra.mxu0 %v7692
    %v7694 = vand.u32 %v7620, 4294901760
    %v7695 = vsub.f32 %v7620, %v7694
    %7696 = vmatmul.f32.gmra.mxu0 %v7695
    %v7697 = vpop.f32.mrf.mxu0
    %v7698 = vadd.f32 %v7674, %v7697
    %7699 = vdwg.mxu0
    %7700 = vmatpush.xpose.msra.mxu0 0.0
    %7701 = vmatpush.xpose.msra.mxu0 0.0
    %7702 = vmatpush.xpose.msra.mxu0 0.0
    %7703 = vmatpush.xpose.msra.mxu0 0.0
    %7704 = vmatpush.xpose.msra.mxu0 0.0
    %7705 = vmatpush.xpose.msra.mxu0 0.0
    %7706 = vmatpush.xpose.msra.mxu0 0.0
    %7707 = vmatpush.xpose.msra.mxu0 0.0
    %7708 = vmatpush.xpose.msra.mxu0 0.0
    %7709 = vmatpush.xpose.msra.mxu0 0.0
    %7710 = vmatpush.xpose.msra.mxu0 0.0
    %7711 = vmatpush.xpose.msra.mxu0 0.0
    %7712 = vmatpush.xpose.msra.mxu0 0.0
    %7713 = vmatpush.xpose.msra.mxu0 0.0
    %7714 = vmatpush.xpose.msra.mxu0 0.0
    %v7715 = vand.u32 %v7622, 4294901760
    %7716 = vmatpush.xpose.msra.mxu0 %v7715
    %v7717 = vand.u32 %v7620, 4294901760
    %v7718 = vsub.f32 %v7620, %v7717
    %v7719 = vand.u32 %v7718, 4294901760
    %7720 = vmatmul.f32.gmra.mxu0 %v7719
    %v7721 = vpop.f32.mrf.mxu0
    %v7722 = vadd.f32 %v7698, %v7721
    %7723 = vdwg.mxu0
    %7724 = vmatpush.xpose.msra.mxu0 0.0
    %7725 = vmatpush.xpose.msra.mxu0 0.0
    %7726 = vmatpush.xpose.msra.mxu0 0.0
    %7727 = vmatpush.xpose.msra.mxu0 0.0
    %7728 = vmatpush.xpose.msra.mxu0 0.0
    %7729 = vmatpush.xpose.msra.mxu0 0.0
    %7730 = vmatpush.xpose.msra.mxu0 0.0
    %7731 = vmatpush.xpose.msra.mxu0 0.0
    %7732 = vmatpush.xpose.msra.mxu0 0.0
    %7733 = vmatpush.xpose.msra.mxu0 0.0
    %7734 = vmatpush.xpose.msra.mxu0 0.0
    %7735 = vmatpush.xpose.msra.mxu0 0.0
    %7736 = vmatpush.xpose.msra.mxu0 0.0
    %7737 = vmatpush.xpose.msra.mxu0 0.0
    %7738 = vmatpush.xpose.msra.mxu0 0.0
    %v7739 = vand.u32 %v7622, 4294901760
    %v7740 = vsub.f32 %v7622, %v7739
    %v7741 = vand.u32 %v7740, 4294901760
    %7742 = vmatpush.xpose.msra.mxu0 %v7741
    %v7743 = vand.u32 %v7620, 4294901760
    %7744 = vmatmul.f32.gmra.mxu0 %v7743
    %v7745 = vpop.f32.mrf.mxu0
    %v7746 = vadd.f32 %v7722, %v7745
    %7747 = vdwg.mxu0
    %7748 = vmatpush.xpose.msra.mxu0 0.0
    %7749 = vmatpush.xpose.msra.mxu0 0.0
    %7750 = vmatpush.xpose.msra.mxu0 0.0
    %7751 = vmatpush.xpose.msra.mxu0 0.0
    %7752 = vmatpush.xpose.msra.mxu0 0.0
    %7753 = vmatpush.xpose.msra.mxu0 0.0
    %7754 = vmatpush.xpose.msra.mxu0 0.0
    %7755 = vmatpush.xpose.msra.mxu0 0.0
    %7756 = vmatpush.xpose.msra.mxu0 0.0
    %7757 = vmatpush.xpose.msra.mxu0 0.0
    %7758 = vmatpush.xpose.msra.mxu0 0.0
    %7759 = vmatpush.xpose.msra.mxu0 0.0
    %7760 = vmatpush.xpose.msra.mxu0 0.0
    %7761 = vmatpush.xpose.msra.mxu0 0.0
    %7762 = vmatpush.xpose.msra.mxu0 0.0
    %v7763 = vand.u32 %v7622, 4294901760
    %7764 = vmatpush.xpose.msra.mxu0 %v7763
    %v7765 = vand.u32 %v7620, 4294901760
    %7766 = vmatmul.f32.gmra.mxu0 %v7765
    %v7767 = vpop.f32.mrf.mxu0
    %v7768 = vadd.f32 %v7746, %v7767
    %7769 = vdwg.mxu0
    %v7770 = vmul.f32 %v7768, 0.35355338
    %v7771 = vsel %vm546, %v7770, -inf
    %7772 = vmax.xlane.f32.xlu0 %v7771
    %v7773 = vpop.xlane.xlu0 %7772
    %v7774 = vsub.f32 %v7770, %v7773
    %v7775 = vmul.f32 %v7774, 1.442695
    %v7776 = vpow.pop %v7775
    %v7777 = vsel %vm546, %v7776, 0.0
    %7778 = vadd.xlane.f32.xlu0 %v7777
    %v7779 = vpop.xlane.xlu0 %7778
    %v7780 = vrcp.pop %v7779
    %v7781 = vmul.f32 %v7779, %v7780
    %v7782 = vsub.f32 1.0, %v7781
    %v7783 = vmul.f32 %v7780, %v7782
    %v7784 = vadd.f32 %v7780, %v7783
    %vm7785 = vweird.f32 %v7779
    %vm7786 = vweird.f32 %v7780
    %vm7787 = vmor %vm7785, %vm7786
    %v7788 = vsel %vm7787, %v7780, %v7784
    %v7789 = vand.u32 2147483647, %v7779
    %vm7790 = vcmp.eq.f32.partialorder %v7789, 8.507059e+37
    %v7791 = vand.u32 %v7779, 2147483648
    %v7792 = vor.u32 1.1754944e-38, %v7791
    %v7793 = vsel %vm7790, %v7792, %v7788
    %v7794 = vmul.f32 %v7776, %v7793
    %7795 = vrot.lane.b32.xlu0 %v4729, 48
    %v7796 = vpop.permute.xlu0 %7795
    %v7799 = vsel %vm546, %v7794, 0
    %7801 = vmatpush.msra.mxu0 0.0
    %7802 = vmatpush.msra.mxu0 0.0
    %7803 = vmatpush.msra.mxu0 0.0
    %7804 = vmatpush.msra.mxu0 0.0
    %7805 = vmatpush.msra.mxu0 0.0
    %7806 = vmatpush.msra.mxu0 0.0
    %7807 = vmatpush.msra.mxu0 0.0
    %7808 = vmatpush.msra.mxu0 0.0
    %7809 = vmatpush.msra.mxu0 0.0
    %7810 = vmatpush.msra.mxu0 0.0
    %7811 = vmatpush.msra.mxu0 0.0
    %7812 = vmatpush.msra.mxu0 0.0
    %7813 = vmatpush.msra.mxu0 0.0
    %7814 = vmatpush.msra.mxu0 0.0
    %7815 = vmatpush.msra.mxu0 0.0
    %v7816 = vand.u32 %v7796, 4294901760
    %7817 = vmatpush.msra.mxu0 %v7816
    %v7818 = vand.u32 %v7799, 4294901760
    %v7819 = vsub.f32 %v7799, %v7818
    %v7820 = vand.u32 %v7819, 4294901760
    %v7821 = vsub.f32 %v7819, %v7820
    %v7822 = vand.u32 %v7821, 4294901760
    %7823 = vmatmul.f32.gmra.mxu0 %v7822
    %v7824 = vpop.f32.mrf.mxu0
    %v7825 = vadd.f32 0.0, %v7824
    %7826 = vdwg.mxu0
    %7827 = vmatpush.msra.mxu0 0.0
    %7828 = vmatpush.msra.mxu0 0.0
    %7829 = vmatpush.msra.mxu0 0.0
    %7830 = vmatpush.msra.mxu0 0.0
    %7831 = vmatpush.msra.mxu0 0.0
    %7832 = vmatpush.msra.mxu0 0.0
    %7833 = vmatpush.msra.mxu0 0.0
    %7834 = vmatpush.msra.mxu0 0.0
    %7835 = vmatpush.msra.mxu0 0.0
    %7836 = vmatpush.msra.mxu0 0.0
    %7837 = vmatpush.msra.mxu0 0.0
    %7838 = vmatpush.msra.mxu0 0.0
    %7839 = vmatpush.msra.mxu0 0.0
    %7840 = vmatpush.msra.mxu0 0.0
    %7841 = vmatpush.msra.mxu0 0.0
    %v7842 = vand.u32 %v7796, 4294901760
    %v7843 = vsub.f32 %v7796, %v7842
    %v7844 = vand.u32 %v7843, 4294901760
    %v7845 = vsub.f32 %v7843, %v7844
    %v7846 = vand.u32 %v7845, 4294901760
    %7847 = vmatpush.msra.mxu0 %v7846
    %v7848 = vand.u32 %v7799, 4294901760
    %7849 = vmatmul.f32.gmra.mxu0 %v7848
    %v7850 = vpop.f32.mrf.mxu0
    %v7851 = vadd.f32 %v7825, %v7850
    %7852 = vdwg.mxu0
    %7853 = vmatpush.msra.mxu0 0.0
    %7854 = vmatpush.msra.mxu0 0.0
    %7855 = vmatpush.msra.mxu0 0.0
    %7856 = vmatpush.msra.mxu0 0.0
    %7857 = vmatpush.msra.mxu0 0.0
    %7858 = vmatpush.msra.mxu0 0.0
    %7859 = vmatpush.msra.mxu0 0.0
    %7860 = vmatpush.msra.mxu0 0.0
    %7861 = vmatpush.msra.mxu0 0.0
    %7862 = vmatpush.msra.mxu0 0.0
    %7863 = vmatpush.msra.mxu0 0.0
    %7864 = vmatpush.msra.mxu0 0.0
    %7865 = vmatpush.msra.mxu0 0.0
    %7866 = vmatpush.msra.mxu0 0.0
    %7867 = vmatpush.msra.mxu0 0.0
    %v7868 = vand.u32 %v7796, 4294901760
    %v7869 = vsub.f32 %v7796, %v7868
    %7870 = vmatpush.msra.mxu0 %v7869
    %v7871 = vand.u32 %v7799, 4294901760
    %v7872 = vsub.f32 %v7799, %v7871
    %7873 = vmatmul.f32.gmra.mxu0 %v7872
    %v7874 = vpop.f32.mrf.mxu0
    %v7875 = vadd.f32 %v7851, %v7874
    %7876 = vdwg.mxu0
    %7877 = vmatpush.msra.mxu0 0.0
    %7878 = vmatpush.msra.mxu0 0.0
    %7879 = vmatpush.msra.mxu0 0.0
    %7880 = vmatpush.msra.mxu0 0.0
    %7881 = vmatpush.msra.mxu0 0.0
    %7882 = vmatpush.msra.mxu0 0.0
    %7883 = vmatpush.msra.mxu0 0.0
    %7884 = vmatpush.msra.mxu0 0.0
    %7885 = vmatpush.msra.mxu0 0.0
    %7886 = vmatpush.msra.mxu0 0.0
    %7887 = vmatpush.msra.mxu0 0.0
    %7888 = vmatpush.msra.mxu0 0.0
    %7889 = vmatpush.msra.mxu0 0.0
    %7890 = vmatpush.msra.mxu0 0.0
    %7891 = vmatpush.msra.mxu0 0.0
    %v7892 = vand.u32 %v7796, 4294901760
    %7893 = vmatpush.msra.mxu0 %v7892
    %v7894 = vand.u32 %v7799, 4294901760
    %v7895 = vsub.f32 %v7799, %v7894
    %v7896 = vand.u32 %v7895, 4294901760
    %7897 = vmatmul.f32.gmra.mxu0 %v7896
    %v7898 = vpop.f32.mrf.mxu0
    %v7899 = vadd.f32 %v7875, %v7898
    %7900 = vdwg.mxu0
    %7901 = vmatpush.msra.mxu0 0.0
    %7902 = vmatpush.msra.mxu0 0.0
    %7903 = vmatpush.msra.mxu0 0.0
    %7904 = vmatpush.msra.mxu0 0.0
    %7905 = vmatpush.msra.mxu0 0.0
    %7906 = vmatpush.msra.mxu0 0.0
    %7907 = vmatpush.msra.mxu0 0.0
    %7908 = vmatpush.msra.mxu0 0.0
    %7909 = vmatpush.msra.mxu0 0.0
    %7910 = vmatpush.msra.mxu0 0.0
    %7911 = vmatpush.msra.mxu0 0.0
    %7912 = vmatpush.msra.mxu0 0.0
    %7913 = vmatpush.msra.mxu0 0.0
    %7914 = vmatpush.msra.mxu0 0.0
    %7915 = vmatpush.msra.mxu0 0.0
    %v7916 = vand.u32 %v7796, 4294901760
    %v7917 = vsub.f32 %v7796, %v7916
    %v7918 = vand.u32 %v7917, 4294901760
    %7919 = vmatpush.msra.mxu0 %v7918
    %v7920 = vand.u32 %v7799, 4294901760
    %7921 = vmatmul.f32.gmra.mxu0 %v7920
    %v7922 = vpop.f32.mrf.mxu0
    %v7923 = vadd.f32 %v7899, %v7922
    %7924 = vdwg.mxu0
    %7925 = vmatpush.msra.mxu0 0.0
    %7926 = vmatpush.msra.mxu0 0.0
    %7927 = vmatpush.msra.mxu0 0.0
    %7928 = vmatpush.msra.mxu0 0.0
    %7929 = vmatpush.msra.mxu0 0.0
    %7930 = vmatpush.msra.mxu0 0.0
    %7931 = vmatpush.msra.mxu0 0.0
    %7932 = vmatpush.msra.mxu0 0.0
    %7933 = vmatpush.msra.mxu0 0.0
    %7934 = vmatpush.msra.mxu0 0.0
    %7935 = vmatpush.msra.mxu0 0.0
    %7936 = vmatpush.msra.mxu0 0.0
    %7937 = vmatpush.msra.mxu0 0.0
    %7938 = vmatpush.msra.mxu0 0.0
    %7939 = vmatpush.msra.mxu0 0.0
    %v7940 = vand.u32 %v7796, 4294901760
    %7941 = vmatpush.msra.mxu0 %v7940
    %v7942 = vand.u32 %v7799, 4294901760
    %7943 = vmatmul.f32.gmra.mxu0 %v7942
    %v7944 = vpop.f32.mrf.mxu0
    %v7945 = vadd.f32 %v7923, %v7944
    %7946 = vdwg.mxu0
    %v7948 = vsel %vm546, %v7945, 0
    %7950 = vmatpush.msra.mxu0 0.0
    %7951 = vmatpush.msra.mxu0 0.0
    %7952 = vmatpush.msra.mxu0 0.0
    %7953 = vmatpush.msra.mxu0 0.0
    %7954 = vmatpush.msra.mxu0 0.0
    %7955 = vmatpush.msra.mxu0 0.0
    %7956 = vmatpush.msra.mxu0 0.0
    %7957 = vmatpush.msra.mxu0 0.0
    %7958 = vmatpush.msra.mxu0 0.0
    %7959 = vmatpush.msra.mxu0 0.0
    %7960 = vmatpush.msra.mxu0 0.0
    %7961 = vmatpush.msra.mxu0 0.0
    %7962 = vmatpush.msra.mxu0 0.0
    %7963 = vmatpush.msra.mxu0 0.0
    %7964 = vmatpush.msra.mxu0 0.0
    %v7965 = vand.u32 %v4733, 4294901760
    %7966 = vmatpush.msra.mxu0 %v7965
    %v7967 = vand.u32 %v7948, 4294901760
    %v7968 = vsub.f32 %v7948, %v7967
    %v7969 = vand.u32 %v7968, 4294901760
    %v7970 = vsub.f32 %v7968, %v7969
    %v7971 = vand.u32 %v7970, 4294901760
    %7972 = vmatmul.f32.gmra.mxu0 %v7971
    %v7973 = vpop.f32.mrf.mxu0
    %v7974 = vadd.f32 0.0, %v7973
    %7975 = vdwg.mxu0
    %7976 = vmatpush.msra.mxu0 0.0
    %7977 = vmatpush.msra.mxu0 0.0
    %7978 = vmatpush.msra.mxu0 0.0
    %7979 = vmatpush.msra.mxu0 0.0
    %7980 = vmatpush.msra.mxu0 0.0
    %7981 = vmatpush.msra.mxu0 0.0
    %7982 = vmatpush.msra.mxu0 0.0
    %7983 = vmatpush.msra.mxu0 0.0
    %7984 = vmatpush.msra.mxu0 0.0
    %7985 = vmatpush.msra.mxu0 0.0
    %7986 = vmatpush.msra.mxu0 0.0
    %7987 = vmatpush.msra.mxu0 0.0
    %7988 = vmatpush.msra.mxu0 0.0
    %7989 = vmatpush.msra.mxu0 0.0
    %7990 = vmatpush.msra.mxu0 0.0
    %v7991 = vand.u32 %v4733, 4294901760
    %v7992 = vsub.f32 %v4733, %v7991
    %v7993 = vand.u32 %v7992, 4294901760
    %v7994 = vsub.f32 %v7992, %v7993
    %v7995 = vand.u32 %v7994, 4294901760
    %7996 = vmatpush.msra.mxu0 %v7995
    %v7997 = vand.u32 %v7948, 4294901760
    %7998 = vmatmul.f32.gmra.mxu0 %v7997
    %v7999 = vpop.f32.mrf.mxu0
    %v8000 = vadd.f32 %v7974, %v7999
    %8001 = vdwg.mxu0
    %8002 = vmatpush.msra.mxu0 0.0
    %8003 = vmatpush.msra.mxu0 0.0
    %8004 = vmatpush.msra.mxu0 0.0
    %8005 = vmatpush.msra.mxu0 0.0
    %8006 = vmatpush.msra.mxu0 0.0
    %8007 = vmatpush.msra.mxu0 0.0
    %8008 = vmatpush.msra.mxu0 0.0
    %8009 = vmatpush.msra.mxu0 0.0
    %8010 = vmatpush.msra.mxu0 0.0
    %8011 = vmatpush.msra.mxu0 0.0
    %8012 = vmatpush.msra.mxu0 0.0
    %8013 = vmatpush.msra.mxu0 0.0
    %8014 = vmatpush.msra.mxu0 0.0
    %8015 = vmatpush.msra.mxu0 0.0
    %8016 = vmatpush.msra.mxu0 0.0
    %v8017 = vand.u32 %v4733, 4294901760
    %v8018 = vsub.f32 %v4733, %v8017
    %8019 = vmatpush.msra.mxu0 %v8018
    %v8020 = vand.u32 %v7948, 4294901760
    %v8021 = vsub.f32 %v7948, %v8020
    %8022 = vmatmul.f32.gmra.mxu0 %v8021
    %v8023 = vpop.f32.mrf.mxu0
    %v8024 = vadd.f32 %v8000, %v8023
    %8025 = vdwg.mxu0
    %8026 = vmatpush.msra.mxu0 0.0
    %8027 = vmatpush.msra.mxu0 0.0
    %8028 = vmatpush.msra.mxu0 0.0
    %8029 = vmatpush.msra.mxu0 0.0
    %8030 = vmatpush.msra.mxu0 0.0
    %8031 = vmatpush.msra.mxu0 0.0
    %8032 = vmatpush.msra.mxu0 0.0
    %8033 = vmatpush.msra.mxu0 0.0
    %8034 = vmatpush.msra.mxu0 0.0
    %8035 = vmatpush.msra.mxu0 0.0
    %8036 = vmatpush.msra.mxu0 0.0
    %8037 = vmatpush.msra.mxu0 0.0
    %8038 = vmatpush.msra.mxu0 0.0
    %8039 = vmatpush.msra.mxu0 0.0
    %8040 = vmatpush.msra.mxu0 0.0
    %v8041 = vand.u32 %v4733, 4294901760
    %8042 = vmatpush.msra.mxu0 %v8041
    %v8043 = vand.u32 %v7948, 4294901760
    %v8044 = vsub.f32 %v7948, %v8043
    %v8045 = vand.u32 %v8044, 4294901760
    %8046 = vmatmul.f32.gmra.mxu0 %v8045
    %v8047 = vpop.f32.mrf.mxu0
    %v8048 = vadd.f32 %v8024, %v8047
    %8049 = vdwg.mxu0
    %8050 = vmatpush.msra.mxu0 0.0
    %8051 = vmatpush.msra.mxu0 0.0
    %8052 = vmatpush.msra.mxu0 0.0
    %8053 = vmatpush.msra.mxu0 0.0
    %8054 = vmatpush.msra.mxu0 0.0
    %8055 = vmatpush.msra.mxu0 0.0
    %8056 = vmatpush.msra.mxu0 0.0
    %8057 = vmatpush.msra.mxu0 0.0
    %8058 = vmatpush.msra.mxu0 0.0
    %8059 = vmatpush.msra.mxu0 0.0
    %8060 = vmatpush.msra.mxu0 0.0
    %8061 = vmatpush.msra.mxu0 0.0
    %8062 = vmatpush.msra.mxu0 0.0
    %8063 = vmatpush.msra.mxu0 0.0
    %8064 = vmatpush.msra.mxu0 0.0
    %v8065 = vand.u32 %v4733, 4294901760
    %v8066 = vsub.f32 %v4733, %v8065
    %v8067 = vand.u32 %v8066, 4294901760
    %8068 = vmatpush.msra.mxu0 %v8067
    %v8069 = vand.u32 %v7948, 4294901760
    %8070 = vmatmul.f32.gmra.mxu0 %v8069
    %v8071 = vpop.f32.mrf.mxu0
    %v8072 = vadd.f32 %v8048, %v8071
    %8073 = vdwg.mxu0
    %8074 = vmatpush.msra.mxu0 0.0
    %8075 = vmatpush.msra.mxu0 0.0
    %8076 = vmatpush.msra.mxu0 0.0
    %8077 = vmatpush.msra.mxu0 0.0
    %8078 = vmatpush.msra.mxu0 0.0
    %8079 = vmatpush.msra.mxu0 0.0
    %8080 = vmatpush.msra.mxu0 0.0
    %8081 = vmatpush.msra.mxu0 0.0
    %8082 = vmatpush.msra.mxu0 0.0
    %8083 = vmatpush.msra.mxu0 0.0
    %8084 = vmatpush.msra.mxu0 0.0
    %8085 = vmatpush.msra.mxu0 0.0
    %8086 = vmatpush.msra.mxu0 0.0
    %8087 = vmatpush.msra.mxu0 0.0
    %8088 = vmatpush.msra.mxu0 0.0
    %v8089 = vand.u32 %v4733, 4294901760
    %8090 = vmatpush.msra.mxu0 %v8089
    %v8091 = vand.u32 %v7948, 4294901760
    %8092 = vmatmul.f32.gmra.mxu0 %v8091
    %v8093 = vpop.f32.mrf.mxu0
    %v8094 = vadd.f32 %v8072, %v8093
    %8095 = vdwg.mxu0
    %v8096 = vadd.f32 %v7614, %v8094
    %8097 = vrot.lane.b32.xlu0 %v4729, 104
    %v8098 = vpop.permute.xlu0 %8097
    %8099 = vrot.lane.b32.xlu0 %v4729, 72
    %v8100 = vpop.permute.xlu0 %8099
    %v8101 = vsel %vm546, %v8098, 0
    %v8103 = vsel %vm546, %v8100, 0
    %8105 = vmatpush.xpose.msra.mxu0 0.0
    %8106 = vmatpush.xpose.msra.mxu0 0.0
    %8107 = vmatpush.xpose.msra.mxu0 0.0
    %8108 = vmatpush.xpose.msra.mxu0 0.0
    %8109 = vmatpush.xpose.msra.mxu0 0.0
    %8110 = vmatpush.xpose.msra.mxu0 0.0
    %8111 = vmatpush.xpose.msra.mxu0 0.0
    %8112 = vmatpush.xpose.msra.mxu0 0.0
    %8113 = vmatpush.xpose.msra.mxu0 0.0
    %8114 = vmatpush.xpose.msra.mxu0 0.0
    %8115 = vmatpush.xpose.msra.mxu0 0.0
    %8116 = vmatpush.xpose.msra.mxu0 0.0
    %8117 = vmatpush.xpose.msra.mxu0 0.0
    %8118 = vmatpush.xpose.msra.mxu0 0.0
    %8119 = vmatpush.xpose.msra.mxu0 0.0
    %v8120 = vand.u32 %v8103, 4294901760
    %8121 = vmatpush.xpose.msra.mxu0 %v8120
    %v8122 = vand.u32 %v8101, 4294901760
    %v8123 = vsub.f32 %v8101, %v8122
    %v8124 = vand.u32 %v8123, 4294901760
    %v8125 = vsub.f32 %v8123, %v8124
    %v8126 = vand.u32 %v8125, 4294901760
    %8127 = vmatmul.f32.gmra.mxu0 %v8126
    %v8128 = vpop.f32.mrf.mxu0
    %v8129 = vadd.f32 0.0, %v8128
    %8130 = vdwg.mxu0
    %8131 = vmatpush.xpose.msra.mxu0 0.0
    %8132 = vmatpush.xpose.msra.mxu0 0.0
    %8133 = vmatpush.xpose.msra.mxu0 0.0
    %8134 = vmatpush.xpose.msra.mxu0 0.0
    %8135 = vmatpush.xpose.msra.mxu0 0.0
    %8136 = vmatpush.xpose.msra.mxu0 0.0
    %8137 = vmatpush.xpose.msra.mxu0 0.0
    %8138 = vmatpush.xpose.msra.mxu0 0.0
    %8139 = vmatpush.xpose.msra.mxu0 0.0
    %8140 = vmatpush.xpose.msra.mxu0 0.0
    %8141 = vmatpush.xpose.msra.mxu0 0.0
    %8142 = vmatpush.xpose.msra.mxu0 0.0
    %8143 = vmatpush.xpose.msra.mxu0 0.0
    %8144 = vmatpush.xpose.msra.mxu0 0.0
    %8145 = vmatpush.xpose.msra.mxu0 0.0
    %v8146 = vand.u32 %v8103, 4294901760
    %v8147 = vsub.f32 %v8103, %v8146
    %v8148 = vand.u32 %v8147, 4294901760
    %v8149 = vsub.f32 %v8147, %v8148
    %v8150 = vand.u32 %v8149, 4294901760
    %8151 = vmatpush.xpose.msra.mxu0 %v8150
    %v8152 = vand.u32 %v8101, 4294901760
    %8153 = vmatmul.f32.gmra.mxu0 %v8152
    %v8154 = vpop.f32.mrf.mxu0
    %v8155 = vadd.f32 %v8129, %v8154
    %8156 = vdwg.mxu0
    %8157 = vmatpush.xpose.msra.mxu0 0.0
    %8158 = vmatpush.xpose.msra.mxu0 0.0
    %8159 = vmatpush.xpose.msra.mxu0 0.0
    %8160 = vmatpush.xpose.msra.mxu0 0.0
    %8161 = vmatpush.xpose.msra.mxu0 0.0
    %8162 = vmatpush.xpose.msra.mxu0 0.0
    %8163 = vmatpush.xpose.msra.mxu0 0.0
    %8164 = vmatpush.xpose.msra.mxu0 0.0
    %8165 = vmatpush.xpose.msra.mxu0 0.0
    %8166 = vmatpush.xpose.msra.mxu0 0.0
    %8167 = vmatpush.xpose.msra.mxu0 0.0
    %8168 = vmatpush.xpose.msra.mxu0 0.0
    %8169 = vmatpush.xpose.msra.mxu0 0.0
    %8170 = vmatpush.xpose.msra.mxu0 0.0
    %8171 = vmatpush.xpose.msra.mxu0 0.0
    %v8172 = vand.u32 %v8103, 4294901760
    %v8173 = vsub.f32 %v8103, %v8172
    %8174 = vmatpush.xpose.msra.mxu0 %v8173
    %v8175 = vand.u32 %v8101, 4294901760
    %v8176 = vsub.f32 %v8101, %v8175
    %8177 = vmatmul.f32.gmra.mxu0 %v8176
    %v8178 = vpop.f32.mrf.mxu0
    %v8179 = vadd.f32 %v8155, %v8178
    %8180 = vdwg.mxu0
    %8181 = vmatpush.xpose.msra.mxu0 0.0
    %8182 = vmatpush.xpose.msra.mxu0 0.0
    %8183 = vmatpush.xpose.msra.mxu0 0.0
    %8184 = vmatpush.xpose.msra.mxu0 0.0
    %8185 = vmatpush.xpose.msra.mxu0 0.0
    %8186 = vmatpush.xpose.msra.mxu0 0.0
    %8187 = vmatpush.xpose.msra.mxu0 0.0
    %8188 = vmatpush.xpose.msra.mxu0 0.0
    %8189 = vmatpush.xpose.msra.mxu0 0.0
    %8190 = vmatpush.xpose.msra.mxu0 0.0
    %8191 = vmatpush.xpose.msra.mxu0 0.0
    %8192 = vmatpush.xpose.msra.mxu0 0.0
    %8193 = vmatpush.xpose.msra.mxu0 0.0
    %8194 = vmatpush.xpose.msra.mxu0 0.0
    %8195 = vmatpush.xpose.msra.mxu0 0.0
    %v8196 = vand.u32 %v8103, 4294901760
    %8197 = vmatpush.xpose.msra.mxu0 %v8196
    %v8198 = vand.u32 %v8101, 4294901760
    %v8199 = vsub.f32 %v8101, %v8198
    %v8200 = vand.u32 %v8199, 4294901760
    %8201 = vmatmul.f32.gmra.mxu0 %v8200
    %v8202 = vpop.f32.mrf.mxu0
    %v8203 = vadd.f32 %v8179, %v8202
    %8204 = vdwg.mxu0
    %8205 = vmatpush.xpose.msra.mxu0 0.0
    %8206 = vmatpush.xpose.msra.mxu0 0.0
    %8207 = vmatpush.xpose.msra.mxu0 0.0
    %8208 = vmatpush.xpose.msra.mxu0 0.0
    %8209 = vmatpush.xpose.msra.mxu0 0.0
    %8210 = vmatpush.xpose.msra.mxu0 0.0
    %8211 = vmatpush.xpose.msra.mxu0 0.0
    %8212 = vmatpush.xpose.msra.mxu0 0.0
    %8213 = vmatpush.xpose.msra.mxu0 0.0
    %8214 = vmatpush.xpose.msra.mxu0 0.0
    %8215 = vmatpush.xpose.msra.mxu0 0.0
    %8216 = vmatpush.xpose.msra.mxu0 0.0
    %8217 = vmatpush.xpose.msra.mxu0 0.0
    %8218 = vmatpush.xpose.msra.mxu0 0.0
    %8219 = vmatpush.xpose.msra.mxu0 0.0
    %v8220 = vand.u32 %v8103, 4294901760
    %v8221 = vsub.f32 %v8103, %v8220
    %v8222 = vand.u32 %v8221, 4294901760
    %8223 = vmatpush.xpose.msra.mxu0 %v8222
    %v8224 = vand.u32 %v8101, 4294901760
    %8225 = vmatmul.f32.gmra.mxu0 %v8224
    %v8226 = vpop.f32.mrf.mxu0
    %v8227 = vadd.f32 %v8203, %v8226
    %8228 = vdwg.mxu0
    %8229 = vmatpush.xpose.msra.mxu0 0.0
    %8230 = vmatpush.xpose.msra.mxu0 0.0
    %8231 = vmatpush.xpose.msra.mxu0 0.0
    %8232 = vmatpush.xpose.msra.mxu0 0.0
    %8233 = vmatpush.xpose.msra.mxu0 0.0
    %8234 = vmatpush.xpose.msra.mxu0 0.0
    %8235 = vmatpush.xpose.msra.mxu0 0.0
    %8236 = vmatpush.xpose.msra.mxu0 0.0
    %8237 = vmatpush.xpose.msra.mxu0 0.0
    %8238 = vmatpush.xpose.msra.mxu0 0.0
    %8239 = vmatpush.xpose.msra.mxu0 0.0
    %8240 = vmatpush.xpose.msra.mxu0 0.0
    %8241 = vmatpush.xpose.msra.mxu0 0.0
    %8242 = vmatpush.xpose.msra.mxu0 0.0
    %8243 = vmatpush.xpose.msra.mxu0 0.0
    %v8244 = vand.u32 %v8103, 4294901760
    %8245 = vmatpush.xpose.msra.mxu0 %v8244
    %v8246 = vand.u32 %v8101, 4294901760
    %8247 = vmatmul.f32.gmra.mxu0 %v8246
    %v8248 = vpop.f32.mrf.mxu0
    %v8249 = vadd.f32 %v8227, %v8248
    %8250 = vdwg.mxu0
    %v8251 = vmul.f32 %v8249, 0.35355338
    %v8252 = vsel %vm546, %v8251, -inf
    %8253 = vmax.xlane.f32.xlu0 %v8252
    %v8254 = vpop.xlane.xlu0 %8253
    %v8255 = vsub.f32 %v8251, %v8254
    %v8256 = vmul.f32 %v8255, 1.442695
    %v8257 = vpow.pop %v8256
    %v8258 = vsel %vm546, %v8257, 0.0
    %8259 = vadd.xlane.f32.xlu0 %v8258
    %v8260 = vpop.xlane.xlu0 %8259
    %v8261 = vrcp.pop %v8260
    %v8262 = vmul.f32 %v8260, %v8261
    %v8263 = vsub.f32 1.0, %v8262
    %v8264 = vmul.f32 %v8261, %v8263
    %v8265 = vadd.f32 %v8261, %v8264
    %vm8266 = vweird.f32 %v8260
    %vm8267 = vweird.f32 %v8261
    %vm8268 = vmor %vm8266, %vm8267
    %v8269 = vsel %vm8268, %v8261, %v8265
    %v8270 = vand.u32 2147483647, %v8260
    %vm8271 = vcmp.eq.f32.partialorder %v8270, 8.507059e+37
    %v8272 = vand.u32 %v8260, 2147483648
    %v8273 = vor.u32 1.1754944e-38, %v8272
    %v8274 = vsel %vm8271, %v8273, %v8269
    %v8275 = vmul.f32 %v8257, %v8274
    %8276 = vrot.lane.b32.xlu0 %v4729, 40
    %v8277 = vpop.permute.xlu0 %8276
    %v8280 = vsel %vm546, %v8275, 0
    %8282 = vmatpush.msra.mxu0 0.0
    %8283 = vmatpush.msra.mxu0 0.0
    %8284 = vmatpush.msra.mxu0 0.0
    %8285 = vmatpush.msra.mxu0 0.0
    %8286 = vmatpush.msra.mxu0 0.0
    %8287 = vmatpush.msra.mxu0 0.0
    %8288 = vmatpush.msra.mxu0 0.0
    %8289 = vmatpush.msra.mxu0 0.0
    %8290 = vmatpush.msra.mxu0 0.0
    %8291 = vmatpush.msra.mxu0 0.0
    %8292 = vmatpush.msra.mxu0 0.0
    %8293 = vmatpush.msra.mxu0 0.0
    %8294 = vmatpush.msra.mxu0 0.0
    %8295 = vmatpush.msra.mxu0 0.0
    %8296 = vmatpush.msra.mxu0 0.0
    %v8297 = vand.u32 %v8277, 4294901760
    %8298 = vmatpush.msra.mxu0 %v8297
    %v8299 = vand.u32 %v8280, 4294901760
    %v8300 = vsub.f32 %v8280, %v8299
    %v8301 = vand.u32 %v8300, 4294901760
    %v8302 = vsub.f32 %v8300, %v8301
    %v8303 = vand.u32 %v8302, 4294901760
    %8304 = vmatmul.f32.gmra.mxu0 %v8303
    %v8305 = vpop.f32.mrf.mxu0
    %v8306 = vadd.f32 0.0, %v8305
    %8307 = vdwg.mxu0
    %8308 = vmatpush.msra.mxu0 0.0
    %8309 = vmatpush.msra.mxu0 0.0
    %8310 = vmatpush.msra.mxu0 0.0
    %8311 = vmatpush.msra.mxu0 0.0
    %8312 = vmatpush.msra.mxu0 0.0
    %8313 = vmatpush.msra.mxu0 0.0
    %8314 = vmatpush.msra.mxu0 0.0
    %8315 = vmatpush.msra.mxu0 0.0
    %8316 = vmatpush.msra.mxu0 0.0
    %8317 = vmatpush.msra.mxu0 0.0
    %8318 = vmatpush.msra.mxu0 0.0
    %8319 = vmatpush.msra.mxu0 0.0
    %8320 = vmatpush.msra.mxu0 0.0
    %8321 = vmatpush.msra.mxu0 0.0
    %8322 = vmatpush.msra.mxu0 0.0
    %v8323 = vand.u32 %v8277, 4294901760
    %v8324 = vsub.f32 %v8277, %v8323
    %v8325 = vand.u32 %v8324, 4294901760
    %v8326 = vsub.f32 %v8324, %v8325
    %v8327 = vand.u32 %v8326, 4294901760
    %8328 = vmatpush.msra.mxu0 %v8327
    %v8329 = vand.u32 %v8280, 4294901760
    %8330 = vmatmul.f32.gmra.mxu0 %v8329
    %v8331 = vpop.f32.mrf.mxu0
    %v8332 = vadd.f32 %v8306, %v8331
    %8333 = vdwg.mxu0
    %8334 = vmatpush.msra.mxu0 0.0
    %8335 = vmatpush.msra.mxu0 0.0
    %8336 = vmatpush.msra.mxu0 0.0
    %8337 = vmatpush.msra.mxu0 0.0
    %8338 = vmatpush.msra.mxu0 0.0
    %8339 = vmatpush.msra.mxu0 0.0
    %8340 = vmatpush.msra.mxu0 0.0
    %8341 = vmatpush.msra.mxu0 0.0
    %8342 = vmatpush.msra.mxu0 0.0
    %8343 = vmatpush.msra.mxu0 0.0
    %8344 = vmatpush.msra.mxu0 0.0
    %8345 = vmatpush.msra.mxu0 0.0
    %8346 = vmatpush.msra.mxu0 0.0
    %8347 = vmatpush.msra.mxu0 0.0
    %8348 = vmatpush.msra.mxu0 0.0
    %v8349 = vand.u32 %v8277, 4294901760
    %v8350 = vsub.f32 %v8277, %v8349
    %8351 = vmatpush.msra.mxu0 %v8350
    %v8352 = vand.u32 %v8280, 4294901760
    %v8353 = vsub.f32 %v8280, %v8352
    %8354 = vmatmul.f32.gmra.mxu0 %v8353
    %v8355 = vpop.f32.mrf.mxu0
    %v8356 = vadd.f32 %v8332, %v8355
    %8357 = vdwg.mxu0
    %8358 = vmatpush.msra.mxu0 0.0
    %8359 = vmatpush.msra.mxu0 0.0
    %8360 = vmatpush.msra.mxu0 0.0
    %8361 = vmatpush.msra.mxu0 0.0
    %8362 = vmatpush.msra.mxu0 0.0
    %8363 = vmatpush.msra.mxu0 0.0
    %8364 = vmatpush.msra.mxu0 0.0
    %8365 = vmatpush.msra.mxu0 0.0
    %8366 = vmatpush.msra.mxu0 0.0
    %8367 = vmatpush.msra.mxu0 0.0
    %8368 = vmatpush.msra.mxu0 0.0
    %8369 = vmatpush.msra.mxu0 0.0
    %8370 = vmatpush.msra.mxu0 0.0
    %8371 = vmatpush.msra.mxu0 0.0
    %8372 = vmatpush.msra.mxu0 0.0
    %v8373 = vand.u32 %v8277, 4294901760
    %8374 = vmatpush.msra.mxu0 %v8373
    %v8375 = vand.u32 %v8280, 4294901760
    %v8376 = vsub.f32 %v8280, %v8375
    %v8377 = vand.u32 %v8376, 4294901760
    %8378 = vmatmul.f32.gmra.mxu0 %v8377
    %v8379 = vpop.f32.mrf.mxu0
    %v8380 = vadd.f32 %v8356, %v8379
    %8381 = vdwg.mxu0
    %8382 = vmatpush.msra.mxu0 0.0
    %8383 = vmatpush.msra.mxu0 0.0
    %8384 = vmatpush.msra.mxu0 0.0
    %8385 = vmatpush.msra.mxu0 0.0
    %8386 = vmatpush.msra.mxu0 0.0
    %8387 = vmatpush.msra.mxu0 0.0
    %8388 = vmatpush.msra.mxu0 0.0
    %8389 = vmatpush.msra.mxu0 0.0
    %8390 = vmatpush.msra.mxu0 0.0
    %8391 = vmatpush.msra.mxu0 0.0
    %8392 = vmatpush.msra.mxu0 0.0
    %8393 = vmatpush.msra.mxu0 0.0
    %8394 = vmatpush.msra.mxu0 0.0
    %8395 = vmatpush.msra.mxu0 0.0
    %8396 = vmatpush.msra.mxu0 0.0
    %v8397 = vand.u32 %v8277, 4294901760
    %v8398 = vsub.f32 %v8277, %v8397
    %v8399 = vand.u32 %v8398, 4294901760
    %8400 = vmatpush.msra.mxu0 %v8399
    %v8401 = vand.u32 %v8280, 4294901760
    %8402 = vmatmul.f32.gmra.mxu0 %v8401
    %v8403 = vpop.f32.mrf.mxu0
    %v8404 = vadd.f32 %v8380, %v8403
    %8405 = vdwg.mxu0
    %8406 = vmatpush.msra.mxu0 0.0
    %8407 = vmatpush.msra.mxu0 0.0
    %8408 = vmatpush.msra.mxu0 0.0
    %8409 = vmatpush.msra.mxu0 0.0
    %8410 = vmatpush.msra.mxu0 0.0
    %8411 = vmatpush.msra.mxu0 0.0
    %8412 = vmatpush.msra.mxu0 0.0
    %8413 = vmatpush.msra.mxu0 0.0
    %8414 = vmatpush.msra.mxu0 0.0
    %8415 = vmatpush.msra.mxu0 0.0
    %8416 = vmatpush.msra.mxu0 0.0
    %8417 = vmatpush.msra.mxu0 0.0
    %8418 = vmatpush.msra.mxu0 0.0
    %8419 = vmatpush.msra.mxu0 0.0
    %8420 = vmatpush.msra.mxu0 0.0
    %v8421 = vand.u32 %v8277, 4294901760
    %8422 = vmatpush.msra.mxu0 %v8421
    %v8423 = vand.u32 %v8280, 4294901760
    %8424 = vmatmul.f32.gmra.mxu0 %v8423
    %v8425 = vpop.f32.mrf.mxu0
    %v8426 = vadd.f32 %v8404, %v8425
    %8427 = vdwg.mxu0
    %v8429 = vsel %vm546, %v8426, 0
    %8431 = vmatpush.msra.mxu0 0.0
    %8432 = vmatpush.msra.mxu0 0.0
    %8433 = vmatpush.msra.mxu0 0.0
    %8434 = vmatpush.msra.mxu0 0.0
    %8435 = vmatpush.msra.mxu0 0.0
    %8436 = vmatpush.msra.mxu0 0.0
    %8437 = vmatpush.msra.mxu0 0.0
    %8438 = vmatpush.msra.mxu0 0.0
    %8439 = vmatpush.msra.mxu0 0.0
    %8440 = vmatpush.msra.mxu0 0.0
    %8441 = vmatpush.msra.mxu0 0.0
    %8442 = vmatpush.msra.mxu0 0.0
    %8443 = vmatpush.msra.mxu0 0.0
    %8444 = vmatpush.msra.mxu0 0.0
    %8445 = vmatpush.msra.mxu0 0.0
    %v8446 = vand.u32 %v4734, 4294901760
    %8447 = vmatpush.msra.mxu0 %v8446
    %v8448 = vand.u32 %v8429, 4294901760
    %v8449 = vsub.f32 %v8429, %v8448
    %v8450 = vand.u32 %v8449, 4294901760
    %v8451 = vsub.f32 %v8449, %v8450
    %v8452 = vand.u32 %v8451, 4294901760
    %8453 = vmatmul.f32.gmra.mxu0 %v8452
    %v8454 = vpop.f32.mrf.mxu0
    %v8455 = vadd.f32 0.0, %v8454
    %8456 = vdwg.mxu0
    %8457 = vmatpush.msra.mxu0 0.0
    %8458 = vmatpush.msra.mxu0 0.0
    %8459 = vmatpush.msra.mxu0 0.0
    %8460 = vmatpush.msra.mxu0 0.0
    %8461 = vmatpush.msra.mxu0 0.0
    %8462 = vmatpush.msra.mxu0 0.0
    %8463 = vmatpush.msra.mxu0 0.0
    %8464 = vmatpush.msra.mxu0 0.0
    %8465 = vmatpush.msra.mxu0 0.0
    %8466 = vmatpush.msra.mxu0 0.0
    %8467 = vmatpush.msra.mxu0 0.0
    %8468 = vmatpush.msra.mxu0 0.0
    %8469 = vmatpush.msra.mxu0 0.0
    %8470 = vmatpush.msra.mxu0 0.0
    %8471 = vmatpush.msra.mxu0 0.0
    %v8472 = vand.u32 %v4734, 4294901760
    %v8473 = vsub.f32 %v4734, %v8472
    %v8474 = vand.u32 %v8473, 4294901760
    %v8475 = vsub.f32 %v8473, %v8474
    %v8476 = vand.u32 %v8475, 4294901760
    %8477 = vmatpush.msra.mxu0 %v8476
    %v8478 = vand.u32 %v8429, 4294901760
    %8479 = vmatmul.f32.gmra.mxu0 %v8478
    %v8480 = vpop.f32.mrf.mxu0
    %v8481 = vadd.f32 %v8455, %v8480
    %8482 = vdwg.mxu0
    %8483 = vmatpush.msra.mxu0 0.0
    %8484 = vmatpush.msra.mxu0 0.0
    %8485 = vmatpush.msra.mxu0 0.0
    %8486 = vmatpush.msra.mxu0 0.0
    %8487 = vmatpush.msra.mxu0 0.0
    %8488 = vmatpush.msra.mxu0 0.0
    %8489 = vmatpush.msra.mxu0 0.0
    %8490 = vmatpush.msra.mxu0 0.0
    %8491 = vmatpush.msra.mxu0 0.0
    %8492 = vmatpush.msra.mxu0 0.0
    %8493 = vmatpush.msra.mxu0 0.0
    %8494 = vmatpush.msra.mxu0 0.0
    %8495 = vmatpush.msra.mxu0 0.0
    %8496 = vmatpush.msra.mxu0 0.0
    %8497 = vmatpush.msra.mxu0 0.0
    %v8498 = vand.u32 %v4734, 4294901760
    %v8499 = vsub.f32 %v4734, %v8498
    %8500 = vmatpush.msra.mxu0 %v8499
    %v8501 = vand.u32 %v8429, 4294901760
    %v8502 = vsub.f32 %v8429, %v8501
    %8503 = vmatmul.f32.gmra.mxu0 %v8502
    %v8504 = vpop.f32.mrf.mxu0
    %v8505 = vadd.f32 %v8481, %v8504
    %8506 = vdwg.mxu0
    %8507 = vmatpush.msra.mxu0 0.0
    %8508 = vmatpush.msra.mxu0 0.0
    %8509 = vmatpush.msra.mxu0 0.0
    %8510 = vmatpush.msra.mxu0 0.0
    %8511 = vmatpush.msra.mxu0 0.0
    %8512 = vmatpush.msra.mxu0 0.0
    %8513 = vmatpush.msra.mxu0 0.0
    %8514 = vmatpush.msra.mxu0 0.0
    %8515 = vmatpush.msra.mxu0 0.0
    %8516 = vmatpush.msra.mxu0 0.0
    %8517 = vmatpush.msra.mxu0 0.0
    %8518 = vmatpush.msra.mxu0 0.0
    %8519 = vmatpush.msra.mxu0 0.0
    %8520 = vmatpush.msra.mxu0 0.0
    %8521 = vmatpush.msra.mxu0 0.0
    %v8522 = vand.u32 %v4734, 4294901760
    %8523 = vmatpush.msra.mxu0 %v8522
    %v8524 = vand.u32 %v8429, 4294901760
    %v8525 = vsub.f32 %v8429, %v8524
    %v8526 = vand.u32 %v8525, 4294901760
    %8527 = vmatmul.f32.gmra.mxu0 %v8526
    %v8528 = vpop.f32.mrf.mxu0
    %v8529 = vadd.f32 %v8505, %v8528
    %8530 = vdwg.mxu0
    %8531 = vmatpush.msra.mxu0 0.0
    %8532 = vmatpush.msra.mxu0 0.0
    %8533 = vmatpush.msra.mxu0 0.0
    %8534 = vmatpush.msra.mxu0 0.0
    %8535 = vmatpush.msra.mxu0 0.0
    %8536 = vmatpush.msra.mxu0 0.0
    %8537 = vmatpush.msra.mxu0 0.0
    %8538 = vmatpush.msra.mxu0 0.0
    %8539 = vmatpush.msra.mxu0 0.0
    %8540 = vmatpush.msra.mxu0 0.0
    %8541 = vmatpush.msra.mxu0 0.0
    %8542 = vmatpush.msra.mxu0 0.0
    %8543 = vmatpush.msra.mxu0 0.0
    %8544 = vmatpush.msra.mxu0 0.0
    %8545 = vmatpush.msra.mxu0 0.0
    %v8546 = vand.u32 %v4734, 4294901760
    %v8547 = vsub.f32 %v4734, %v8546
    %v8548 = vand.u32 %v8547, 4294901760
    %8549 = vmatpush.msra.mxu0 %v8548
    %v8550 = vand.u32 %v8429, 4294901760
    %8551 = vmatmul.f32.gmra.mxu0 %v8550
    %v8552 = vpop.f32.mrf.mxu0
    %v8553 = vadd.f32 %v8529, %v8552
    %8554 = vdwg.mxu0
    %8555 = vmatpush.msra.mxu0 0.0
    %8556 = vmatpush.msra.mxu0 0.0
    %8557 = vmatpush.msra.mxu0 0.0
    %8558 = vmatpush.msra.mxu0 0.0
    %8559 = vmatpush.msra.mxu0 0.0
    %8560 = vmatpush.msra.mxu0 0.0
    %8561 = vmatpush.msra.mxu0 0.0
    %8562 = vmatpush.msra.mxu0 0.0
    %8563 = vmatpush.msra.mxu0 0.0
    %8564 = vmatpush.msra.mxu0 0.0
    %8565 = vmatpush.msra.mxu0 0.0
    %8566 = vmatpush.msra.mxu0 0.0
    %8567 = vmatpush.msra.mxu0 0.0
    %8568 = vmatpush.msra.mxu0 0.0
    %8569 = vmatpush.msra.mxu0 0.0
    %v8570 = vand.u32 %v4734, 4294901760
    %8571 = vmatpush.msra.mxu0 %v8570
    %v8572 = vand.u32 %v8429, 4294901760
    %8573 = vmatmul.f32.gmra.mxu0 %v8572
    %v8574 = vpop.f32.mrf.mxu0
    %v8575 = vadd.f32 %v8553, %v8574
    %8576 = vdwg.mxu0
    %v8577 = vadd.f32 %v8096, %v8575
    %v8578 = vperm.slane %v4735, 0
    %v8579 = vadd.f32 %v6656, %v8578
    %v8580 = vadd.f32 %v8577, %v8578
    %v8581 = vadd.f32 %v4501, %v8579
    %v8582 = vadd.f32 %v4502, %v8580
    %v8583 = vld [vmem:[#allocation7 + $0x9] sm:$0x1]
    %v8584 = vld [vmem:[#allocation7 + $0xa] sm:$0x1]
    %v8585 = vsel %vm90, %v8581, 0.0
    %8586 = vadd.xlane.f32.xlu0 %v8585
    %v8587 = vpop.xlane.xlu0 %8586
    %v8588 = vsel %vm90, %v8582, 0.0
    %8589 = vadd.xlane.f32.xlu0 %v8588
    %v8590 = vpop.xlane.xlu0 %8589
    %v8591 = vmul.f32 %v8587, %v4406
    %v8592 = vmul.f32 %v8590, %v4406
    %v8593 = vsub.f32 %v8581, %v8591
    %v8594 = vsub.f32 %v8582, %v8592
    %v8595 = vmul.f32 %v8593, %v8593
    %v8596 = vmul.f32 %v8594, %v8594
    %v8597 = vsel %vm90, %v8595, 0.0
    %8598 = vadd.xlane.f32.xlu0 %v8597
    %v8599 = vpop.xlane.xlu0 %8598
    %v8600 = vsel %vm90, %v8596, 0.0
    %8601 = vadd.xlane.f32.xlu0 %v8600
    %v8602 = vpop.xlane.xlu0 %8601
    %v8603 = vmul.f32 %v8599, %v4406
    %v8604 = vmul.f32 %v8602, %v4406
    %v8605 = vadd.f32 %v8603, 1e-05
    %v8606 = vadd.f32 %v8604, 1e-05
    %v8607 = vrsqrt.pop %v8605
    %v8608 = vmul.f32 %v8607, %v8605
    %v8609 = vmul.f32 %v8608, %v8607
    %v8610 = vmul.f32 0.5, %v8609
    %v8611 = vsub.f32 1.5, %v8610
    %v8612 = vmul.f32 %v8607, %v8611
    %vm8613 = vweird.f32 %v8605
    %vm8614 = vweird.f32 %v8607
    %vm8615 = vmor %vm8613, %vm8614
    %v8616 = vsel %vm8615, %v8607, %v8612
    %v8617 = vrsqrt.pop %v8606
    %v8618 = vmul.f32 %v8617, %v8606
    %v8619 = vmul.f32 %v8618, %v8617
    %v8620 = vmul.f32 0.5, %v8619
    %v8621 = vsub.f32 1.5, %v8620
    %v8622 = vmul.f32 %v8617, %v8621
    %vm8623 = vweird.f32 %v8606
    %vm8624 = vweird.f32 %v8617
    %vm8625 = vmor %vm8623, %vm8624
    %v8626 = vsel %vm8625, %v8617, %v8622
    %v8627 = vmul.f32 %v8593, %v8616
    %v8628 = vmul.f32 %v8594, %v8626
    %v8629 = vperm.slane %v8583, 0
    %v8630 = vmul.f32 %v8627, %v8629
    %v8631 = vmul.f32 %v8628, %v8629
    %v8632 = vperm.slane %v8584, 0
    %v8633 = vadd.f32 %v8630, %v8632
    %v8634 = vadd.f32 %v8631, %v8632
    %v8635 = vld [vmem:[#allocation6 + $0xa0] sm:$0xff]
    %v8636 = vld [vmem:[#allocation6 + $0xa8] sm:$0xff]
    %v8637 = vld [vmem:[#allocation6 + $0xb0] sm:$0xff]
    %v8638 = vld [vmem:[#allocation6 + $0xb8] sm:$0xff]
    %v8639 = vld [vmem:[#allocation7 + $0xb] sm:$0x1]
    %v8640 = vperm.slane %v8639, 0
    %v8642 = vsel %vm90, %v8633, 0
    %v8645 = vsel %vm90, %v8634, 0
    %8647 = vmatpush.msra.mxu0 0.0
    %8648 = vmatpush.msra.mxu0 0.0
    %8649 = vmatpush.msra.mxu0 0.0
    %8650 = vmatpush.msra.mxu0 0.0
    %8651 = vmatpush.msra.mxu0 0.0
    %8652 = vmatpush.msra.mxu0 0.0
    %8653 = vmatpush.msra.mxu0 0.0
    %8654 = vmatpush.msra.mxu0 0.0
    %8655 = vmatpush.msra.mxu0 0.0
    %8656 = vmatpush.msra.mxu0 0.0
    %8657 = vmatpush.msra.mxu0 0.0
    %8658 = vmatpush.msra.mxu0 0.0
    %v8659 = vand.u32 %v8638, 4294901760
    %8660 = vmatpush.msra.mxu0 %v8659
    %v8661 = vand.u32 %v8637, 4294901760
    %8662 = vmatpush.msra.mxu0 %v8661
    %v8663 = vand.u32 %v8636, 4294901760
    %8664 = vmatpush.msra.mxu0 %v8663
    %v8665 = vand.u32 %v8635, 4294901760
    %8666 = vmatpush.msra.mxu0 %v8665
    %v8667 = vand.u32 %v8642, 4294901760
    %v8668 = vsub.f32 %v8642, %v8667
    %v8669 = vand.u32 %v8668, 4294901760
    %v8670 = vsub.f32 %v8668, %v8669
    %v8671 = vand.u32 %v8670, 4294901760
    %8672 = vmatmul.f32.gmra.mxu0 %v8671
    %v8673 = vpop.f32.mrf.mxu0
    %v8674 = vadd.f32 %v8640, %v8673
    %v8675 = vand.u32 %v8645, 4294901760
    %v8676 = vsub.f32 %v8645, %v8675
    %v8677 = vand.u32 %v8676, 4294901760
    %v8678 = vsub.f32 %v8676, %v8677
    %v8679 = vand.u32 %v8678, 4294901760
    %8680 = vmatmul.f32.gmra.mxu0 %v8679
    %v8681 = vpop.f32.mrf.mxu0
    %v8682 = vadd.f32 %v8640, %v8681
    %8683 = vdwg.mxu0
    %8684 = vmatpush.msra.mxu0 0.0
    %8685 = vmatpush.msra.mxu0 0.0
    %8686 = vmatpush.msra.mxu0 0.0
    %8687 = vmatpush.msra.mxu0 0.0
    %8688 = vmatpush.msra.mxu0 0.0
    %8689 = vmatpush.msra.mxu0 0.0
    %8690 = vmatpush.msra.mxu0 0.0
    %8691 = vmatpush.msra.mxu0 0.0
    %8692 = vmatpush.msra.mxu0 0.0
    %8693 = vmatpush.msra.mxu0 0.0
    %8694 = vmatpush.msra.mxu0 0.0
    %8695 = vmatpush.msra.mxu0 0.0
    %v8696 = vand.u32 %v8638, 4294901760
    %v8697 = vsub.f32 %v8638, %v8696
    %v8698 = vand.u32 %v8697, 4294901760
    %v8699 = vsub.f32 %v8697, %v8698
    %v8700 = vand.u32 %v8699, 4294901760
    %8701 = vmatpush.msra.mxu0 %v8700
    %v8702 = vand.u32 %v8637, 4294901760
    %v8703 = vsub.f32 %v8637, %v8702
    %v8704 = vand.u32 %v8703, 4294901760
    %v8705 = vsub.f32 %v8703, %v8704
    %v8706 = vand.u32 %v8705, 4294901760
    %8707 = vmatpush.msra.mxu0 %v8706
    %v8708 = vand.u32 %v8636, 4294901760
    %v8709 = vsub.f32 %v8636, %v8708
    %v8710 = vand.u32 %v8709, 4294901760
    %v8711 = vsub.f32 %v8709, %v8710
    %v8712 = vand.u32 %v8711, 4294901760
    %8713 = vmatpush.msra.mxu0 %v8712
    %v8714 = vand.u32 %v8635, 4294901760
    %v8715 = vsub.f32 %v8635, %v8714
    %v8716 = vand.u32 %v8715, 4294901760
    %v8717 = vsub.f32 %v8715, %v8716
    %v8718 = vand.u32 %v8717, 4294901760
    %8719 = vmatpush.msra.mxu0 %v8718
    %v8720 = vand.u32 %v8642, 4294901760
    %8721 = vmatmul.f32.gmra.mxu0 %v8720
    %v8722 = vpop.f32.mrf.mxu0
    %v8723 = vadd.f32 %v8674, %v8722
    %v8724 = vand.u32 %v8645, 4294901760
    %8725 = vmatmul.f32.gmra.mxu0 %v8724
    %v8726 = vpop.f32.mrf.mxu0
    %v8727 = vadd.f32 %v8682, %v8726
    %8728 = vdwg.mxu0
    %8729 = vmatpush.msra.mxu0 0.0
    %8730 = vmatpush.msra.mxu0 0.0
    %8731 = vmatpush.msra.mxu0 0.0
    %8732 = vmatpush.msra.mxu0 0.0
    %8733 = vmatpush.msra.mxu0 0.0
    %8734 = vmatpush.msra.mxu0 0.0
    %8735 = vmatpush.msra.mxu0 0.0
    %8736 = vmatpush.msra.mxu0 0.0
    %8737 = vmatpush.msra.mxu0 0.0
    %8738 = vmatpush.msra.mxu0 0.0
    %8739 = vmatpush.msra.mxu0 0.0
    %8740 = vmatpush.msra.mxu0 0.0
    %v8741 = vand.u32 %v8638, 4294901760
    %v8742 = vsub.f32 %v8638, %v8741
    %8743 = vmatpush.msra.mxu0 %v8742
    %v8744 = vand.u32 %v8637, 4294901760
    %v8745 = vsub.f32 %v8637, %v8744
    %8746 = vmatpush.msra.mxu0 %v8745
    %v8747 = vand.u32 %v8636, 4294901760
    %v8748 = vsub.f32 %v8636, %v8747
    %8749 = vmatpush.msra.mxu0 %v8748
    %v8750 = vand.u32 %v8635, 4294901760
    %v8751 = vsub.f32 %v8635, %v8750
    %8752 = vmatpush.msra.mxu0 %v8751
    %v8753 = vand.u32 %v8642, 4294901760
    %v8754 = vsub.f32 %v8642, %v8753
    %8755 = vmatmul.f32.gmra.mxu0 %v8754
    %v8756 = vpop.f32.mrf.mxu0
    %v8757 = vadd.f32 %v8723, %v8756
    %v8758 = vand.u32 %v8645, 4294901760
    %v8759 = vsub.f32 %v8645, %v8758
    %8760 = vmatmul.f32.gmra.mxu0 %v8759
    %v8761 = vpop.f32.mrf.mxu0
    %v8762 = vadd.f32 %v8727, %v8761
    %8763 = vdwg.mxu0
    %8764 = vmatpush.msra.mxu0 0.0
    %8765 = vmatpush.msra.mxu0 0.0
    %8766 = vmatpush.msra.mxu0 0.0
    %8767 = vmatpush.msra.mxu0 0.0
    %8768 = vmatpush.msra.mxu0 0.0
    %8769 = vmatpush.msra.mxu0 0.0
    %8770 = vmatpush.msra.mxu0 0.0
    %8771 = vmatpush.msra.mxu0 0.0
    %8772 = vmatpush.msra.mxu0 0.0
    %8773 = vmatpush.msra.mxu0 0.0
    %8774 = vmatpush.msra.mxu0 0.0
    %8775 = vmatpush.msra.mxu0 0.0
    %v8776 = vand.u32 %v8638, 4294901760
    %8777 = vmatpush.msra.mxu0 %v8776
    %v8778 = vand.u32 %v8637, 4294901760
    %8779 = vmatpush.msra.mxu0 %v8778
    %v8780 = vand.u32 %v8636, 4294901760
    %8781 = vmatpush.msra.mxu0 %v8780
    %v8782 = vand.u32 %v8635, 4294901760
    %8783 = vmatpush.msra.mxu0 %v8782
    %v8784 = vand.u32 %v8642, 4294901760
    %v8785 = vsub.f32 %v8642, %v8784
    %v8786 = vand.u32 %v8785, 4294901760
    %8787 = vmatmul.f32.gmra.mxu0 %v8786
    %v8788 = vpop.f32.mrf.mxu0
    %v8789 = vadd.f32 %v8757, %v8788
    %v8790 = vand.u32 %v8645, 4294901760
    %v8791 = vsub.f32 %v8645, %v8790
    %v8792 = vand.u32 %v8791, 4294901760
    %8793 = vmatmul.f32.gmra.mxu0 %v8792
    %v8794 = vpop.f32.mrf.mxu0
    %v8795 = vadd.f32 %v8762, %v8794
    %8796 = vdwg.mxu0
    %8797 = vmatpush.msra.mxu0 0.0
    %8798 = vmatpush.msra.mxu0 0.0
    %8799 = vmatpush.msra.mxu0 0.0
    %8800 = vmatpush.msra.mxu0 0.0
    %8801 = vmatpush.msra.mxu0 0.0
    %8802 = vmatpush.msra.mxu0 0.0
    %8803 = vmatpush.msra.mxu0 0.0
    %8804 = vmatpush.msra.mxu0 0.0
    %8805 = vmatpush.msra.mxu0 0.0
    %8806 = vmatpush.msra.mxu0 0.0
    %8807 = vmatpush.msra.mxu0 0.0
    %8808 = vmatpush.msra.mxu0 0.0
    %v8809 = vand.u32 %v8638, 4294901760
    %v8810 = vsub.f32 %v8638, %v8809
    %v8811 = vand.u32 %v8810, 4294901760
    %8812 = vmatpush.msra.mxu0 %v8811
    %v8813 = vand.u32 %v8637, 4294901760
    %v8814 = vsub.f32 %v8637, %v8813
    %v8815 = vand.u32 %v8814, 4294901760
    %8816 = vmatpush.msra.mxu0 %v8815
    %v8817 = vand.u32 %v8636, 4294901760
    %v8818 = vsub.f32 %v8636, %v8817
    %v8819 = vand.u32 %v8818, 4294901760
    %8820 = vmatpush.msra.mxu0 %v8819
    %v8821 = vand.u32 %v8635, 4294901760
    %v8822 = vsub.f32 %v8635, %v8821
    %v8823 = vand.u32 %v8822, 4294901760
    %8824 = vmatpush.msra.mxu0 %v8823
    %v8825 = vand.u32 %v8642, 4294901760
    %8826 = vmatmul.f32.gmra.mxu0 %v8825
    %v8827 = vpop.f32.mrf.mxu0
    %v8828 = vadd.f32 %v8789, %v8827
    %v8829 = vand.u32 %v8645, 4294901760
    %8830 = vmatmul.f32.gmra.mxu0 %v8829
    %v8831 = vpop.f32.mrf.mxu0
    %v8832 = vadd.f32 %v8795, %v8831
    %8833 = vdwg.mxu0
    %8834 = vmatpush.msra.mxu0 0.0
    %8835 = vmatpush.msra.mxu0 0.0
    %8836 = vmatpush.msra.mxu0 0.0
    %8837 = vmatpush.msra.mxu0 0.0
    %8838 = vmatpush.msra.mxu0 0.0
    %8839 = vmatpush.msra.mxu0 0.0
    %8840 = vmatpush.msra.mxu0 0.0
    %8841 = vmatpush.msra.mxu0 0.0
    %8842 = vmatpush.msra.mxu0 0.0
    %8843 = vmatpush.msra.mxu0 0.0
    %8844 = vmatpush.msra.mxu0 0.0
    %8845 = vmatpush.msra.mxu0 0.0
    %v8846 = vand.u32 %v8638, 4294901760
    %8847 = vmatpush.msra.mxu0 %v8846
    %v8848 = vand.u32 %v8637, 4294901760
    %8849 = vmatpush.msra.mxu0 %v8848
    %v8850 = vand.u32 %v8636, 4294901760
    %8851 = vmatpush.msra.mxu0 %v8850
    %v8852 = vand.u32 %v8635, 4294901760
    %8853 = vmatpush.msra.mxu0 %v8852
    %v8854 = vand.u32 %v8642, 4294901760
    %8855 = vmatmul.f32.gmra.mxu0 %v8854
    %v8856 = vpop.f32.mrf.mxu0
    %v8857 = vadd.f32 %v8828, %v8856
    %v8858 = vand.u32 %v8645, 4294901760
    %8859 = vmatmul.f32.gmra.mxu0 %v8858
    %v8860 = vpop.f32.mrf.mxu0
    %v8861 = vadd.f32 %v8832, %v8860
    %8862 = vdwg.mxu0
    %v8863 = vmax.f32 %v8857, 0.0
    %v8864 = vmax.f32 %v8861, 0.0
    %v8865 = vld [vmem:[#allocation6 + $0xc0] sm:$0xff]
    %v8866 = vld [vmem:[#allocation6 + $0xc8] sm:$0xff]
    %v8867 = vld [vmem:[#allocation6 + $0xd0] sm:$0xff]
    %v8868 = vld [vmem:[#allocation6 + $0xd8] sm:$0xff]
    %v8869 = vld [vmem:[#allocation6 + $0xe0] sm:$0xff]
    %v8870 = vld [vmem:[#allocation6 + $0xe8] sm:$0xff]
    %v8871 = vld [vmem:[#allocation6 + $0xf0] sm:$0xff]
    %v8872 = vld [vmem:[#allocation6 + $0xf8] sm:$0xff]
    %v8873 = vld [vmem:[#allocation7 + $0xc] sm:$0x1]
    %v8874 = vperm.slane %v8873, 0
    %vm8875 = vcmask 523264
    %v8877 = vsel %vm8875, %v8863, 0
    %v8880 = vsel %vm8875, %v8864, 0
    %8882 = vmatpush.msra.mxu0 0.0
    %8883 = vmatpush.msra.mxu0 0.0
    %8884 = vmatpush.msra.mxu0 0.0
    %8885 = vmatpush.msra.mxu0 0.0
    %8886 = vmatpush.msra.mxu0 0.0
    %8887 = vmatpush.msra.mxu0 0.0
    %8888 = vmatpush.msra.mxu0 0.0
    %8889 = vmatpush.msra.mxu0 0.0
    %v8890 = vand.u32 %v8872, 4294901760
    %8891 = vmatpush.msra.mxu0 %v8890
    %v8892 = vand.u32 %v8871, 4294901760
    %8893 = vmatpush.msra.mxu0 %v8892
    %v8894 = vand.u32 %v8870, 4294901760
    %8895 = vmatpush.msra.mxu0 %v8894
    %v8896 = vand.u32 %v8869, 4294901760
    %8897 = vmatpush.msra.mxu0 %v8896
    %v8898 = vand.u32 %v8868, 4294901760
    %8899 = vmatpush.msra.mxu0 %v8898
    %v8900 = vand.u32 %v8867, 4294901760
    %8901 = vmatpush.msra.mxu0 %v8900
    %v8902 = vand.u32 %v8866, 4294901760
    %8903 = vmatpush.msra.mxu0 %v8902
    %v8904 = vand.u32 %v8865, 4294901760
    %8905 = vmatpush.msra.mxu0 %v8904
    %v8906 = vand.u32 %v8877, 4294901760
    %v8907 = vsub.f32 %v8877, %v8906
    %v8908 = vand.u32 %v8907, 4294901760
    %v8909 = vsub.f32 %v8907, %v8908
    %v8910 = vand.u32 %v8909, 4294901760
    %8911 = vmatmul.f32.gmra.mxu0 %v8910
    %v8912 = vpop.f32.mrf.mxu0
    %v8913 = vadd.f32 %v8874, %v8912
    %v8914 = vand.u32 %v8880, 4294901760
    %v8915 = vsub.f32 %v8880, %v8914
    %v8916 = vand.u32 %v8915, 4294901760
    %v8917 = vsub.f32 %v8915, %v8916
    %v8918 = vand.u32 %v8917, 4294901760
    %8919 = vmatmul.f32.gmra.mxu0 %v8918
    %v8920 = vpop.f32.mrf.mxu0
    %v8921 = vadd.f32 %v8874, %v8920
    %8922 = vdwg.mxu0
    %8923 = vmatpush.msra.mxu0 0.0
    %8924 = vmatpush.msra.mxu0 0.0
    %8925 = vmatpush.msra.mxu0 0.0
    %8926 = vmatpush.msra.mxu0 0.0
    %8927 = vmatpush.msra.mxu0 0.0
    %8928 = vmatpush.msra.mxu0 0.0
    %8929 = vmatpush.msra.mxu0 0.0
    %8930 = vmatpush.msra.mxu0 0.0
    %v8931 = vand.u32 %v8872, 4294901760
    %v8932 = vsub.f32 %v8872, %v8931
    %v8933 = vand.u32 %v8932, 4294901760
    %v8934 = vsub.f32 %v8932, %v8933
    %v8935 = vand.u32 %v8934, 4294901760
    %8936 = vmatpush.msra.mxu0 %v8935
    %v8937 = vand.u32 %v8871, 4294901760
    %v8938 = vsub.f32 %v8871, %v8937
    %v8939 = vand.u32 %v8938, 4294901760
    %v8940 = vsub.f32 %v8938, %v8939
    %v8941 = vand.u32 %v8940, 4294901760
    %8942 = vmatpush.msra.mxu0 %v8941
    %v8943 = vand.u32 %v8870, 4294901760
    %v8944 = vsub.f32 %v8870, %v8943
    %v8945 = vand.u32 %v8944, 4294901760
    %v8946 = vsub.f32 %v8944, %v8945
    %v8947 = vand.u32 %v8946, 4294901760
    %8948 = vmatpush.msra.mxu0 %v8947
    %v8949 = vand.u32 %v8869, 4294901760
    %v8950 = vsub.f32 %v8869, %v8949
    %v8951 = vand.u32 %v8950, 4294901760
    %v8952 = vsub.f32 %v8950, %v8951
    %v8953 = vand.u32 %v8952, 4294901760
    %8954 = vmatpush.msra.mxu0 %v8953
    %v8955 = vand.u32 %v8868, 4294901760
    %v8956 = vsub.f32 %v8868, %v8955
    %v8957 = vand.u32 %v8956, 4294901760
    %v8958 = vsub.f32 %v8956, %v8957
    %v8959 = vand.u32 %v8958, 4294901760
    %8960 = vmatpush.msra.mxu0 %v8959
    %v8961 = vand.u32 %v8867, 4294901760
    %v8962 = vsub.f32 %v8867, %v8961
    %v8963 = vand.u32 %v8962, 4294901760
    %v8964 = vsub.f32 %v8962, %v8963
    %v8965 = vand.u32 %v8964, 4294901760
    %8966 = vmatpush.msra.mxu0 %v8965
    %v8967 = vand.u32 %v8866, 4294901760
    %v8968 = vsub.f32 %v8866, %v8967
    %v8969 = vand.u32 %v8968, 4294901760
    %v8970 = vsub.f32 %v8968, %v8969
    %v8971 = vand.u32 %v8970, 4294901760
    %8972 = vmatpush.msra.mxu0 %v8971
    %v8973 = vand.u32 %v8865, 4294901760
    %v8974 = vsub.f32 %v8865, %v8973
    %v8975 = vand.u32 %v8974, 4294901760
    %v8976 = vsub.f32 %v8974, %v8975
    %v8977 = vand.u32 %v8976, 4294901760
    %8978 = vmatpush.msra.mxu0 %v8977
    %v8979 = vand.u32 %v8877, 4294901760
    %8980 = vmatmul.f32.gmra.mxu0 %v8979
    %v8981 = vpop.f32.mrf.mxu0
    %v8982 = vadd.f32 %v8913, %v8981
    %v8983 = vand.u32 %v8880, 4294901760
    %8984 = vmatmul.f32.gmra.mxu0 %v8983
    %v8985 = vpop.f32.mrf.mxu0
    %v8986 = vadd.f32 %v8921, %v8985
    %8987 = vdwg.mxu0
    %8988 = vmatpush.msra.mxu0 0.0
    %8989 = vmatpush.msra.mxu0 0.0
    %8990 = vmatpush.msra.mxu0 0.0
    %8991 = vmatpush.msra.mxu0 0.0
    %8992 = vmatpush.msra.mxu0 0.0
    %8993 = vmatpush.msra.mxu0 0.0
    %8994 = vmatpush.msra.mxu0 0.0
    %8995 = vmatpush.msra.mxu0 0.0
    %v8996 = vand.u32 %v8872, 4294901760
    %v8997 = vsub.f32 %v8872, %v8996
    %8998 = vmatpush.msra.mxu0 %v8997
    %v8999 = vand.u32 %v8871, 4294901760
    %v9000 = vsub.f32 %v8871, %v8999
    %9001 = vmatpush.msra.mxu0 %v9000
    %v9002 = vand.u32 %v8870, 4294901760
    %v9003 = vsub.f32 %v8870, %v9002
    %9004 = vmatpush.msra.mxu0 %v9003
    %v9005 = vand.u32 %v8869, 4294901760
    %v9006 = vsub.f32 %v8869, %v9005
    %9007 = vmatpush.msra.mxu0 %v9006
    %v9008 = vand.u32 %v8868, 4294901760
    %v9009 = vsub.f32 %v8868, %v9008
    %9010 = vmatpush.msra.mxu0 %v9009
    %v9011 = vand.u32 %v8867, 4294901760
    %v9012 = vsub.f32 %v8867, %v9011
    %9013 = vmatpush.msra.mxu0 %v9012
    %v9014 = vand.u32 %v8866, 4294901760
    %v9015 = vsub.f32 %v8866, %v9014
    %9016 = vmatpush.msra.mxu0 %v9015
    %v9017 = vand.u32 %v8865, 4294901760
    %v9018 = vsub.f32 %v8865, %v9017
    %9019 = vmatpush.msra.mxu0 %v9018
    %v9020 = vand.u32 %v8877, 4294901760
    %v9021 = vsub.f32 %v8877, %v9020
    %9022 = vmatmul.f32.gmra.mxu0 %v9021
    %v9023 = vpop.f32.mrf.mxu0
    %v9024 = vadd.f32 %v8982, %v9023
    %v9025 = vand.u32 %v8880, 4294901760
    %v9026 = vsub.f32 %v8880, %v9025
    %9027 = vmatmul.f32.gmra.mxu0 %v9026
    %v9028 = vpop.f32.mrf.mxu0
    %v9029 = vadd.f32 %v8986, %v9028
    %9030 = vdwg.mxu0
    %9031 = vmatpush.msra.mxu0 0.0
    %9032 = vmatpush.msra.mxu0 0.0
    %9033 = vmatpush.msra.mxu0 0.0
    %9034 = vmatpush.msra.mxu0 0.0
    %9035 = vmatpush.msra.mxu0 0.0
    %9036 = vmatpush.msra.mxu0 0.0
    %9037 = vmatpush.msra.mxu0 0.0
    %9038 = vmatpush.msra.mxu0 0.0
    %v9039 = vand.u32 %v8872, 4294901760
    %9040 = vmatpush.msra.mxu0 %v9039
    %v9041 = vand.u32 %v8871, 4294901760
    %9042 = vmatpush.msra.mxu0 %v9041
    %v9043 = vand.u32 %v8870, 4294901760
    %9044 = vmatpush.msra.mxu0 %v9043
    %v9045 = vand.u32 %v8869, 4294901760
    %9046 = vmatpush.msra.mxu0 %v9045
    %v9047 = vand.u32 %v8868, 4294901760
    %9048 = vmatpush.msra.mxu0 %v9047
    %v9049 = vand.u32 %v8867, 4294901760
    %9050 = vmatpush.msra.mxu0 %v9049
    %v9051 = vand.u32 %v8866, 4294901760
    %9052 = vmatpush.msra.mxu0 %v9051
    %v9053 = vand.u32 %v8865, 4294901760
    %9054 = vmatpush.msra.mxu0 %v9053
    %v9055 = vand.u32 %v8877, 4294901760
    %v9056 = vsub.f32 %v8877, %v9055
    %v9057 = vand.u32 %v9056, 4294901760
    %9058 = vmatmul.f32.gmra.mxu0 %v9057
    %v9059 = vpop.f32.mrf.mxu0
    %v9060 = vadd.f32 %v9024, %v9059
    %v9061 = vand.u32 %v8880, 4294901760
    %v9062 = vsub.f32 %v8880, %v9061
    %v9063 = vand.u32 %v9062, 4294901760
    %9064 = vmatmul.f32.gmra.mxu0 %v9063
    %v9065 = vpop.f32.mrf.mxu0
    %v9066 = vadd.f32 %v9029, %v9065
    %9067 = vdwg.mxu0
    %9068 = vmatpush.msra.mxu0 0.0
    %9069 = vmatpush.msra.mxu0 0.0
    %9070 = vmatpush.msra.mxu0 0.0
    %9071 = vmatpush.msra.mxu0 0.0
    %9072 = vmatpush.msra.mxu0 0.0
    %9073 = vmatpush.msra.mxu0 0.0
    %9074 = vmatpush.msra.mxu0 0.0
    %9075 = vmatpush.msra.mxu0 0.0
    %v9076 = vand.u32 %v8872, 4294901760
    %v9077 = vsub.f32 %v8872, %v9076
    %v9078 = vand.u32 %v9077, 4294901760
    %9079 = vmatpush.msra.mxu0 %v9078
    %v9080 = vand.u32 %v8871, 4294901760
    %v9081 = vsub.f32 %v8871, %v9080
    %v9082 = vand.u32 %v9081, 4294901760
    %9083 = vmatpush.msra.mxu0 %v9082
    %v9084 = vand.u32 %v8870, 4294901760
    %v9085 = vsub.f32 %v8870, %v9084
    %v9086 = vand.u32 %v9085, 4294901760
    %9087 = vmatpush.msra.mxu0 %v9086
    %v9088 = vand.u32 %v8869, 4294901760
    %v9089 = vsub.f32 %v8869, %v9088
    %v9090 = vand.u32 %v9089, 4294901760
    %9091 = vmatpush.msra.mxu0 %v9090
    %v9092 = vand.u32 %v8868, 4294901760
    %v9093 = vsub.f32 %v8868, %v9092
    %v9094 = vand.u32 %v9093, 4294901760
    %9095 = vmatpush.msra.mxu0 %v9094
    %v9096 = vand.u32 %v8867, 4294901760
    %v9097 = vsub.f32 %v8867, %v9096
    %v9098 = vand.u32 %v9097, 4294901760
    %9099 = vmatpush.msra.mxu0 %v9098
    %v9100 = vand.u32 %v8866, 4294901760
    %v9101 = vsub.f32 %v8866, %v9100
    %v9102 = vand.u32 %v9101, 4294901760
    %9103 = vmatpush.msra.mxu0 %v9102
    %v9104 = vand.u32 %v8865, 4294901760
    %v9105 = vsub.f32 %v8865, %v9104
    %v9106 = vand.u32 %v9105, 4294901760
    %9107 = vmatpush.msra.mxu0 %v9106
    %v9108 = vand.u32 %v8877, 4294901760
    %9109 = vmatmul.f32.gmra.mxu0 %v9108
    %v9110 = vpop.f32.mrf.mxu0
    %v9111 = vadd.f32 %v9060, %v9110
    %v9112 = vand.u32 %v8880, 4294901760
    %9113 = vmatmul.f32.gmra.mxu0 %v9112
    %v9114 = vpop.f32.mrf.mxu0
    %v9115 = vadd.f32 %v9066, %v9114
    %9116 = vdwg.mxu0
    %9117 = vmatpush.msra.mxu0 0.0
    %9118 = vmatpush.msra.mxu0 0.0
    %9119 = vmatpush.msra.mxu0 0.0
    %9120 = vmatpush.msra.mxu0 0.0
    %9121 = vmatpush.msra.mxu0 0.0
    %9122 = vmatpush.msra.mxu0 0.0
    %9123 = vmatpush.msra.mxu0 0.0
    %9124 = vmatpush.msra.mxu0 0.0
    %v9125 = vand.u32 %v8872, 4294901760
    %9126 = vmatpush.msra.mxu0 %v9125
    %v9127 = vand.u32 %v8871, 4294901760
    %9128 = vmatpush.msra.mxu0 %v9127
    %v9129 = vand.u32 %v8870, 4294901760
    %9130 = vmatpush.msra.mxu0 %v9129
    %v9131 = vand.u32 %v8869, 4294901760
    %9132 = vmatpush.msra.mxu0 %v9131
    %v9133 = vand.u32 %v8868, 4294901760
    %9134 = vmatpush.msra.mxu0 %v9133
    %v9135 = vand.u32 %v8867, 4294901760
    %9136 = vmatpush.msra.mxu0 %v9135
    %v9137 = vand.u32 %v8866, 4294901760
    %9138 = vmatpush.msra.mxu0 %v9137
    %v9139 = vand.u32 %v8865, 4294901760
    %9140 = vmatpush.msra.mxu0 %v9139
    %v9141 = vand.u32 %v8877, 4294901760
    %9142 = vmatmul.f32.gmra.mxu0 %v9141
    %v9143 = vpop.f32.mrf.mxu0
    %v9144 = vadd.f32 %v9111, %v9143
    %v9145 = vand.u32 %v8880, 4294901760
    %9146 = vmatmul.f32.gmra.mxu0 %v9145
    %v9147 = vpop.f32.mrf.mxu0
    %v9148 = vadd.f32 %v9115, %v9147
    %9149 = vdwg.mxu0
    %v9150 = vadd.f32 %v8633, %v9144
    %v9151 = vadd.f32 %v8634, %v9148
    %v9152 = vld [vmem:[#allocation7 + $0xd] sm:$0x1]
    %v9153 = vld [vmem:[#allocation7 + $0xe] sm:$0x1]
    %v9154 = vsel %vm90, %v9150, 0.0
    %9155 = vadd.xlane.f32.xlu0 %v9154
    %v9156 = vpop.xlane.xlu0 %9155
    %v9157 = vsel %vm90, %v9151, 0.0
    %9158 = vadd.xlane.f32.xlu0 %v9157
    %v9159 = vpop.xlane.xlu0 %9158
    %v9160 = vmul.f32 %v9156, %v4406
    %v9161 = vmul.f32 %v9159, %v4406
    %v9162 = vsub.f32 %v9150, %v9160
    %v9163 = vsub.f32 %v9151, %v9161
    %v9164 = vmul.f32 %v9162, %v9162
    %v9165 = vmul.f32 %v9163, %v9163
    %v9166 = vsel %vm90, %v9164, 0.0
    %9167 = vadd.xlane.f32.xlu0 %v9166
    %v9168 = vpop.xlane.xlu0 %9167
    %v9169 = vsel %vm90, %v9165, 0.0
    %9170 = vadd.xlane.f32.xlu0 %v9169
    %v9171 = vpop.xlane.xlu0 %9170
    %v9172 = vmul.f32 %v9168, %v4406
    %v9173 = vmul.f32 %v9171, %v4406
    %v9174 = vadd.f32 %v9172, 1e-05
    %v9175 = vadd.f32 %v9173, 1e-05
    %v9176 = vrsqrt.pop %v9174
    %v9177 = vmul.f32 %v9176, %v9174
    %v9178 = vmul.f32 %v9177, %v9176
    %v9179 = vmul.f32 0.5, %v9178
    %v9180 = vsub.f32 1.5, %v9179
    %v9181 = vmul.f32 %v9176, %v9180
    %vm9182 = vweird.f32 %v9174
    %vm9183 = vweird.f32 %v9176
    %vm9184 = vmor %vm9182, %vm9183
    %v9185 = vsel %vm9184, %v9176, %v9181
    %v9186 = vrsqrt.pop %v9175
    %v9187 = vmul.f32 %v9186, %v9175
    %v9188 = vmul.f32 %v9187, %v9186
    %v9189 = vmul.f32 0.5, %v9188
    %v9190 = vsub.f32 1.5, %v9189
    %v9191 = vmul.f32 %v9186, %v9190
    %vm9192 = vweird.f32 %v9175
    %vm9193 = vweird.f32 %v9186
    %vm9194 = vmor %vm9192, %vm9193
    %v9195 = vsel %vm9194, %v9186, %v9191
    %v9196 = vmul.f32 %v9162, %v9185
    %v9197 = vmul.f32 %v9163, %v9195
    %v9198 = vperm.slane %v9152, 0
    %v9199 = vmul.f32 %v9196, %v9198
    %v9200 = vmul.f32 %v9197, %v9198
    %v9201 = vperm.slane %v9153, 0
    %v9202 = vadd.f32 %v9199, %v9201
    %v9203 = vadd.f32 %v9200, %v9201
    %v9204 = vld [vmem:[#allocation7 + $0xf] sm:$0x1]
    %v9205 = vld [vmem:[#allocation7 + $0x10] sm:$0x1]
    %v9206 = vsel %vm90, %v9202, 0.0
    %9207 = vadd.xlane.f32.xlu0 %v9206
    %v9208 = vpop.xlane.xlu0 %9207
    %v9209 = vsel %vm90, %v9203, 0.0
    %9210 = vadd.xlane.f32.xlu0 %v9209
    %v9211 = vpop.xlane.xlu0 %9210
    %v9212 = vmul.f32 %v9208, %v4406
    %v9213 = vmul.f32 %v9211, %v4406
    %v9214 = vsub.f32 %v9202, %v9212
    %v9215 = vsub.f32 %v9203, %v9213
    %v9216 = vmul.f32 %v9214, %v9214
    %v9217 = vmul.f32 %v9215, %v9215
    %v9218 = vsel %vm90, %v9216, 0.0
    %9219 = vadd.xlane.f32.xlu0 %v9218
    %v9220 = vpop.xlane.xlu0 %9219
    %v9221 = vsel %vm90, %v9217, 0.0
    %9222 = vadd.xlane.f32.xlu0 %v9221
    %v9223 = vpop.xlane.xlu0 %9222
    %v9224 = vmul.f32 %v9220, %v4406
    %v9225 = vmul.f32 %v9223, %v4406
    %v9226 = vadd.f32 %v9224, 1e-05
    %v9227 = vadd.f32 %v9225, 1e-05
    %v9228 = vrsqrt.pop %v9226
    %v9229 = vmul.f32 %v9228, %v9226
    %v9230 = vmul.f32 %v9229, %v9228
    %v9231 = vmul.f32 0.5, %v9230
    %v9232 = vsub.f32 1.5, %v9231
    %v9233 = vmul.f32 %v9228, %v9232
    %vm9234 = vweird.f32 %v9226
    %vm9235 = vweird.f32 %v9228
    %vm9236 = vmor %vm9234, %vm9235
    %v9237 = vsel %vm9236, %v9228, %v9233
    %v9238 = vrsqrt.pop %v9227
    %v9239 = vmul.f32 %v9238, %v9227
    %v9240 = vmul.f32 %v9239, %v9238
    %v9241 = vmul.f32 0.5, %v9240
    %v9242 = vsub.f32 1.5, %v9241
    %v9243 = vmul.f32 %v9238, %v9242
    %vm9244 = vweird.f32 %v9227
    %vm9245 = vweird.f32 %v9238
    %vm9246 = vmor %vm9244, %vm9245
    %v9247 = vsel %vm9246, %v9238, %v9243
    %v9248 = vmul.f32 %v9214, %v9237
    %v9249 = vmul.f32 %v9215, %v9247
    %v9250 = vperm.slane %v9204, 0
    %v9251 = vmul.f32 %v9248, %v9250
    %v9252 = vmul.f32 %v9249, %v9250
    %v9253 = vperm.slane %v9205, 0
    %v9254 = vadd.f32 %v9251, %v9253
    %v9255 = vadd.f32 %v9252, %v9253
    %v9256 = vld [vmem:[#allocation6 + $0x100] sm:$0xff]
    %v9257 = vld [vmem:[#allocation6 + $0x108] sm:$0xff]
    %v9258 = vld [vmem:[#allocation6 + $0x110] sm:$0xff]
    %v9259 = vld [vmem:[#allocation6 + $0x118] sm:$0xff]
    %v9260 = vld [vmem:[#allocation7 + $0x11] sm:$0x1]
    %v9261 = vperm.slane %v9260, 0
    %v9263 = vsel %vm90, %v9254, 0
    %v9266 = vsel %vm90, %v9255, 0
    %9268 = vmatpush.msra.mxu0 0.0
    %9269 = vmatpush.msra.mxu0 0.0
    %9270 = vmatpush.msra.mxu0 0.0
    %9271 = vmatpush.msra.mxu0 0.0
    %9272 = vmatpush.msra.mxu0 0.0
    %9273 = vmatpush.msra.mxu0 0.0
    %9274 = vmatpush.msra.mxu0 0.0
    %9275 = vmatpush.msra.mxu0 0.0
    %9276 = vmatpush.msra.mxu0 0.0
    %9277 = vmatpush.msra.mxu0 0.0
    %9278 = vmatpush.msra.mxu0 0.0
    %9279 = vmatpush.msra.mxu0 0.0
    %v9280 = vand.u32 %v9259, 4294901760
    %9281 = vmatpush.msra.mxu0 %v9280
    %v9282 = vand.u32 %v9258, 4294901760
    %9283 = vmatpush.msra.mxu0 %v9282
    %v9284 = vand.u32 %v9257, 4294901760
    %9285 = vmatpush.msra.mxu0 %v9284
    %v9286 = vand.u32 %v9256, 4294901760
    %9287 = vmatpush.msra.mxu0 %v9286
    %v9288 = vand.u32 %v9263, 4294901760
    %v9289 = vsub.f32 %v9263, %v9288
    %v9290 = vand.u32 %v9289, 4294901760
    %v9291 = vsub.f32 %v9289, %v9290
    %v9292 = vand.u32 %v9291, 4294901760
    %9293 = vmatmul.f32.gmra.mxu0 %v9292
    %v9294 = vpop.f32.mrf.mxu0
    %v9295 = vadd.f32 %v9261, %v9294
    %v9296 = vand.u32 %v9266, 4294901760
    %v9297 = vsub.f32 %v9266, %v9296
    %v9298 = vand.u32 %v9297, 4294901760
    %v9299 = vsub.f32 %v9297, %v9298
    %v9300 = vand.u32 %v9299, 4294901760
    %9301 = vmatmul.f32.gmra.mxu0 %v9300
    %v9302 = vpop.f32.mrf.mxu0
    %v9303 = vadd.f32 %v9261, %v9302
    %9304 = vdwg.mxu0
    %9305 = vmatpush.msra.mxu0 0.0
    %9306 = vmatpush.msra.mxu0 0.0
    %9307 = vmatpush.msra.mxu0 0.0
    %9308 = vmatpush.msra.mxu0 0.0
    %9309 = vmatpush.msra.mxu0 0.0
    %9310 = vmatpush.msra.mxu0 0.0
    %9311 = vmatpush.msra.mxu0 0.0
    %9312 = vmatpush.msra.mxu0 0.0
    %9313 = vmatpush.msra.mxu0 0.0
    %9314 = vmatpush.msra.mxu0 0.0
    %9315 = vmatpush.msra.mxu0 0.0
    %9316 = vmatpush.msra.mxu0 0.0
    %v9317 = vand.u32 %v9259, 4294901760
    %v9318 = vsub.f32 %v9259, %v9317
    %v9319 = vand.u32 %v9318, 4294901760
    %v9320 = vsub.f32 %v9318, %v9319
    %v9321 = vand.u32 %v9320, 4294901760
    %9322 = vmatpush.msra.mxu0 %v9321
    %v9323 = vand.u32 %v9258, 4294901760
    %v9324 = vsub.f32 %v9258, %v9323
    %v9325 = vand.u32 %v9324, 4294901760
    %v9326 = vsub.f32 %v9324, %v9325
    %v9327 = vand.u32 %v9326, 4294901760
    %9328 = vmatpush.msra.mxu0 %v9327
    %v9329 = vand.u32 %v9257, 4294901760
    %v9330 = vsub.f32 %v9257, %v9329
    %v9331 = vand.u32 %v9330, 4294901760
    %v9332 = vsub.f32 %v9330, %v9331
    %v9333 = vand.u32 %v9332, 4294901760
    %9334 = vmatpush.msra.mxu0 %v9333
    %v9335 = vand.u32 %v9256, 4294901760
    %v9336 = vsub.f32 %v9256, %v9335
    %v9337 = vand.u32 %v9336, 4294901760
    %v9338 = vsub.f32 %v9336, %v9337
    %v9339 = vand.u32 %v9338, 4294901760
    %9340 = vmatpush.msra.mxu0 %v9339
    %v9341 = vand.u32 %v9263, 4294901760
    %9342 = vmatmul.f32.gmra.mxu0 %v9341
    %v9343 = vpop.f32.mrf.mxu0
    %v9344 = vadd.f32 %v9295, %v9343
    %v9345 = vand.u32 %v9266, 4294901760
    %9346 = vmatmul.f32.gmra.mxu0 %v9345
    %v9347 = vpop.f32.mrf.mxu0
    %v9348 = vadd.f32 %v9303, %v9347
    %9349 = vdwg.mxu0
    %9350 = vmatpush.msra.mxu0 0.0
    %9351 = vmatpush.msra.mxu0 0.0
    %9352 = vmatpush.msra.mxu0 0.0
    %9353 = vmatpush.msra.mxu0 0.0
    %9354 = vmatpush.msra.mxu0 0.0
    %9355 = vmatpush.msra.mxu0 0.0
    %9356 = vmatpush.msra.mxu0 0.0
    %9357 = vmatpush.msra.mxu0 0.0
    %9358 = vmatpush.msra.mxu0 0.0
    %9359 = vmatpush.msra.mxu0 0.0
    %9360 = vmatpush.msra.mxu0 0.0
    %9361 = vmatpush.msra.mxu0 0.0
    %v9362 = vand.u32 %v9259, 4294901760
    %v9363 = vsub.f32 %v9259, %v9362
    %9364 = vmatpush.msra.mxu0 %v9363
    %v9365 = vand.u32 %v9258, 4294901760
    %v9366 = vsub.f32 %v9258, %v9365
    %9367 = vmatpush.msra.mxu0 %v9366
    %v9368 = vand.u32 %v9257, 4294901760
    %v9369 = vsub.f32 %v9257, %v9368
    %9370 = vmatpush.msra.mxu0 %v9369
    %v9371 = vand.u32 %v9256, 4294901760
    %v9372 = vsub.f32 %v9256, %v9371
    %9373 = vmatpush.msra.mxu0 %v9372
    %v9374 = vand.u32 %v9263, 4294901760
    %v9375 = vsub.f32 %v9263, %v9374
    %9376 = vmatmul.f32.gmra.mxu0 %v9375
    %v9377 = vpop.f32.mrf.mxu0
    %v9378 = vadd.f32 %v9344, %v9377
    %v9379 = vand.u32 %v9266, 4294901760
    %v9380 = vsub.f32 %v9266, %v9379
    %9381 = vmatmul.f32.gmra.mxu0 %v9380
    %v9382 = vpop.f32.mrf.mxu0
    %v9383 = vadd.f32 %v9348, %v9382
    %9384 = vdwg.mxu0
    %9385 = vmatpush.msra.mxu0 0.0
    %9386 = vmatpush.msra.mxu0 0.0
    %9387 = vmatpush.msra.mxu0 0.0
    %9388 = vmatpush.msra.mxu0 0.0
    %9389 = vmatpush.msra.mxu0 0.0
    %9390 = vmatpush.msra.mxu0 0.0
    %9391 = vmatpush.msra.mxu0 0.0
    %9392 = vmatpush.msra.mxu0 0.0
    %9393 = vmatpush.msra.mxu0 0.0
    %9394 = vmatpush.msra.mxu0 0.0
    %9395 = vmatpush.msra.mxu0 0.0
    %9396 = vmatpush.msra.mxu0 0.0
    %v9397 = vand.u32 %v9259, 4294901760
    %9398 = vmatpush.msra.mxu0 %v9397
    %v9399 = vand.u32 %v9258, 4294901760
    %9400 = vmatpush.msra.mxu0 %v9399
    %v9401 = vand.u32 %v9257, 4294901760
    %9402 = vmatpush.msra.mxu0 %v9401
    %v9403 = vand.u32 %v9256, 4294901760
    %9404 = vmatpush.msra.mxu0 %v9403
    %v9405 = vand.u32 %v9263, 4294901760
    %v9406 = vsub.f32 %v9263, %v9405
    %v9407 = vand.u32 %v9406, 4294901760
    %9408 = vmatmul.f32.gmra.mxu0 %v9407
    %v9409 = vpop.f32.mrf.mxu0
    %v9410 = vadd.f32 %v9378, %v9409
    %v9411 = vand.u32 %v9266, 4294901760
    %v9412 = vsub.f32 %v9266, %v9411
    %v9413 = vand.u32 %v9412, 4294901760
    %9414 = vmatmul.f32.gmra.mxu0 %v9413
    %v9415 = vpop.f32.mrf.mxu0
    %v9416 = vadd.f32 %v9383, %v9415
    %9417 = vdwg.mxu0
    %9418 = vmatpush.msra.mxu0 0.0
    %9419 = vmatpush.msra.mxu0 0.0
    %9420 = vmatpush.msra.mxu0 0.0
    %9421 = vmatpush.msra.mxu0 0.0
    %9422 = vmatpush.msra.mxu0 0.0
    %9423 = vmatpush.msra.mxu0 0.0
    %9424 = vmatpush.msra.mxu0 0.0
    %9425 = vmatpush.msra.mxu0 0.0
    %9426 = vmatpush.msra.mxu0 0.0
    %9427 = vmatpush.msra.mxu0 0.0
    %9428 = vmatpush.msra.mxu0 0.0
    %9429 = vmatpush.msra.mxu0 0.0
    %v9430 = vand.u32 %v9259, 4294901760
    %v9431 = vsub.f32 %v9259, %v9430
    %v9432 = vand.u32 %v9431, 4294901760
    %9433 = vmatpush.msra.mxu0 %v9432
    %v9434 = vand.u32 %v9258, 4294901760
    %v9435 = vsub.f32 %v9258, %v9434
    %v9436 = vand.u32 %v9435, 4294901760
    %9437 = vmatpush.msra.mxu0 %v9436
    %v9438 = vand.u32 %v9257, 4294901760
    %v9439 = vsub.f32 %v9257, %v9438
    %v9440 = vand.u32 %v9439, 4294901760
    %9441 = vmatpush.msra.mxu0 %v9440
    %v9442 = vand.u32 %v9256, 4294901760
    %v9443 = vsub.f32 %v9256, %v9442
    %v9444 = vand.u32 %v9443, 4294901760
    %9445 = vmatpush.msra.mxu0 %v9444
    %v9446 = vand.u32 %v9263, 4294901760
    %9447 = vmatmul.f32.gmra.mxu0 %v9446
    %v9448 = vpop.f32.mrf.mxu0
    %v9449 = vadd.f32 %v9410, %v9448
    %v9450 = vand.u32 %v9266, 4294901760
    %9451 = vmatmul.f32.gmra.mxu0 %v9450
    %v9452 = vpop.f32.mrf.mxu0
    %v9453 = vadd.f32 %v9416, %v9452
    %9454 = vdwg.mxu0
    %9455 = vmatpush.msra.mxu0 0.0
    %9456 = vmatpush.msra.mxu0 0.0
    %9457 = vmatpush.msra.mxu0 0.0
    %9458 = vmatpush.msra.mxu0 0.0
    %9459 = vmatpush.msra.mxu0 0.0
    %9460 = vmatpush.msra.mxu0 0.0
    %9461 = vmatpush.msra.mxu0 0.0
    %9462 = vmatpush.msra.mxu0 0.0
    %9463 = vmatpush.msra.mxu0 0.0
    %9464 = vmatpush.msra.mxu0 0.0
    %9465 = vmatpush.msra.mxu0 0.0
    %9466 = vmatpush.msra.mxu0 0.0
    %v9467 = vand.u32 %v9259, 4294901760
    %9468 = vmatpush.msra.mxu0 %v9467
    %v9469 = vand.u32 %v9258, 4294901760
    %9470 = vmatpush.msra.mxu0 %v9469
    %v9471 = vand.u32 %v9257, 4294901760
    %9472 = vmatpush.msra.mxu0 %v9471
    %v9473 = vand.u32 %v9256, 4294901760
    %9474 = vmatpush.msra.mxu0 %v9473
    %v9475 = vand.u32 %v9263, 4294901760
    %9476 = vmatmul.f32.gmra.mxu0 %v9475
    %v9477 = vpop.f32.mrf.mxu0
    %v9478 = vadd.f32 %v9449, %v9477
    %v9479 = vand.u32 %v9266, 4294901760
    %9480 = vmatmul.f32.gmra.mxu0 %v9479
    %v9481 = vpop.f32.mrf.mxu0
    %v9482 = vadd.f32 %v9453, %v9481
    %9483 = vdwg.mxu0
    %vm9484 = vcmask 7168
    %9485 = vst.msk [vmem:[%s4] sm:$0xff] %vm9484, %v9478
    %9486 = vst.msk [vmem:[%s4 + $0x8] sm:$0xff] %vm9484, %v9482
    // Predicated region
    $region34: #{tpu_custom_call.1} parent=1 // pred_check
      _
    $region35: #{tpu_custom_call.1} parent=1 // pred_check_branch
      %9488 = sbr.rel (0) target = $region37
    $region36: #{tpu_custom_call.1} parent=1 // pred_region
      _
    $region37: #{tpu_custom_call.1} parent=1 // pred_fallthru
      _
    // Predicated region
    $region38: #{tpu_custom_call.1} parent=1 // pred_check
      _
    $region39: #{tpu_custom_call.1} parent=1 // pred_check_branch
      %9490 = sbr.rel (0) target = $region41
    $region40: #{tpu_custom_call.1} parent=1 // pred_region
      _
    $region41: #{tpu_custom_call.1} parent=1 // pred_fallthru
      _
    %9491 = vsyncpa [#allocation3], 1
    %9492 = vsyncpa [#allocation5], 1
    %9493 = vsyncpa [#allocation8], 1

</llo_original>
